<compile_context>
chip_gen: v7x
topology: tpu7x:2x2x1
jax: 0.10.0
libtpu: 0.0.40
codegen_flags: <defaults>
</compile_context>

<pallas_src>
import functools

import jax
import jax.numpy as jnp
from jax.experimental import pallas as pl
from jax.experimental.pallas import tpu as pltpu

LANE = 128
_VMEM = pl.BlockSpec(memory_space=pltpu.MemorySpace.VMEM)


def _round_up(x, m):
    return ((x + m - 1) // m) * m


def _pad_to(x, shape):
    return jnp.pad(x, [(0, t - s) for s, t in zip(x.shape, shape)])


# ----------------------------- Pallas kernels ------------------------------

def stage1_kernel(p_ref, w_ref, b_ref, o_ref):
    """Fused conv1-as-GEMM + bias + ReLU + 2x2 max-pool.

    p_ref: (4, M, K)  im2col patches, one slab per pooling phase (dh, dw);
                      rows ordered (b, ph, pw); cols ordered (cin, kh, kw),
                      zero-padded to K=128.
    w_ref: (K, 128)   conv1 weights, Cout zero-padded to 128 lanes.
    b_ref: (1, 128)
    o_ref: (M, 128)   pooled, ReLU'd conv1 activations, rows (b, ph, pw).
    """
    w = w_ref[...]
    y0 = jnp.dot(p_ref[0], w, preferred_element_type=jnp.float32)
    y1 = jnp.dot(p_ref[1], w, preferred_element_type=jnp.float32)
    y2 = jnp.dot(p_ref[2], w, preferred_element_type=jnp.float32)
    y3 = jnp.dot(p_ref[3], w, preferred_element_type=jnp.float32)
    m = jnp.maximum(jnp.maximum(y0, y1), jnp.maximum(y2, y3))
    o_ref[...] = jnp.maximum(m + b_ref[...], 0.0)


def stage2_kernel(p_ref, w2_ref, b2_ref, wf1_ref, bf1_ref, wf2_ref, bf2_ref,
                  wf3_ref, bf3_ref, o_ref, *, n_pos, rows_per_pos):
    """Fused conv2-as-GEMM + bias + ReLU + 2x2 max-pool + fc1 + fc2 + fc3.

    p_ref:  (4, n_pos*rows_per_pos, K2) conv2 patches per pooling phase;
            rows ordered (u, v, padded-batch); K2 zero-padded to 256.
    w2_ref: (K2, 128); b2_ref: (1, 128)
    wf1_ref:(n_pos, 128, 256)  fc1 weights regrouped per (u, v) position.
    bf1_ref:(1, 256); wf2_ref:(256, 128); bf2_ref:(1, 128)
    wf3_ref:(128, NCP); bf3_ref:(1, NCP)
    o_ref:  (rows_per_pos, NCP) logits (batch and classes padded).
    """
    w2 = w2_ref[...]
    y0 = jnp.dot(p_ref[0], w2, preferred_element_type=jnp.float32)
    y1 = jnp.dot(p_ref[1], w2, preferred_element_type=jnp.float32)
    y2 = jnp.dot(p_ref[2], w2, preferred_element_type=jnp.float32)
    y3 = jnp.dot(p_ref[3], w2, preferred_element_type=jnp.float32)
    p2 = jnp.maximum(jnp.maximum(y0, y1), jnp.maximum(y2, y3))
    p2 = jnp.maximum(p2 + b2_ref[...], 0.0)             # (n_pos*rows_per_pos, 128)

    # fc1: sum over the spatial positions; each position is a full sublane tile.
    acc = jnp.dot(p2[0:rows_per_pos, :], wf1_ref[0],
                  preferred_element_type=jnp.float32)
    for k in range(1, n_pos):
        acc = acc + jnp.dot(p2[k * rows_per_pos:(k + 1) * rows_per_pos, :],
                            wf1_ref[k], preferred_element_type=jnp.float32)
    h1 = jnp.maximum(acc + bf1_ref[...], 0.0)            # (rows_per_pos, 256)
    h2 = jnp.maximum(jnp.dot(h1, wf2_ref[...], preferred_element_type=jnp.float32)
                     + bf2_ref[...], 0.0)                # (rows_per_pos, 128)
    o_ref[...] = (jnp.dot(h2, wf3_ref[...], preferred_element_type=jnp.float32)
                  + bf3_ref[...])                        # (rows_per_pos, NCP)


# ------------------------------ JAX-side glue -------------------------------

def _im2col_nhwc(x, k):
    """(B,H,W,C) -> (B,OH,OW,C*k*k); columns ordered (c, kh, kw) to match
    PyTorch's Conv2d weight layout (Cout, Cin, kh, kw)."""
    B, H, W, C = x.shape
    OH, OW = H - k + 1, W - k + 1
    taps = [x[:, i:i + OH, j:j + OW, :] for i in range(k) for j in range(k)]
    p = jnp.stack(taps, axis=0)          # (k*k, B, OH, OW, C); dim0 = kh*k+kw
    p = p.transpose(1, 2, 3, 4, 0)       # (B, OH, OW, C, k*k)
    return p.reshape(B, OH, OW, C * k * k)


def _pool_phase_slabs(p, row_order):
    """(B, OH, OW, K) -> (4, rows, K): one row-slab per 2x2-pool phase (dh, dw)
    so the max-pool becomes an elementwise max of the four slabs in-kernel.
    row_order 'bhw' -> rows (b, ph, pw);  'hwb' -> rows (ph, pw, b)."""
    B, OH, OW, K = p.shape
    PH, PW = OH // 2, OW // 2
    q = p.reshape(B, PH, 2, PW, 2, K)
    if row_order == "bhw":
        q = q.transpose(2, 4, 0, 1, 3, 5)   # (dh, dw, b, ph, pw, K)
    else:
        q = q.transpose(2, 4, 1, 3, 0, 5)   # (dh, dw, ph, pw, b, K)
    return q.reshape(4, B * PH * PW, K)


# --------------------------------- Params -----------------------------------

def init_lenet_params(num_classes=100):
    """PyTorch-layout parameters (Conv2d: (Cout,Cin,kh,kw); Linear: (out,in))."""
    key = jax.random.PRNGKey(0)
    ks = jax.random.split(key, 10)

    def w(k, shape, fan_in):
        return (jax.random.normal(k, shape, jnp.float32) / jnp.sqrt(fan_in)
                ).astype(jnp.float32)

    return {
        "conv1_w": w(ks[0], (6, 3, 5, 5), 3 * 5 * 5),
        "conv1_b": w(ks[1], (6,), 3 * 5 * 5),
        "conv2_w": w(ks[2], (16, 6, 5, 5), 6 * 5 * 5),
        "conv2_b": w(ks[3], (16,), 6 * 5 * 5),
        "fc1_w": w(ks[4], (256, 400), 400),
        "fc1_b": w(ks[5], (256,), 400),
        "fc2_w": w(ks[6], (128, 256), 256),
        "fc2_b": w(ks[7], (128,), 256),
        "fc3_w": w(ks[8], (num_classes, 128), 128),
        "fc3_b": w(ks[9], (num_classes,), 128),
    }


def prepare_kernel_params(params, num_classes=100):
    """One-time weight prep: transpose to (K, N), zero-pad to lane-dense 128-wide
    slabs, regroup fc1 per spatial position.  Done once, outside the hot path."""
    assert num_classes <= LANE
    ncp = _round_up(num_classes, LANE)

    K1 = 3 * 5 * 5                                            # 75
    w1mat = _pad_to(params["conv1_w"].reshape(6, K1).T,
                    (_round_up(K1, LANE), LANE))              # (128, 128)
    b1 = _pad_to(params["conv1_b"].reshape(1, 6), (1, LANE))

    K2 = 6 * 5 * 5                                            # 150
    w2mat = _pad_to(params["conv2_w"].reshape(16, K2).T,
                    (_round_up(K2, LANE), LANE))              # (256, 128)
    b2 = _pad_to(params["conv2_b"].reshape(1, 16), (1, LANE))

    # fc1 input features are flattened (c, h, w) in PyTorch; regroup per (h, w).
    wf1 = params["fc1_w"].reshape(256, 16, 25).transpose(2, 1, 0)  # (25, 16, 256)
    wf1 = _pad_to(wf1, (25, LANE, 256))                            # (25, 128, 256)
    bf1 = params["fc1_b"].reshape(1, 256)

    wf2 = params["fc2_w"].T                                   # (256, 128)
    bf2 = params["fc2_b"].reshape(1, 128)

    wf3 = _pad_to(params["fc3_w"].T, (128, ncp))              # (128, 128)
    bf3 = _pad_to(params["fc3_b"].reshape(1, num_classes), (1, ncp))

    return {"w1": w1mat, "b1": b1, "w2": w2mat, "b2": b2,
            "wf1": wf1, "bf1": bf1, "wf2": wf2, "bf2": bf2,
            "wf3": wf3, "bf3": bf3}


# --------------------------------- Forward -----------------------------------

@functools.partial(jax.jit, static_argnames=("num_classes",))
def _lenet_forward_impl(x_nchw, kp, num_classes):
    B = x_nchw.shape[0]
    bp = max(8, _round_up(B, 8))          # pad batch rows to a full sublane tile
    x = jnp.transpose(x_nchw, (0, 2, 3, 1)).astype(jnp.float32)  # NHWC (B,32,32,3)

    # ---- stage 1: conv1 + ReLU + pool1 (single fused kernel) ----
    p1_patches = _pool_phase_slabs(_im2col_nhwc(x, 5), "bhw")    # (4, B*196, 75)
    p1_patches = _pad_to(p1_patches,
                         (4, p1_patches.shape[1], kp["w1"].shape[0]))
    M1 = p1_patches.shape[1]
    p1 = pl.pallas_call(
        stage1_kernel,
        out_shape=jax.ShapeDtypeStruct((M1, LANE), jnp.float32),
        in_specs=[_VMEM, _VMEM, _VMEM],
        out_specs=_VMEM,
    )(p1_patches, kp["w1"], kp["b1"])                            # (B*196, 128)

    # ---- glue: im2col on the tiny pooled activation for conv2 ----
    p1_img = p1.reshape(B, 14, 14, LANE)[..., :6]                # (B,14,14,6)
    p1_img = jnp.pad(p1_img, ((0, bp - B), (0, 0), (0, 0), (0, 0)))
    p2_patches = _pool_phase_slabs(_im2col_nhwc(p1_img, 5), "hwb")  # (4, 25*bp, 150)
    p2_patches = _pad_to(p2_patches,
                         (4, p2_patches.shape[1], kp["w2"].shape[0]))

    # ---- stage 2: conv2 + ReLU + pool2 + fc1 + fc2 + fc3 (single fused kernel) ----
    ncp = kp["wf3"].shape[1]
    kernel2 = functools.partial(stage2_kernel, n_pos=25, rows_per_pos=bp)
    logits_pad = pl.pallas_call(
        kernel2,
        out_shape=jax.ShapeDtypeStruct((bp, ncp), jnp.float32),
        in_specs=[_VMEM] * 9,
        out_specs=_VMEM,
    )(p2_patches, kp["w2"], kp["b2"], kp["wf1"], kp["bf1"],
      kp["wf2"], kp["bf2"], kp["wf3"], kp["bf3"])

    return logits_pad[:B, :num_classes]


def lenet_forward(x_nchw, kernel_params, num_classes=100):
    out = _lenet_forward_impl(x_nchw, kernel_params, num_classes)
    B = x_nchw.shape[0]
    # Same intermediate shapes the PyTorch module reports (NCHW).
    shape_dict = {1: [B, 6, 14, 14], 2: [B, 16, 5, 5], 3: [B, 400],
                  4: [B, 256], 5: [B, 128], 6: [B, num_classes]}
    return out, shape_dict


if __name__ == "__main__":
    B, num_classes = 2, 100
    key = jax.random.PRNGKey(0)
    x = jax.random.normal(key, (B, 3, 32, 32), jnp.float32)  # fc1=400 => 3x32x32

    params = init_lenet_params(num_classes)
    kparams = prepare_kernel_params(params, num_classes)

    out, shape_dict = lenet_forward(x, kparams, num_classes)
    out = jax.block_until_ready(out)

    assert out.shape == (B, num_classes)
    assert shape_dict[1] == [B, 6, 14, 14]
    assert shape_dict[2] == [B, 16, 5, 5]
    assert shape_dict[3] == [B, 400]
    assert shape_dict[6] == [B, num_classes]
    assert bool(jnp.all(jnp.isfinite(out)))
    print("KERNEL_OK")
</pallas_src>

<mosaic_0001>
module attributes {stable_mosaic.version = 11 : i64} {
  func.func @stage1_kernel(%arg0: memref<4x392x128xf32, #tpu.memory_space<vmem>>, %arg1: memref<128x128xf32, #tpu.memory_space<vmem>>, %arg2: memref<1x128xf32, #tpu.memory_space<vmem>>, %arg3: memref<392x128xf32, #tpu.memory_space<vmem>>) attributes {dimension_semantics = [], scalar_prefetch = 0 : i64, scratch_operands = 0 : i64, tpu.core_type = #tpu.core_type<tc>} {
    %c0 = arith.constant 0 : index
    %c0_0 = arith.constant 0 : index
    %0 = vector.load %arg1[%c0, %c0_0] : memref<128x128xf32, #tpu.memory_space<vmem>>, vector<128x128xf32>
    %c0_1 = arith.constant 0 : index
    %c0_2 = arith.constant 0 : index
    %c0_3 = arith.constant 0 : index
    %1 = vector.load %arg0[%c0_1, %c0_2, %c0_3] : memref<4x392x128xf32, #tpu.memory_space<vmem>>, vector<1x392x128xf32>
    %2 = vector.shape_cast %1 : vector<1x392x128xf32> to vector<392x128xf32>
    %cst = arith.constant dense<0.000000e+00> : vector<392x128xf32>
    %3 = tpu.matmul %2, %0, %cst {dimension_numbers = #tpu.dot_dimension_numbers<[1], [0], [0], [1], [0, 0, 1, 1], [], []>} : vector<392x128xf32>, vector<128x128xf32>, vector<392x128xf32> -> vector<392x128xf32>
    %c1 = arith.constant 1 : index
    %c0_4 = arith.constant 0 : index
    %c0_5 = arith.constant 0 : index
    %4 = vector.load %arg0[%c1, %c0_4, %c0_5] : memref<4x392x128xf32, #tpu.memory_space<vmem>>, vector<1x392x128xf32>
    %5 = vector.shape_cast %4 : vector<1x392x128xf32> to vector<392x128xf32>
    %cst_6 = arith.constant dense<0.000000e+00> : vector<392x128xf32>
    %6 = tpu.matmul %5, %0, %cst_6 {dimension_numbers = #tpu.dot_dimension_numbers<[1], [0], [0], [1], [0, 0, 1, 1], [], []>} : vector<392x128xf32>, vector<128x128xf32>, vector<392x128xf32> -> vector<392x128xf32>
    %c2 = arith.constant 2 : index
    %c0_7 = arith.constant 0 : index
    %c0_8 = arith.constant 0 : index
    %7 = vector.load %arg0[%c2, %c0_7, %c0_8] : memref<4x392x128xf32, #tpu.memory_space<vmem>>, vector<1x392x128xf32>
    %8 = vector.shape_cast %7 : vector<1x392x128xf32> to vector<392x128xf32>
    %cst_9 = arith.constant dense<0.000000e+00> : vector<392x128xf32>
    %9 = tpu.matmul %8, %0, %cst_9 {dimension_numbers = #tpu.dot_dimension_numbers<[1], [0], [0], [1], [0, 0, 1, 1], [], []>} : vector<392x128xf32>, vector<128x128xf32>, vector<392x128xf32> -> vector<392x128xf32>
    %c3 = arith.constant 3 : index
    %c0_10 = arith.constant 0 : index
    %c0_11 = arith.constant 0 : index
    %10 = vector.load %arg0[%c3, %c0_10, %c0_11] : memref<4x392x128xf32, #tpu.memory_space<vmem>>, vector<1x392x128xf32>
    %11 = vector.shape_cast %10 : vector<1x392x128xf32> to vector<392x128xf32>
    %cst_12 = arith.constant dense<0.000000e+00> : vector<392x128xf32>
    %12 = tpu.matmul %11, %0, %cst_12 {dimension_numbers = #tpu.dot_dimension_numbers<[1], [0], [0], [1], [0, 0, 1, 1], [], []>} : vector<392x128xf32>, vector<128x128xf32>, vector<392x128xf32> -> vector<392x128xf32>
    %13 = arith.maximumf %3, %6 : vector<392x128xf32>
    %14 = arith.maximumf %9, %12 : vector<392x128xf32>
    %15 = arith.maximumf %13, %14 : vector<392x128xf32>
    %c0_13 = arith.constant 0 : index
    %c0_14 = arith.constant 0 : index
    %16 = vector.load %arg2[%c0_13, %c0_14] : memref<1x128xf32, #tpu.memory_space<vmem>>, vector<1x128xf32>
    %17 = vector.broadcast %16 : vector<1x128xf32> to vector<392x128xf32>
    %18 = arith.addf %15, %17 : vector<392x128xf32>
    %cst_15 = arith.constant 0.000000e+00 : f32
    %19 = vector.broadcast %cst_15 : f32 to vector<392x128xf32>
    %20 = arith.maximumf %18, %19 : vector<392x128xf32>
    %c0_16 = arith.constant 0 : index
    %c0_17 = arith.constant 0 : index
    %21 = vector.load %arg3[%c0_16, %c0_17] : memref<392x128xf32, #tpu.memory_space<vmem>>, vector<392x128xf32>
    tpu.vector_store %arg3[%c0_16, %c0_17], %20 {strides = array<i32>} : memref<392x128xf32, #tpu.memory_space<vmem>>, vector<392x128xf32>,
    return
  }
}

module attributes {stable_mosaic.version = 11 : i64} {
  func.func @stage2_kernel(%arg0: memref<4x200x256xf32, #tpu.memory_space<vmem>>, %arg1: memref<256x128xf32, #tpu.memory_space<vmem>>, %arg2: memref<1x128xf32, #tpu.memory_space<vmem>>, %arg3: memref<25x128x256xf32, #tpu.memory_space<vmem>>, %arg4: memref<1x256xf32, #tpu.memory_space<vmem>>, %arg5: memref<256x128xf32, #tpu.memory_space<vmem>>, %arg6: memref<1x128xf32, #tpu.memory_space<vmem>>, %arg7: memref<128x128xf32, #tpu.memory_space<vmem>>, %arg8: memref<1x128xf32, #tpu.memory_space<vmem>>, %arg9: memref<8x128xf32, #tpu.memory_space<vmem>>) attributes {dimension_semantics = [], scalar_prefetch = 0 : i64, scratch_operands = 0 : i64, tpu.core_type = #tpu.core_type<tc>} {
    %c0 = arith.constant 0 : index
    %c0_0 = arith.constant 0 : index
    %0 = vector.load %arg1[%c0, %c0_0] : memref<256x128xf32, #tpu.memory_space<vmem>>, vector<256x128xf32>
    %c0_1 = arith.constant 0 : index
    %c0_2 = arith.constant 0 : index
    %c0_3 = arith.constant 0 : index
    %1 = vector.load %arg0[%c0_1, %c0_2, %c0_3] : memref<4x200x256xf32, #tpu.memory_space<vmem>>, vector<1x200x256xf32>
    %2 = vector.shape_cast %1 : vector<1x200x256xf32> to vector<200x256xf32>
    %cst = arith.constant dense<0.000000e+00> : vector<200x128xf32>
    %3 = tpu.matmul %2, %0, %cst {dimension_numbers = #tpu.dot_dimension_numbers<[1], [0], [0], [1], [0, 0, 1, 1], [], []>} : vector<200x256xf32>, vector<256x128xf32>, vector<200x128xf32> -> vector<200x128xf32>
    %c1 = arith.constant 1 : index
    %c0_4 = arith.constant 0 : index
    %c0_5 = arith.constant 0 : index
    %4 = vector.load %arg0[%c1, %c0_4, %c0_5] : memref<4x200x256xf32, #tpu.memory_space<vmem>>, vector<1x200x256xf32>
    %5 = vector.shape_cast %4 : vector<1x200x256xf32> to vector<200x256xf32>
    %cst_6 = arith.constant dense<0.000000e+00> : vector<200x128xf32>
    %6 = tpu.matmul %5, %0, %cst_6 {dimension_numbers = #tpu.dot_dimension_numbers<[1], [0], [0], [1], [0, 0, 1, 1], [], []>} : vector<200x256xf32>, vector<256x128xf32>, vector<200x128xf32> -> vector<200x128xf32>
    %c2 = arith.constant 2 : index
    %c0_7 = arith.constant 0 : index
    %c0_8 = arith.constant 0 : index
    %7 = vector.load %arg0[%c2, %c0_7, %c0_8] : memref<4x200x256xf32, #tpu.memory_space<vmem>>, vector<1x200x256xf32>
    %8 = vector.shape_cast %7 : vector<1x200x256xf32> to vector<200x256xf32>
    %cst_9 = arith.constant dense<0.000000e+00> : vector<200x128xf32>
    %9 = tpu.matmul %8, %0, %cst_9 {dimension_numbers = #tpu.dot_dimension_numbers<[1], [0], [0], [1], [0, 0, 1, 1], [], []>} : vector<200x256xf32>, vector<256x128xf32>, vector<200x128xf32> -> vector<200x128xf32>
    %c3 = arith.constant 3 : index
    %c0_10 = arith.constant 0 : index
    %c0_11 = arith.constant 0 : index
    %10 = vector.load %arg0[%c3, %c0_10, %c0_11] : memref<4x200x256xf32, #tpu.memory_space<vmem>>, vector<1x200x256xf32>
    %11 = vector.shape_cast %10 : vector<1x200x256xf32> to vector<200x256xf32>
    %cst_12 = arith.constant dense<0.000000e+00> : vector<200x128xf32>
    %12 = tpu.matmul %11, %0, %cst_12 {dimension_numbers = #tpu.dot_dimension_numbers<[1], [0], [0], [1], [0, 0, 1, 1], [], []>} : vector<200x256xf32>, vector<256x128xf32>, vector<200x128xf32> -> vector<200x128xf32>
    %13 = arith.maximumf %3, %6 : vector<200x128xf32>
    %14 = arith.maximumf %9, %12 : vector<200x128xf32>
    %15 = arith.maximumf %13, %14 : vector<200x128xf32>
    %c0_13 = arith.constant 0 : index
    %c0_14 = arith.constant 0 : index
    %16 = vector.load %arg2[%c0_13, %c0_14] : memref<1x128xf32, #tpu.memory_space<vmem>>, vector<1x128xf32>
    %17 = vector.broadcast %16 : vector<1x128xf32> to vector<200x128xf32>
    %18 = arith.addf %15, %17 : vector<200x128xf32>
    %cst_15 = arith.constant 0.000000e+00 : f32
    %19 = vector.broadcast %cst_15 : f32 to vector<200x128xf32>
    %20 = arith.maximumf %18, %19 : vector<200x128xf32>
    %21 = vector.extract_strided_slice %20 {offsets = [0, 0], sizes = [8, 128], strides = [1, 1]} : vector<200x128xf32> to vector<8x128xf32>
    %c0_16 = arith.constant 0 : index
    %c0_17 = arith.constant 0 : index
    %c0_18 = arith.constant 0 : index
    %22 = vector.load %arg3[%c0_16, %c0_17, %c0_18] : memref<25x128x256xf32, #tpu.memory_space<vmem>>, vector<1x128x256xf32>
    %23 = vector.shape_cast %22 : vector<1x128x256xf32> to vector<128x256xf32>
    %cst_19 = arith.constant dense<0.000000e+00> : vector<8x256xf32>
    %24 = tpu.matmul %21, %23, %cst_19 {dimension_numbers = #tpu.dot_dimension_numbers<[1], [0], [0], [1], [0, 0, 1, 1], [], []>} : vector<8x128xf32>, vector<128x256xf32>, vector<8x256xf32> -> vector<8x256xf32>
    %25 = vector.extract_strided_slice %20 {offsets = [8, 0], sizes = [8, 128], strides = [1, 1]} : vector<200x128xf32> to vector<8x128xf32>
    %c1_20 = arith.constant 1 : index
    %c0_21 = arith.constant 0 : index
    %c0_22 = arith.constant 0 : index
    %26 = vector.load %arg3[%c1_20, %c0_21, %c0_22] : memref<25x128x256xf32, #tpu.memory_space<vmem>>, vector<1x128x256xf32>
    %27 = vector.shape_cast %26 : vector<1x128x256xf32> to vector<128x256xf32>
    %cst_23 = arith.constant dense<0.000000e+00> : vector<8x256xf32>
    %28 = tpu.matmul %25, %27, %cst_23 {dimension_numbers = #tpu.dot_dimension_numbers<[1], [0], [0], [1], [0, 0, 1, 1], [], []>} : vector<8x128xf32>, vector<128x256xf32>, vector<8x256xf32> -> vector<8x256xf32>
    %29 = arith.addf %24, %28 : vector<8x256xf32>
    %30 = vector.extract_strided_slice %20 {offsets = [16, 0], sizes = [8, 128], strides = [1, 1]} : vector<200x128xf32> to vector<8x128xf32>
    %c2_24 = arith.constant 2 : index
    %c0_25 = arith.constant 0 : index
    %c0_26 = arith.constant 0 : index
    %31 = vector.load %arg3[%c2_24, %c0_25, %c0_26] : memref<25x128x256xf32, #tpu.memory_space<vmem>>, vector<1x128x256xf32>
    %32 = vector.shape_cast %31 : vector<1x128x256xf32> to vector<128x256xf32>
    %cst_27 = arith.constant dense<0.000000e+00> : vector<8x256xf32>
    %33 = tpu.matmul %30, %32, %cst_27 {dimension_numbers = #tpu.dot_dimension_numbers<[1], [0], [0], [1], [0, 0, 1, 1], [], []>} : vector<8x128xf32>, vector<128x256xf32>, vector<8x256xf32> -> vector<8x256xf32>
    %34 = arith.addf %29, %33 : vector<8x256xf32>
    %35 = vector.extract_strided_slice %20 {offsets = [24, 0], sizes = [8, 128], strides = [1, 1]} : vector<200x128xf32> to vector<8x128xf32>
    %c3_28 = arith.constant 3 : index
    %c0_29 = arith.constant 0 : index
    %c0_30 = arith.constant 0 : index
    %36 = vector.load %arg3[%c3_28, %c0_29, %c0_30] : memref<25x128x256xf32, #tpu.memory_space<vmem>>, vector<1x128x256xf32>
    %37 = vector.shape_cast %36 : vector<1x128x256xf32> to vector<128x256xf32>
    %cst_31 = arith.constant dense<0.000000e+00> : vector<8x256xf32>
    %38 = tpu.matmul %35, %37, %cst_31 {dimension_numbers = #tpu.dot_dimension_numbers<[1], [0], [0], [1], [0, 0, 1, 1], [], []>} : vector<8x128xf32>, vector<128x256xf32>, vector<8x256xf32> -> vector<8x256xf32>
    %39 = arith.addf %34, %38 : vector<8x256xf32>
    %40 = vector.extract_strided_slice %20 {offsets = [32, 0], sizes = [8, 128], strides = [1, 1]} : vector<200x128xf32> to vector<8x128xf32>
    %c4 = arith.constant 4 : index
    %c0_32 = arith.constant 0 : index
    %c0_33 = arith.constant 0 : index
    %41 = vector.load %arg3[%c4, %c0_32, %c0_33] : memref<25x128x256xf32, #tpu.memory_space<vmem>>, vector<1x128x256xf32>
    %42 = vector.shape_cast %41 : vector<1x128x256xf32> to vector<128x256xf32>
    %cst_34 = arith.constant dense<0.000000e+00> : vector<8x256xf32>
    %43 = tpu.matmul %40, %42, %cst_34 {dimension_numbers = #tpu.dot_dimension_numbers<[1], [0], [0], [1], [0, 0, 1, 1], [], []>} : vector<8x128xf32>, vector<128x256xf32>, vector<8x256xf32> -> vector<8x256xf32>
    %44 = arith.addf %39, %43 : vector<8x256xf32>
    %45 = vector.extract_strided_slice %20 {offsets = [40, 0], sizes = [8, 128], strides = [1, 1]} : vector<200x128xf32> to vector<8x128xf32>
    %c5 = arith.constant 5 : index
    %c0_35 = arith.constant 0 : index
    %c0_36 = arith.constant 0 : index
    %46 = vector.load %arg3[%c5, %c0_35, %c0_36] : memref<25x128x256xf32, #tpu.memory_space<vmem>>, vector<1x128x256xf32>
    %47 = vector.shape_cast %46 : vector<1x128x256xf32> to vector<128x256xf32>
    %cst_37 = arith.constant dense<0.000000e+00> : vector<8x256xf32>
    %48 = tpu.matmul %45, %47, %cst_37 {dimension_numbers = #tpu.dot_dimension_numbers<[1], [0], [0], [1], [0, 0, 1, 1], [], []>} : vector<8x128xf32>, vector<128x256xf32>, vector<8x256xf32> -> vector<8x256xf32>
    %49 = arith.addf %44, %48 : vector<8x256xf32>
    %50 = vector.extract_strided_slice %20 {offsets = [48, 0], sizes = [8, 128], strides = [1, 1]} : vector<200x128xf32> to vector<8x128xf32>
    %c6 = arith.constant 6 : index
    %c0_38 = arith.constant 0 : index
    %c0_39 = arith.constant 0 : index
    %51 = vector.load %arg3[%c6, %c0_38, %c0_39] : memref<25x128x256xf32, #tpu.memory_space<vmem>>, vector<1x128x256xf32>
    %52 = vector.shape_cast %51 : vector<1x128x256xf32> to vector<128x256xf32>
    %cst_40 = arith.constant dense<0.000000e+00> : vector<8x256xf32>
    %53 = tpu.matmul %50, %52, %cst_40 {dimension_numbers = #tpu.dot_dimension_numbers<[1], [0], [0], [1], [0, 0, 1, 1], [], []>} : vector<8x128xf32>, vector<128x256xf32>, vector<8x256xf32> -> vector<8x256xf32>
    %54 = arith.addf %49, %53 : vector<8x256xf32>
    %55 = vector.extract_strided_slice %20 {offsets = [56, 0], sizes = [8, 128], strides = [1, 1]} : vector<200x128xf32> to vector<8x128xf32>
    %c7 = arith.constant 7 : index
    %c0_41 = arith.constant 0 : index
    %c0_42 = arith.constant 0 : index
    %56 = vector.load %arg3[%c7, %c0_41, %c0_42] : memref<25x128x256xf32, #tpu.memory_space<vmem>>, vector<1x128x256xf32>
    %57 = vector.shape_cast %56 : vector<1x128x256xf32> to vector<128x256xf32>
    %cst_43 = arith.constant dense<0.000000e+00> : vector<8x256xf32>
    %58 = tpu.matmul %55, %57, %cst_43 {dimension_numbers = #tpu.dot_dimension_numbers<[1], [0], [0], [1], [0, 0, 1, 1], [], []>} : vector<8x128xf32>, vector<128x256xf32>, vector<8x256xf32> -> vector<8x256xf32>
    %59 = arith.addf %54, %58 : vector<8x256xf32>
    %60 = vector.extract_strided_slice %20 {offsets = [64, 0], sizes = [8, 128], strides = [1, 1]} : vector<200x128xf32> to vector<8x128xf32>
    %c8 = arith.constant 8 : index
    %c0_44 = arith.constant 0 : index
    %c0_45 = arith.constant 0 : index
    %61 = vector.load %arg3[%c8, %c0_44, %c0_45] : memref<25x128x256xf32, #tpu.memory_space<vmem>>, vector<1x128x256xf32>
    %62 = vector.shape_cast %61 : vector<1x128x256xf32> to vector<128x256xf32>
    %cst_46 = arith.constant dense<0.000000e+00> : vector<8x256xf32>
    %63 = tpu.matmul %60, %62, %cst_46 {dimension_numbers = #tpu.dot_dimension_numbers<[1], [0], [0], [1], [0, 0, 1, 1], [], []>} : vector<8x128xf32>, vector<128x256xf32>, vector<8x256xf32> -> vector<8x256xf32>
    %64 = arith.addf %59, %63 : vector<8x256xf32>
    %65 = vector.extract_strided_slice %20 {offsets = [72, 0], sizes = [8, 128], strides = [1, 1]} : vector<200x128xf32> to vector<8x128xf32>
    %c9 = arith.constant 9 : index
    %c0_47 = arith.constant 0 : index
    %c0_48 = arith.constant 0 : index
    %66 = vector.load %arg3[%c9, %c0_47, %c0_48] : memref<25x128x256xf32, #tpu.memory_space<vmem>>, vector<1x128x256xf32>
    %67 = vector.shape_cast %66 : vector<1x128x256xf32> to vector<128x256xf32>
    %cst_49 = arith.constant dense<0.000000e+00> : vector<8x256xf32>
    %68 = tpu.matmul %65, %67, %cst_49 {dimension_numbers = #tpu.dot_dimension_numbers<[1], [0], [0], [1], [0, 0, 1, 1], [], []>} : vector<8x128xf32>, vector<128x256xf32>, vector<8x256xf32> -> vector<8x256xf32>
    %69 = arith.addf %64, %68 : vector<8x256xf32>
    %70 = vector.extract_strided_slice %20 {offsets = [80, 0], sizes = [8, 128], strides = [1, 1]} : vector<200x128xf32> to vector<8x128xf32>
    %c10 = arith.constant 10 : index
    %c0_50 = arith.constant 0 : index
    %c0_51 = arith.constant 0 : index
    %71 = vector.load %arg3[%c10, %c0_50, %c0_51] : memref<25x128x256xf32, #tpu.memory_space<vmem>>, vector<1x128x256xf32>
    %72 = vector.shape_cast %71 : vector<1x128x256xf32> to vector<128x256xf32>
    %cst_52 = arith.constant dense<0.000000e+00> : vector<8x256xf32>
    %73 = tpu.matmul %70, %72, %cst_52 {dimension_numbers = #tpu.dot_dimension_numbers<[1], [0], [0], [1], [0, 0, 1, 1], [], []>} : vector<8x128xf32>, vector<128x256xf32>, vector<8x256xf32> -> vector<8x256xf32>
    %74 = arith.addf %69, %73 : vector<8x256xf32>
    %75 = vector.extract_strided_slice %20 {offsets = [88, 0], sizes = [8, 128], strides = [1, 1]} : vector<200x128xf32> to vector<8x128xf32>
    %c11 = arith.constant 11 : index
    %c0_53 = arith.constant 0 : index
    %c0_54 = arith.constant 0 : index
    %76 = vector.load %arg3[%c11, %c0_53, %c0_54] : memref<25x128x256xf32, #tpu.memory_space<vmem>>, vector<1x128x256xf32>
    %77 = vector.shape_cast %76 : vector<1x128x256xf32> to vector<128x256xf32>
    %cst_55 = arith.constant dense<0.000000e+00> : vector<8x256xf32>
    %78 = tpu.matmul %75, %77, %cst_55 {dimension_numbers = #tpu.dot_dimension_numbers<[1], [0], [0], [1], [0, 0, 1, 1], [], []>} : vector<8x128xf32>, vector<128x256xf32>, vector<8x256xf32> -> vector<8x256xf32>
    %79 = arith.addf %74, %78 : vector<8x256xf32>
    %80 = vector.extract_strided_slice %20 {offsets = [96, 0], sizes = [8, 128], strides = [1, 1]} : vector<200x128xf32> to vector<8x128xf32>
    %c12 = arith.constant 12 : index
    %c0_56 = arith.constant 0 : index
    %c0_57 = arith.constant 0 : index
    %81 = vector.load %arg3[%c12, %c0_56, %c0_57] : memref<25x128x256xf32, #tpu.memory_space<vmem>>, vector<1x128x256xf32>
    %82 = vector.shape_cast %81 : vector<1x128x256xf32> to vector<128x256xf32>
    %cst_58 = arith.constant dense<0.000000e+00> : vector<8x256xf32>
    %83 = tpu.matmul %80, %82, %cst_58 {dimension_numbers = #tpu.dot_dimension_numbers<[1], [0], [0], [1], [0, 0, 1, 1], [], []>} : vector<8x128xf32>, vector<128x256xf32>, vector<8x256xf32> -> vector<8x256xf32>
    %84 = arith.addf %79, %83 : vector<8x256xf32>
    %85 = vector.extract_strided_slice %20 {offsets = [104, 0], sizes = [8, 128], strides = [1, 1]} : vector<200x128xf32> to vector<8x128xf32>
    %c13 = arith.constant 13 : index
    %c0_59 = arith.constant 0 : index
    %c0_60 = arith.constant 0 : index
    %86 = vector.load %arg3[%c13, %c0_59, %c0_60] : memref<25x128x256xf32, #tpu.memory_space<vmem>>, vector<1x128x256xf32>
    %87 = vector.shape_cast %86 : vector<1x128x256xf32> to vector<128x256xf32>
    %cst_61 = arith.constant dense<0.000000e+00> : vector<8x256xf32>
    %88 = tpu.matmul %85, %87, %cst_61 {dimension_numbers = #tpu.dot_dimension_numbers<[1], [0], [0], [1], [0, 0, 1, 1], [], []>} : vector<8x128xf32>, vector<128x256xf32>, vector<8x256xf32> -> vector<8x256xf32>
    %89 = arith.addf %84, %88 : vector<8x256xf32>
    %90 = vector.extract_strided_slice %20 {offsets = [112, 0], sizes = [8, 128], strides = [1, 1]} : vector<200x128xf32> to vector<8x128xf32>
    %c14 = arith.constant 14 : index
    %c0_62 = arith.constant 0 : index
    %c0_63 = arith.constant 0 : index
    %91 = vector.load %arg3[%c14, %c0_62, %c0_63] : memref<25x128x256xf32, #tpu.memory_space<vmem>>, vector<1x128x256xf32>
    %92 = vector.shape_cast %91 : vector<1x128x256xf32> to vector<128x256xf32>
    %cst_64 = arith.constant dense<0.000000e+00> : vector<8x256xf32>
    %93 = tpu.matmul %90, %92, %cst_64 {dimension_numbers = #tpu.dot_dimension_numbers<[1], [0], [0], [1], [0, 0, 1, 1], [], []>} : vector<8x128xf32>, vector<128x256xf32>, vector<8x256xf32> -> vector<8x256xf32>
    %94 = arith.addf %89, %93 : vector<8x256xf32>
    %95 = vector.extract_strided_slice %20 {offsets = [120, 0], sizes = [8, 128], strides = [1, 1]} : vector<200x128xf32> to vector<8x128xf32>
    %c15 = arith.constant 15 : index
    %c0_65 = arith.constant 0 : index
    %c0_66 = arith.constant 0 : index
    %96 = vector.load %arg3[%c15, %c0_65, %c0_66] : memref<25x128x256xf32, #tpu.memory_space<vmem>>, vector<1x128x256xf32>
    %97 = vector.shape_cast %96 : vector<1x128x256xf32> to vector<128x256xf32>
    %cst_67 = arith.constant dense<0.000000e+00> : vector<8x256xf32>
    %98 = tpu.matmul %95, %97, %cst_67 {dimension_numbers = #tpu.dot_dimension_numbers<[1], [0], [0], [1], [0, 0, 1, 1], [], []>} : vector<8x128xf32>, vector<128x256xf32>, vector<8x256xf32> -> vector<8x256xf32>
    %99 = arith.addf %94, %98 : vector<8x256xf32>
    %100 = vector.extract_strided_slice %20 {offsets = [128, 0], sizes = [8, 128], strides = [1, 1]} : vector<200x128xf32> to vector<8x128xf32>
    %c16 = arith.constant 16 : index
    %c0_68 = arith.constant 0 : index
    %c0_69 = arith.constant 0 : index
    %101 = vector.load %arg3[%c16, %c0_68, %c0_69] : memref<25x128x256xf32, #tpu.memory_space<vmem>>, vector<1x128x256xf32>
    %102 = vector.shape_cast %101 : vector<1x128x256xf32> to vector<128x256xf32>
    %cst_70 = arith.constant dense<0.000000e+00> : vector<8x256xf32>
    %103 = tpu.matmul %100, %102, %cst_70 {dimension_numbers = #tpu.dot_dimension_numbers<[1], [0], [0], [1], [0, 0, 1, 1], [], []>} : vector<8x128xf32>, vector<128x256xf32>, vector<8x256xf32> -> vector<8x256xf32>
    %104 = arith.addf %99, %103 : vector<8x256xf32>
    %105 = vector.extract_strided_slice %20 {offsets = [136, 0], sizes = [8, 128], strides = [1, 1]} : vector<200x128xf32> to vector<8x128xf32>
    %c17 = arith.constant 17 : index
    %c0_71 = arith.constant 0 : index
    %c0_72 = arith.constant 0 : index
    %106 = vector.load %arg3[%c17, %c0_71, %c0_72] : memref<25x128x256xf32, #tpu.memory_space<vmem>>, vector<1x128x256xf32>
    %107 = vector.shape_cast %106 : vector<1x128x256xf32> to vector<128x256xf32>
    %cst_73 = arith.constant dense<0.000000e+00> : vector<8x256xf32>
    %108 = tpu.matmul %105, %107, %cst_73 {dimension_numbers = #tpu.dot_dimension_numbers<[1], [0], [0], [1], [0, 0, 1, 1], [], []>} : vector<8x128xf32>, vector<128x256xf32>, vector<8x256xf32> -> vector<8x256xf32>
    %109 = arith.addf %104, %108 : vector<8x256xf32>
    %110 = vector.extract_strided_slice %20 {offsets = [144, 0], sizes = [8, 128], strides = [1, 1]} : vector<200x128xf32> to vector<8x128xf32>
    %c18 = arith.constant 18 : index
    %c0_74 = arith.constant 0 : index
    %c0_75 = arith.constant 0 : index
    %111 = vector.load %arg3[%c18, %c0_74, %c0_75] : memref<25x128x256xf32, #tpu.memory_space<vmem>>, vector<1x128x256xf32>
    %112 = vector.shape_cast %111 : vector<1x128x256xf32> to vector<128x256xf32>
    %cst_76 = arith.constant dense<0.000000e+00> : vector<8x256xf32>
    %113 = tpu.matmul %110, %112, %cst_76 {dimension_numbers = #tpu.dot_dimension_numbers<[1], [0], [0], [1], [0, 0, 1, 1], [], []>} : vector<8x128xf32>, vector<128x256xf32>, vector<8x256xf32> -> vector<8x256xf32>
    %114 = arith.addf %109, %113 : vector<8x256xf32>
    %115 = vector.extract_strided_slice %20 {offsets = [152, 0], sizes = [8, 128], strides = [1, 1]} : vector<200x128xf32> to vector<8x128xf32>
    %c19 = arith.constant 19 : index
    %c0_77 = arith.constant 0 : index
    %c0_78 = arith.constant 0 : index
    %116 = vector.load %arg3[%c19, %c0_77, %c0_78] : memref<25x128x256xf32, #tpu.memory_space<vmem>>, vector<1x128x256xf32>
    %117 = vector.shape_cast %116 : vector<1x128x256xf32> to vector<128x256xf32>
    %cst_79 = arith.constant dense<0.000000e+00> : vector<8x256xf32>
    %118 = tpu.matmul %115, %117, %cst_79 {dimension_numbers = #tpu.dot_dimension_numbers<[1], [0], [0], [1], [0, 0, 1, 1], [], []>} : vector<8x128xf32>, vector<128x256xf32>, vector<8x256xf32> -> vector<8x256xf32>
    %119 = arith.addf %114, %118 : vector<8x256xf32>
    %120 = vector.extract_strided_slice %20 {offsets = [160, 0], sizes = [8, 128], strides = [1, 1]} : vector<200x128xf32> to vector<8x128xf32>
    %c20 = arith.constant 20 : index
    %c0_80 = arith.constant 0 : index
    %c0_81 = arith.constant 0 : index
    %121 = vector.load %arg3[%c20, %c0_80, %c0_81] : memref<25x128x256xf32, #tpu.memory_space<vmem>>, vector<1x128x256xf32>
    %122 = vector.shape_cast %121 : vector<1x128x256xf32> to vector<128x256xf32>
    %cst_82 = arith.constant dense<0.000000e+00> : vector<8x256xf32>
    %123 = tpu.matmul %120, %122, %cst_82 {dimension_numbers = #tpu.dot_dimension_numbers<[1], [0], [0], [1], [0, 0, 1, 1], [], []>} : vector<8x128xf32>, vector<128x256xf32>, vector<8x256xf32> -> vector<8x256xf32>
    %124 = arith.addf %119, %123 : vector<8x256xf32>
    %125 = vector.extract_strided_slice %20 {offsets = [168, 0], sizes = [8, 128], strides = [1, 1]} : vector<200x128xf32> to vector<8x128xf32>
    %c21 = arith.constant 21 : index
    %c0_83 = arith.constant 0 : index
    %c0_84 = arith.constant 0 : index
    %126 = vector.load %arg3[%c21, %c0_83, %c0_84] : memref<25x128x256xf32, #tpu.memory_space<vmem>>, vector<1x128x256xf32>
    %127 = vector.shape_cast %126 : vector<1x128x256xf32> to vector<128x256xf32>
    %cst_85 = arith.constant dense<0.000000e+00> : vector<8x256xf32>
    %128 = tpu.matmul %125, %127, %cst_85 {dimension_numbers = #tpu.dot_dimension_numbers<[1], [0], [0], [1], [0, 0, 1, 1], [], []>} : vector<8x128xf32>, vector<128x256xf32>, vector<8x256xf32> -> vector<8x256xf32>
    %129 = arith.addf %124, %128 : vector<8x256xf32>
    %130 = vector.extract_strided_slice %20 {offsets = [176, 0], sizes = [8, 128], strides = [1, 1]} : vector<200x128xf32> to vector<8x128xf32>
    %c22 = arith.constant 22 : index
    %c0_86 = arith.constant 0 : index
    %c0_87 = arith.constant 0 : index
    %131 = vector.load %arg3[%c22, %c0_86, %c0_87] : memref<25x128x256xf32, #tpu.memory_space<vmem>>, vector<1x128x256xf32>
    %132 = vector.shape_cast %131 : vector<1x128x256xf32> to vector<128x256xf32>
    %cst_88 = arith.constant dense<0.000000e+00> : vector<8x256xf32>
    %133 = tpu.matmul %130, %132, %cst_88 {dimension_numbers = #tpu.dot_dimension_numbers<[1], [0], [0], [1], [0, 0, 1, 1], [], []>} : vector<8x128xf32>, vector<128x256xf32>, vector<8x256xf32> -> vector<8x256xf32>
    %134 = arith.addf %129, %133 : vector<8x256xf32>
    %135 = vector.extract_strided_slice %20 {offsets = [184, 0], sizes = [8, 128], strides = [1, 1]} : vector<200x128xf32> to vector<8x128xf32>
    %c23 = arith.constant 23 : index
    %c0_89 = arith.constant 0 : index
    %c0_90 = arith.constant 0 : index
    %136 = vector.load %arg3[%c23, %c0_89, %c0_90] : memref<25x128x256xf32, #tpu.memory_space<vmem>>, vector<1x128x256xf32>
    %137 = vector.shape_cast %136 : vector<1x128x256xf32> to vector<128x256xf32>
    %cst_91 = arith.constant dense<0.000000e+00> : vector<8x256xf32>
    %138 = tpu.matmul %135, %137, %cst_91 {dimension_numbers = #tpu.dot_dimension_numbers<[1], [0], [0], [1], [0, 0, 1, 1], [], []>} : vector<8x128xf32>, vector<128x256xf32>, vector<8x256xf32> -> vector<8x256xf32>
    %139 = arith.addf %134, %138 : vector<8x256xf32>
    %140 = vector.extract_strided_slice %20 {offsets = [192, 0], sizes = [8, 128], strides = [1, 1]} : vector<200x128xf32> to vector<8x128xf32>
    %c24 = arith.constant 24 : index
    %c0_92 = arith.constant 0 : index
    %c0_93 = arith.constant 0 : index
    %141 = vector.load %arg3[%c24, %c0_92, %c0_93] : memref<25x128x256xf32, #tpu.memory_space<vmem>>, vector<1x128x256xf32>
    %142 = vector.shape_cast %141 : vector<1x128x256xf32> to vector<128x256xf32>
    %cst_94 = arith.constant dense<0.000000e+00> : vector<8x256xf32>
    %143 = tpu.matmul %140, %142, %cst_94 {dimension_numbers = #tpu.dot_dimension_numbers<[1], [0], [0], [1], [0, 0, 1, 1], [], []>} : vector<8x128xf32>, vector<128x256xf32>, vector<8x256xf32> -> vector<8x256xf32>
    %144 = arith.addf %139, %143 : vector<8x256xf32>
    %c0_95 = arith.constant 0 : index
    %c0_96 = arith.constant 0 : index
    %145 = vector.load %arg4[%c0_95, %c0_96] : memref<1x256xf32, #tpu.memory_space<vmem>>, vector<1x256xf32>
    %146 = vector.broadcast %145 : vector<1x256xf32> to vector<8x256xf32>
    %147 = arith.addf %144, %146 : vector<8x256xf32>
    %cst_97 = arith.constant 0.000000e+00 : f32
    %148 = vector.broadcast %cst_97 : f32 to vector<8x256xf32>
    %149 = arith.maximumf %147, %148 : vector<8x256xf32>
    %c0_98 = arith.constant 0 : index
    %c0_99 = arith.constant 0 : index
    %150 = vector.load %arg5[%c0_98, %c0_99] : memref<256x128xf32, #tpu.memory_space<vmem>>, vector<256x128xf32>
    %cst_100 = arith.constant dense<0.000000e+00> : vector<8x128xf32>
    %151 = tpu.matmul %149, %150, %cst_100 {dimension_numbers = #tpu.dot_dimension_numbers<[1], [0], [0], [1], [0, 0, 1, 1], [], []>} : vector<8x256xf32>, vector<256x128xf32>, vector<8x128xf32> -> vector<8x128xf32>
    %c0_101 = arith.constant 0 : index
    %c0_102 = arith.constant 0 : index
    %152 = vector.load %arg6[%c0_101, %c0_102] : memref<1x128xf32, #tpu.memory_space<vmem>>, vector<1x128xf32>
    %153 = vector.broadcast %152 : vector<1x128xf32> to vector<8x128xf32>
    %154 = arith.addf %151, %153 : vector<8x128xf32>
    %cst_103 = arith.constant 0.000000e+00 : f32
    %155 = vector.broadcast %cst_103 : f32 to vector<8x128xf32>
    %156 = arith.maximumf %154, %155 : vector<8x128xf32>
    %c0_104 = arith.constant 0 : index
    %c0_105 = arith.constant 0 : index
    %157 = vector.load %arg7[%c0_104, %c0_105] : memref<128x128xf32, #tpu.memory_space<vmem>>, vector<128x128xf32>
    %cst_106 = arith.constant dense<0.000000e+00> : vector<8x128xf32>
    %158 = tpu.matmul %156, %157, %cst_106 {dimension_numbers = #tpu.dot_dimension_numbers<[1], [0], [0], [1], [0, 0, 1, 1], [], []>} : vector<8x128xf32>, vector<128x128xf32>, vector<8x128xf32> -> vector<8x128xf32>
    %c0_107 = arith.constant 0 : index
    %c0_108 = arith.constant 0 : index
    %159 = vector.load %arg8[%c0_107, %c0_108] : memref<1x128xf32, #tpu.memory_space<vmem>>, vector<1x128xf32>
    %160 = vector.broadcast %159 : vector<1x128xf32> to vector<8x128xf32>
    %161 = arith.addf %158, %160 : vector<8x128xf32>
    %c0_109 = arith.constant 0 : index
    %c0_110 = arith.constant 0 : index
    %162 = vector.load %arg9[%c0_109, %c0_110] : memref<8x128xf32, #tpu.memory_space<vmem>>, vector<8x128xf32>
    tpu.vector_store %arg9[%c0_109, %c0_110], %161 {strides = array<i32>} : memref<8x128xf32, #tpu.memory_space<vmem>>, vector<8x128xf32>,
    return
  }
}

</mosaic_0001>

<llo_original>
// kernel: _lenet_forward_impl.2
$region0: #{_lenet_forward_impl.2}
  #allocation0 [shape = 'u32[]', space=smem, size = 0x4, offset = 0x4, fixed_abs, tag = 'smem constant byte address 0x4 - core index']
  #allocation1 [shape = 'u32[144,128]{1,0:T(1,128)}', space=vmem, size = 0x12000, scoped, tag = 'internal scratch']
  %s0 = inlined_call_operand.vmem [shape: f32[4,392,128], index: 0, kind: input, shape index: {}]
  %s1 = inlined_call_operand.vmem [shape: f32[128,128], index: 1, kind: input, shape index: {}]
  %s2 = inlined_call_operand.vmem [shape: f32[1,128], index: 2, kind: input, shape index: {}]
  %s3 = inlined_call_operand.vmem [shape: f32[392,128], index: 3, kind: output, shape index: {}]
  %s4 = sld [smem:[#allocation0]]
  $region22: #{_lenet_forward_impl.2} parent=0
    _
  %s6 = ssub.s32 1, %s4
  %s7 = scalar_select 0, %s6, %s4
  // Predicated region
  $region2: #{_lenet_forward_impl.2} parent=0 // pred_check
    _
  $region3: #{_lenet_forward_impl.2} parent=0 // pred_check_branch
    %9 = sbr.rel (0) target = $region5
  $region4: #{_lenet_forward_impl.2} parent=0 // pred_region
    _
  $region5: #{_lenet_forward_impl.2} parent=0 // pred_fallthru
    _
  // Predicated region
  $region6: #{_lenet_forward_impl.2} parent=0 // pred_check
    _
  $region7: #{_lenet_forward_impl.2} parent=0 // pred_check_branch
    %11 = sbr.rel (0) target = $region9
  $region8: #{_lenet_forward_impl.2} parent=0 // pred_region
    _
  $region9: #{_lenet_forward_impl.2} parent=0 // pred_fallthru
    _
  // Predicated region
  $region10: #{_lenet_forward_impl.2} parent=0 // pred_check
    _
  $region11: #{_lenet_forward_impl.2} parent=0 // pred_check_branch
    %13 = sbr.rel (0) target = $region13
  $region12: #{_lenet_forward_impl.2} parent=0 // pred_region
    _
  $region13: #{_lenet_forward_impl.2} parent=0 // pred_fallthru
    _
  %v14 = vld [vmem:[%s1] sm:$0xff]
  %v15 = vld [vmem:[%s1 + $0x8] sm:$0xff]
  %v16 = vld [vmem:[%s1 + $0x10] sm:$0xff]
  %v17 = vld [vmem:[%s1 + $0x18] sm:$0xff]
  %v18 = vld [vmem:[%s1 + $0x20] sm:$0xff]
  %v19 = vld [vmem:[%s1 + $0x28] sm:$0xff]
  %v20 = vld [vmem:[%s1 + $0x30] sm:$0xff]
  %v21 = vld [vmem:[%s1 + $0x38] sm:$0xff]
  %v22 = vld [vmem:[%s1 + $0x40] sm:$0xff]
  %v23 = vld [vmem:[%s1 + $0x48] sm:$0xff]
  %v24 = vld [vmem:[%s1 + $0x50] sm:$0xff]
  %v25 = vld [vmem:[%s1 + $0x58] sm:$0xff]
  %v26 = vld [vmem:[%s1 + $0x60] sm:$0xff]
  %v27 = vld [vmem:[%s1 + $0x68] sm:$0xff]
  %v28 = vld [vmem:[%s1 + $0x70] sm:$0xff]
  %v29 = vld [vmem:[%s1 + $0x78] sm:$0xff]
  %v30 = vld [vmem:[%s0] sm:$0xff]
  %v31 = vld [vmem:[%s0 + $0x8] sm:$0xff]
  %v32 = vld [vmem:[%s0 + $0x10] sm:$0xff]
  %v33 = vld [vmem:[%s0 + $0x18] sm:$0xff]
  %v34 = vld [vmem:[%s0 + $0x20] sm:$0xff]
  %v35 = vld [vmem:[%s0 + $0x28] sm:$0xff]
  %v36 = vld [vmem:[%s0 + $0x30] sm:$0xff]
  %v37 = vld [vmem:[%s0 + $0x38] sm:$0xff]
  %v38 = vld [vmem:[%s0 + $0x40] sm:$0xff]
  %v39 = vld [vmem:[%s0 + $0x48] sm:$0xff]
  %v40 = vld [vmem:[%s0 + $0x50] sm:$0xff]
  %v41 = vld [vmem:[%s0 + $0x58] sm:$0xff]
  %v42 = vld [vmem:[%s0 + $0x60] sm:$0xff]
  %v43 = vld [vmem:[%s0 + $0x68] sm:$0xff]
  %v44 = vld [vmem:[%s0 + $0x70] sm:$0xff]
  %v45 = vld [vmem:[%s0 + $0x78] sm:$0xff]
  %v46 = vld [vmem:[%s0 + $0x80] sm:$0xff]
  %v47 = vld [vmem:[%s0 + $0x88] sm:$0xff]
  %v48 = vld [vmem:[%s0 + $0x90] sm:$0xff]
  %v49 = vld [vmem:[%s0 + $0x98] sm:$0xff]
  %v50 = vld [vmem:[%s0 + $0xa0] sm:$0xff]
  %v51 = vld [vmem:[%s0 + $0xa8] sm:$0xff]
  %v52 = vld [vmem:[%s0 + $0xb0] sm:$0xff]
  %v53 = vld [vmem:[%s0 + $0xb8] sm:$0xff]
  %v54 = vld [vmem:[%s0 + $0xc0] sm:$0xff]
  %v55 = vld [vmem:[%s0 + $0xc8] sm:$0xff]
  %v56 = vld [vmem:[%s0 + $0xd0] sm:$0xff]
  %v57 = vld [vmem:[%s0 + $0xd8] sm:$0xff]
  %v58 = vld [vmem:[%s0 + $0xe0] sm:$0xff]
  %v59 = vld [vmem:[%s0 + $0xe8] sm:$0xff]
  %v60 = vld [vmem:[%s0 + $0xf0] sm:$0xff]
  %v61 = vld [vmem:[%s0 + $0xf8] sm:$0xff]
  %v62 = vld [vmem:[%s0 + $0x100] sm:$0xff]
  %v63 = vld [vmem:[%s0 + $0x108] sm:$0xff]
  %v64 = vld [vmem:[%s0 + $0x110] sm:$0xff]
  %v65 = vld [vmem:[%s0 + $0x118] sm:$0xff]
  %v66 = vld [vmem:[%s0 + $0x120] sm:$0xff]
  %v67 = vld [vmem:[%s0 + $0x128] sm:$0xff]
  %v68 = vld [vmem:[%s0 + $0x130] sm:$0xff]
  %v69 = vld [vmem:[%s0 + $0x138] sm:$0xff]
  %v70 = vld [vmem:[%s0 + $0x140] sm:$0xff]
  %v71 = vld [vmem:[%s0 + $0x148] sm:$0xff]
  %v72 = vld [vmem:[%s0 + $0x150] sm:$0xff]
  %v73 = vld [vmem:[%s0 + $0x158] sm:$0xff]
  %v74 = vld [vmem:[%s0 + $0x160] sm:$0xff]
  %v75 = vld [vmem:[%s0 + $0x168] sm:$0xff]
  %v76 = vld [vmem:[%s0 + $0x170] sm:$0xff]
  %v77 = vld [vmem:[%s0 + $0x178] sm:$0xff]
  %v78 = vld [vmem:[%s0 + $0x180] sm:$0xff]
  %79 = vmatprep.subr.mxu0 0.0
  %80 = vmatpush1.msra.mxu0 %v14
  %81 = vmatprep.subr.mxu0 0.0
  %82 = vmatpush1.msra.mxu0 %v15
  %83 = vmatprep.subr.mxu0 0.0
  %84 = vmatpush1.msra.mxu0 %v16
  %85 = vmatprep.subr.mxu0 0.0
  %86 = vmatpush1.msra.mxu0 %v17
  %87 = vmatprep.subr.mxu0 0.0
  %88 = vmatpush1.msra.mxu0 %v18
  %89 = vmatprep.subr.mxu0 0.0
  %90 = vmatpush1.msra.mxu0 %v19
  %91 = vmatprep.subr.mxu0 0.0
  %92 = vmatpush1.msra.mxu0 %v20
  %93 = vmatprep.subr.mxu0 0.0
  %94 = vmatpush1.msra.mxu0 %v21
  %95 = vmatprep.subr.mxu0 0.0
  %96 = vmatpush1.msra.mxu0 %v22
  %97 = vmatprep.subr.mxu0 0.0
  %98 = vmatpush1.msra.mxu0 %v23
  %99 = vmatprep.subr.mxu0 0.0
  %100 = vmatpush1.msra.mxu0 %v24
  %101 = vmatprep.subr.mxu0 0.0
  %102 = vmatpush1.msra.mxu0 %v25
  %103 = vmatprep.subr.mxu0 0.0
  %104 = vmatpush1.msra.mxu0 %v26
  %105 = vmatprep.subr.mxu0 0.0
  %106 = vmatpush1.msra.mxu0 %v27
  %107 = vmatprep.subr.mxu0 0.0
  %108 = vmatpush1.msra.mxu0 %v28
  %109 = vmatprep.subr.mxu0 0.0
  %110 = vmatpush1.msra.mxu0 %v29
  %111 = vmatprep.subr.mxu0 0.0
  %112 = vmatpush1.msra.mxu0 0.0
  %113 = vmatprep.subr.mxu0 0.0
  %114 = vmatpush1.msra.mxu0 0.0
  %115 = vmatprep.subr.mxu0 0.0
  %116 = vmatpush1.msra.mxu0 0.0
  %117 = vmatprep.subr.mxu0 0.0
  %118 = vmatpush1.msra.mxu0 0.0
  %119 = vmatprep.subr.mxu0 0.0
  %120 = vmatpush1.msra.mxu0 0.0
  %121 = vmatprep.subr.mxu0 0.0
  %122 = vmatpush1.msra.mxu0 0.0
  %123 = vmatprep.subr.mxu0 0.0
  %124 = vmatpush1.msra.mxu0 0.0
  %125 = vmatprep.subr.mxu0 0.0
  %126 = vmatpush1.msra.mxu0 0.0
  %127 = vmatprep.subr.mxu0 0.0
  %128 = vmatpush1.msra.mxu0 0.0
  %129 = vmatprep.subr.mxu0 0.0
  %130 = vmatpush1.msra.mxu0 0.0
  %131 = vmatprep.subr.mxu0 0.0
  %132 = vmatpush1.msra.mxu0 0.0
  %133 = vmatprep.subr.mxu0 0.0
  %134 = vmatpush1.msra.mxu0 0.0
  %135 = vmatprep.subr.mxu0 0.0
  %136 = vmatpush1.msra.mxu0 0.0
  %137 = vmatprep.subr.mxu0 0.0
  %138 = vmatpush1.msra.mxu0 0.0
  %139 = vmatprep.subr.mxu0 0.0
  %140 = vmatpush1.msra.mxu0 0.0
  %141 = vmatprep.subr.mxu0 0.0
  %142 = vmatpush1.msra.mxu0 0.0
  %143 = vmatprep.mubr.f32.mxu0 0.0
  %144 = vmatmul.mubr.f32.gmra.mrb[0].mxu0 %v30
  %v145 = vpop.f32.mrb[0].mxu0
  %v146 = vadd.f32 0.0, %v145
  %v147 = vpop.f32.mrb[0].mxu0
  %148 = vmatprep.mubr.f32.mxu0 0.0
  %149 = vmatmul.mubr.f32.gmra.mrb[0].mxu0 %v31
  %v150 = vpop.f32.mrb[0].mxu0
  %v151 = vadd.f32 0.0, %v150
  %v152 = vpop.f32.mrb[0].mxu0
  %153 = vmatprep.mubr.f32.mxu0 0.0
  %154 = vmatmul.mubr.f32.gmra.mrb[0].mxu0 %v32
  %v155 = vpop.f32.mrb[0].mxu0
  %v156 = vadd.f32 0.0, %v155
  %v157 = vpop.f32.mrb[0].mxu0
  %158 = vmatprep.mubr.f32.mxu0 0.0
  %159 = vmatmul.mubr.f32.gmra.mrb[0].mxu0 %v33
  %v160 = vpop.f32.mrb[0].mxu0
  %v161 = vadd.f32 0.0, %v160
  %v162 = vpop.f32.mrb[0].mxu0
  %163 = vmatprep.mubr.f32.mxu0 0.0
  %164 = vmatmul.mubr.f32.gmra.mrb[0].mxu0 %v34
  %v165 = vpop.f32.mrb[0].mxu0
  %v166 = vadd.f32 0.0, %v165
  %v167 = vpop.f32.mrb[0].mxu0
  %168 = vmatprep.mubr.f32.mxu0 0.0
  %169 = vmatmul.mubr.f32.gmra.mrb[0].mxu0 %v35
  %v170 = vpop.f32.mrb[0].mxu0
  %v171 = vadd.f32 0.0, %v170
  %v172 = vpop.f32.mrb[0].mxu0
  %173 = vmatprep.mubr.f32.mxu0 0.0
  %174 = vmatmul.mubr.f32.gmra.mrb[0].mxu0 %v36
  %v175 = vpop.f32.mrb[0].mxu0
  %v176 = vadd.f32 0.0, %v175
  %v177 = vpop.f32.mrb[0].mxu0
  %178 = vmatprep.mubr.f32.mxu0 0.0
  %179 = vmatmul.mubr.f32.gmra.mrb[0].mxu0 %v37
  %v180 = vpop.f32.mrb[0].mxu0
  %v181 = vadd.f32 0.0, %v180
  %v182 = vpop.f32.mrb[0].mxu0
  %183 = vmatprep.mubr.f32.mxu0 0.0
  %184 = vmatmul.mubr.f32.gmra.mrb[0].mxu0 %v38
  %v185 = vpop.f32.mrb[0].mxu0
  %v186 = vadd.f32 0.0, %v185
  %v187 = vpop.f32.mrb[0].mxu0
  %188 = vmatprep.mubr.f32.mxu0 0.0
  %189 = vmatmul.mubr.f32.gmra.mrb[0].mxu0 %v39
  %v190 = vpop.f32.mrb[0].mxu0
  %v191 = vadd.f32 0.0, %v190
  %v192 = vpop.f32.mrb[0].mxu0
  %193 = vmatprep.mubr.f32.mxu0 0.0
  %194 = vmatmul.mubr.f32.gmra.mrb[0].mxu0 %v40
  %v195 = vpop.f32.mrb[0].mxu0
  %v196 = vadd.f32 0.0, %v195
  %v197 = vpop.f32.mrb[0].mxu0
  %198 = vmatprep.mubr.f32.mxu0 0.0
  %199 = vmatmul.mubr.f32.gmra.mrb[0].mxu0 %v41
  %v200 = vpop.f32.mrb[0].mxu0
  %v201 = vadd.f32 0.0, %v200
  %v202 = vpop.f32.mrb[0].mxu0
  %203 = vmatprep.mubr.f32.mxu0 0.0
  %204 = vmatmul.mubr.f32.gmra.mrb[0].mxu0 %v42
  %v205 = vpop.f32.mrb[0].mxu0
  %v206 = vadd.f32 0.0, %v205
  %v207 = vpop.f32.mrb[0].mxu0
  %208 = vmatprep.mubr.f32.mxu0 0.0
  %209 = vmatmul.mubr.f32.gmra.mrb[0].mxu0 %v43
  %v210 = vpop.f32.mrb[0].mxu0
  %v211 = vadd.f32 0.0, %v210
  %v212 = vpop.f32.mrb[0].mxu0
  %213 = vmatprep.mubr.f32.mxu0 0.0
  %214 = vmatmul.mubr.f32.gmra.mrb[0].mxu0 %v44
  %v215 = vpop.f32.mrb[0].mxu0
  %v216 = vadd.f32 0.0, %v215
  %v217 = vpop.f32.mrb[0].mxu0
  %218 = vmatprep.mubr.f32.mxu0 0.0
  %219 = vmatmul.mubr.f32.gmra.mrb[0].mxu0 %v45
  %v220 = vpop.f32.mrb[0].mxu0
  %v221 = vadd.f32 0.0, %v220
  %v222 = vpop.f32.mrb[0].mxu0
  %223 = vmatprep.mubr.f32.mxu0 0.0
  %224 = vmatmul.mubr.f32.gmra.mrb[0].mxu0 %v46
  %v225 = vpop.f32.mrb[0].mxu0
  %v226 = vadd.f32 0.0, %v225
  %v227 = vpop.f32.mrb[0].mxu0
  %228 = vmatprep.mubr.f32.mxu0 0.0
  %229 = vmatmul.mubr.f32.gmra.mrb[0].mxu0 %v47
  %v230 = vpop.f32.mrb[0].mxu0
  %v231 = vadd.f32 0.0, %v230
  %v232 = vpop.f32.mrb[0].mxu0
  %233 = vmatprep.mubr.f32.mxu0 0.0
  %234 = vmatmul.mubr.f32.gmra.mrb[0].mxu0 %v48
  %v235 = vpop.f32.mrb[0].mxu0
  %v236 = vadd.f32 0.0, %v235
  %v237 = vpop.f32.mrb[0].mxu0
  %238 = vmatprep.mubr.f32.mxu0 0.0
  %239 = vmatmul.mubr.f32.gmra.mrb[0].mxu0 %v49
  %v240 = vpop.f32.mrb[0].mxu0
  %v241 = vadd.f32 0.0, %v240
  %v242 = vpop.f32.mrb[0].mxu0
  %243 = vmatprep.mubr.f32.mxu0 0.0
  %244 = vmatmul.mubr.f32.gmra.mrb[0].mxu0 %v50
  %v245 = vpop.f32.mrb[0].mxu0
  %v246 = vadd.f32 0.0, %v245
  %v247 = vpop.f32.mrb[0].mxu0
  %248 = vmatprep.mubr.f32.mxu0 0.0
  %249 = vmatmul.mubr.f32.gmra.mrb[0].mxu0 %v51
  %v250 = vpop.f32.mrb[0].mxu0
  %v251 = vadd.f32 0.0, %v250
  %v252 = vpop.f32.mrb[0].mxu0
  %253 = vmatprep.mubr.f32.mxu0 0.0
  %254 = vmatmul.mubr.f32.gmra.mrb[0].mxu0 %v52
  %v255 = vpop.f32.mrb[0].mxu0
  %v256 = vadd.f32 0.0, %v255
  %v257 = vpop.f32.mrb[0].mxu0
  %258 = vmatprep.mubr.f32.mxu0 0.0
  %259 = vmatmul.mubr.f32.gmra.mrb[0].mxu0 %v53
  %v260 = vpop.f32.mrb[0].mxu0
  %v261 = vadd.f32 0.0, %v260
  %v262 = vpop.f32.mrb[0].mxu0
  %263 = vmatprep.mubr.f32.mxu0 0.0
  %264 = vmatmul.mubr.f32.gmra.mrb[0].mxu0 %v54
  %v265 = vpop.f32.mrb[0].mxu0
  %v266 = vadd.f32 0.0, %v265
  %v267 = vpop.f32.mrb[0].mxu0
  %268 = vmatprep.mubr.f32.mxu0 0.0
  %269 = vmatmul.mubr.f32.gmra.mrb[0].mxu0 %v55
  %v270 = vpop.f32.mrb[0].mxu0
  %v271 = vadd.f32 0.0, %v270
  %v272 = vpop.f32.mrb[0].mxu0
  %273 = vmatprep.mubr.f32.mxu0 0.0
  %274 = vmatmul.mubr.f32.gmra.mrb[0].mxu0 %v56
  %v275 = vpop.f32.mrb[0].mxu0
  %v276 = vadd.f32 0.0, %v275
  %v277 = vpop.f32.mrb[0].mxu0
  %278 = vmatprep.mubr.f32.mxu0 0.0
  %279 = vmatmul.mubr.f32.gmra.mrb[0].mxu0 %v57
  %v280 = vpop.f32.mrb[0].mxu0
  %v281 = vadd.f32 0.0, %v280
  %v282 = vpop.f32.mrb[0].mxu0
  %283 = vmatprep.mubr.f32.mxu0 0.0
  %284 = vmatmul.mubr.f32.gmra.mrb[0].mxu0 %v58
  %v285 = vpop.f32.mrb[0].mxu0
  %v286 = vadd.f32 0.0, %v285
  %v287 = vpop.f32.mrb[0].mxu0
  %288 = vmatprep.mubr.f32.mxu0 0.0
  %289 = vmatmul.mubr.f32.gmra.mrb[0].mxu0 %v59
  %v290 = vpop.f32.mrb[0].mxu0
  %v291 = vadd.f32 0.0, %v290
  %v292 = vpop.f32.mrb[0].mxu0
  %293 = vmatprep.mubr.f32.mxu0 0.0
  %294 = vmatmul.mubr.f32.gmra.mrb[0].mxu0 %v60
  %v295 = vpop.f32.mrb[0].mxu0
  %v296 = vadd.f32 0.0, %v295
  %v297 = vpop.f32.mrb[0].mxu0
  %298 = vmatprep.mubr.f32.mxu0 0.0
  %299 = vmatmul.mubr.f32.gmra.mrb[0].mxu0 %v61
  %v300 = vpop.f32.mrb[0].mxu0
  %v301 = vadd.f32 0.0, %v300
  %v302 = vpop.f32.mrb[0].mxu0
  %303 = vmatprep.mubr.f32.mxu0 0.0
  %304 = vmatmul.mubr.f32.gmra.mrb[0].mxu0 %v62
  %v305 = vpop.f32.mrb[0].mxu0
  %v306 = vadd.f32 0.0, %v305
  %v307 = vpop.f32.mrb[0].mxu0
  %308 = vmatprep.mubr.f32.mxu0 0.0
  %309 = vmatmul.mubr.f32.gmra.mrb[0].mxu0 %v63
  %v310 = vpop.f32.mrb[0].mxu0
  %v311 = vadd.f32 0.0, %v310
  %v312 = vpop.f32.mrb[0].mxu0
  %313 = vmatprep.mubr.f32.mxu0 0.0
  %314 = vmatmul.mubr.f32.gmra.mrb[0].mxu0 %v64
  %v315 = vpop.f32.mrb[0].mxu0
  %v316 = vadd.f32 0.0, %v315
  %v317 = vpop.f32.mrb[0].mxu0
  %318 = vmatprep.mubr.f32.mxu0 0.0
  %319 = vmatmul.mubr.f32.gmra.mrb[0].mxu0 %v65
  %v320 = vpop.f32.mrb[0].mxu0
  %v321 = vadd.f32 0.0, %v320
  %v322 = vpop.f32.mrb[0].mxu0
  %323 = vmatprep.mubr.f32.mxu0 0.0
  %324 = vmatmul.mubr.f32.gmra.mrb[0].mxu0 %v66
  %v325 = vpop.f32.mrb[0].mxu0
  %v326 = vadd.f32 0.0, %v325
  %v327 = vpop.f32.mrb[0].mxu0
  %328 = vmatprep.mubr.f32.mxu0 0.0
  %329 = vmatmul.mubr.f32.gmra.mrb[0].mxu0 %v67
  %v330 = vpop.f32.mrb[0].mxu0
  %v331 = vadd.f32 0.0, %v330
  %v332 = vpop.f32.mrb[0].mxu0
  %333 = vmatprep.mubr.f32.mxu0 0.0
  %334 = vmatmul.mubr.f32.gmra.mrb[0].mxu0 %v68
  %v335 = vpop.f32.mrb[0].mxu0
  %v336 = vadd.f32 0.0, %v335
  %v337 = vpop.f32.mrb[0].mxu0
  %338 = vmatprep.mubr.f32.mxu0 0.0
  %339 = vmatmul.mubr.f32.gmra.mrb[0].mxu0 %v69
  %v340 = vpop.f32.mrb[0].mxu0
  %v341 = vadd.f32 0.0, %v340
  %v342 = vpop.f32.mrb[0].mxu0
  %343 = vmatprep.mubr.f32.mxu0 0.0
  %344 = vmatmul.mubr.f32.gmra.mrb[0].mxu0 %v70
  %v345 = vpop.f32.mrb[0].mxu0
  %v346 = vadd.f32 0.0, %v345
  %v347 = vpop.f32.mrb[0].mxu0
  %348 = vmatprep.mubr.f32.mxu0 0.0
  %349 = vmatmul.mubr.f32.gmra.mrb[0].mxu0 %v71
  %v350 = vpop.f32.mrb[0].mxu0
  %v351 = vadd.f32 0.0, %v350
  %v352 = vpop.f32.mrb[0].mxu0
  %353 = vmatprep.mubr.f32.mxu0 0.0
  %354 = vmatmul.mubr.f32.gmra.mrb[0].mxu0 %v72
  %v355 = vpop.f32.mrb[0].mxu0
  %v356 = vadd.f32 0.0, %v355
  %v357 = vpop.f32.mrb[0].mxu0
  %358 = vmatprep.mubr.f32.mxu0 0.0
  %359 = vmatmul.mubr.f32.gmra.mrb[0].mxu0 %v73
  %v360 = vpop.f32.mrb[0].mxu0
  %v361 = vadd.f32 0.0, %v360
  %v362 = vpop.f32.mrb[0].mxu0
  %363 = vmatprep.mubr.f32.mxu0 0.0
  %364 = vmatmul.mubr.f32.gmra.mrb[0].mxu0 %v74
  %v365 = vpop.f32.mrb[0].mxu0
  %v366 = vadd.f32 0.0, %v365
  %v367 = vpop.f32.mrb[0].mxu0
  %368 = vmatprep.mubr.f32.mxu0 0.0
  %369 = vmatmul.mubr.f32.gmra.mrb[0].mxu0 %v75
  %v370 = vpop.f32.mrb[0].mxu0
  %v371 = vadd.f32 0.0, %v370
  %v372 = vpop.f32.mrb[0].mxu0
  %373 = vmatprep.mubr.f32.mxu0 0.0
  %374 = vmatmul.mubr.f32.gmra.mrb[0].mxu0 %v76
  %v375 = vpop.f32.mrb[0].mxu0
  %v376 = vadd.f32 0.0, %v375
  %v377 = vpop.f32.mrb[0].mxu0
  %378 = vmatprep.mubr.f32.mxu0 0.0
  %379 = vmatmul.mubr.f32.gmra.mrb[0].mxu0 %v77
  %v380 = vpop.f32.mrb[0].mxu0
  %v381 = vadd.f32 0.0, %v380
  %v382 = vpop.f32.mrb[0].mxu0
  %383 = vmatprep.mubr.f32.mxu0 0.0
  %384 = vmatmul.mubr.f32.gmra.mrb[0].mxu0 %v78
  %v385 = vpop.f32.mrb[0].mxu0
  %v386 = vadd.f32 0.0, %v385
  %v387 = vpop.f32.mrb[0].mxu0
  %388 = vdwg.mxu0
  %s389 = scalar_lea.vmem %s0, 392
  %v390 = vld [vmem:[%s389] sm:$0xff]
  %v391 = vld [vmem:[%s389 + $0x8] sm:$0xff]
  %v392 = vld [vmem:[%s389 + $0x10] sm:$0xff]
  %v393 = vld [vmem:[%s389 + $0x18] sm:$0xff]
  %v394 = vld [vmem:[%s389 + $0x20] sm:$0xff]
  %v395 = vld [vmem:[%s389 + $0x28] sm:$0xff]
  %v396 = vld [vmem:[%s389 + $0x30] sm:$0xff]
  %v397 = vld [vmem:[%s389 + $0x38] sm:$0xff]
  %v398 = vld [vmem:[%s389 + $0x40] sm:$0xff]
  %v399 = vld [vmem:[%s389 + $0x48] sm:$0xff]
  %v400 = vld [vmem:[%s389 + $0x50] sm:$0xff]
  %v401 = vld [vmem:[%s389 + $0x58] sm:$0xff]
  %v402 = vld [vmem:[%s389 + $0x60] sm:$0xff]
  %v403 = vld [vmem:[%s389 + $0x68] sm:$0xff]
  %v404 = vld [vmem:[%s389 + $0x70] sm:$0xff]
  %v405 = vld [vmem:[%s389 + $0x78] sm:$0xff]
  %v406 = vld [vmem:[%s389 + $0x80] sm:$0xff]
  %v407 = vld [vmem:[%s389 + $0x88] sm:$0xff]
  %v408 = vld [vmem:[%s389 + $0x90] sm:$0xff]
  %v409 = vld [vmem:[%s389 + $0x98] sm:$0xff]
  %v410 = vld [vmem:[%s389 + $0xa0] sm:$0xff]
  %v411 = vld [vmem:[%s389 + $0xa8] sm:$0xff]
  %v412 = vld [vmem:[%s389 + $0xb0] sm:$0xff]
  %v413 = vld [vmem:[%s389 + $0xb8] sm:$0xff]
  %v414 = vld [vmem:[%s389 + $0xc0] sm:$0xff]
  %v415 = vld [vmem:[%s389 + $0xc8] sm:$0xff]
  %v416 = vld [vmem:[%s389 + $0xd0] sm:$0xff]
  %v417 = vld [vmem:[%s389 + $0xd8] sm:$0xff]
  %v418 = vld [vmem:[%s389 + $0xe0] sm:$0xff]
  %v419 = vld [vmem:[%s389 + $0xe8] sm:$0xff]
  %v420 = vld [vmem:[%s389 + $0xf0] sm:$0xff]
  %v421 = vld [vmem:[%s389 + $0xf8] sm:$0xff]
  %v422 = vld [vmem:[%s389 + $0x100] sm:$0xff]
  %v423 = vld [vmem:[%s389 + $0x108] sm:$0xff]
  %v424 = vld [vmem:[%s389 + $0x110] sm:$0xff]
  %v425 = vld [vmem:[%s389 + $0x118] sm:$0xff]
  %v426 = vld [vmem:[%s389 + $0x120] sm:$0xff]
  %v427 = vld [vmem:[%s389 + $0x128] sm:$0xff]
  %v428 = vld [vmem:[%s389 + $0x130] sm:$0xff]
  %v429 = vld [vmem:[%s389 + $0x138] sm:$0xff]
  %v430 = vld [vmem:[%s389 + $0x140] sm:$0xff]
  %v431 = vld [vmem:[%s389 + $0x148] sm:$0xff]
  %v432 = vld [vmem:[%s389 + $0x150] sm:$0xff]
  %v433 = vld [vmem:[%s389 + $0x158] sm:$0xff]
  %v434 = vld [vmem:[%s389 + $0x160] sm:$0xff]
  %v435 = vld [vmem:[%s389 + $0x168] sm:$0xff]
  %v436 = vld [vmem:[%s389 + $0x170] sm:$0xff]
  %v437 = vld [vmem:[%s389 + $0x178] sm:$0xff]
  %v438 = vld [vmem:[%s389 + $0x180] sm:$0xff]
  %439 = vmatprep.subr.mxu0 0.0
  %440 = vmatpush1.msra.mxu0 %v14
  %441 = vmatprep.subr.mxu0 0.0
  %442 = vmatpush1.msra.mxu0 %v15
  %443 = vmatprep.subr.mxu0 0.0
  %444 = vmatpush1.msra.mxu0 %v16
  %445 = vmatprep.subr.mxu0 0.0
  %446 = vmatpush1.msra.mxu0 %v17
  %447 = vmatprep.subr.mxu0 0.0
  %448 = vmatpush1.msra.mxu0 %v18
  %449 = vmatprep.subr.mxu0 0.0
  %450 = vmatpush1.msra.mxu0 %v19
  %451 = vmatprep.subr.mxu0 0.0
  %452 = vmatpush1.msra.mxu0 %v20
  %453 = vmatprep.subr.mxu0 0.0
  %454 = vmatpush1.msra.mxu0 %v21
  %455 = vmatprep.subr.mxu0 0.0
  %456 = vmatpush1.msra.mxu0 %v22
  %457 = vmatprep.subr.mxu0 0.0
  %458 = vmatpush1.msra.mxu0 %v23
  %459 = vmatprep.subr.mxu0 0.0
  %460 = vmatpush1.msra.mxu0 %v24
  %461 = vmatprep.subr.mxu0 0.0
  %462 = vmatpush1.msra.mxu0 %v25
  %463 = vmatprep.subr.mxu0 0.0
  %464 = vmatpush1.msra.mxu0 %v26
  %465 = vmatprep.subr.mxu0 0.0
  %466 = vmatpush1.msra.mxu0 %v27
  %467 = vmatprep.subr.mxu0 0.0
  %468 = vmatpush1.msra.mxu0 %v28
  %469 = vmatprep.subr.mxu0 0.0
  %470 = vmatpush1.msra.mxu0 %v29
  %471 = vmatprep.subr.mxu0 0.0
  %472 = vmatpush1.msra.mxu0 0.0
  %473 = vmatprep.subr.mxu0 0.0
  %474 = vmatpush1.msra.mxu0 0.0
  %475 = vmatprep.subr.mxu0 0.0
  %476 = vmatpush1.msra.mxu0 0.0
  %477 = vmatprep.subr.mxu0 0.0
  %478 = vmatpush1.msra.mxu0 0.0
  %479 = vmatprep.subr.mxu0 0.0
  %480 = vmatpush1.msra.mxu0 0.0
  %481 = vmatprep.subr.mxu0 0.0
  %482 = vmatpush1.msra.mxu0 0.0
  %483 = vmatprep.subr.mxu0 0.0
  %484 = vmatpush1.msra.mxu0 0.0
  %485 = vmatprep.subr.mxu0 0.0
  %486 = vmatpush1.msra.mxu0 0.0
  %487 = vmatprep.subr.mxu0 0.0
  %488 = vmatpush1.msra.mxu0 0.0
  %489 = vmatprep.subr.mxu0 0.0
  %490 = vmatpush1.msra.mxu0 0.0
  %491 = vmatprep.subr.mxu0 0.0
  %492 = vmatpush1.msra.mxu0 0.0
  %493 = vmatprep.subr.mxu0 0.0
  %494 = vmatpush1.msra.mxu0 0.0
  %495 = vmatprep.subr.mxu0 0.0
  %496 = vmatpush1.msra.mxu0 0.0
  %497 = vmatprep.subr.mxu0 0.0
  %498 = vmatpush1.msra.mxu0 0.0
  %499 = vmatprep.subr.mxu0 0.0
  %500 = vmatpush1.msra.mxu0 0.0
  %501 = vmatprep.subr.mxu0 0.0
  %502 = vmatpush1.msra.mxu0 0.0
  %503 = vmatprep.mubr.f32.mxu0 0.0
  %504 = vmatmul.mubr.f32.gmra.mrb[0].mxu0 %v390
  %v505 = vpop.f32.mrb[0].mxu0
  %v506 = vadd.f32 0.0, %v505
  %v507 = vpop.f32.mrb[0].mxu0
  %508 = vmatprep.mubr.f32.mxu0 0.0
  %509 = vmatmul.mubr.f32.gmra.mrb[0].mxu0 %v391
  %v510 = vpop.f32.mrb[0].mxu0
  %v511 = vadd.f32 0.0, %v510
  %v512 = vpop.f32.mrb[0].mxu0
  %513 = vmatprep.mubr.f32.mxu0 0.0
  %514 = vmatmul.mubr.f32.gmra.mrb[0].mxu0 %v392
  %v515 = vpop.f32.mrb[0].mxu0
  %v516 = vadd.f32 0.0, %v515
  %v517 = vpop.f32.mrb[0].mxu0
  %518 = vmatprep.mubr.f32.mxu0 0.0
  %519 = vmatmul.mubr.f32.gmra.mrb[0].mxu0 %v393
  %v520 = vpop.f32.mrb[0].mxu0
  %v521 = vadd.f32 0.0, %v520
  %v522 = vpop.f32.mrb[0].mxu0
  %523 = vmatprep.mubr.f32.mxu0 0.0
  %524 = vmatmul.mubr.f32.gmra.mrb[0].mxu0 %v394
  %v525 = vpop.f32.mrb[0].mxu0
  %v526 = vadd.f32 0.0, %v525
  %v527 = vpop.f32.mrb[0].mxu0
  %528 = vmatprep.mubr.f32.mxu0 0.0
  %529 = vmatmul.mubr.f32.gmra.mrb[0].mxu0 %v395
  %v530 = vpop.f32.mrb[0].mxu0
  %v531 = vadd.f32 0.0, %v530
  %v532 = vpop.f32.mrb[0].mxu0
  %533 = vmatprep.mubr.f32.mxu0 0.0
  %534 = vmatmul.mubr.f32.gmra.mrb[0].mxu0 %v396
  %v535 = vpop.f32.mrb[0].mxu0
  %v536 = vadd.f32 0.0, %v535
  %v537 = vpop.f32.mrb[0].mxu0
  %538 = vmatprep.mubr.f32.mxu0 0.0
  %539 = vmatmul.mubr.f32.gmra.mrb[0].mxu0 %v397
  %v540 = vpop.f32.mrb[0].mxu0
  %v541 = vadd.f32 0.0, %v540
  %v542 = vpop.f32.mrb[0].mxu0
  %543 = vmatprep.mubr.f32.mxu0 0.0
  %544 = vmatmul.mubr.f32.gmra.mrb[0].mxu0 %v398
  %v545 = vpop.f32.mrb[0].mxu0
  %v546 = vadd.f32 0.0, %v545
  %v547 = vpop.f32.mrb[0].mxu0
  %548 = vmatprep.mubr.f32.mxu0 0.0
  %549 = vmatmul.mubr.f32.gmra.mrb[0].mxu0 %v399
  %v550 = vpop.f32.mrb[0].mxu0
  %v551 = vadd.f32 0.0, %v550
  %v552 = vpop.f32.mrb[0].mxu0
  %553 = vmatprep.mubr.f32.mxu0 0.0
  %554 = vmatmul.mubr.f32.gmra.mrb[0].mxu0 %v400
  %v555 = vpop.f32.mrb[0].mxu0
  %v556 = vadd.f32 0.0, %v555
  %v557 = vpop.f32.mrb[0].mxu0
  %558 = vmatprep.mubr.f32.mxu0 0.0
  %559 = vmatmul.mubr.f32.gmra.mrb[0].mxu0 %v401
  %v560 = vpop.f32.mrb[0].mxu0
  %v561 = vadd.f32 0.0, %v560
  %v562 = vpop.f32.mrb[0].mxu0
  %563 = vmatprep.mubr.f32.mxu0 0.0
  %564 = vmatmul.mubr.f32.gmra.mrb[0].mxu0 %v402
  %v565 = vpop.f32.mrb[0].mxu0
  %v566 = vadd.f32 0.0, %v565
  %v567 = vpop.f32.mrb[0].mxu0
  %568 = vmatprep.mubr.f32.mxu0 0.0
  %569 = vmatmul.mubr.f32.gmra.mrb[0].mxu0 %v403
  %v570 = vpop.f32.mrb[0].mxu0
  %v571 = vadd.f32 0.0, %v570
  %v572 = vpop.f32.mrb[0].mxu0
  %573 = vmatprep.mubr.f32.mxu0 0.0
  %574 = vmatmul.mubr.f32.gmra.mrb[0].mxu0 %v404
  %v575 = vpop.f32.mrb[0].mxu0
  %v576 = vadd.f32 0.0, %v575
  %v577 = vpop.f32.mrb[0].mxu0
  %578 = vmatprep.mubr.f32.mxu0 0.0
  %579 = vmatmul.mubr.f32.gmra.mrb[0].mxu0 %v405
  %v580 = vpop.f32.mrb[0].mxu0
  %v581 = vadd.f32 0.0, %v580
  %v582 = vpop.f32.mrb[0].mxu0
  %583 = vmatprep.mubr.f32.mxu0 0.0
  %584 = vmatmul.mubr.f32.gmra.mrb[0].mxu0 %v406
  %v585 = vpop.f32.mrb[0].mxu0
  %v586 = vadd.f32 0.0, %v585
  %v587 = vpop.f32.mrb[0].mxu0
  %588 = vmatprep.mubr.f32.mxu0 0.0
  %589 = vmatmul.mubr.f32.gmra.mrb[0].mxu0 %v407
  %v590 = vpop.f32.mrb[0].mxu0
  %v591 = vadd.f32 0.0, %v590
  %v592 = vpop.f32.mrb[0].mxu0
  %593 = vmatprep.mubr.f32.mxu0 0.0
  %594 = vmatmul.mubr.f32.gmra.mrb[0].mxu0 %v408
  %v595 = vpop.f32.mrb[0].mxu0
  %v596 = vadd.f32 0.0, %v595
  %v597 = vpop.f32.mrb[0].mxu0
  %598 = vmatprep.mubr.f32.mxu0 0.0
  %599 = vmatmul.mubr.f32.gmra.mrb[0].mxu0 %v409
  %v600 = vpop.f32.mrb[0].mxu0
  %v601 = vadd.f32 0.0, %v600
  %v602 = vpop.f32.mrb[0].mxu0
  %603 = vmatprep.mubr.f32.mxu0 0.0
  %604 = vmatmul.mubr.f32.gmra.mrb[0].mxu0 %v410
  %v605 = vpop.f32.mrb[0].mxu0
  %v606 = vadd.f32 0.0, %v605
  %v607 = vpop.f32.mrb[0].mxu0
  %608 = vmatprep.mubr.f32.mxu0 0.0
  %609 = vmatmul.mubr.f32.gmra.mrb[0].mxu0 %v411
  %v610 = vpop.f32.mrb[0].mxu0
  %v611 = vadd.f32 0.0, %v610
  %v612 = vpop.f32.mrb[0].mxu0
  %613 = vmatprep.mubr.f32.mxu0 0.0
  %614 = vmatmul.mubr.f32.gmra.mrb[0].mxu0 %v412
  %v615 = vpop.f32.mrb[0].mxu0
  %v616 = vadd.f32 0.0, %v615
  %v617 = vpop.f32.mrb[0].mxu0
  %618 = vmatprep.mubr.f32.mxu0 0.0
  %619 = vmatmul.mubr.f32.gmra.mrb[0].mxu0 %v413
  %v620 = vpop.f32.mrb[0].mxu0
  %v621 = vadd.f32 0.0, %v620
  %v622 = vpop.f32.mrb[0].mxu0
  %623 = vmatprep.mubr.f32.mxu0 0.0
  %624 = vmatmul.mubr.f32.gmra.mrb[0].mxu0 %v414
  %v625 = vpop.f32.mrb[0].mxu0
  %v626 = vadd.f32 0.0, %v625
  %v627 = vpop.f32.mrb[0].mxu0
  %628 = vmatprep.mubr.f32.mxu0 0.0
  %629 = vmatmul.mubr.f32.gmra.mrb[0].mxu0 %v415
  %v630 = vpop.f32.mrb[0].mxu0
  %v631 = vadd.f32 0.0, %v630
  %v632 = vpop.f32.mrb[0].mxu0
  %633 = vmatprep.mubr.f32.mxu0 0.0
  %634 = vmatmul.mubr.f32.gmra.mrb[0].mxu0 %v416
  %v635 = vpop.f32.mrb[0].mxu0
  %v636 = vadd.f32 0.0, %v635
  %v637 = vpop.f32.mrb[0].mxu0
  %638 = vmatprep.mubr.f32.mxu0 0.0
  %639 = vmatmul.mubr.f32.gmra.mrb[0].mxu0 %v417
  %v640 = vpop.f32.mrb[0].mxu0
  %v641 = vadd.f32 0.0, %v640
  %v642 = vpop.f32.mrb[0].mxu0
  %643 = vmatprep.mubr.f32.mxu0 0.0
  %644 = vmatmul.mubr.f32.gmra.mrb[0].mxu0 %v418
  %v645 = vpop.f32.mrb[0].mxu0
  %v646 = vadd.f32 0.0, %v645
  %v647 = vpop.f32.mrb[0].mxu0
  %648 = vmatprep.mubr.f32.mxu0 0.0
  %649 = vmatmul.mubr.f32.gmra.mrb[0].mxu0 %v419
  %v650 = vpop.f32.mrb[0].mxu0
  %v651 = vadd.f32 0.0, %v650
  %v652 = vpop.f32.mrb[0].mxu0
  %653 = vmatprep.mubr.f32.mxu0 0.0
  %654 = vmatmul.mubr.f32.gmra.mrb[0].mxu0 %v420
  %v655 = vpop.f32.mrb[0].mxu0
  %v656 = vadd.f32 0.0, %v655
  %v657 = vpop.f32.mrb[0].mxu0
  %658 = vmatprep.mubr.f32.mxu0 0.0
  %659 = vmatmul.mubr.f32.gmra.mrb[0].mxu0 %v421
  %v660 = vpop.f32.mrb[0].mxu0
  %v661 = vadd.f32 0.0, %v660
  %v662 = vpop.f32.mrb[0].mxu0
  %663 = vmatprep.mubr.f32.mxu0 0.0
  %664 = vmatmul.mubr.f32.gmra.mrb[0].mxu0 %v422
  %v665 = vpop.f32.mrb[0].mxu0
  %v666 = vadd.f32 0.0, %v665
  %v667 = vpop.f32.mrb[0].mxu0
  %668 = vmatprep.mubr.f32.mxu0 0.0
  %669 = vmatmul.mubr.f32.gmra.mrb[0].mxu0 %v423
  %v670 = vpop.f32.mrb[0].mxu0
  %v671 = vadd.f32 0.0, %v670
  %v672 = vpop.f32.mrb[0].mxu0
  %673 = vmatprep.mubr.f32.mxu0 0.0
  %674 = vmatmul.mubr.f32.gmra.mrb[0].mxu0 %v424
  %v675 = vpop.f32.mrb[0].mxu0
  %v676 = vadd.f32 0.0, %v675
  %v677 = vpop.f32.mrb[0].mxu0
  %678 = vmatprep.mubr.f32.mxu0 0.0
  %679 = vmatmul.mubr.f32.gmra.mrb[0].mxu0 %v425
  %v680 = vpop.f32.mrb[0].mxu0
  %v681 = vadd.f32 0.0, %v680
  %v682 = vpop.f32.mrb[0].mxu0
  %683 = vmatprep.mubr.f32.mxu0 0.0
  %684 = vmatmul.mubr.f32.gmra.mrb[0].mxu0 %v426
  %v685 = vpop.f32.mrb[0].mxu0
  %v686 = vadd.f32 0.0, %v685
  %v687 = vpop.f32.mrb[0].mxu0
  %688 = vmatprep.mubr.f32.mxu0 0.0
  %689 = vmatmul.mubr.f32.gmra.mrb[0].mxu0 %v427
  %v690 = vpop.f32.mrb[0].mxu0
  %v691 = vadd.f32 0.0, %v690
  %v692 = vpop.f32.mrb[0].mxu0
  %693 = vmatprep.mubr.f32.mxu0 0.0
  %694 = vmatmul.mubr.f32.gmra.mrb[0].mxu0 %v428
  %v695 = vpop.f32.mrb[0].mxu0
  %v696 = vadd.f32 0.0, %v695
  %v697 = vpop.f32.mrb[0].mxu0
  %698 = vmatprep.mubr.f32.mxu0 0.0
  %699 = vmatmul.mubr.f32.gmra.mrb[0].mxu0 %v429
  %v700 = vpop.f32.mrb[0].mxu0
  %v701 = vadd.f32 0.0, %v700
  %v702 = vpop.f32.mrb[0].mxu0
  %703 = vmatprep.mubr.f32.mxu0 0.0
  %704 = vmatmul.mubr.f32.gmra.mrb[0].mxu0 %v430
  %v705 = vpop.f32.mrb[0].mxu0
  %v706 = vadd.f32 0.0, %v705
  %v707 = vpop.f32.mrb[0].mxu0
  %708 = vmatprep.mubr.f32.mxu0 0.0
  %709 = vmatmul.mubr.f32.gmra.mrb[0].mxu0 %v431
  %v710 = vpop.f32.mrb[0].mxu0
  %v711 = vadd.f32 0.0, %v710
  %v712 = vpop.f32.mrb[0].mxu0
  %713 = vmatprep.mubr.f32.mxu0 0.0
  %714 = vmatmul.mubr.f32.gmra.mrb[0].mxu0 %v432
  %v715 = vpop.f32.mrb[0].mxu0
  %v716 = vadd.f32 0.0, %v715
  %v717 = vpop.f32.mrb[0].mxu0
  %718 = vmatprep.mubr.f32.mxu0 0.0
  %719 = vmatmul.mubr.f32.gmra.mrb[0].mxu0 %v433
  %v720 = vpop.f32.mrb[0].mxu0
  %v721 = vadd.f32 0.0, %v720
  %v722 = vpop.f32.mrb[0].mxu0
  %723 = vmatprep.mubr.f32.mxu0 0.0
  %724 = vmatmul.mubr.f32.gmra.mrb[0].mxu0 %v434
  %v725 = vpop.f32.mrb[0].mxu0
  %v726 = vadd.f32 0.0, %v725
  %v727 = vpop.f32.mrb[0].mxu0
  %728 = vmatprep.mubr.f32.mxu0 0.0
  %729 = vmatmul.mubr.f32.gmra.mrb[0].mxu0 %v435
  %v730 = vpop.f32.mrb[0].mxu0
  %v731 = vadd.f32 0.0, %v730
  %v732 = vpop.f32.mrb[0].mxu0
  %733 = vmatprep.mubr.f32.mxu0 0.0
  %734 = vmatmul.mubr.f32.gmra.mrb[0].mxu0 %v436
  %v735 = vpop.f32.mrb[0].mxu0
  %v736 = vadd.f32 0.0, %v735
  %v737 = vpop.f32.mrb[0].mxu0
  %738 = vmatprep.mubr.f32.mxu0 0.0
  %739 = vmatmul.mubr.f32.gmra.mrb[0].mxu0 %v437
  %v740 = vpop.f32.mrb[0].mxu0
  %v741 = vadd.f32 0.0, %v740
  %v742 = vpop.f32.mrb[0].mxu0
  %743 = vmatprep.mubr.f32.mxu0 0.0
  %744 = vmatmul.mubr.f32.gmra.mrb[0].mxu0 %v438
  %v745 = vpop.f32.mrb[0].mxu0
  %v746 = vadd.f32 0.0, %v745
  %v747 = vpop.f32.mrb[0].mxu0
  %748 = vdwg.mxu0
  %s749 = scalar_lea.vmem %s0, 784
  %v750 = vld [vmem:[%s749] sm:$0xff]
  %v751 = vld [vmem:[%s749 + $0x8] sm:$0xff]
  %v752 = vld [vmem:[%s749 + $0x10] sm:$0xff]
  %v753 = vld [vmem:[%s749 + $0x18] sm:$0xff]
  %v754 = vld [vmem:[%s749 + $0x20] sm:$0xff]
  %v755 = vld [vmem:[%s749 + $0x28] sm:$0xff]
  %v756 = vld [vmem:[%s749 + $0x30] sm:$0xff]
  %v757 = vld [vmem:[%s749 + $0x38] sm:$0xff]
  %v758 = vld [vmem:[%s749 + $0x40] sm:$0xff]
  %v759 = vld [vmem:[%s749 + $0x48] sm:$0xff]
  %v760 = vld [vmem:[%s749 + $0x50] sm:$0xff]
  %v761 = vld [vmem:[%s749 + $0x58] sm:$0xff]
  %v762 = vld [vmem:[%s749 + $0x60] sm:$0xff]
  %v763 = vld [vmem:[%s749 + $0x68] sm:$0xff]
  %v764 = vld [vmem:[%s749 + $0x70] sm:$0xff]
  %v765 = vld [vmem:[%s749 + $0x78] sm:$0xff]
  %v766 = vld [vmem:[%s749 + $0x80] sm:$0xff]
  %v767 = vld [vmem:[%s749 + $0x88] sm:$0xff]
  %v768 = vld [vmem:[%s749 + $0x90] sm:$0xff]
  %v769 = vld [vmem:[%s749 + $0x98] sm:$0xff]
  %v770 = vld [vmem:[%s749 + $0xa0] sm:$0xff]
  %v771 = vld [vmem:[%s749 + $0xa8] sm:$0xff]
  %v772 = vld [vmem:[%s749 + $0xb0] sm:$0xff]
  %v773 = vld [vmem:[%s749 + $0xb8] sm:$0xff]
  %v774 = vld [vmem:[%s749 + $0xc0] sm:$0xff]
  %v775 = vld [vmem:[%s749 + $0xc8] sm:$0xff]
  %v776 = vld [vmem:[%s749 + $0xd0] sm:$0xff]
  %v777 = vld [vmem:[%s749 + $0xd8] sm:$0xff]
  %v778 = vld [vmem:[%s749 + $0xe0] sm:$0xff]
  %v779 = vld [vmem:[%s749 + $0xe8] sm:$0xff]
  %v780 = vld [vmem:[%s749 + $0xf0] sm:$0xff]
  %v781 = vld [vmem:[%s749 + $0xf8] sm:$0xff]
  %v782 = vld [vmem:[%s749 + $0x100] sm:$0xff]
  %v783 = vld [vmem:[%s749 + $0x108] sm:$0xff]
  %v784 = vld [vmem:[%s749 + $0x110] sm:$0xff]
  %v785 = vld [vmem:[%s749 + $0x118] sm:$0xff]
  %v786 = vld [vmem:[%s749 + $0x120] sm:$0xff]
  %v787 = vld [vmem:[%s749 + $0x128] sm:$0xff]
  %v788 = vld [vmem:[%s749 + $0x130] sm:$0xff]
  %v789 = vld [vmem:[%s749 + $0x138] sm:$0xff]
  %v790 = vld [vmem:[%s749 + $0x140] sm:$0xff]
  %v791 = vld [vmem:[%s749 + $0x148] sm:$0xff]
  %v792 = vld [vmem:[%s749 + $0x150] sm:$0xff]
  %v793 = vld [vmem:[%s749 + $0x158] sm:$0xff]
  %v794 = vld [vmem:[%s749 + $0x160] sm:$0xff]
  %v795 = vld [vmem:[%s749 + $0x168] sm:$0xff]
  %v796 = vld [vmem:[%s749 + $0x170] sm:$0xff]
  %v797 = vld [vmem:[%s749 + $0x178] sm:$0xff]
  %v798 = vld [vmem:[%s749 + $0x180] sm:$0xff]
  %799 = vmatprep.subr.mxu0 0.0
  %800 = vmatpush1.msra.mxu0 %v14
  %801 = vmatprep.subr.mxu0 0.0
  %802 = vmatpush1.msra.mxu0 %v15
  %803 = vmatprep.subr.mxu0 0.0
  %804 = vmatpush1.msra.mxu0 %v16
  %805 = vmatprep.subr.mxu0 0.0
  %806 = vmatpush1.msra.mxu0 %v17
  %807 = vmatprep.subr.mxu0 0.0
  %808 = vmatpush1.msra.mxu0 %v18
  %809 = vmatprep.subr.mxu0 0.0
  %810 = vmatpush1.msra.mxu0 %v19
  %811 = vmatprep.subr.mxu0 0.0
  %812 = vmatpush1.msra.mxu0 %v20
  %813 = vmatprep.subr.mxu0 0.0
  %814 = vmatpush1.msra.mxu0 %v21
  %815 = vmatprep.subr.mxu0 0.0
  %816 = vmatpush1.msra.mxu0 %v22
  %817 = vmatprep.subr.mxu0 0.0
  %818 = vmatpush1.msra.mxu0 %v23
  %819 = vmatprep.subr.mxu0 0.0
  %820 = vmatpush1.msra.mxu0 %v24
  %821 = vmatprep.subr.mxu0 0.0
  %822 = vmatpush1.msra.mxu0 %v25
  %823 = vmatprep.subr.mxu0 0.0
  %824 = vmatpush1.msra.mxu0 %v26
  %825 = vmatprep.subr.mxu0 0.0
  %826 = vmatpush1.msra.mxu0 %v27
  %827 = vmatprep.subr.mxu0 0.0
  %828 = vmatpush1.msra.mxu0 %v28
  %829 = vmatprep.subr.mxu0 0.0
  %830 = vmatpush1.msra.mxu0 %v29
  %831 = vmatprep.subr.mxu0 0.0
  %832 = vmatpush1.msra.mxu0 0.0
  %833 = vmatprep.subr.mxu0 0.0
  %834 = vmatpush1.msra.mxu0 0.0
  %835 = vmatprep.subr.mxu0 0.0
  %836 = vmatpush1.msra.mxu0 0.0
  %837 = vmatprep.subr.mxu0 0.0
  %838 = vmatpush1.msra.mxu0 0.0
  %839 = vmatprep.subr.mxu0 0.0
  %840 = vmatpush1.msra.mxu0 0.0
  %841 = vmatprep.subr.mxu0 0.0
  %842 = vmatpush1.msra.mxu0 0.0
  %843 = vmatprep.subr.mxu0 0.0
  %844 = vmatpush1.msra.mxu0 0.0
  %845 = vmatprep.subr.mxu0 0.0
  %846 = vmatpush1.msra.mxu0 0.0
  %847 = vmatprep.subr.mxu0 0.0
  %848 = vmatpush1.msra.mxu0 0.0
  %849 = vmatprep.subr.mxu0 0.0
  %850 = vmatpush1.msra.mxu0 0.0
  %851 = vmatprep.subr.mxu0 0.0
  %852 = vmatpush1.msra.mxu0 0.0
  %853 = vmatprep.subr.mxu0 0.0
  %854 = vmatpush1.msra.mxu0 0.0
  %855 = vmatprep.subr.mxu0 0.0
  %856 = vmatpush1.msra.mxu0 0.0
  %857 = vmatprep.subr.mxu0 0.0
  %858 = vmatpush1.msra.mxu0 0.0
  %859 = vmatprep.subr.mxu0 0.0
  %860 = vmatpush1.msra.mxu0 0.0
  %861 = vmatprep.subr.mxu0 0.0
  %862 = vmatpush1.msra.mxu0 0.0
  %863 = vmatprep.mubr.f32.mxu0 0.0
  %864 = vmatmul.mubr.f32.gmra.mrb[0].mxu0 %v750
  %v865 = vpop.f32.mrb[0].mxu0
  %v866 = vadd.f32 0.0, %v865
  %v867 = vpop.f32.mrb[0].mxu0
  %868 = vmatprep.mubr.f32.mxu0 0.0
  %869 = vmatmul.mubr.f32.gmra.mrb[0].mxu0 %v751
  %v870 = vpop.f32.mrb[0].mxu0
  %v871 = vadd.f32 0.0, %v870
  %v872 = vpop.f32.mrb[0].mxu0
  %873 = vmatprep.mubr.f32.mxu0 0.0
  %874 = vmatmul.mubr.f32.gmra.mrb[0].mxu0 %v752
  %v875 = vpop.f32.mrb[0].mxu0
  %v876 = vadd.f32 0.0, %v875
  %v877 = vpop.f32.mrb[0].mxu0
  %878 = vmatprep.mubr.f32.mxu0 0.0
  %879 = vmatmul.mubr.f32.gmra.mrb[0].mxu0 %v753
  %v880 = vpop.f32.mrb[0].mxu0
  %v881 = vadd.f32 0.0, %v880
  %v882 = vpop.f32.mrb[0].mxu0
  %883 = vmatprep.mubr.f32.mxu0 0.0
  %884 = vmatmul.mubr.f32.gmra.mrb[0].mxu0 %v754
  %v885 = vpop.f32.mrb[0].mxu0
  %v886 = vadd.f32 0.0, %v885
  %v887 = vpop.f32.mrb[0].mxu0
  %888 = vmatprep.mubr.f32.mxu0 0.0
  %889 = vmatmul.mubr.f32.gmra.mrb[0].mxu0 %v755
  %v890 = vpop.f32.mrb[0].mxu0
  %v891 = vadd.f32 0.0, %v890
  %v892 = vpop.f32.mrb[0].mxu0
  %893 = vmatprep.mubr.f32.mxu0 0.0
  %894 = vmatmul.mubr.f32.gmra.mrb[0].mxu0 %v756
  %v895 = vpop.f32.mrb[0].mxu0
  %v896 = vadd.f32 0.0, %v895
  %v897 = vpop.f32.mrb[0].mxu0
  %898 = vmatprep.mubr.f32.mxu0 0.0
  %899 = vmatmul.mubr.f32.gmra.mrb[0].mxu0 %v757
  %v900 = vpop.f32.mrb[0].mxu0
  %v901 = vadd.f32 0.0, %v900
  %v902 = vpop.f32.mrb[0].mxu0
  %903 = vmatprep.mubr.f32.mxu0 0.0
  %904 = vmatmul.mubr.f32.gmra.mrb[0].mxu0 %v758
  %v905 = vpop.f32.mrb[0].mxu0
  %v906 = vadd.f32 0.0, %v905
  %v907 = vpop.f32.mrb[0].mxu0
  %908 = vmatprep.mubr.f32.mxu0 0.0
  %909 = vmatmul.mubr.f32.gmra.mrb[0].mxu0 %v759
  %v910 = vpop.f32.mrb[0].mxu0
  %v911 = vadd.f32 0.0, %v910
  %v912 = vpop.f32.mrb[0].mxu0
  %913 = vmatprep.mubr.f32.mxu0 0.0
  %914 = vmatmul.mubr.f32.gmra.mrb[0].mxu0 %v760
  %v915 = vpop.f32.mrb[0].mxu0
  %v916 = vadd.f32 0.0, %v915
  %v917 = vpop.f32.mrb[0].mxu0
  %918 = vmatprep.mubr.f32.mxu0 0.0
  %919 = vmatmul.mubr.f32.gmra.mrb[0].mxu0 %v761
  %v920 = vpop.f32.mrb[0].mxu0
  %v921 = vadd.f32 0.0, %v920
  %v922 = vpop.f32.mrb[0].mxu0
  %923 = vmatprep.mubr.f32.mxu0 0.0
  %924 = vmatmul.mubr.f32.gmra.mrb[0].mxu0 %v762
  %v925 = vpop.f32.mrb[0].mxu0
  %v926 = vadd.f32 0.0, %v925
  %v927 = vpop.f32.mrb[0].mxu0
  %928 = vmatprep.mubr.f32.mxu0 0.0
  %929 = vmatmul.mubr.f32.gmra.mrb[0].mxu0 %v763
  %v930 = vpop.f32.mrb[0].mxu0
  %v931 = vadd.f32 0.0, %v930
  %v932 = vpop.f32.mrb[0].mxu0
  %933 = vmatprep.mubr.f32.mxu0 0.0
  %934 = vmatmul.mubr.f32.gmra.mrb[0].mxu0 %v764
  %v935 = vpop.f32.mrb[0].mxu0
  %v936 = vadd.f32 0.0, %v935
  %v937 = vpop.f32.mrb[0].mxu0
  %938 = vmatprep.mubr.f32.mxu0 0.0
  %939 = vmatmul.mubr.f32.gmra.mrb[0].mxu0 %v765
  %v940 = vpop.f32.mrb[0].mxu0
  %v941 = vadd.f32 0.0, %v940
  %v942 = vpop.f32.mrb[0].mxu0
  %943 = vmatprep.mubr.f32.mxu0 0.0
  %944 = vmatmul.mubr.f32.gmra.mrb[0].mxu0 %v766
  %v945 = vpop.f32.mrb[0].mxu0
  %v946 = vadd.f32 0.0, %v945
  %v947 = vpop.f32.mrb[0].mxu0
  %948 = vmatprep.mubr.f32.mxu0 0.0
  %949 = vmatmul.mubr.f32.gmra.mrb[0].mxu0 %v767
  %v950 = vpop.f32.mrb[0].mxu0
  %v951 = vadd.f32 0.0, %v950
  %v952 = vpop.f32.mrb[0].mxu0
  %953 = vmatprep.mubr.f32.mxu0 0.0
  %954 = vmatmul.mubr.f32.gmra.mrb[0].mxu0 %v768
  %v955 = vpop.f32.mrb[0].mxu0
  %v956 = vadd.f32 0.0, %v955
  %v957 = vpop.f32.mrb[0].mxu0
  %958 = vmatprep.mubr.f32.mxu0 0.0
  %959 = vmatmul.mubr.f32.gmra.mrb[0].mxu0 %v769
  %v960 = vpop.f32.mrb[0].mxu0
  %v961 = vadd.f32 0.0, %v960
  %v962 = vpop.f32.mrb[0].mxu0
  %963 = vmatprep.mubr.f32.mxu0 0.0
  %964 = vmatmul.mubr.f32.gmra.mrb[0].mxu0 %v770
  %v965 = vpop.f32.mrb[0].mxu0
  %v966 = vadd.f32 0.0, %v965
  %v967 = vpop.f32.mrb[0].mxu0
  %968 = vmatprep.mubr.f32.mxu0 0.0
  %969 = vmatmul.mubr.f32.gmra.mrb[0].mxu0 %v771
  %v970 = vpop.f32.mrb[0].mxu0
  %v971 = vadd.f32 0.0, %v970
  %v972 = vpop.f32.mrb[0].mxu0
  %973 = vmatprep.mubr.f32.mxu0 0.0
  %974 = vmatmul.mubr.f32.gmra.mrb[0].mxu0 %v772
  %v975 = vpop.f32.mrb[0].mxu0
  %v976 = vadd.f32 0.0, %v975
  %v977 = vpop.f32.mrb[0].mxu0
  %978 = vmatprep.mubr.f32.mxu0 0.0
  %979 = vmatmul.mubr.f32.gmra.mrb[0].mxu0 %v773
  %v980 = vpop.f32.mrb[0].mxu0
  %v981 = vadd.f32 0.0, %v980
  %v982 = vpop.f32.mrb[0].mxu0
  %983 = vmatprep.mubr.f32.mxu0 0.0
  %984 = vmatmul.mubr.f32.gmra.mrb[0].mxu0 %v774
  %v985 = vpop.f32.mrb[0].mxu0
  %v986 = vadd.f32 0.0, %v985
  %v987 = vpop.f32.mrb[0].mxu0
  %988 = vmatprep.mubr.f32.mxu0 0.0
  %989 = vmatmul.mubr.f32.gmra.mrb[0].mxu0 %v775
  %v990 = vpop.f32.mrb[0].mxu0
  %v991 = vadd.f32 0.0, %v990
  %v992 = vpop.f32.mrb[0].mxu0
  %993 = vmatprep.mubr.f32.mxu0 0.0
  %994 = vmatmul.mubr.f32.gmra.mrb[0].mxu0 %v776
  %v995 = vpop.f32.mrb[0].mxu0
  %v996 = vadd.f32 0.0, %v995
  %v997 = vpop.f32.mrb[0].mxu0
  %998 = vmatprep.mubr.f32.mxu0 0.0
  %999 = vmatmul.mubr.f32.gmra.mrb[0].mxu0 %v777
  %v1000 = vpop.f32.mrb[0].mxu0
  %v1001 = vadd.f32 0.0, %v1000
  %v1002 = vpop.f32.mrb[0].mxu0
  %1003 = vmatprep.mubr.f32.mxu0 0.0
  %1004 = vmatmul.mubr.f32.gmra.mrb[0].mxu0 %v778
  %v1005 = vpop.f32.mrb[0].mxu0
  %v1006 = vadd.f32 0.0, %v1005
  %v1007 = vpop.f32.mrb[0].mxu0
  %1008 = vmatprep.mubr.f32.mxu0 0.0
  %1009 = vmatmul.mubr.f32.gmra.mrb[0].mxu0 %v779
  %v1010 = vpop.f32.mrb[0].mxu0
  %v1011 = vadd.f32 0.0, %v1010
  %v1012 = vpop.f32.mrb[0].mxu0
  %1013 = vmatprep.mubr.f32.mxu0 0.0
  %1014 = vmatmul.mubr.f32.gmra.mrb[0].mxu0 %v780
  %v1015 = vpop.f32.mrb[0].mxu0
  %v1016 = vadd.f32 0.0, %v1015
  %v1017 = vpop.f32.mrb[0].mxu0
  %1018 = vmatprep.mubr.f32.mxu0 0.0
  %1019 = vmatmul.mubr.f32.gmra.mrb[0].mxu0 %v781
  %v1020 = vpop.f32.mrb[0].mxu0
  %v1021 = vadd.f32 0.0, %v1020
  %v1022 = vpop.f32.mrb[0].mxu0
  %1023 = vmatprep.mubr.f32.mxu0 0.0
  %1024 = vmatmul.mubr.f32.gmra.mrb[0].mxu0 %v782
  %v1025 = vpop.f32.mrb[0].mxu0
  %v1026 = vadd.f32 0.0, %v1025
  %v1027 = vpop.f32.mrb[0].mxu0
  %1028 = vmatprep.mubr.f32.mxu0 0.0
  %1029 = vmatmul.mubr.f32.gmra.mrb[0].mxu0 %v783
  %v1030 = vpop.f32.mrb[0].mxu0
  %v1031 = vadd.f32 0.0, %v1030
  %v1032 = vpop.f32.mrb[0].mxu0
  %1033 = vmatprep.mubr.f32.mxu0 0.0
  %1034 = vmatmul.mubr.f32.gmra.mrb[0].mxu0 %v784
  %v1035 = vpop.f32.mrb[0].mxu0
  %v1036 = vadd.f32 0.0, %v1035
  %v1037 = vpop.f32.mrb[0].mxu0
  %1038 = vmatprep.mubr.f32.mxu0 0.0
  %1039 = vmatmul.mubr.f32.gmra.mrb[0].mxu0 %v785
  %v1040 = vpop.f32.mrb[0].mxu0
  %v1041 = vadd.f32 0.0, %v1040
  %v1042 = vpop.f32.mrb[0].mxu0
  %1043 = vmatprep.mubr.f32.mxu0 0.0
  %1044 = vmatmul.mubr.f32.gmra.mrb[0].mxu0 %v786
  %v1045 = vpop.f32.mrb[0].mxu0
  %v1046 = vadd.f32 0.0, %v1045
  %v1047 = vpop.f32.mrb[0].mxu0
  %1048 = vmatprep.mubr.f32.mxu0 0.0
  %1049 = vmatmul.mubr.f32.gmra.mrb[0].mxu0 %v787
  %v1050 = vpop.f32.mrb[0].mxu0
  %v1051 = vadd.f32 0.0, %v1050
  %v1052 = vpop.f32.mrb[0].mxu0
  %1053 = vmatprep.mubr.f32.mxu0 0.0
  %1054 = vmatmul.mubr.f32.gmra.mrb[0].mxu0 %v788
  %v1055 = vpop.f32.mrb[0].mxu0
  %v1056 = vadd.f32 0.0, %v1055
  %v1057 = vpop.f32.mrb[0].mxu0
  %1058 = vmatprep.mubr.f32.mxu0 0.0
  %1059 = vmatmul.mubr.f32.gmra.mrb[0].mxu0 %v789
  %v1060 = vpop.f32.mrb[0].mxu0
  %v1061 = vadd.f32 0.0, %v1060
  %v1062 = vpop.f32.mrb[0].mxu0
  %1063 = vmatprep.mubr.f32.mxu0 0.0
  %1064 = vmatmul.mubr.f32.gmra.mrb[0].mxu0 %v790
  %v1065 = vpop.f32.mrb[0].mxu0
  %v1066 = vadd.f32 0.0, %v1065
  %v1067 = vpop.f32.mrb[0].mxu0
  %1068 = vmatprep.mubr.f32.mxu0 0.0
  %1069 = vmatmul.mubr.f32.gmra.mrb[0].mxu0 %v791
  %v1070 = vpop.f32.mrb[0].mxu0
  %v1071 = vadd.f32 0.0, %v1070
  %v1072 = vpop.f32.mrb[0].mxu0
  %1073 = vmatprep.mubr.f32.mxu0 0.0
  %1074 = vmatmul.mubr.f32.gmra.mrb[0].mxu0 %v792
  %v1075 = vpop.f32.mrb[0].mxu0
  %v1076 = vadd.f32 0.0, %v1075
  %v1077 = vpop.f32.mrb[0].mxu0
  %1078 = vmatprep.mubr.f32.mxu0 0.0
  %1079 = vmatmul.mubr.f32.gmra.mrb[0].mxu0 %v793
  %v1080 = vpop.f32.mrb[0].mxu0
  %v1081 = vadd.f32 0.0, %v1080
  %v1082 = vpop.f32.mrb[0].mxu0
  %1083 = vmatprep.mubr.f32.mxu0 0.0
  %1084 = vmatmul.mubr.f32.gmra.mrb[0].mxu0 %v794
  %v1085 = vpop.f32.mrb[0].mxu0
  %v1086 = vadd.f32 0.0, %v1085
  %v1087 = vpop.f32.mrb[0].mxu0
  %1088 = vmatprep.mubr.f32.mxu0 0.0
  %1089 = vmatmul.mubr.f32.gmra.mrb[0].mxu0 %v795
  %v1090 = vpop.f32.mrb[0].mxu0
  %v1091 = vadd.f32 0.0, %v1090
  %v1092 = vpop.f32.mrb[0].mxu0
  %1093 = vmatprep.mubr.f32.mxu0 0.0
  %1094 = vmatmul.mubr.f32.gmra.mrb[0].mxu0 %v796
  %v1095 = vpop.f32.mrb[0].mxu0
  %v1096 = vadd.f32 0.0, %v1095
  %v1097 = vpop.f32.mrb[0].mxu0
  %1098 = vmatprep.mubr.f32.mxu0 0.0
  %1099 = vmatmul.mubr.f32.gmra.mrb[0].mxu0 %v797
  %v1100 = vpop.f32.mrb[0].mxu0
  %v1101 = vadd.f32 0.0, %v1100
  %v1102 = vpop.f32.mrb[0].mxu0
  %1103 = vmatprep.mubr.f32.mxu0 0.0
  %1104 = vmatmul.mubr.f32.gmra.mrb[0].mxu0 %v798
  %v1105 = vpop.f32.mrb[0].mxu0
  %v1106 = vadd.f32 0.0, %v1105
  %v1107 = vpop.f32.mrb[0].mxu0
  %1108 = vdwg.mxu0
  %s1109 = scalar_lea.vmem %s0, 1176
  %v1110 = vld [vmem:[%s1109] sm:$0xff]
  %v1111 = vld [vmem:[%s1109 + $0x8] sm:$0xff]
  %v1112 = vld [vmem:[%s1109 + $0x10] sm:$0xff]
  %v1113 = vld [vmem:[%s1109 + $0x18] sm:$0xff]
  %v1114 = vld [vmem:[%s1109 + $0x20] sm:$0xff]
  %v1115 = vld [vmem:[%s1109 + $0x28] sm:$0xff]
  %v1116 = vld [vmem:[%s1109 + $0x30] sm:$0xff]
  %v1117 = vld [vmem:[%s1109 + $0x38] sm:$0xff]
  %v1118 = vld [vmem:[%s1109 + $0x40] sm:$0xff]
  %v1119 = vld [vmem:[%s1109 + $0x48] sm:$0xff]
  %v1120 = vld [vmem:[%s1109 + $0x50] sm:$0xff]
  %v1121 = vld [vmem:[%s1109 + $0x58] sm:$0xff]
  %v1122 = vld [vmem:[%s1109 + $0x60] sm:$0xff]
  %v1123 = vld [vmem:[%s1109 + $0x68] sm:$0xff]
  %v1124 = vld [vmem:[%s1109 + $0x70] sm:$0xff]
  %v1125 = vld [vmem:[%s1109 + $0x78] sm:$0xff]
  %v1126 = vld [vmem:[%s1109 + $0x80] sm:$0xff]
  %v1127 = vld [vmem:[%s1109 + $0x88] sm:$0xff]
  %v1128 = vld [vmem:[%s1109 + $0x90] sm:$0xff]
  %v1129 = vld [vmem:[%s1109 + $0x98] sm:$0xff]
  %v1130 = vld [vmem:[%s1109 + $0xa0] sm:$0xff]
  %v1131 = vld [vmem:[%s1109 + $0xa8] sm:$0xff]
  %v1132 = vld [vmem:[%s1109 + $0xb0] sm:$0xff]
  %v1133 = vld [vmem:[%s1109 + $0xb8] sm:$0xff]
  %v1134 = vld [vmem:[%s1109 + $0xc0] sm:$0xff]
  %v1135 = vld [vmem:[%s1109 + $0xc8] sm:$0xff]
  %v1136 = vld [vmem:[%s1109 + $0xd0] sm:$0xff]
  %v1137 = vld [vmem:[%s1109 + $0xd8] sm:$0xff]
  %v1138 = vld [vmem:[%s1109 + $0xe0] sm:$0xff]
  %v1139 = vld [vmem:[%s1109 + $0xe8] sm:$0xff]
  %v1140 = vld [vmem:[%s1109 + $0xf0] sm:$0xff]
  %v1141 = vld [vmem:[%s1109 + $0xf8] sm:$0xff]
  %v1142 = vld [vmem:[%s1109 + $0x100] sm:$0xff]
  %v1143 = vld [vmem:[%s1109 + $0x108] sm:$0xff]
  %v1144 = vld [vmem:[%s1109 + $0x110] sm:$0xff]
  %v1145 = vld [vmem:[%s1109 + $0x118] sm:$0xff]
  %v1146 = vld [vmem:[%s1109 + $0x120] sm:$0xff]
  %v1147 = vld [vmem:[%s1109 + $0x128] sm:$0xff]
  %v1148 = vld [vmem:[%s1109 + $0x130] sm:$0xff]
  %v1149 = vld [vmem:[%s1109 + $0x138] sm:$0xff]
  %v1150 = vld [vmem:[%s1109 + $0x140] sm:$0xff]
  %v1151 = vld [vmem:[%s1109 + $0x148] sm:$0xff]
  %v1152 = vld [vmem:[%s1109 + $0x150] sm:$0xff]
  %v1153 = vld [vmem:[%s1109 + $0x158] sm:$0xff]
  %v1154 = vld [vmem:[%s1109 + $0x160] sm:$0xff]
  %v1155 = vld [vmem:[%s1109 + $0x168] sm:$0xff]
  %v1156 = vld [vmem:[%s1109 + $0x170] sm:$0xff]
  %v1157 = vld [vmem:[%s1109 + $0x178] sm:$0xff]
  %v1158 = vld [vmem:[%s1109 + $0x180] sm:$0xff]
  %1159 = vmatprep.subr.mxu0 0.0
  %1160 = vmatpush1.msra.mxu0 %v14
  %1161 = vmatprep.subr.mxu0 0.0
  %1162 = vmatpush1.msra.mxu0 %v15
  %1163 = vmatprep.subr.mxu0 0.0
  %1164 = vmatpush1.msra.mxu0 %v16
  %1165 = vmatprep.subr.mxu0 0.0
  %1166 = vmatpush1.msra.mxu0 %v17
  %1167 = vmatprep.subr.mxu0 0.0
  %1168 = vmatpush1.msra.mxu0 %v18
  %1169 = vmatprep.subr.mxu0 0.0
  %1170 = vmatpush1.msra.mxu0 %v19
  %1171 = vmatprep.subr.mxu0 0.0
  %1172 = vmatpush1.msra.mxu0 %v20
  %1173 = vmatprep.subr.mxu0 0.0
  %1174 = vmatpush1.msra.mxu0 %v21
  %1175 = vmatprep.subr.mxu0 0.0
  %1176 = vmatpush1.msra.mxu0 %v22
  %1177 = vmatprep.subr.mxu0 0.0
  %1178 = vmatpush1.msra.mxu0 %v23
  %1179 = vmatprep.subr.mxu0 0.0
  %1180 = vmatpush1.msra.mxu0 %v24
  %1181 = vmatprep.subr.mxu0 0.0
  %1182 = vmatpush1.msra.mxu0 %v25
  %1183 = vmatprep.subr.mxu0 0.0
  %1184 = vmatpush1.msra.mxu0 %v26
  %1185 = vmatprep.subr.mxu0 0.0
  %1186 = vmatpush1.msra.mxu0 %v27
  %1187 = vmatprep.subr.mxu0 0.0
  %1188 = vmatpush1.msra.mxu0 %v28
  %1189 = vmatprep.subr.mxu0 0.0
  %1190 = vmatpush1.msra.mxu0 %v29
  %1191 = vmatprep.subr.mxu0 0.0
  %1192 = vmatpush1.msra.mxu0 0.0
  %1193 = vmatprep.subr.mxu0 0.0
  %1194 = vmatpush1.msra.mxu0 0.0
  %1195 = vmatprep.subr.mxu0 0.0
  %1196 = vmatpush1.msra.mxu0 0.0
  %1197 = vmatprep.subr.mxu0 0.0
  %1198 = vmatpush1.msra.mxu0 0.0
  %1199 = vmatprep.subr.mxu0 0.0
  %1200 = vmatpush1.msra.mxu0 0.0
  %1201 = vmatprep.subr.mxu0 0.0
  %1202 = vmatpush1.msra.mxu0 0.0
  %1203 = vmatprep.subr.mxu0 0.0
  %1204 = vmatpush1.msra.mxu0 0.0
  %1205 = vmatprep.subr.mxu0 0.0
  %1206 = vmatpush1.msra.mxu0 0.0
  %1207 = vmatprep.subr.mxu0 0.0
  %1208 = vmatpush1.msra.mxu0 0.0
  %1209 = vmatprep.subr.mxu0 0.0
  %1210 = vmatpush1.msra.mxu0 0.0
  %1211 = vmatprep.subr.mxu0 0.0
  %1212 = vmatpush1.msra.mxu0 0.0
  %1213 = vmatprep.subr.mxu0 0.0
  %1214 = vmatpush1.msra.mxu0 0.0
  %1215 = vmatprep.subr.mxu0 0.0
  %1216 = vmatpush1.msra.mxu0 0.0
  %1217 = vmatprep.subr.mxu0 0.0
  %1218 = vmatpush1.msra.mxu0 0.0
  %1219 = vmatprep.subr.mxu0 0.0
  %1220 = vmatpush1.msra.mxu0 0.0
  %1221 = vmatprep.subr.mxu0 0.0
  %1222 = vmatpush1.msra.mxu0 0.0
  %1223 = vmatprep.mubr.f32.mxu0 0.0
  %1224 = vmatmul.mubr.f32.gmra.mrb[0].mxu0 %v1110
  %v1225 = vpop.f32.mrb[0].mxu0
  %v1226 = vadd.f32 0.0, %v1225
  %v1227 = vpop.f32.mrb[0].mxu0
  %1228 = vmatprep.mubr.f32.mxu0 0.0
  %1229 = vmatmul.mubr.f32.gmra.mrb[0].mxu0 %v1111
  %v1230 = vpop.f32.mrb[0].mxu0
  %v1231 = vadd.f32 0.0, %v1230
  %v1232 = vpop.f32.mrb[0].mxu0
  %1233 = vmatprep.mubr.f32.mxu0 0.0
  %1234 = vmatmul.mubr.f32.gmra.mrb[0].mxu0 %v1112
  %v1235 = vpop.f32.mrb[0].mxu0
  %v1236 = vadd.f32 0.0, %v1235
  %v1237 = vpop.f32.mrb[0].mxu0
  %1238 = vmatprep.mubr.f32.mxu0 0.0
  %1239 = vmatmul.mubr.f32.gmra.mrb[0].mxu0 %v1113
  %v1240 = vpop.f32.mrb[0].mxu0
  %v1241 = vadd.f32 0.0, %v1240
  %v1242 = vpop.f32.mrb[0].mxu0
  %1243 = vmatprep.mubr.f32.mxu0 0.0
  %1244 = vmatmul.mubr.f32.gmra.mrb[0].mxu0 %v1114
  %v1245 = vpop.f32.mrb[0].mxu0
  %v1246 = vadd.f32 0.0, %v1245
  %v1247 = vpop.f32.mrb[0].mxu0
  %1248 = vmatprep.mubr.f32.mxu0 0.0
  %1249 = vmatmul.mubr.f32.gmra.mrb[0].mxu0 %v1115
  %v1250 = vpop.f32.mrb[0].mxu0
  %v1251 = vadd.f32 0.0, %v1250
  %v1252 = vpop.f32.mrb[0].mxu0
  %1253 = vmatprep.mubr.f32.mxu0 0.0
  %1254 = vmatmul.mubr.f32.gmra.mrb[0].mxu0 %v1116
  %v1255 = vpop.f32.mrb[0].mxu0
  %v1256 = vadd.f32 0.0, %v1255
  %v1257 = vpop.f32.mrb[0].mxu0
  %1258 = vmatprep.mubr.f32.mxu0 0.0
  %1259 = vmatmul.mubr.f32.gmra.mrb[0].mxu0 %v1117
  %v1260 = vpop.f32.mrb[0].mxu0
  %v1261 = vadd.f32 0.0, %v1260
  %v1262 = vpop.f32.mrb[0].mxu0
  %1263 = vmatprep.mubr.f32.mxu0 0.0
  %1264 = vmatmul.mubr.f32.gmra.mrb[0].mxu0 %v1118
  %v1265 = vpop.f32.mrb[0].mxu0
  %v1266 = vadd.f32 0.0, %v1265
  %v1267 = vpop.f32.mrb[0].mxu0
  %1268 = vmatprep.mubr.f32.mxu0 0.0
  %1269 = vmatmul.mubr.f32.gmra.mrb[0].mxu0 %v1119
  %v1270 = vpop.f32.mrb[0].mxu0
  %v1271 = vadd.f32 0.0, %v1270
  %v1272 = vpop.f32.mrb[0].mxu0
  %1273 = vmatprep.mubr.f32.mxu0 0.0
  %1274 = vmatmul.mubr.f32.gmra.mrb[0].mxu0 %v1120
  %v1275 = vpop.f32.mrb[0].mxu0
  %v1276 = vadd.f32 0.0, %v1275
  %v1277 = vpop.f32.mrb[0].mxu0
  %1278 = vmatprep.mubr.f32.mxu0 0.0
  %1279 = vmatmul.mubr.f32.gmra.mrb[0].mxu0 %v1121
  %v1280 = vpop.f32.mrb[0].mxu0
  %v1281 = vadd.f32 0.0, %v1280
  %v1282 = vpop.f32.mrb[0].mxu0
  %1283 = vmatprep.mubr.f32.mxu0 0.0
  %1284 = vmatmul.mubr.f32.gmra.mrb[0].mxu0 %v1122
  %v1285 = vpop.f32.mrb[0].mxu0
  %v1286 = vadd.f32 0.0, %v1285
  %v1287 = vpop.f32.mrb[0].mxu0
  %1288 = vmatprep.mubr.f32.mxu0 0.0
  %1289 = vmatmul.mubr.f32.gmra.mrb[0].mxu0 %v1123
  %v1290 = vpop.f32.mrb[0].mxu0
  %v1291 = vadd.f32 0.0, %v1290
  %v1292 = vpop.f32.mrb[0].mxu0
  %1293 = vmatprep.mubr.f32.mxu0 0.0
  %1294 = vmatmul.mubr.f32.gmra.mrb[0].mxu0 %v1124
  %v1295 = vpop.f32.mrb[0].mxu0
  %v1296 = vadd.f32 0.0, %v1295
  %v1297 = vpop.f32.mrb[0].mxu0
  %1298 = vmatprep.mubr.f32.mxu0 0.0
  %1299 = vmatmul.mubr.f32.gmra.mrb[0].mxu0 %v1125
  %v1300 = vpop.f32.mrb[0].mxu0
  %v1301 = vadd.f32 0.0, %v1300
  %v1302 = vpop.f32.mrb[0].mxu0
  %1303 = vmatprep.mubr.f32.mxu0 0.0
  %1304 = vmatmul.mubr.f32.gmra.mrb[0].mxu0 %v1126
  %v1305 = vpop.f32.mrb[0].mxu0
  %v1306 = vadd.f32 0.0, %v1305
  %v1307 = vpop.f32.mrb[0].mxu0
  %1308 = vmatprep.mubr.f32.mxu0 0.0
  %1309 = vmatmul.mubr.f32.gmra.mrb[0].mxu0 %v1127
  %v1310 = vpop.f32.mrb[0].mxu0
  %v1311 = vadd.f32 0.0, %v1310
  %v1312 = vpop.f32.mrb[0].mxu0
  %1313 = vmatprep.mubr.f32.mxu0 0.0
  %1314 = vmatmul.mubr.f32.gmra.mrb[0].mxu0 %v1128
  %v1315 = vpop.f32.mrb[0].mxu0
  %v1316 = vadd.f32 0.0, %v1315
  %v1317 = vpop.f32.mrb[0].mxu0
  %1318 = vmatprep.mubr.f32.mxu0 0.0
  %1319 = vmatmul.mubr.f32.gmra.mrb[0].mxu0 %v1129
  %v1320 = vpop.f32.mrb[0].mxu0
  %v1321 = vadd.f32 0.0, %v1320
  %v1322 = vpop.f32.mrb[0].mxu0
  %1323 = vmatprep.mubr.f32.mxu0 0.0
  %1324 = vmatmul.mubr.f32.gmra.mrb[0].mxu0 %v1130
  %v1325 = vpop.f32.mrb[0].mxu0
  %v1326 = vadd.f32 0.0, %v1325
  %v1327 = vpop.f32.mrb[0].mxu0
  %1328 = vmatprep.mubr.f32.mxu0 0.0
  %1329 = vmatmul.mubr.f32.gmra.mrb[0].mxu0 %v1131
  %v1330 = vpop.f32.mrb[0].mxu0
  %v1331 = vadd.f32 0.0, %v1330
  %v1332 = vpop.f32.mrb[0].mxu0
  %1333 = vmatprep.mubr.f32.mxu0 0.0
  %1334 = vmatmul.mubr.f32.gmra.mrb[0].mxu0 %v1132
  %v1335 = vpop.f32.mrb[0].mxu0
  %v1336 = vadd.f32 0.0, %v1335
  %v1337 = vpop.f32.mrb[0].mxu0
  %1338 = vmatprep.mubr.f32.mxu0 0.0
  %1339 = vmatmul.mubr.f32.gmra.mrb[0].mxu0 %v1133
  %v1340 = vpop.f32.mrb[0].mxu0
  %v1341 = vadd.f32 0.0, %v1340
  %v1342 = vpop.f32.mrb[0].mxu0
  %1343 = vmatprep.mubr.f32.mxu0 0.0
  %1344 = vmatmul.mubr.f32.gmra.mrb[0].mxu0 %v1134
  %v1345 = vpop.f32.mrb[0].mxu0
  %v1346 = vadd.f32 0.0, %v1345
  %v1347 = vpop.f32.mrb[0].mxu0
  %1348 = vmatprep.mubr.f32.mxu0 0.0
  %1349 = vmatmul.mubr.f32.gmra.mrb[0].mxu0 %v1135
  %v1350 = vpop.f32.mrb[0].mxu0
  %v1351 = vadd.f32 0.0, %v1350
  %v1352 = vpop.f32.mrb[0].mxu0
  %1353 = vmatprep.mubr.f32.mxu0 0.0
  %1354 = vmatmul.mubr.f32.gmra.mrb[0].mxu0 %v1136
  %v1355 = vpop.f32.mrb[0].mxu0
  %v1356 = vadd.f32 0.0, %v1355
  %v1357 = vpop.f32.mrb[0].mxu0
  %1358 = vmatprep.mubr.f32.mxu0 0.0
  %1359 = vmatmul.mubr.f32.gmra.mrb[0].mxu0 %v1137
  %v1360 = vpop.f32.mrb[0].mxu0
  %v1361 = vadd.f32 0.0, %v1360
  %v1362 = vpop.f32.mrb[0].mxu0
  %1363 = vmatprep.mubr.f32.mxu0 0.0
  %1364 = vmatmul.mubr.f32.gmra.mrb[0].mxu0 %v1138
  %v1365 = vpop.f32.mrb[0].mxu0
  %v1366 = vadd.f32 0.0, %v1365
  %v1367 = vpop.f32.mrb[0].mxu0
  %1368 = vmatprep.mubr.f32.mxu0 0.0
  %1369 = vmatmul.mubr.f32.gmra.mrb[0].mxu0 %v1139
  %v1370 = vpop.f32.mrb[0].mxu0
  %v1371 = vadd.f32 0.0, %v1370
  %v1372 = vpop.f32.mrb[0].mxu0
  %1373 = vmatprep.mubr.f32.mxu0 0.0
  %1374 = vmatmul.mubr.f32.gmra.mrb[0].mxu0 %v1140
  %v1375 = vpop.f32.mrb[0].mxu0
  %v1376 = vadd.f32 0.0, %v1375
  %v1377 = vpop.f32.mrb[0].mxu0
  %1378 = vmatprep.mubr.f32.mxu0 0.0
  %1379 = vmatmul.mubr.f32.gmra.mrb[0].mxu0 %v1141
  %v1380 = vpop.f32.mrb[0].mxu0
  %v1381 = vadd.f32 0.0, %v1380
  %v1382 = vpop.f32.mrb[0].mxu0
  %1383 = vmatprep.mubr.f32.mxu0 0.0
  %1384 = vmatmul.mubr.f32.gmra.mrb[0].mxu0 %v1142
  %v1385 = vpop.f32.mrb[0].mxu0
  %v1386 = vadd.f32 0.0, %v1385
  %v1387 = vpop.f32.mrb[0].mxu0
  %1388 = vmatprep.mubr.f32.mxu0 0.0
  %1389 = vmatmul.mubr.f32.gmra.mrb[0].mxu0 %v1143
  %v1390 = vpop.f32.mrb[0].mxu0
  %v1391 = vadd.f32 0.0, %v1390
  %v1392 = vpop.f32.mrb[0].mxu0
  %1393 = vmatprep.mubr.f32.mxu0 0.0
  %1394 = vmatmul.mubr.f32.gmra.mrb[0].mxu0 %v1144
  %v1395 = vpop.f32.mrb[0].mxu0
  %v1396 = vadd.f32 0.0, %v1395
  %v1397 = vpop.f32.mrb[0].mxu0
  %1398 = vmatprep.mubr.f32.mxu0 0.0
  %1399 = vmatmul.mubr.f32.gmra.mrb[0].mxu0 %v1145
  %v1400 = vpop.f32.mrb[0].mxu0
  %v1401 = vadd.f32 0.0, %v1400
  %v1402 = vpop.f32.mrb[0].mxu0
  %1403 = vmatprep.mubr.f32.mxu0 0.0
  %1404 = vmatmul.mubr.f32.gmra.mrb[0].mxu0 %v1146
  %v1405 = vpop.f32.mrb[0].mxu0
  %v1406 = vadd.f32 0.0, %v1405
  %v1407 = vpop.f32.mrb[0].mxu0
  %1408 = vmatprep.mubr.f32.mxu0 0.0
  %1409 = vmatmul.mubr.f32.gmra.mrb[0].mxu0 %v1147
  %v1410 = vpop.f32.mrb[0].mxu0
  %v1411 = vadd.f32 0.0, %v1410
  %v1412 = vpop.f32.mrb[0].mxu0
  %1413 = vmatprep.mubr.f32.mxu0 0.0
  %1414 = vmatmul.mubr.f32.gmra.mrb[0].mxu0 %v1148
  %v1415 = vpop.f32.mrb[0].mxu0
  %v1416 = vadd.f32 0.0, %v1415
  %v1417 = vpop.f32.mrb[0].mxu0
  %1418 = vmatprep.mubr.f32.mxu0 0.0
  %1419 = vmatmul.mubr.f32.gmra.mrb[0].mxu0 %v1149
  %v1420 = vpop.f32.mrb[0].mxu0
  %v1421 = vadd.f32 0.0, %v1420
  %v1422 = vpop.f32.mrb[0].mxu0
  %1423 = vmatprep.mubr.f32.mxu0 0.0
  %1424 = vmatmul.mubr.f32.gmra.mrb[0].mxu0 %v1150
  %v1425 = vpop.f32.mrb[0].mxu0
  %v1426 = vadd.f32 0.0, %v1425
  %v1427 = vpop.f32.mrb[0].mxu0
  %1428 = vmatprep.mubr.f32.mxu0 0.0
  %1429 = vmatmul.mubr.f32.gmra.mrb[0].mxu0 %v1151
  %v1430 = vpop.f32.mrb[0].mxu0
  %v1431 = vadd.f32 0.0, %v1430
  %v1432 = vpop.f32.mrb[0].mxu0
  %1433 = vmatprep.mubr.f32.mxu0 0.0
  %1434 = vmatmul.mubr.f32.gmra.mrb[0].mxu0 %v1152
  %v1435 = vpop.f32.mrb[0].mxu0
  %v1436 = vadd.f32 0.0, %v1435
  %v1437 = vpop.f32.mrb[0].mxu0
  %1438 = vmatprep.mubr.f32.mxu0 0.0
  %1439 = vmatmul.mubr.f32.gmra.mrb[0].mxu0 %v1153
  %v1440 = vpop.f32.mrb[0].mxu0
  %v1441 = vadd.f32 0.0, %v1440
  %v1442 = vpop.f32.mrb[0].mxu0
  %1443 = vmatprep.mubr.f32.mxu0 0.0
  %1444 = vmatmul.mubr.f32.gmra.mrb[0].mxu0 %v1154
  %v1445 = vpop.f32.mrb[0].mxu0
  %v1446 = vadd.f32 0.0, %v1445
  %v1447 = vpop.f32.mrb[0].mxu0
  %1448 = vmatprep.mubr.f32.mxu0 0.0
  %1449 = vmatmul.mubr.f32.gmra.mrb[0].mxu0 %v1155
  %v1450 = vpop.f32.mrb[0].mxu0
  %v1451 = vadd.f32 0.0, %v1450
  %v1452 = vpop.f32.mrb[0].mxu0
  %1453 = vmatprep.mubr.f32.mxu0 0.0
  %1454 = vmatmul.mubr.f32.gmra.mrb[0].mxu0 %v1156
  %v1455 = vpop.f32.mrb[0].mxu0
  %v1456 = vadd.f32 0.0, %v1455
  %v1457 = vpop.f32.mrb[0].mxu0
  %1458 = vmatprep.mubr.f32.mxu0 0.0
  %1459 = vmatmul.mubr.f32.gmra.mrb[0].mxu0 %v1157
  %v1460 = vpop.f32.mrb[0].mxu0
  %v1461 = vadd.f32 0.0, %v1460
  %v1462 = vpop.f32.mrb[0].mxu0
  %1463 = vmatprep.mubr.f32.mxu0 0.0
  %1464 = vmatmul.mubr.f32.gmra.mrb[0].mxu0 %v1158
  %v1465 = vpop.f32.mrb[0].mxu0
  %v1466 = vadd.f32 0.0, %v1465
  %v1467 = vpop.f32.mrb[0].mxu0
  %1468 = vdwg.mxu0
  %v1469 = vmax.f32 %v146, %v506
  %v1470 = vmax.f32 %v151, %v511
  %v1471 = vmax.f32 %v156, %v516
  %v1472 = vmax.f32 %v161, %v521
  %v1473 = vmax.f32 %v166, %v526
  %v1474 = vmax.f32 %v171, %v531
  %v1475 = vmax.f32 %v176, %v536
  %v1476 = vmax.f32 %v181, %v541
  %v1477 = vmax.f32 %v186, %v546
  %v1478 = vmax.f32 %v191, %v551
  %v1479 = vmax.f32 %v196, %v556
  %v1480 = vmax.f32 %v201, %v561
  %v1481 = vmax.f32 %v206, %v566
  %v1482 = vmax.f32 %v211, %v571
  %v1483 = vmax.f32 %v216, %v576
  %v1484 = vmax.f32 %v221, %v581
  %v1485 = vmax.f32 %v226, %v586
  %v1486 = vmax.f32 %v231, %v591
  %v1487 = vmax.f32 %v236, %v596
  %v1488 = vmax.f32 %v241, %v601
  %v1489 = vmax.f32 %v246, %v606
  %v1490 = vmax.f32 %v251, %v611
  %v1491 = vmax.f32 %v256, %v616
  %v1492 = vmax.f32 %v261, %v621
  %v1493 = vmax.f32 %v266, %v626
  %v1494 = vmax.f32 %v271, %v631
  %v1495 = vmax.f32 %v276, %v636
  %v1496 = vmax.f32 %v281, %v641
  %v1497 = vmax.f32 %v286, %v646
  %v1498 = vmax.f32 %v291, %v651
  %v1499 = vmax.f32 %v296, %v656
  %v1500 = vmax.f32 %v301, %v661
  %v1501 = vmax.f32 %v306, %v666
  %v1502 = vmax.f32 %v311, %v671
  %v1503 = vmax.f32 %v316, %v676
  %v1504 = vmax.f32 %v321, %v681
  %v1505 = vmax.f32 %v326, %v686
  %v1506 = vmax.f32 %v331, %v691
  %v1507 = vmax.f32 %v336, %v696
  %v1508 = vmax.f32 %v341, %v701
  %v1509 = vmax.f32 %v346, %v706
  %v1510 = vmax.f32 %v351, %v711
  %v1511 = vmax.f32 %v356, %v716
  %v1512 = vmax.f32 %v361, %v721
  %v1513 = vmax.f32 %v366, %v726
  %v1514 = vmax.f32 %v371, %v731
  %v1515 = vmax.f32 %v376, %v736
  %v1516 = vmax.f32 %v381, %v741
  %v1517 = vmax.f32 %v386, %v746
  %v1518 = vmax.f32 %v866, %v1226
  %v1519 = vmax.f32 %v871, %v1231
  %v1520 = vmax.f32 %v876, %v1236
  %v1521 = vmax.f32 %v881, %v1241
  %v1522 = vmax.f32 %v886, %v1246
  %v1523 = vmax.f32 %v891, %v1251
  %v1524 = vmax.f32 %v896, %v1256
  %v1525 = vmax.f32 %v901, %v1261
  %v1526 = vmax.f32 %v906, %v1266
  %v1527 = vmax.f32 %v911, %v1271
  %v1528 = vmax.f32 %v916, %v1276
  %v1529 = vmax.f32 %v921, %v1281
  %v1530 = vmax.f32 %v926, %v1286
  %v1531 = vmax.f32 %v931, %v1291
  %v1532 = vmax.f32 %v936, %v1296
  %v1533 = vmax.f32 %v941, %v1301
  %v1534 = vmax.f32 %v946, %v1306
  %v1535 = vmax.f32 %v951, %v1311
  %v1536 = vmax.f32 %v956, %v1316
  %v1537 = vmax.f32 %v961, %v1321
  %v1538 = vmax.f32 %v966, %v1326
  %v1539 = vmax.f32 %v971, %v1331
  %v1540 = vmax.f32 %v976, %v1336
  %v1541 = vmax.f32 %v981, %v1341
  %v1542 = vmax.f32 %v986, %v1346
  %v1543 = vmax.f32 %v991, %v1351
  %v1544 = vmax.f32 %v996, %v1356
  %v1545 = vmax.f32 %v1001, %v1361
  %v1546 = vmax.f32 %v1006, %v1366
  %v1547 = vmax.f32 %v1011, %v1371
  %v1548 = vmax.f32 %v1016, %v1376
  %v1549 = vmax.f32 %v1021, %v1381
  %v1550 = vmax.f32 %v1026, %v1386
  %v1551 = vmax.f32 %v1031, %v1391
  %v1552 = vmax.f32 %v1036, %v1396
  %v1553 = vmax.f32 %v1041, %v1401
  %v1554 = vmax.f32 %v1046, %v1406
  %v1555 = vmax.f32 %v1051, %v1411
  %v1556 = vmax.f32 %v1056, %v1416
  %v1557 = vmax.f32 %v1061, %v1421
  %v1558 = vmax.f32 %v1066, %v1426
  %v1559 = vmax.f32 %v1071, %v1431
  %v1560 = vmax.f32 %v1076, %v1436
  %v1561 = vmax.f32 %v1081, %v1441
  %v1562 = vmax.f32 %v1086, %v1446
  %v1563 = vmax.f32 %v1091, %v1451
  %v1564 = vmax.f32 %v1096, %v1456
  %v1565 = vmax.f32 %v1101, %v1461
  %v1566 = vmax.f32 %v1106, %v1466
  %v1567 = vmax.f32 %v1469, %v1518
  %v1568 = vmax.f32 %v1470, %v1519
  %v1569 = vmax.f32 %v1471, %v1520
  %v1570 = vmax.f32 %v1472, %v1521
  %v1571 = vmax.f32 %v1473, %v1522
  %v1572 = vmax.f32 %v1474, %v1523
  %v1573 = vmax.f32 %v1475, %v1524
  %v1574 = vmax.f32 %v1476, %v1525
  %v1575 = vmax.f32 %v1477, %v1526
  %v1576 = vmax.f32 %v1478, %v1527
  %v1577 = vmax.f32 %v1479, %v1528
  %v1578 = vmax.f32 %v1480, %v1529
  %v1579 = vmax.f32 %v1481, %v1530
  %v1580 = vmax.f32 %v1482, %v1531
  %v1581 = vmax.f32 %v1483, %v1532
  %v1582 = vmax.f32 %v1484, %v1533
  %v1583 = vmax.f32 %v1485, %v1534
  %v1584 = vmax.f32 %v1486, %v1535
  %v1585 = vmax.f32 %v1487, %v1536
  %v1586 = vmax.f32 %v1488, %v1537
  %v1587 = vmax.f32 %v1489, %v1538
  %v1588 = vmax.f32 %v1490, %v1539
  %v1589 = vmax.f32 %v1491, %v1540
  %v1590 = vmax.f32 %v1492, %v1541
  %v1591 = vmax.f32 %v1493, %v1542
  %v1592 = vmax.f32 %v1494, %v1543
  %v1593 = vmax.f32 %v1495, %v1544
  %v1594 = vmax.f32 %v1496, %v1545
  %v1595 = vmax.f32 %v1497, %v1546
  %v1596 = vmax.f32 %v1498, %v1547
  %v1597 = vmax.f32 %v1499, %v1548
  %v1598 = vmax.f32 %v1500, %v1549
  %v1599 = vmax.f32 %v1501, %v1550
  %v1600 = vmax.f32 %v1502, %v1551
  %v1601 = vmax.f32 %v1503, %v1552
  %v1602 = vmax.f32 %v1504, %v1553
  %v1603 = vmax.f32 %v1505, %v1554
  %v1604 = vmax.f32 %v1506, %v1555
  %v1605 = vmax.f32 %v1507, %v1556
  %v1606 = vmax.f32 %v1508, %v1557
  %v1607 = vmax.f32 %v1509, %v1558
  %v1608 = vmax.f32 %v1510, %v1559
  %v1609 = vmax.f32 %v1511, %v1560
  %v1610 = vmax.f32 %v1512, %v1561
  %v1611 = vmax.f32 %v1513, %v1562
  %v1612 = vmax.f32 %v1514, %v1563
  %v1613 = vmax.f32 %v1515, %v1564
  %v1614 = vmax.f32 %v1516, %v1565
  %v1615 = vmax.f32 %v1517, %v1566
  %v1616 = vld [vmem:[%s2] sm:$0x1]
  %v1618 = vlaneseq
  %v1619 = vshrl.u32 %v1618, 7
  %v1620 = vsub.s32 0, %v1619
  %v1621 = vrot.slane %v1616, %v1620
  %v1623 = vadd.f32 %v1567, %v1621
  %v1624 = vadd.f32 %v1568, %v1621
  %v1625 = vadd.f32 %v1569, %v1621
  %v1626 = vadd.f32 %v1570, %v1621
  %v1627 = vadd.f32 %v1571, %v1621
  %v1628 = vadd.f32 %v1572, %v1621
  %v1629 = vadd.f32 %v1573, %v1621
  %v1630 = vadd.f32 %v1574, %v1621
  %v1631 = vadd.f32 %v1575, %v1621
  %v1632 = vadd.f32 %v1576, %v1621
  %v1633 = vadd.f32 %v1577, %v1621
  %v1634 = vadd.f32 %v1578, %v1621
  %v1635 = vadd.f32 %v1579, %v1621
  %v1636 = vadd.f32 %v1580, %v1621
  %v1637 = vadd.f32 %v1581, %v1621
  %v1638 = vadd.f32 %v1582, %v1621
  %v1639 = vadd.f32 %v1583, %v1621
  %v1640 = vadd.f32 %v1584, %v1621
  %v1641 = vadd.f32 %v1585, %v1621
  %v1642 = vadd.f32 %v1586, %v1621
  %v1643 = vadd.f32 %v1587, %v1621
  %v1644 = vadd.f32 %v1588, %v1621
  %v1645 = vadd.f32 %v1589, %v1621
  %v1646 = vadd.f32 %v1590, %v1621
  %v1647 = vadd.f32 %v1591, %v1621
  %v1648 = vadd.f32 %v1592, %v1621
  %v1649 = vadd.f32 %v1593, %v1621
  %v1650 = vadd.f32 %v1594, %v1621
  %v1651 = vadd.f32 %v1595, %v1621
  %v1652 = vadd.f32 %v1596, %v1621
  %v1653 = vadd.f32 %v1597, %v1621
  %v1654 = vadd.f32 %v1598, %v1621
  %v1655 = vadd.f32 %v1599, %v1621
  %v1656 = vadd.f32 %v1600, %v1621
  %v1657 = vadd.f32 %v1601, %v1621
  %v1658 = vadd.f32 %v1602, %v1621
  %v1659 = vadd.f32 %v1603, %v1621
  %v1660 = vadd.f32 %v1604, %v1621
  %v1661 = vadd.f32 %v1605, %v1621
  %v1662 = vadd.f32 %v1606, %v1621
  %v1663 = vadd.f32 %v1607, %v1621
  %v1664 = vadd.f32 %v1608, %v1621
  %v1665 = vadd.f32 %v1609, %v1621
  %v1666 = vadd.f32 %v1610, %v1621
  %v1667 = vadd.f32 %v1611, %v1621
  %v1668 = vadd.f32 %v1612, %v1621
  %v1669 = vadd.f32 %v1613, %v1621
  %v1670 = vadd.f32 %v1614, %v1621
  %v1671 = vadd.f32 %v1615, %v1621
  %v1672 = vmax.f32 %v1623, 0.0
  %v1673 = vmax.f32 %v1624, 0.0
  %v1674 = vmax.f32 %v1625, 0.0
  %v1675 = vmax.f32 %v1626, 0.0
  %v1676 = vmax.f32 %v1627, 0.0
  %v1677 = vmax.f32 %v1628, 0.0
  %v1678 = vmax.f32 %v1629, 0.0
  %v1679 = vmax.f32 %v1630, 0.0
  %v1680 = vmax.f32 %v1631, 0.0
  %v1681 = vmax.f32 %v1632, 0.0
  %v1682 = vmax.f32 %v1633, 0.0
  %v1683 = vmax.f32 %v1634, 0.0
  %v1684 = vmax.f32 %v1635, 0.0
  %v1685 = vmax.f32 %v1636, 0.0
  %v1686 = vmax.f32 %v1637, 0.0
  %v1687 = vmax.f32 %v1638, 0.0
  %v1688 = vmax.f32 %v1639, 0.0
  %v1689 = vmax.f32 %v1640, 0.0
  %v1690 = vmax.f32 %v1641, 0.0
  %v1691 = vmax.f32 %v1642, 0.0
  %v1692 = vmax.f32 %v1643, 0.0
  %v1693 = vmax.f32 %v1644, 0.0
  %v1694 = vmax.f32 %v1645, 0.0
  %v1695 = vmax.f32 %v1646, 0.0
  %v1696 = vmax.f32 %v1647, 0.0
  %v1697 = vmax.f32 %v1648, 0.0
  %v1698 = vmax.f32 %v1649, 0.0
  %v1699 = vmax.f32 %v1650, 0.0
  %v1700 = vmax.f32 %v1651, 0.0
  %v1701 = vmax.f32 %v1652, 0.0
  %v1702 = vmax.f32 %v1653, 0.0
  %v1703 = vmax.f32 %v1654, 0.0
  %v1704 = vmax.f32 %v1655, 0.0
  %v1705 = vmax.f32 %v1656, 0.0
  %v1706 = vmax.f32 %v1657, 0.0
  %v1707 = vmax.f32 %v1658, 0.0
  %v1708 = vmax.f32 %v1659, 0.0
  %v1709 = vmax.f32 %v1660, 0.0
  %v1710 = vmax.f32 %v1661, 0.0
  %v1711 = vmax.f32 %v1662, 0.0
  %v1712 = vmax.f32 %v1663, 0.0
  %v1713 = vmax.f32 %v1664, 0.0
  %v1714 = vmax.f32 %v1665, 0.0
  %v1715 = vmax.f32 %v1666, 0.0
  %v1716 = vmax.f32 %v1667, 0.0
  %v1717 = vmax.f32 %v1668, 0.0
  %v1718 = vmax.f32 %v1669, 0.0
  %v1719 = vmax.f32 %v1670, 0.0
  %v1720 = vmax.f32 %v1671, 0.0
  %1721 = vst [vmem:[%s3] sm:$0xff] %v1672
  %1722 = vst [vmem:[%s3 + $0x8] sm:$0xff] %v1673
  %1723 = vst [vmem:[%s3 + $0x10] sm:$0xff] %v1674
  %1724 = vst [vmem:[%s3 + $0x18] sm:$0xff] %v1675
  %1725 = vst [vmem:[%s3 + $0x20] sm:$0xff] %v1676
  %1726 = vst [vmem:[%s3 + $0x28] sm:$0xff] %v1677
  %1727 = vst [vmem:[%s3 + $0x30] sm:$0xff] %v1678
  %1728 = vst [vmem:[%s3 + $0x38] sm:$0xff] %v1679
  %1729 = vst [vmem:[%s3 + $0x40] sm:$0xff] %v1680
  %1730 = vst [vmem:[%s3 + $0x48] sm:$0xff] %v1681
  %1731 = vst [vmem:[%s3 + $0x50] sm:$0xff] %v1682
  %1732 = vst [vmem:[%s3 + $0x58] sm:$0xff] %v1683
  %1733 = vst [vmem:[%s3 + $0x60] sm:$0xff] %v1684
  %1734 = vst [vmem:[%s3 + $0x68] sm:$0xff] %v1685
  %1735 = vst [vmem:[%s3 + $0x70] sm:$0xff] %v1686
  %1736 = vst [vmem:[%s3 + $0x78] sm:$0xff] %v1687
  %1737 = vst [vmem:[%s3 + $0x80] sm:$0xff] %v1688
  %1738 = vst [vmem:[%s3 + $0x88] sm:$0xff] %v1689
  %1739 = vst [vmem:[%s3 + $0x90] sm:$0xff] %v1690
  %1740 = vst [vmem:[%s3 + $0x98] sm:$0xff] %v1691
  %1741 = vst [vmem:[%s3 + $0xa0] sm:$0xff] %v1692
  %1742 = vst [vmem:[%s3 + $0xa8] sm:$0xff] %v1693
  %1743 = vst [vmem:[%s3 + $0xb0] sm:$0xff] %v1694
  %1744 = vst [vmem:[%s3 + $0xb8] sm:$0xff] %v1695
  %1745 = vst [vmem:[%s3 + $0xc0] sm:$0xff] %v1696
  %1746 = vst [vmem:[%s3 + $0xc8] sm:$0xff] %v1697
  %1747 = vst [vmem:[%s3 + $0xd0] sm:$0xff] %v1698
  %1748 = vst [vmem:[%s3 + $0xd8] sm:$0xff] %v1699
  %1749 = vst [vmem:[%s3 + $0xe0] sm:$0xff] %v1700
  %1750 = vst [vmem:[%s3 + $0xe8] sm:$0xff] %v1701
  %1751 = vst [vmem:[%s3 + $0xf0] sm:$0xff] %v1702
  %1752 = vst [vmem:[%s3 + $0xf8] sm:$0xff] %v1703
  %1753 = vst [vmem:[%s3 + $0x100] sm:$0xff] %v1704
  %1754 = vst [vmem:[%s3 + $0x108] sm:$0xff] %v1705
  %1755 = vst [vmem:[%s3 + $0x110] sm:$0xff] %v1706
  %1756 = vst [vmem:[%s3 + $0x118] sm:$0xff] %v1707
  %1757 = vst [vmem:[%s3 + $0x120] sm:$0xff] %v1708
  %1758 = vst [vmem:[%s3 + $0x128] sm:$0xff] %v1709
  %1759 = vst [vmem:[%s3 + $0x130] sm:$0xff] %v1710
  %1760 = vst [vmem:[%s3 + $0x138] sm:$0xff] %v1711
  %1761 = vst [vmem:[%s3 + $0x140] sm:$0xff] %v1712
  %1762 = vst [vmem:[%s3 + $0x148] sm:$0xff] %v1713
  %1763 = vst [vmem:[%s3 + $0x150] sm:$0xff] %v1714
  %1764 = vst [vmem:[%s3 + $0x158] sm:$0xff] %v1715
  %1765 = vst [vmem:[%s3 + $0x160] sm:$0xff] %v1716
  %1766 = vst [vmem:[%s3 + $0x168] sm:$0xff] %v1717
  %1767 = vst [vmem:[%s3 + $0x170] sm:$0xff] %v1718
  %1768 = vst [vmem:[%s3 + $0x178] sm:$0xff] %v1719
  %1769 = vst [vmem:[%s3 + $0x180] sm:$0xff] %v1720
  // Predicated region
  $region14: #{_lenet_forward_impl.2} parent=0 // pred_check
    _
  $region15: #{_lenet_forward_impl.2} parent=0 // pred_check_branch
    %1771 = sbr.rel (0) target = $region17
  $region16: #{_lenet_forward_impl.2} parent=0 // pred_region
    _
  $region17: #{_lenet_forward_impl.2} parent=0 // pred_fallthru
    _
  // Predicated region
  $region18: #{_lenet_forward_impl.2} parent=0 // pred_check
    _
  $region19: #{_lenet_forward_impl.2} parent=0 // pred_check_branch
    %1773 = sbr.rel (0) target = $region21
  $region20: #{_lenet_forward_impl.2} parent=0 // pred_region
    _
  $region21: #{_lenet_forward_impl.2} parent=0 // pred_fallthru
    _

// kernel: _lenet_forward_impl.3
$region0: #{_lenet_forward_impl.3}
  #allocation0 [shape = 'u32[]', space=smem, size = 0x4, offset = 0x4, fixed_abs, tag = 'smem constant byte address 0x4 - core index']
  #allocation1 [shape = 'u32[144,128]{1,0:T(1,128)}', space=vmem, size = 0x12000, scoped, tag = 'internal scratch']
  %s0 = inlined_call_operand.vmem [shape: f32[4,200,256], index: 0, kind: input, shape index: {}]
  %s1 = inlined_call_operand.vmem [shape: f32[256,128], index: 1, kind: input, shape index: {}]
  %s2 = inlined_call_operand.vmem [shape: f32[1,128], index: 2, kind: input, shape index: {}]
  %s3 = inlined_call_operand.vmem [shape: f32[25,128,256], index: 3, kind: input, shape index: {}]
  %s4 = inlined_call_operand.vmem [shape: f32[1,256], index: 4, kind: input, shape index: {}]
  %s5 = inlined_call_operand.vmem [shape: f32[256,128], index: 5, kind: input, shape index: {}]
  %s6 = inlined_call_operand.vmem [shape: f32[1,128], index: 6, kind: input, shape index: {}]
  %s7 = inlined_call_operand.vmem [shape: f32[128,128], index: 7, kind: input, shape index: {}]
  %s8 = inlined_call_operand.vmem [shape: f32[1,128], index: 8, kind: input, shape index: {}]
  %s9 = inlined_call_operand.vmem [shape: f32[8,128], index: 9, kind: output, shape index: {}]
  %s10 = sld [smem:[#allocation0]]
  $region46: #{_lenet_forward_impl.3} parent=0
    _
  %s12 = ssub.s32 1, %s10
  %s13 = scalar_select 0, %s12, %s10
  // Predicated region
  $region2: #{_lenet_forward_impl.3} parent=0 // pred_check
    _
  $region3: #{_lenet_forward_impl.3} parent=0 // pred_check_branch
    %15 = sbr.rel (0) target = $region5
  $region4: #{_lenet_forward_impl.3} parent=0 // pred_region
    _
  $region5: #{_lenet_forward_impl.3} parent=0 // pred_fallthru
    _
  // Predicated region
  $region6: #{_lenet_forward_impl.3} parent=0 // pred_check
    _
  $region7: #{_lenet_forward_impl.3} parent=0 // pred_check_branch
    %17 = sbr.rel (0) target = $region9
  $region8: #{_lenet_forward_impl.3} parent=0 // pred_region
    _
  $region9: #{_lenet_forward_impl.3} parent=0 // pred_fallthru
    _
  // Predicated region
  $region10: #{_lenet_forward_impl.3} parent=0 // pred_check
    _
  $region11: #{_lenet_forward_impl.3} parent=0 // pred_check_branch
    %19 = sbr.rel (0) target = $region13
  $region12: #{_lenet_forward_impl.3} parent=0 // pred_region
    _
  $region13: #{_lenet_forward_impl.3} parent=0 // pred_fallthru
    _
  // Predicated region
  $region14: #{_lenet_forward_impl.3} parent=0 // pred_check
    _
  $region15: #{_lenet_forward_impl.3} parent=0 // pred_check_branch
    %21 = sbr.rel (0) target = $region17
  $region16: #{_lenet_forward_impl.3} parent=0 // pred_region
    _
  $region17: #{_lenet_forward_impl.3} parent=0 // pred_fallthru
    _
  // Predicated region
  $region18: #{_lenet_forward_impl.3} parent=0 // pred_check
    _
  $region19: #{_lenet_forward_impl.3} parent=0 // pred_check_branch
    %23 = sbr.rel (0) target = $region21
  $region20: #{_lenet_forward_impl.3} parent=0 // pred_region
    _
  $region21: #{_lenet_forward_impl.3} parent=0 // pred_fallthru
    _
  // Predicated region
  $region22: #{_lenet_forward_impl.3} parent=0 // pred_check
    _
  $region23: #{_lenet_forward_impl.3} parent=0 // pred_check_branch
    %25 = sbr.rel (0) target = $region25
  $region24: #{_lenet_forward_impl.3} parent=0 // pred_region
    _
  $region25: #{_lenet_forward_impl.3} parent=0 // pred_fallthru
    _
  // Predicated region
  $region26: #{_lenet_forward_impl.3} parent=0 // pred_check
    _
  $region27: #{_lenet_forward_impl.3} parent=0 // pred_check_branch
    %27 = sbr.rel (0) target = $region29
  $region28: #{_lenet_forward_impl.3} parent=0 // pred_region
    _
  $region29: #{_lenet_forward_impl.3} parent=0 // pred_fallthru
    _
  // Predicated region
  $region30: #{_lenet_forward_impl.3} parent=0 // pred_check
    _
  $region31: #{_lenet_forward_impl.3} parent=0 // pred_check_branch
    %29 = sbr.rel (0) target = $region33
  $region32: #{_lenet_forward_impl.3} parent=0 // pred_region
    _
  $region33: #{_lenet_forward_impl.3} parent=0 // pred_fallthru
    _
  // Predicated region
  $region34: #{_lenet_forward_impl.3} parent=0 // pred_check
    _
  $region35: #{_lenet_forward_impl.3} parent=0 // pred_check_branch
    %31 = sbr.rel (0) target = $region37
  $region36: #{_lenet_forward_impl.3} parent=0 // pred_region
    _
  $region37: #{_lenet_forward_impl.3} parent=0 // pred_fallthru
    _
  %v32 = vld [vmem:[%s1] sm:$0xff]
  %v33 = vld [vmem:[%s1 + $0x8] sm:$0xff]
  %v34 = vld [vmem:[%s1 + $0x10] sm:$0xff]
  %v35 = vld [vmem:[%s1 + $0x18] sm:$0xff]
  %v36 = vld [vmem:[%s1 + $0x20] sm:$0xff]
  %v37 = vld [vmem:[%s1 + $0x28] sm:$0xff]
  %v38 = vld [vmem:[%s1 + $0x30] sm:$0xff]
  %v39 = vld [vmem:[%s1 + $0x38] sm:$0xff]
  %v40 = vld [vmem:[%s1 + $0x40] sm:$0xff]
  %v41 = vld [vmem:[%s1 + $0x48] sm:$0xff]
  %v42 = vld [vmem:[%s1 + $0x50] sm:$0xff]
  %v43 = vld [vmem:[%s1 + $0x58] sm:$0xff]
  %v44 = vld [vmem:[%s1 + $0x60] sm:$0xff]
  %v45 = vld [vmem:[%s1 + $0x68] sm:$0xff]
  %v46 = vld [vmem:[%s1 + $0x70] sm:$0xff]
  %v47 = vld [vmem:[%s1 + $0x78] sm:$0xff]
  %v48 = vld [vmem:[%s1 + $0x80] sm:$0xff]
  %v49 = vld [vmem:[%s1 + $0x88] sm:$0xff]
  %v50 = vld [vmem:[%s1 + $0x90] sm:$0xff]
  %v51 = vld [vmem:[%s1 + $0x98] sm:$0xff]
  %v52 = vld [vmem:[%s1 + $0xa0] sm:$0xff]
  %v53 = vld [vmem:[%s1 + $0xa8] sm:$0xff]
  %v54 = vld [vmem:[%s1 + $0xb0] sm:$0xff]
  %v55 = vld [vmem:[%s1 + $0xb8] sm:$0xff]
  %v56 = vld [vmem:[%s1 + $0xc0] sm:$0xff]
  %v57 = vld [vmem:[%s1 + $0xc8] sm:$0xff]
  %v58 = vld [vmem:[%s1 + $0xd0] sm:$0xff]
  %v59 = vld [vmem:[%s1 + $0xd8] sm:$0xff]
  %v60 = vld [vmem:[%s1 + $0xe0] sm:$0xff]
  %v61 = vld [vmem:[%s1 + $0xe8] sm:$0xff]
  %v62 = vld [vmem:[%s1 + $0xf0] sm:$0xff]
  %v63 = vld [vmem:[%s1 + $0xf8] sm:$0xff]
  %v64 = vld [vmem:[%s0] sm:$0xff]
  %v65 = vld [vmem:[%s0 + $0x8] sm:$0xff]
  %v66 = vld [vmem:[%s0 + $0x10] sm:$0xff]
  %v67 = vld [vmem:[%s0 + $0x18] sm:$0xff]
  %v68 = vld [vmem:[%s0 + $0x20] sm:$0xff]
  %v69 = vld [vmem:[%s0 + $0x28] sm:$0xff]
  %v70 = vld [vmem:[%s0 + $0x30] sm:$0xff]
  %v71 = vld [vmem:[%s0 + $0x38] sm:$0xff]
  %v72 = vld [vmem:[%s0 + $0x40] sm:$0xff]
  %v73 = vld [vmem:[%s0 + $0x48] sm:$0xff]
  %v74 = vld [vmem:[%s0 + $0x50] sm:$0xff]
  %v75 = vld [vmem:[%s0 + $0x58] sm:$0xff]
  %v76 = vld [vmem:[%s0 + $0x60] sm:$0xff]
  %v77 = vld [vmem:[%s0 + $0x68] sm:$0xff]
  %v78 = vld [vmem:[%s0 + $0x70] sm:$0xff]
  %v79 = vld [vmem:[%s0 + $0x78] sm:$0xff]
  %v80 = vld [vmem:[%s0 + $0x80] sm:$0xff]
  %v81 = vld [vmem:[%s0 + $0x88] sm:$0xff]
  %v82 = vld [vmem:[%s0 + $0x90] sm:$0xff]
  %v83 = vld [vmem:[%s0 + $0x98] sm:$0xff]
  %v84 = vld [vmem:[%s0 + $0xa0] sm:$0xff]
  %v85 = vld [vmem:[%s0 + $0xa8] sm:$0xff]
  %v86 = vld [vmem:[%s0 + $0xb0] sm:$0xff]
  %v87 = vld [vmem:[%s0 + $0xb8] sm:$0xff]
  %v88 = vld [vmem:[%s0 + $0xc0] sm:$0xff]
  %v89 = vld [vmem:[%s0 + $0xc8] sm:$0xff]
  %v90 = vld [vmem:[%s0 + $0xd0] sm:$0xff]
  %v91 = vld [vmem:[%s0 + $0xd8] sm:$0xff]
  %v92 = vld [vmem:[%s0 + $0xe0] sm:$0xff]
  %v93 = vld [vmem:[%s0 + $0xe8] sm:$0xff]
  %v94 = vld [vmem:[%s0 + $0xf0] sm:$0xff]
  %v95 = vld [vmem:[%s0 + $0xf8] sm:$0xff]
  %v96 = vld [vmem:[%s0 + $0x100] sm:$0xff]
  %v97 = vld [vmem:[%s0 + $0x108] sm:$0xff]
  %v98 = vld [vmem:[%s0 + $0x110] sm:$0xff]
  %v99 = vld [vmem:[%s0 + $0x118] sm:$0xff]
  %v100 = vld [vmem:[%s0 + $0x120] sm:$0xff]
  %v101 = vld [vmem:[%s0 + $0x128] sm:$0xff]
  %v102 = vld [vmem:[%s0 + $0x130] sm:$0xff]
  %v103 = vld [vmem:[%s0 + $0x138] sm:$0xff]
  %v104 = vld [vmem:[%s0 + $0x140] sm:$0xff]
  %v105 = vld [vmem:[%s0 + $0x148] sm:$0xff]
  %v106 = vld [vmem:[%s0 + $0x150] sm:$0xff]
  %v107 = vld [vmem:[%s0 + $0x158] sm:$0xff]
  %v108 = vld [vmem:[%s0 + $0x160] sm:$0xff]
  %v109 = vld [vmem:[%s0 + $0x168] sm:$0xff]
  %v110 = vld [vmem:[%s0 + $0x170] sm:$0xff]
  %v111 = vld [vmem:[%s0 + $0x178] sm:$0xff]
  %v112 = vld [vmem:[%s0 + $0x180] sm:$0xff]
  %v113 = vld [vmem:[%s0 + $0x188] sm:$0xff]
  %114 = vmatprep.subr.mxu0 0.0
  %115 = vmatpush1.msra.mxu0 %v32
  %116 = vmatprep.subr.mxu0 0.0
  %117 = vmatpush1.msra.mxu0 %v33
  %118 = vmatprep.subr.mxu0 0.0
  %119 = vmatpush1.msra.mxu0 %v34
  %120 = vmatprep.subr.mxu0 0.0
  %121 = vmatpush1.msra.mxu0 %v35
  %122 = vmatprep.subr.mxu0 0.0
  %123 = vmatpush1.msra.mxu0 %v36
  %124 = vmatprep.subr.mxu0 0.0
  %125 = vmatpush1.msra.mxu0 %v37
  %126 = vmatprep.subr.mxu0 0.0
  %127 = vmatpush1.msra.mxu0 %v38
  %128 = vmatprep.subr.mxu0 0.0
  %129 = vmatpush1.msra.mxu0 %v39
  %130 = vmatprep.subr.mxu0 0.0
  %131 = vmatpush1.msra.mxu0 %v40
  %132 = vmatprep.subr.mxu0 0.0
  %133 = vmatpush1.msra.mxu0 %v41
  %134 = vmatprep.subr.mxu0 0.0
  %135 = vmatpush1.msra.mxu0 %v42
  %136 = vmatprep.subr.mxu0 0.0
  %137 = vmatpush1.msra.mxu0 %v43
  %138 = vmatprep.subr.mxu0 0.0
  %139 = vmatpush1.msra.mxu0 %v44
  %140 = vmatprep.subr.mxu0 0.0
  %141 = vmatpush1.msra.mxu0 %v45
  %142 = vmatprep.subr.mxu0 0.0
  %143 = vmatpush1.msra.mxu0 %v46
  %144 = vmatprep.subr.mxu0 0.0
  %145 = vmatpush1.msra.mxu0 %v47
  %146 = vmatprep.subr.mxu0 0.0
  %147 = vmatpush1.msra.mxu0 %v48
  %148 = vmatprep.subr.mxu0 0.0
  %149 = vmatpush1.msra.mxu0 %v49
  %150 = vmatprep.subr.mxu0 0.0
  %151 = vmatpush1.msra.mxu0 %v50
  %152 = vmatprep.subr.mxu0 0.0
  %153 = vmatpush1.msra.mxu0 %v51
  %154 = vmatprep.subr.mxu0 0.0
  %155 = vmatpush1.msra.mxu0 %v52
  %156 = vmatprep.subr.mxu0 0.0
  %157 = vmatpush1.msra.mxu0 %v53
  %158 = vmatprep.subr.mxu0 0.0
  %159 = vmatpush1.msra.mxu0 %v54
  %160 = vmatprep.subr.mxu0 0.0
  %161 = vmatpush1.msra.mxu0 %v55
  %162 = vmatprep.subr.mxu0 0.0
  %163 = vmatpush1.msra.mxu0 %v56
  %164 = vmatprep.subr.mxu0 0.0
  %165 = vmatpush1.msra.mxu0 %v57
  %166 = vmatprep.subr.mxu0 0.0
  %167 = vmatpush1.msra.mxu0 %v58
  %168 = vmatprep.subr.mxu0 0.0
  %169 = vmatpush1.msra.mxu0 %v59
  %170 = vmatprep.subr.mxu0 0.0
  %171 = vmatpush1.msra.mxu0 %v60
  %172 = vmatprep.subr.mxu0 0.0
  %173 = vmatpush1.msra.mxu0 %v61
  %174 = vmatprep.subr.mxu0 0.0
  %175 = vmatpush1.msra.mxu0 %v62
  %176 = vmatprep.subr.mxu0 0.0
  %177 = vmatpush1.msra.mxu0 %v63
  %178 = vmatprep.mubr.f32.mxu0 %v65
  %179 = vmatmul.mubr.f32.gmra.mrb[0].mxu0 %v64
  %v180 = vpop.f32.mrb[0].mxu0
  %v181 = vadd.f32 0.0, %v180
  %v182 = vpop.f32.mrb[0].mxu0
  %183 = vmatprep.mubr.f32.mxu0 %v67
  %184 = vmatmul.mubr.f32.gmra.mrb[0].mxu0 %v66
  %v185 = vpop.f32.mrb[0].mxu0
  %v186 = vadd.f32 0.0, %v185
  %v187 = vpop.f32.mrb[0].mxu0
  %188 = vmatprep.mubr.f32.mxu0 %v69
  %189 = vmatmul.mubr.f32.gmra.mrb[0].mxu0 %v68
  %v190 = vpop.f32.mrb[0].mxu0
  %v191 = vadd.f32 0.0, %v190
  %v192 = vpop.f32.mrb[0].mxu0
  %193 = vmatprep.mubr.f32.mxu0 %v71
  %194 = vmatmul.mubr.f32.gmra.mrb[0].mxu0 %v70
  %v195 = vpop.f32.mrb[0].mxu0
  %v196 = vadd.f32 0.0, %v195
  %v197 = vpop.f32.mrb[0].mxu0
  %198 = vmatprep.mubr.f32.mxu0 %v73
  %199 = vmatmul.mubr.f32.gmra.mrb[0].mxu0 %v72
  %v200 = vpop.f32.mrb[0].mxu0
  %v201 = vadd.f32 0.0, %v200
  %v202 = vpop.f32.mrb[0].mxu0
  %203 = vmatprep.mubr.f32.mxu0 %v75
  %204 = vmatmul.mubr.f32.gmra.mrb[0].mxu0 %v74
  %v205 = vpop.f32.mrb[0].mxu0
  %v206 = vadd.f32 0.0, %v205
  %v207 = vpop.f32.mrb[0].mxu0
  %208 = vmatprep.mubr.f32.mxu0 %v77
  %209 = vmatmul.mubr.f32.gmra.mrb[0].mxu0 %v76
  %v210 = vpop.f32.mrb[0].mxu0
  %v211 = vadd.f32 0.0, %v210
  %v212 = vpop.f32.mrb[0].mxu0
  %213 = vmatprep.mubr.f32.mxu0 %v79
  %214 = vmatmul.mubr.f32.gmra.mrb[0].mxu0 %v78
  %v215 = vpop.f32.mrb[0].mxu0
  %v216 = vadd.f32 0.0, %v215
  %v217 = vpop.f32.mrb[0].mxu0
  %218 = vmatprep.mubr.f32.mxu0 %v81
  %219 = vmatmul.mubr.f32.gmra.mrb[0].mxu0 %v80
  %v220 = vpop.f32.mrb[0].mxu0
  %v221 = vadd.f32 0.0, %v220
  %v222 = vpop.f32.mrb[0].mxu0
  %223 = vmatprep.mubr.f32.mxu0 %v83
  %224 = vmatmul.mubr.f32.gmra.mrb[0].mxu0 %v82
  %v225 = vpop.f32.mrb[0].mxu0
  %v226 = vadd.f32 0.0, %v225
  %v227 = vpop.f32.mrb[0].mxu0
  %228 = vmatprep.mubr.f32.mxu0 %v85
  %229 = vmatmul.mubr.f32.gmra.mrb[0].mxu0 %v84
  %v230 = vpop.f32.mrb[0].mxu0
  %v231 = vadd.f32 0.0, %v230
  %v232 = vpop.f32.mrb[0].mxu0
  %233 = vmatprep.mubr.f32.mxu0 %v87
  %234 = vmatmul.mubr.f32.gmra.mrb[0].mxu0 %v86
  %v235 = vpop.f32.mrb[0].mxu0
  %v236 = vadd.f32 0.0, %v235
  %v237 = vpop.f32.mrb[0].mxu0
  %238 = vmatprep.mubr.f32.mxu0 %v89
  %239 = vmatmul.mubr.f32.gmra.mrb[0].mxu0 %v88
  %v240 = vpop.f32.mrb[0].mxu0
  %v241 = vadd.f32 0.0, %v240
  %v242 = vpop.f32.mrb[0].mxu0
  %243 = vmatprep.mubr.f32.mxu0 %v91
  %244 = vmatmul.mubr.f32.gmra.mrb[0].mxu0 %v90
  %v245 = vpop.f32.mrb[0].mxu0
  %v246 = vadd.f32 0.0, %v245
  %v247 = vpop.f32.mrb[0].mxu0
  %248 = vmatprep.mubr.f32.mxu0 %v93
  %249 = vmatmul.mubr.f32.gmra.mrb[0].mxu0 %v92
  %v250 = vpop.f32.mrb[0].mxu0
  %v251 = vadd.f32 0.0, %v250
  %v252 = vpop.f32.mrb[0].mxu0
  %253 = vmatprep.mubr.f32.mxu0 %v95
  %254 = vmatmul.mubr.f32.gmra.mrb[0].mxu0 %v94
  %v255 = vpop.f32.mrb[0].mxu0
  %v256 = vadd.f32 0.0, %v255
  %v257 = vpop.f32.mrb[0].mxu0
  %258 = vmatprep.mubr.f32.mxu0 %v97
  %259 = vmatmul.mubr.f32.gmra.mrb[0].mxu0 %v96
  %v260 = vpop.f32.mrb[0].mxu0
  %v261 = vadd.f32 0.0, %v260
  %v262 = vpop.f32.mrb[0].mxu0
  %263 = vmatprep.mubr.f32.mxu0 %v99
  %264 = vmatmul.mubr.f32.gmra.mrb[0].mxu0 %v98
  %v265 = vpop.f32.mrb[0].mxu0
  %v266 = vadd.f32 0.0, %v265
  %v267 = vpop.f32.mrb[0].mxu0
  %268 = vmatprep.mubr.f32.mxu0 %v101
  %269 = vmatmul.mubr.f32.gmra.mrb[0].mxu0 %v100
  %v270 = vpop.f32.mrb[0].mxu0
  %v271 = vadd.f32 0.0, %v270
  %v272 = vpop.f32.mrb[0].mxu0
  %273 = vmatprep.mubr.f32.mxu0 %v103
  %274 = vmatmul.mubr.f32.gmra.mrb[0].mxu0 %v102
  %v275 = vpop.f32.mrb[0].mxu0
  %v276 = vadd.f32 0.0, %v275
  %v277 = vpop.f32.mrb[0].mxu0
  %278 = vmatprep.mubr.f32.mxu0 %v105
  %279 = vmatmul.mubr.f32.gmra.mrb[0].mxu0 %v104
  %v280 = vpop.f32.mrb[0].mxu0
  %v281 = vadd.f32 0.0, %v280
  %v282 = vpop.f32.mrb[0].mxu0
  %283 = vmatprep.mubr.f32.mxu0 %v107
  %284 = vmatmul.mubr.f32.gmra.mrb[0].mxu0 %v106
  %v285 = vpop.f32.mrb[0].mxu0
  %v286 = vadd.f32 0.0, %v285
  %v287 = vpop.f32.mrb[0].mxu0
  %288 = vmatprep.mubr.f32.mxu0 %v109
  %289 = vmatmul.mubr.f32.gmra.mrb[0].mxu0 %v108
  %v290 = vpop.f32.mrb[0].mxu0
  %v291 = vadd.f32 0.0, %v290
  %v292 = vpop.f32.mrb[0].mxu0
  %293 = vmatprep.mubr.f32.mxu0 %v111
  %294 = vmatmul.mubr.f32.gmra.mrb[0].mxu0 %v110
  %v295 = vpop.f32.mrb[0].mxu0
  %v296 = vadd.f32 0.0, %v295
  %v297 = vpop.f32.mrb[0].mxu0
  %298 = vmatprep.mubr.f32.mxu0 %v113
  %299 = vmatmul.mubr.f32.gmra.mrb[0].mxu0 %v112
  %v300 = vpop.f32.mrb[0].mxu0
  %v301 = vadd.f32 0.0, %v300
  %v302 = vpop.f32.mrb[0].mxu0
  %303 = vdwg.mxu0
  %s304 = scalar_lea.vmem %s0, 400
  %v305 = vld [vmem:[%s304] sm:$0xff]
  %v306 = vld [vmem:[%s304 + $0x8] sm:$0xff]
  %v307 = vld [vmem:[%s304 + $0x10] sm:$0xff]
  %v308 = vld [vmem:[%s304 + $0x18] sm:$0xff]
  %v309 = vld [vmem:[%s304 + $0x20] sm:$0xff]
  %v310 = vld [vmem:[%s304 + $0x28] sm:$0xff]
  %v311 = vld [vmem:[%s304 + $0x30] sm:$0xff]
  %v312 = vld [vmem:[%s304 + $0x38] sm:$0xff]
  %v313 = vld [vmem:[%s304 + $0x40] sm:$0xff]
  %v314 = vld [vmem:[%s304 + $0x48] sm:$0xff]
  %v315 = vld [vmem:[%s304 + $0x50] sm:$0xff]
  %v316 = vld [vmem:[%s304 + $0x58] sm:$0xff]
  %v317 = vld [vmem:[%s304 + $0x60] sm:$0xff]
  %v318 = vld [vmem:[%s304 + $0x68] sm:$0xff]
  %v319 = vld [vmem:[%s304 + $0x70] sm:$0xff]
  %v320 = vld [vmem:[%s304 + $0x78] sm:$0xff]
  %v321 = vld [vmem:[%s304 + $0x80] sm:$0xff]
  %v322 = vld [vmem:[%s304 + $0x88] sm:$0xff]
  %v323 = vld [vmem:[%s304 + $0x90] sm:$0xff]
  %v324 = vld [vmem:[%s304 + $0x98] sm:$0xff]
  %v325 = vld [vmem:[%s304 + $0xa0] sm:$0xff]
  %v326 = vld [vmem:[%s304 + $0xa8] sm:$0xff]
  %v327 = vld [vmem:[%s304 + $0xb0] sm:$0xff]
  %v328 = vld [vmem:[%s304 + $0xb8] sm:$0xff]
  %v329 = vld [vmem:[%s304 + $0xc0] sm:$0xff]
  %v330 = vld [vmem:[%s304 + $0xc8] sm:$0xff]
  %v331 = vld [vmem:[%s304 + $0xd0] sm:$0xff]
  %v332 = vld [vmem:[%s304 + $0xd8] sm:$0xff]
  %v333 = vld [vmem:[%s304 + $0xe0] sm:$0xff]
  %v334 = vld [vmem:[%s304 + $0xe8] sm:$0xff]
  %v335 = vld [vmem:[%s304 + $0xf0] sm:$0xff]
  %v336 = vld [vmem:[%s304 + $0xf8] sm:$0xff]
  %v337 = vld [vmem:[%s304 + $0x100] sm:$0xff]
  %v338 = vld [vmem:[%s304 + $0x108] sm:$0xff]
  %v339 = vld [vmem:[%s304 + $0x110] sm:$0xff]
  %v340 = vld [vmem:[%s304 + $0x118] sm:$0xff]
  %v341 = vld [vmem:[%s304 + $0x120] sm:$0xff]
  %v342 = vld [vmem:[%s304 + $0x128] sm:$0xff]
  %v343 = vld [vmem:[%s304 + $0x130] sm:$0xff]
  %v344 = vld [vmem:[%s304 + $0x138] sm:$0xff]
  %v345 = vld [vmem:[%s304 + $0x140] sm:$0xff]
  %v346 = vld [vmem:[%s304 + $0x148] sm:$0xff]
  %v347 = vld [vmem:[%s304 + $0x150] sm:$0xff]
  %v348 = vld [vmem:[%s304 + $0x158] sm:$0xff]
  %v349 = vld [vmem:[%s304 + $0x160] sm:$0xff]
  %v350 = vld [vmem:[%s304 + $0x168] sm:$0xff]
  %v351 = vld [vmem:[%s304 + $0x170] sm:$0xff]
  %v352 = vld [vmem:[%s304 + $0x178] sm:$0xff]
  %v353 = vld [vmem:[%s304 + $0x180] sm:$0xff]
  %v354 = vld [vmem:[%s304 + $0x188] sm:$0xff]
  %355 = vmatprep.subr.mxu0 0.0
  %356 = vmatpush1.msra.mxu0 %v32
  %357 = vmatprep.subr.mxu0 0.0
  %358 = vmatpush1.msra.mxu0 %v33
  %359 = vmatprep.subr.mxu0 0.0
  %360 = vmatpush1.msra.mxu0 %v34
  %361 = vmatprep.subr.mxu0 0.0
  %362 = vmatpush1.msra.mxu0 %v35
  %363 = vmatprep.subr.mxu0 0.0
  %364 = vmatpush1.msra.mxu0 %v36
  %365 = vmatprep.subr.mxu0 0.0
  %366 = vmatpush1.msra.mxu0 %v37
  %367 = vmatprep.subr.mxu0 0.0
  %368 = vmatpush1.msra.mxu0 %v38
  %369 = vmatprep.subr.mxu0 0.0
  %370 = vmatpush1.msra.mxu0 %v39
  %371 = vmatprep.subr.mxu0 0.0
  %372 = vmatpush1.msra.mxu0 %v40
  %373 = vmatprep.subr.mxu0 0.0
  %374 = vmatpush1.msra.mxu0 %v41
  %375 = vmatprep.subr.mxu0 0.0
  %376 = vmatpush1.msra.mxu0 %v42
  %377 = vmatprep.subr.mxu0 0.0
  %378 = vmatpush1.msra.mxu0 %v43
  %379 = vmatprep.subr.mxu0 0.0
  %380 = vmatpush1.msra.mxu0 %v44
  %381 = vmatprep.subr.mxu0 0.0
  %382 = vmatpush1.msra.mxu0 %v45
  %383 = vmatprep.subr.mxu0 0.0
  %384 = vmatpush1.msra.mxu0 %v46
  %385 = vmatprep.subr.mxu0 0.0
  %386 = vmatpush1.msra.mxu0 %v47
  %387 = vmatprep.subr.mxu0 0.0
  %388 = vmatpush1.msra.mxu0 %v48
  %389 = vmatprep.subr.mxu0 0.0
  %390 = vmatpush1.msra.mxu0 %v49
  %391 = vmatprep.subr.mxu0 0.0
  %392 = vmatpush1.msra.mxu0 %v50
  %393 = vmatprep.subr.mxu0 0.0
  %394 = vmatpush1.msra.mxu0 %v51
  %395 = vmatprep.subr.mxu0 0.0
  %396 = vmatpush1.msra.mxu0 %v52
  %397 = vmatprep.subr.mxu0 0.0
  %398 = vmatpush1.msra.mxu0 %v53
  %399 = vmatprep.subr.mxu0 0.0
  %400 = vmatpush1.msra.mxu0 %v54
  %401 = vmatprep.subr.mxu0 0.0
  %402 = vmatpush1.msra.mxu0 %v55
  %403 = vmatprep.subr.mxu0 0.0
  %404 = vmatpush1.msra.mxu0 %v56
  %405 = vmatprep.subr.mxu0 0.0
  %406 = vmatpush1.msra.mxu0 %v57
  %407 = vmatprep.subr.mxu0 0.0
  %408 = vmatpush1.msra.mxu0 %v58
  %409 = vmatprep.subr.mxu0 0.0
  %410 = vmatpush1.msra.mxu0 %v59
  %411 = vmatprep.subr.mxu0 0.0
  %412 = vmatpush1.msra.mxu0 %v60
  %413 = vmatprep.subr.mxu0 0.0
  %414 = vmatpush1.msra.mxu0 %v61
  %415 = vmatprep.subr.mxu0 0.0
  %416 = vmatpush1.msra.mxu0 %v62
  %417 = vmatprep.subr.mxu0 0.0
  %418 = vmatpush1.msra.mxu0 %v63
  %419 = vmatprep.mubr.f32.mxu0 %v306
  %420 = vmatmul.mubr.f32.gmra.mrb[0].mxu0 %v305
  %v421 = vpop.f32.mrb[0].mxu0
  %v422 = vadd.f32 0.0, %v421
  %v423 = vpop.f32.mrb[0].mxu0
  %424 = vmatprep.mubr.f32.mxu0 %v308
  %425 = vmatmul.mubr.f32.gmra.mrb[0].mxu0 %v307
  %v426 = vpop.f32.mrb[0].mxu0
  %v427 = vadd.f32 0.0, %v426
  %v428 = vpop.f32.mrb[0].mxu0
  %429 = vmatprep.mubr.f32.mxu0 %v310
  %430 = vmatmul.mubr.f32.gmra.mrb[0].mxu0 %v309
  %v431 = vpop.f32.mrb[0].mxu0
  %v432 = vadd.f32 0.0, %v431
  %v433 = vpop.f32.mrb[0].mxu0
  %434 = vmatprep.mubr.f32.mxu0 %v312
  %435 = vmatmul.mubr.f32.gmra.mrb[0].mxu0 %v311
  %v436 = vpop.f32.mrb[0].mxu0
  %v437 = vadd.f32 0.0, %v436
  %v438 = vpop.f32.mrb[0].mxu0
  %439 = vmatprep.mubr.f32.mxu0 %v314
  %440 = vmatmul.mubr.f32.gmra.mrb[0].mxu0 %v313
  %v441 = vpop.f32.mrb[0].mxu0
  %v442 = vadd.f32 0.0, %v441
  %v443 = vpop.f32.mrb[0].mxu0
  %444 = vmatprep.mubr.f32.mxu0 %v316
  %445 = vmatmul.mubr.f32.gmra.mrb[0].mxu0 %v315
  %v446 = vpop.f32.mrb[0].mxu0
  %v447 = vadd.f32 0.0, %v446
  %v448 = vpop.f32.mrb[0].mxu0
  %449 = vmatprep.mubr.f32.mxu0 %v318
  %450 = vmatmul.mubr.f32.gmra.mrb[0].mxu0 %v317
  %v451 = vpop.f32.mrb[0].mxu0
  %v452 = vadd.f32 0.0, %v451
  %v453 = vpop.f32.mrb[0].mxu0
  %454 = vmatprep.mubr.f32.mxu0 %v320
  %455 = vmatmul.mubr.f32.gmra.mrb[0].mxu0 %v319
  %v456 = vpop.f32.mrb[0].mxu0
  %v457 = vadd.f32 0.0, %v456
  %v458 = vpop.f32.mrb[0].mxu0
  %459 = vmatprep.mubr.f32.mxu0 %v322
  %460 = vmatmul.mubr.f32.gmra.mrb[0].mxu0 %v321
  %v461 = vpop.f32.mrb[0].mxu0
  %v462 = vadd.f32 0.0, %v461
  %v463 = vpop.f32.mrb[0].mxu0
  %464 = vmatprep.mubr.f32.mxu0 %v324
  %465 = vmatmul.mubr.f32.gmra.mrb[0].mxu0 %v323
  %v466 = vpop.f32.mrb[0].mxu0
  %v467 = vadd.f32 0.0, %v466
  %v468 = vpop.f32.mrb[0].mxu0
  %469 = vmatprep.mubr.f32.mxu0 %v326
  %470 = vmatmul.mubr.f32.gmra.mrb[0].mxu0 %v325
  %v471 = vpop.f32.mrb[0].mxu0
  %v472 = vadd.f32 0.0, %v471
  %v473 = vpop.f32.mrb[0].mxu0
  %474 = vmatprep.mubr.f32.mxu0 %v328
  %475 = vmatmul.mubr.f32.gmra.mrb[0].mxu0 %v327
  %v476 = vpop.f32.mrb[0].mxu0
  %v477 = vadd.f32 0.0, %v476
  %v478 = vpop.f32.mrb[0].mxu0
  %479 = vmatprep.mubr.f32.mxu0 %v330
  %480 = vmatmul.mubr.f32.gmra.mrb[0].mxu0 %v329
  %v481 = vpop.f32.mrb[0].mxu0
  %v482 = vadd.f32 0.0, %v481
  %v483 = vpop.f32.mrb[0].mxu0
  %484 = vmatprep.mubr.f32.mxu0 %v332
  %485 = vmatmul.mubr.f32.gmra.mrb[0].mxu0 %v331
  %v486 = vpop.f32.mrb[0].mxu0
  %v487 = vadd.f32 0.0, %v486
  %v488 = vpop.f32.mrb[0].mxu0
  %489 = vmatprep.mubr.f32.mxu0 %v334
  %490 = vmatmul.mubr.f32.gmra.mrb[0].mxu0 %v333
  %v491 = vpop.f32.mrb[0].mxu0
  %v492 = vadd.f32 0.0, %v491
  %v493 = vpop.f32.mrb[0].mxu0
  %494 = vmatprep.mubr.f32.mxu0 %v336
  %495 = vmatmul.mubr.f32.gmra.mrb[0].mxu0 %v335
  %v496 = vpop.f32.mrb[0].mxu0
  %v497 = vadd.f32 0.0, %v496
  %v498 = vpop.f32.mrb[0].mxu0
  %499 = vmatprep.mubr.f32.mxu0 %v338
  %500 = vmatmul.mubr.f32.gmra.mrb[0].mxu0 %v337
  %v501 = vpop.f32.mrb[0].mxu0
  %v502 = vadd.f32 0.0, %v501
  %v503 = vpop.f32.mrb[0].mxu0
  %504 = vmatprep.mubr.f32.mxu0 %v340
  %505 = vmatmul.mubr.f32.gmra.mrb[0].mxu0 %v339
  %v506 = vpop.f32.mrb[0].mxu0
  %v507 = vadd.f32 0.0, %v506
  %v508 = vpop.f32.mrb[0].mxu0
  %509 = vmatprep.mubr.f32.mxu0 %v342
  %510 = vmatmul.mubr.f32.gmra.mrb[0].mxu0 %v341
  %v511 = vpop.f32.mrb[0].mxu0
  %v512 = vadd.f32 0.0, %v511
  %v513 = vpop.f32.mrb[0].mxu0
  %514 = vmatprep.mubr.f32.mxu0 %v344
  %515 = vmatmul.mubr.f32.gmra.mrb[0].mxu0 %v343
  %v516 = vpop.f32.mrb[0].mxu0
  %v517 = vadd.f32 0.0, %v516
  %v518 = vpop.f32.mrb[0].mxu0
  %519 = vmatprep.mubr.f32.mxu0 %v346
  %520 = vmatmul.mubr.f32.gmra.mrb[0].mxu0 %v345
  %v521 = vpop.f32.mrb[0].mxu0
  %v522 = vadd.f32 0.0, %v521
  %v523 = vpop.f32.mrb[0].mxu0
  %524 = vmatprep.mubr.f32.mxu0 %v348
  %525 = vmatmul.mubr.f32.gmra.mrb[0].mxu0 %v347
  %v526 = vpop.f32.mrb[0].mxu0
  %v527 = vadd.f32 0.0, %v526
  %v528 = vpop.f32.mrb[0].mxu0
  %529 = vmatprep.mubr.f32.mxu0 %v350
  %530 = vmatmul.mubr.f32.gmra.mrb[0].mxu0 %v349
  %v531 = vpop.f32.mrb[0].mxu0
  %v532 = vadd.f32 0.0, %v531
  %v533 = vpop.f32.mrb[0].mxu0
  %534 = vmatprep.mubr.f32.mxu0 %v352
  %535 = vmatmul.mubr.f32.gmra.mrb[0].mxu0 %v351
  %v536 = vpop.f32.mrb[0].mxu0
  %v537 = vadd.f32 0.0, %v536
  %v538 = vpop.f32.mrb[0].mxu0
  %539 = vmatprep.mubr.f32.mxu0 %v354
  %540 = vmatmul.mubr.f32.gmra.mrb[0].mxu0 %v353
  %v541 = vpop.f32.mrb[0].mxu0
  %v542 = vadd.f32 0.0, %v541
  %v543 = vpop.f32.mrb[0].mxu0
  %544 = vdwg.mxu0
  %s545 = scalar_lea.vmem %s0, 800
  %v546 = vld [vmem:[%s545] sm:$0xff]
  %v547 = vld [vmem:[%s545 + $0x8] sm:$0xff]
  %v548 = vld [vmem:[%s545 + $0x10] sm:$0xff]
  %v549 = vld [vmem:[%s545 + $0x18] sm:$0xff]
  %v550 = vld [vmem:[%s545 + $0x20] sm:$0xff]
  %v551 = vld [vmem:[%s545 + $0x28] sm:$0xff]
  %v552 = vld [vmem:[%s545 + $0x30] sm:$0xff]
  %v553 = vld [vmem:[%s545 + $0x38] sm:$0xff]
  %v554 = vld [vmem:[%s545 + $0x40] sm:$0xff]
  %v555 = vld [vmem:[%s545 + $0x48] sm:$0xff]
  %v556 = vld [vmem:[%s545 + $0x50] sm:$0xff]
  %v557 = vld [vmem:[%s545 + $0x58] sm:$0xff]
  %v558 = vld [vmem:[%s545 + $0x60] sm:$0xff]
  %v559 = vld [vmem:[%s545 + $0x68] sm:$0xff]
  %v560 = vld [vmem:[%s545 + $0x70] sm:$0xff]
  %v561 = vld [vmem:[%s545 + $0x78] sm:$0xff]
  %v562 = vld [vmem:[%s545 + $0x80] sm:$0xff]
  %v563 = vld [vmem:[%s545 + $0x88] sm:$0xff]
  %v564 = vld [vmem:[%s545 + $0x90] sm:$0xff]
  %v565 = vld [vmem:[%s545 + $0x98] sm:$0xff]
  %v566 = vld [vmem:[%s545 + $0xa0] sm:$0xff]
  %v567 = vld [vmem:[%s545 + $0xa8] sm:$0xff]
  %v568 = vld [vmem:[%s545 + $0xb0] sm:$0xff]
  %v569 = vld [vmem:[%s545 + $0xb8] sm:$0xff]
  %v570 = vld [vmem:[%s545 + $0xc0] sm:$0xff]
  %v571 = vld [vmem:[%s545 + $0xc8] sm:$0xff]
  %v572 = vld [vmem:[%s545 + $0xd0] sm:$0xff]
  %v573 = vld [vmem:[%s545 + $0xd8] sm:$0xff]
  %v574 = vld [vmem:[%s545 + $0xe0] sm:$0xff]
  %v575 = vld [vmem:[%s545 + $0xe8] sm:$0xff]
  %v576 = vld [vmem:[%s545 + $0xf0] sm:$0xff]
  %v577 = vld [vmem:[%s545 + $0xf8] sm:$0xff]
  %v578 = vld [vmem:[%s545 + $0x100] sm:$0xff]
  %v579 = vld [vmem:[%s545 + $0x108] sm:$0xff]
  %v580 = vld [vmem:[%s545 + $0x110] sm:$0xff]
  %v581 = vld [vmem:[%s545 + $0x118] sm:$0xff]
  %v582 = vld [vmem:[%s545 + $0x120] sm:$0xff]
  %v583 = vld [vmem:[%s545 + $0x128] sm:$0xff]
  %v584 = vld [vmem:[%s545 + $0x130] sm:$0xff]
  %v585 = vld [vmem:[%s545 + $0x138] sm:$0xff]
  %v586 = vld [vmem:[%s545 + $0x140] sm:$0xff]
  %v587 = vld [vmem:[%s545 + $0x148] sm:$0xff]
  %v588 = vld [vmem:[%s545 + $0x150] sm:$0xff]
  %v589 = vld [vmem:[%s545 + $0x158] sm:$0xff]
  %v590 = vld [vmem:[%s545 + $0x160] sm:$0xff]
  %v591 = vld [vmem:[%s545 + $0x168] sm:$0xff]
  %v592 = vld [vmem:[%s545 + $0x170] sm:$0xff]
  %v593 = vld [vmem:[%s545 + $0x178] sm:$0xff]
  %v594 = vld [vmem:[%s545 + $0x180] sm:$0xff]
  %v595 = vld [vmem:[%s545 + $0x188] sm:$0xff]
  %596 = vmatprep.subr.mxu0 0.0
  %597 = vmatpush1.msra.mxu0 %v32
  %598 = vmatprep.subr.mxu0 0.0
  %599 = vmatpush1.msra.mxu0 %v33
  %600 = vmatprep.subr.mxu0 0.0
  %601 = vmatpush1.msra.mxu0 %v34
  %602 = vmatprep.subr.mxu0 0.0
  %603 = vmatpush1.msra.mxu0 %v35
  %604 = vmatprep.subr.mxu0 0.0
  %605 = vmatpush1.msra.mxu0 %v36
  %606 = vmatprep.subr.mxu0 0.0
  %607 = vmatpush1.msra.mxu0 %v37
  %608 = vmatprep.subr.mxu0 0.0
  %609 = vmatpush1.msra.mxu0 %v38
  %610 = vmatprep.subr.mxu0 0.0
  %611 = vmatpush1.msra.mxu0 %v39
  %612 = vmatprep.subr.mxu0 0.0
  %613 = vmatpush1.msra.mxu0 %v40
  %614 = vmatprep.subr.mxu0 0.0
  %615 = vmatpush1.msra.mxu0 %v41
  %616 = vmatprep.subr.mxu0 0.0
  %617 = vmatpush1.msra.mxu0 %v42
  %618 = vmatprep.subr.mxu0 0.0
  %619 = vmatpush1.msra.mxu0 %v43
  %620 = vmatprep.subr.mxu0 0.0
  %621 = vmatpush1.msra.mxu0 %v44
  %622 = vmatprep.subr.mxu0 0.0
  %623 = vmatpush1.msra.mxu0 %v45
  %624 = vmatprep.subr.mxu0 0.0
  %625 = vmatpush1.msra.mxu0 %v46
  %626 = vmatprep.subr.mxu0 0.0
  %627 = vmatpush1.msra.mxu0 %v47
  %628 = vmatprep.subr.mxu0 0.0
  %629 = vmatpush1.msra.mxu0 %v48
  %630 = vmatprep.subr.mxu0 0.0
  %631 = vmatpush1.msra.mxu0 %v49
  %632 = vmatprep.subr.mxu0 0.0
  %633 = vmatpush1.msra.mxu0 %v50
  %634 = vmatprep.subr.mxu0 0.0
  %635 = vmatpush1.msra.mxu0 %v51
  %636 = vmatprep.subr.mxu0 0.0
  %637 = vmatpush1.msra.mxu0 %v52
  %638 = vmatprep.subr.mxu0 0.0
  %639 = vmatpush1.msra.mxu0 %v53
  %640 = vmatprep.subr.mxu0 0.0
  %641 = vmatpush1.msra.mxu0 %v54
  %642 = vmatprep.subr.mxu0 0.0
  %643 = vmatpush1.msra.mxu0 %v55
  %644 = vmatprep.subr.mxu0 0.0
  %645 = vmatpush1.msra.mxu0 %v56
  %646 = vmatprep.subr.mxu0 0.0
  %647 = vmatpush1.msra.mxu0 %v57
  %648 = vmatprep.subr.mxu0 0.0
  %649 = vmatpush1.msra.mxu0 %v58
  %650 = vmatprep.subr.mxu0 0.0
  %651 = vmatpush1.msra.mxu0 %v59
  %652 = vmatprep.subr.mxu0 0.0
  %653 = vmatpush1.msra.mxu0 %v60
  %654 = vmatprep.subr.mxu0 0.0
  %655 = vmatpush1.msra.mxu0 %v61
  %656 = vmatprep.subr.mxu0 0.0
  %657 = vmatpush1.msra.mxu0 %v62
  %658 = vmatprep.subr.mxu0 0.0
  %659 = vmatpush1.msra.mxu0 %v63
  %660 = vmatprep.mubr.f32.mxu0 %v547
  %661 = vmatmul.mubr.f32.gmra.mrb[0].mxu0 %v546
  %v662 = vpop.f32.mrb[0].mxu0
  %v663 = vadd.f32 0.0, %v662
  %v664 = vpop.f32.mrb[0].mxu0
  %665 = vmatprep.mubr.f32.mxu0 %v549
  %666 = vmatmul.mubr.f32.gmra.mrb[0].mxu0 %v548
  %v667 = vpop.f32.mrb[0].mxu0
  %v668 = vadd.f32 0.0, %v667
  %v669 = vpop.f32.mrb[0].mxu0
  %670 = vmatprep.mubr.f32.mxu0 %v551
  %671 = vmatmul.mubr.f32.gmra.mrb[0].mxu0 %v550
  %v672 = vpop.f32.mrb[0].mxu0
  %v673 = vadd.f32 0.0, %v672
  %v674 = vpop.f32.mrb[0].mxu0
  %675 = vmatprep.mubr.f32.mxu0 %v553
  %676 = vmatmul.mubr.f32.gmra.mrb[0].mxu0 %v552
  %v677 = vpop.f32.mrb[0].mxu0
  %v678 = vadd.f32 0.0, %v677
  %v679 = vpop.f32.mrb[0].mxu0
  %680 = vmatprep.mubr.f32.mxu0 %v555
  %681 = vmatmul.mubr.f32.gmra.mrb[0].mxu0 %v554
  %v682 = vpop.f32.mrb[0].mxu0
  %v683 = vadd.f32 0.0, %v682
  %v684 = vpop.f32.mrb[0].mxu0
  %685 = vmatprep.mubr.f32.mxu0 %v557
  %686 = vmatmul.mubr.f32.gmra.mrb[0].mxu0 %v556
  %v687 = vpop.f32.mrb[0].mxu0
  %v688 = vadd.f32 0.0, %v687
  %v689 = vpop.f32.mrb[0].mxu0
  %690 = vmatprep.mubr.f32.mxu0 %v559
  %691 = vmatmul.mubr.f32.gmra.mrb[0].mxu0 %v558
  %v692 = vpop.f32.mrb[0].mxu0
  %v693 = vadd.f32 0.0, %v692
  %v694 = vpop.f32.mrb[0].mxu0
  %695 = vmatprep.mubr.f32.mxu0 %v561
  %696 = vmatmul.mubr.f32.gmra.mrb[0].mxu0 %v560
  %v697 = vpop.f32.mrb[0].mxu0
  %v698 = vadd.f32 0.0, %v697
  %v699 = vpop.f32.mrb[0].mxu0
  %700 = vmatprep.mubr.f32.mxu0 %v563
  %701 = vmatmul.mubr.f32.gmra.mrb[0].mxu0 %v562
  %v702 = vpop.f32.mrb[0].mxu0
  %v703 = vadd.f32 0.0, %v702
  %v704 = vpop.f32.mrb[0].mxu0
  %705 = vmatprep.mubr.f32.mxu0 %v565
  %706 = vmatmul.mubr.f32.gmra.mrb[0].mxu0 %v564
  %v707 = vpop.f32.mrb[0].mxu0
  %v708 = vadd.f32 0.0, %v707
  %v709 = vpop.f32.mrb[0].mxu0
  %710 = vmatprep.mubr.f32.mxu0 %v567
  %711 = vmatmul.mubr.f32.gmra.mrb[0].mxu0 %v566
  %v712 = vpop.f32.mrb[0].mxu0
  %v713 = vadd.f32 0.0, %v712
  %v714 = vpop.f32.mrb[0].mxu0
  %715 = vmatprep.mubr.f32.mxu0 %v569
  %716 = vmatmul.mubr.f32.gmra.mrb[0].mxu0 %v568
  %v717 = vpop.f32.mrb[0].mxu0
  %v718 = vadd.f32 0.0, %v717
  %v719 = vpop.f32.mrb[0].mxu0
  %720 = vmatprep.mubr.f32.mxu0 %v571
  %721 = vmatmul.mubr.f32.gmra.mrb[0].mxu0 %v570
  %v722 = vpop.f32.mrb[0].mxu0
  %v723 = vadd.f32 0.0, %v722
  %v724 = vpop.f32.mrb[0].mxu0
  %725 = vmatprep.mubr.f32.mxu0 %v573
  %726 = vmatmul.mubr.f32.gmra.mrb[0].mxu0 %v572
  %v727 = vpop.f32.mrb[0].mxu0
  %v728 = vadd.f32 0.0, %v727
  %v729 = vpop.f32.mrb[0].mxu0
  %730 = vmatprep.mubr.f32.mxu0 %v575
  %731 = vmatmul.mubr.f32.gmra.mrb[0].mxu0 %v574
  %v732 = vpop.f32.mrb[0].mxu0
  %v733 = vadd.f32 0.0, %v732
  %v734 = vpop.f32.mrb[0].mxu0
  %735 = vmatprep.mubr.f32.mxu0 %v577
  %736 = vmatmul.mubr.f32.gmra.mrb[0].mxu0 %v576
  %v737 = vpop.f32.mrb[0].mxu0
  %v738 = vadd.f32 0.0, %v737
  %v739 = vpop.f32.mrb[0].mxu0
  %740 = vmatprep.mubr.f32.mxu0 %v579
  %741 = vmatmul.mubr.f32.gmra.mrb[0].mxu0 %v578
  %v742 = vpop.f32.mrb[0].mxu0
  %v743 = vadd.f32 0.0, %v742
  %v744 = vpop.f32.mrb[0].mxu0
  %745 = vmatprep.mubr.f32.mxu0 %v581
  %746 = vmatmul.mubr.f32.gmra.mrb[0].mxu0 %v580
  %v747 = vpop.f32.mrb[0].mxu0
  %v748 = vadd.f32 0.0, %v747
  %v749 = vpop.f32.mrb[0].mxu0
  %750 = vmatprep.mubr.f32.mxu0 %v583
  %751 = vmatmul.mubr.f32.gmra.mrb[0].mxu0 %v582
  %v752 = vpop.f32.mrb[0].mxu0
  %v753 = vadd.f32 0.0, %v752
  %v754 = vpop.f32.mrb[0].mxu0
  %755 = vmatprep.mubr.f32.mxu0 %v585
  %756 = vmatmul.mubr.f32.gmra.mrb[0].mxu0 %v584
  %v757 = vpop.f32.mrb[0].mxu0
  %v758 = vadd.f32 0.0, %v757
  %v759 = vpop.f32.mrb[0].mxu0
  %760 = vmatprep.mubr.f32.mxu0 %v587
  %761 = vmatmul.mubr.f32.gmra.mrb[0].mxu0 %v586
  %v762 = vpop.f32.mrb[0].mxu0
  %v763 = vadd.f32 0.0, %v762
  %v764 = vpop.f32.mrb[0].mxu0
  %765 = vmatprep.mubr.f32.mxu0 %v589
  %766 = vmatmul.mubr.f32.gmra.mrb[0].mxu0 %v588
  %v767 = vpop.f32.mrb[0].mxu0
  %v768 = vadd.f32 0.0, %v767
  %v769 = vpop.f32.mrb[0].mxu0
  %770 = vmatprep.mubr.f32.mxu0 %v591
  %771 = vmatmul.mubr.f32.gmra.mrb[0].mxu0 %v590
  %v772 = vpop.f32.mrb[0].mxu0
  %v773 = vadd.f32 0.0, %v772
  %v774 = vpop.f32.mrb[0].mxu0
  %775 = vmatprep.mubr.f32.mxu0 %v593
  %776 = vmatmul.mubr.f32.gmra.mrb[0].mxu0 %v592
  %v777 = vpop.f32.mrb[0].mxu0
  %v778 = vadd.f32 0.0, %v777
  %v779 = vpop.f32.mrb[0].mxu0
  %780 = vmatprep.mubr.f32.mxu0 %v595
  %781 = vmatmul.mubr.f32.gmra.mrb[0].mxu0 %v594
  %v782 = vpop.f32.mrb[0].mxu0
  %v783 = vadd.f32 0.0, %v782
  %v784 = vpop.f32.mrb[0].mxu0
  %785 = vdwg.mxu0
  %s786 = scalar_lea.vmem %s0, 1200
  %v787 = vld [vmem:[%s786] sm:$0xff]
  %v788 = vld [vmem:[%s786 + $0x8] sm:$0xff]
  %v789 = vld [vmem:[%s786 + $0x10] sm:$0xff]
  %v790 = vld [vmem:[%s786 + $0x18] sm:$0xff]
  %v791 = vld [vmem:[%s786 + $0x20] sm:$0xff]
  %v792 = vld [vmem:[%s786 + $0x28] sm:$0xff]
  %v793 = vld [vmem:[%s786 + $0x30] sm:$0xff]
  %v794 = vld [vmem:[%s786 + $0x38] sm:$0xff]
  %v795 = vld [vmem:[%s786 + $0x40] sm:$0xff]
  %v796 = vld [vmem:[%s786 + $0x48] sm:$0xff]
  %v797 = vld [vmem:[%s786 + $0x50] sm:$0xff]
  %v798 = vld [vmem:[%s786 + $0x58] sm:$0xff]
  %v799 = vld [vmem:[%s786 + $0x60] sm:$0xff]
  %v800 = vld [vmem:[%s786 + $0x68] sm:$0xff]
  %v801 = vld [vmem:[%s786 + $0x70] sm:$0xff]
  %v802 = vld [vmem:[%s786 + $0x78] sm:$0xff]
  %v803 = vld [vmem:[%s786 + $0x80] sm:$0xff]
  %v804 = vld [vmem:[%s786 + $0x88] sm:$0xff]
  %v805 = vld [vmem:[%s786 + $0x90] sm:$0xff]
  %v806 = vld [vmem:[%s786 + $0x98] sm:$0xff]
  %v807 = vld [vmem:[%s786 + $0xa0] sm:$0xff]
  %v808 = vld [vmem:[%s786 + $0xa8] sm:$0xff]
  %v809 = vld [vmem:[%s786 + $0xb0] sm:$0xff]
  %v810 = vld [vmem:[%s786 + $0xb8] sm:$0xff]
  %v811 = vld [vmem:[%s786 + $0xc0] sm:$0xff]
  %v812 = vld [vmem:[%s786 + $0xc8] sm:$0xff]
  %v813 = vld [vmem:[%s786 + $0xd0] sm:$0xff]
  %v814 = vld [vmem:[%s786 + $0xd8] sm:$0xff]
  %v815 = vld [vmem:[%s786 + $0xe0] sm:$0xff]
  %v816 = vld [vmem:[%s786 + $0xe8] sm:$0xff]
  %v817 = vld [vmem:[%s786 + $0xf0] sm:$0xff]
  %v818 = vld [vmem:[%s786 + $0xf8] sm:$0xff]
  %v819 = vld [vmem:[%s786 + $0x100] sm:$0xff]
  %v820 = vld [vmem:[%s786 + $0x108] sm:$0xff]
  %v821 = vld [vmem:[%s786 + $0x110] sm:$0xff]
  %v822 = vld [vmem:[%s786 + $0x118] sm:$0xff]
  %v823 = vld [vmem:[%s786 + $0x120] sm:$0xff]
  %v824 = vld [vmem:[%s786 + $0x128] sm:$0xff]
  %v825 = vld [vmem:[%s786 + $0x130] sm:$0xff]
  %v826 = vld [vmem:[%s786 + $0x138] sm:$0xff]
  %v827 = vld [vmem:[%s786 + $0x140] sm:$0xff]
  %v828 = vld [vmem:[%s786 + $0x148] sm:$0xff]
  %v829 = vld [vmem:[%s786 + $0x150] sm:$0xff]
  %v830 = vld [vmem:[%s786 + $0x158] sm:$0xff]
  %v831 = vld [vmem:[%s786 + $0x160] sm:$0xff]
  %v832 = vld [vmem:[%s786 + $0x168] sm:$0xff]
  %v833 = vld [vmem:[%s786 + $0x170] sm:$0xff]
  %v834 = vld [vmem:[%s786 + $0x178] sm:$0xff]
  %v835 = vld [vmem:[%s786 + $0x180] sm:$0xff]
  %v836 = vld [vmem:[%s786 + $0x188] sm:$0xff]
  %837 = vmatprep.subr.mxu0 0.0
  %838 = vmatpush1.msra.mxu0 %v32
  %839 = vmatprep.subr.mxu0 0.0
  %840 = vmatpush1.msra.mxu0 %v33
  %841 = vmatprep.subr.mxu0 0.0
  %842 = vmatpush1.msra.mxu0 %v34
  %843 = vmatprep.subr.mxu0 0.0
  %844 = vmatpush1.msra.mxu0 %v35
  %845 = vmatprep.subr.mxu0 0.0
  %846 = vmatpush1.msra.mxu0 %v36
  %847 = vmatprep.subr.mxu0 0.0
  %848 = vmatpush1.msra.mxu0 %v37
  %849 = vmatprep.subr.mxu0 0.0
  %850 = vmatpush1.msra.mxu0 %v38
  %851 = vmatprep.subr.mxu0 0.0
  %852 = vmatpush1.msra.mxu0 %v39
  %853 = vmatprep.subr.mxu0 0.0
  %854 = vmatpush1.msra.mxu0 %v40
  %855 = vmatprep.subr.mxu0 0.0
  %856 = vmatpush1.msra.mxu0 %v41
  %857 = vmatprep.subr.mxu0 0.0
  %858 = vmatpush1.msra.mxu0 %v42
  %859 = vmatprep.subr.mxu0 0.0
  %860 = vmatpush1.msra.mxu0 %v43
  %861 = vmatprep.subr.mxu0 0.0
  %862 = vmatpush1.msra.mxu0 %v44
  %863 = vmatprep.subr.mxu0 0.0
  %864 = vmatpush1.msra.mxu0 %v45
  %865 = vmatprep.subr.mxu0 0.0
  %866 = vmatpush1.msra.mxu0 %v46
  %867 = vmatprep.subr.mxu0 0.0
  %868 = vmatpush1.msra.mxu0 %v47
  %869 = vmatprep.subr.mxu0 0.0
  %870 = vmatpush1.msra.mxu0 %v48
  %871 = vmatprep.subr.mxu0 0.0
  %872 = vmatpush1.msra.mxu0 %v49
  %873 = vmatprep.subr.mxu0 0.0
  %874 = vmatpush1.msra.mxu0 %v50
  %875 = vmatprep.subr.mxu0 0.0
  %876 = vmatpush1.msra.mxu0 %v51
  %877 = vmatprep.subr.mxu0 0.0
  %878 = vmatpush1.msra.mxu0 %v52
  %879 = vmatprep.subr.mxu0 0.0
  %880 = vmatpush1.msra.mxu0 %v53
  %881 = vmatprep.subr.mxu0 0.0
  %882 = vmatpush1.msra.mxu0 %v54
  %883 = vmatprep.subr.mxu0 0.0
  %884 = vmatpush1.msra.mxu0 %v55
  %885 = vmatprep.subr.mxu0 0.0
  %886 = vmatpush1.msra.mxu0 %v56
  %887 = vmatprep.subr.mxu0 0.0
  %888 = vmatpush1.msra.mxu0 %v57
  %889 = vmatprep.subr.mxu0 0.0
  %890 = vmatpush1.msra.mxu0 %v58
  %891 = vmatprep.subr.mxu0 0.0
  %892 = vmatpush1.msra.mxu0 %v59
  %893 = vmatprep.subr.mxu0 0.0
  %894 = vmatpush1.msra.mxu0 %v60
  %895 = vmatprep.subr.mxu0 0.0
  %896 = vmatpush1.msra.mxu0 %v61
  %897 = vmatprep.subr.mxu0 0.0
  %898 = vmatpush1.msra.mxu0 %v62
  %899 = vmatprep.subr.mxu0 0.0
  %900 = vmatpush1.msra.mxu0 %v63
  %901 = vmatprep.mubr.f32.mxu0 %v788
  %902 = vmatmul.mubr.f32.gmra.mrb[0].mxu0 %v787
  %v903 = vpop.f32.mrb[0].mxu0
  %v904 = vadd.f32 0.0, %v903
  %v905 = vpop.f32.mrb[0].mxu0
  %906 = vmatprep.mubr.f32.mxu0 %v790
  %907 = vmatmul.mubr.f32.gmra.mrb[0].mxu0 %v789
  %v908 = vpop.f32.mrb[0].mxu0
  %v909 = vadd.f32 0.0, %v908
  %v910 = vpop.f32.mrb[0].mxu0
  %911 = vmatprep.mubr.f32.mxu0 %v792
  %912 = vmatmul.mubr.f32.gmra.mrb[0].mxu0 %v791
  %v913 = vpop.f32.mrb[0].mxu0
  %v914 = vadd.f32 0.0, %v913
  %v915 = vpop.f32.mrb[0].mxu0
  %916 = vmatprep.mubr.f32.mxu0 %v794
  %917 = vmatmul.mubr.f32.gmra.mrb[0].mxu0 %v793
  %v918 = vpop.f32.mrb[0].mxu0
  %v919 = vadd.f32 0.0, %v918
  %v920 = vpop.f32.mrb[0].mxu0
  %921 = vmatprep.mubr.f32.mxu0 %v796
  %922 = vmatmul.mubr.f32.gmra.mrb[0].mxu0 %v795
  %v923 = vpop.f32.mrb[0].mxu0
  %v924 = vadd.f32 0.0, %v923
  %v925 = vpop.f32.mrb[0].mxu0
  %926 = vmatprep.mubr.f32.mxu0 %v798
  %927 = vmatmul.mubr.f32.gmra.mrb[0].mxu0 %v797
  %v928 = vpop.f32.mrb[0].mxu0
  %v929 = vadd.f32 0.0, %v928
  %v930 = vpop.f32.mrb[0].mxu0
  %931 = vmatprep.mubr.f32.mxu0 %v800
  %932 = vmatmul.mubr.f32.gmra.mrb[0].mxu0 %v799
  %v933 = vpop.f32.mrb[0].mxu0
  %v934 = vadd.f32 0.0, %v933
  %v935 = vpop.f32.mrb[0].mxu0
  %936 = vmatprep.mubr.f32.mxu0 %v802
  %937 = vmatmul.mubr.f32.gmra.mrb[0].mxu0 %v801
  %v938 = vpop.f32.mrb[0].mxu0
  %v939 = vadd.f32 0.0, %v938
  %v940 = vpop.f32.mrb[0].mxu0
  %941 = vmatprep.mubr.f32.mxu0 %v804
  %942 = vmatmul.mubr.f32.gmra.mrb[0].mxu0 %v803
  %v943 = vpop.f32.mrb[0].mxu0
  %v944 = vadd.f32 0.0, %v943
  %v945 = vpop.f32.mrb[0].mxu0
  %946 = vmatprep.mubr.f32.mxu0 %v806
  %947 = vmatmul.mubr.f32.gmra.mrb[0].mxu0 %v805
  %v948 = vpop.f32.mrb[0].mxu0
  %v949 = vadd.f32 0.0, %v948
  %v950 = vpop.f32.mrb[0].mxu0
  %951 = vmatprep.mubr.f32.mxu0 %v808
  %952 = vmatmul.mubr.f32.gmra.mrb[0].mxu0 %v807
  %v953 = vpop.f32.mrb[0].mxu0
  %v954 = vadd.f32 0.0, %v953
  %v955 = vpop.f32.mrb[0].mxu0
  %956 = vmatprep.mubr.f32.mxu0 %v810
  %957 = vmatmul.mubr.f32.gmra.mrb[0].mxu0 %v809
  %v958 = vpop.f32.mrb[0].mxu0
  %v959 = vadd.f32 0.0, %v958
  %v960 = vpop.f32.mrb[0].mxu0
  %961 = vmatprep.mubr.f32.mxu0 %v812
  %962 = vmatmul.mubr.f32.gmra.mrb[0].mxu0 %v811
  %v963 = vpop.f32.mrb[0].mxu0
  %v964 = vadd.f32 0.0, %v963
  %v965 = vpop.f32.mrb[0].mxu0
  %966 = vmatprep.mubr.f32.mxu0 %v814
  %967 = vmatmul.mubr.f32.gmra.mrb[0].mxu0 %v813
  %v968 = vpop.f32.mrb[0].mxu0
  %v969 = vadd.f32 0.0, %v968
  %v970 = vpop.f32.mrb[0].mxu0
  %971 = vmatprep.mubr.f32.mxu0 %v816
  %972 = vmatmul.mubr.f32.gmra.mrb[0].mxu0 %v815
  %v973 = vpop.f32.mrb[0].mxu0
  %v974 = vadd.f32 0.0, %v973
  %v975 = vpop.f32.mrb[0].mxu0
  %976 = vmatprep.mubr.f32.mxu0 %v818
  %977 = vmatmul.mubr.f32.gmra.mrb[0].mxu0 %v817
  %v978 = vpop.f32.mrb[0].mxu0
  %v979 = vadd.f32 0.0, %v978
  %v980 = vpop.f32.mrb[0].mxu0
  %981 = vmatprep.mubr.f32.mxu0 %v820
  %982 = vmatmul.mubr.f32.gmra.mrb[0].mxu0 %v819
  %v983 = vpop.f32.mrb[0].mxu0
  %v984 = vadd.f32 0.0, %v983
  %v985 = vpop.f32.mrb[0].mxu0
  %986 = vmatprep.mubr.f32.mxu0 %v822
  %987 = vmatmul.mubr.f32.gmra.mrb[0].mxu0 %v821
  %v988 = vpop.f32.mrb[0].mxu0
  %v989 = vadd.f32 0.0, %v988
  %v990 = vpop.f32.mrb[0].mxu0
  %991 = vmatprep.mubr.f32.mxu0 %v824
  %992 = vmatmul.mubr.f32.gmra.mrb[0].mxu0 %v823
  %v993 = vpop.f32.mrb[0].mxu0
  %v994 = vadd.f32 0.0, %v993
  %v995 = vpop.f32.mrb[0].mxu0
  %996 = vmatprep.mubr.f32.mxu0 %v826
  %997 = vmatmul.mubr.f32.gmra.mrb[0].mxu0 %v825
  %v998 = vpop.f32.mrb[0].mxu0
  %v999 = vadd.f32 0.0, %v998
  %v1000 = vpop.f32.mrb[0].mxu0
  %1001 = vmatprep.mubr.f32.mxu0 %v828
  %1002 = vmatmul.mubr.f32.gmra.mrb[0].mxu0 %v827
  %v1003 = vpop.f32.mrb[0].mxu0
  %v1004 = vadd.f32 0.0, %v1003
  %v1005 = vpop.f32.mrb[0].mxu0
  %1006 = vmatprep.mubr.f32.mxu0 %v830
  %1007 = vmatmul.mubr.f32.gmra.mrb[0].mxu0 %v829
  %v1008 = vpop.f32.mrb[0].mxu0
  %v1009 = vadd.f32 0.0, %v1008
  %v1010 = vpop.f32.mrb[0].mxu0
  %1011 = vmatprep.mubr.f32.mxu0 %v832
  %1012 = vmatmul.mubr.f32.gmra.mrb[0].mxu0 %v831
  %v1013 = vpop.f32.mrb[0].mxu0
  %v1014 = vadd.f32 0.0, %v1013
  %v1015 = vpop.f32.mrb[0].mxu0
  %1016 = vmatprep.mubr.f32.mxu0 %v834
  %1017 = vmatmul.mubr.f32.gmra.mrb[0].mxu0 %v833
  %v1018 = vpop.f32.mrb[0].mxu0
  %v1019 = vadd.f32 0.0, %v1018
  %v1020 = vpop.f32.mrb[0].mxu0
  %1021 = vmatprep.mubr.f32.mxu0 %v836
  %1022 = vmatmul.mubr.f32.gmra.mrb[0].mxu0 %v835
  %v1023 = vpop.f32.mrb[0].mxu0
  %v1024 = vadd.f32 0.0, %v1023
  %v1025 = vpop.f32.mrb[0].mxu0
  %1026 = vdwg.mxu0
  %v1027 = vmax.f32 %v181, %v422
  %v1028 = vmax.f32 %v186, %v427
  %v1029 = vmax.f32 %v191, %v432
  %v1030 = vmax.f32 %v196, %v437
  %v1031 = vmax.f32 %v201, %v442
  %v1032 = vmax.f32 %v206, %v447
  %v1033 = vmax.f32 %v211, %v452
  %v1034 = vmax.f32 %v216, %v457
  %v1035 = vmax.f32 %v221, %v462
  %v1036 = vmax.f32 %v226, %v467
  %v1037 = vmax.f32 %v231, %v472
  %v1038 = vmax.f32 %v236, %v477
  %v1039 = vmax.f32 %v241, %v482
  %v1040 = vmax.f32 %v246, %v487
  %v1041 = vmax.f32 %v251, %v492
  %v1042 = vmax.f32 %v256, %v497
  %v1043 = vmax.f32 %v261, %v502
  %v1044 = vmax.f32 %v266, %v507
  %v1045 = vmax.f32 %v271, %v512
  %v1046 = vmax.f32 %v276, %v517
  %v1047 = vmax.f32 %v281, %v522
  %v1048 = vmax.f32 %v286, %v527
  %v1049 = vmax.f32 %v291, %v532
  %v1050 = vmax.f32 %v296, %v537
  %v1051 = vmax.f32 %v301, %v542
  %v1052 = vmax.f32 %v663, %v904
  %v1053 = vmax.f32 %v668, %v909
  %v1054 = vmax.f32 %v673, %v914
  %v1055 = vmax.f32 %v678, %v919
  %v1056 = vmax.f32 %v683, %v924
  %v1057 = vmax.f32 %v688, %v929
  %v1058 = vmax.f32 %v693, %v934
  %v1059 = vmax.f32 %v698, %v939
  %v1060 = vmax.f32 %v703, %v944
  %v1061 = vmax.f32 %v708, %v949
  %v1062 = vmax.f32 %v713, %v954
  %v1063 = vmax.f32 %v718, %v959
  %v1064 = vmax.f32 %v723, %v964
  %v1065 = vmax.f32 %v728, %v969
  %v1066 = vmax.f32 %v733, %v974
  %v1067 = vmax.f32 %v738, %v979
  %v1068 = vmax.f32 %v743, %v984
  %v1069 = vmax.f32 %v748, %v989
  %v1070 = vmax.f32 %v753, %v994
  %v1071 = vmax.f32 %v758, %v999
  %v1072 = vmax.f32 %v763, %v1004
  %v1073 = vmax.f32 %v768, %v1009
  %v1074 = vmax.f32 %v773, %v1014
  %v1075 = vmax.f32 %v778, %v1019
  %v1076 = vmax.f32 %v783, %v1024
  %v1077 = vmax.f32 %v1027, %v1052
  %v1078 = vmax.f32 %v1028, %v1053
  %v1079 = vmax.f32 %v1029, %v1054
  %v1080 = vmax.f32 %v1030, %v1055
  %v1081 = vmax.f32 %v1031, %v1056
  %v1082 = vmax.f32 %v1032, %v1057
  %v1083 = vmax.f32 %v1033, %v1058
  %v1084 = vmax.f32 %v1034, %v1059
  %v1085 = vmax.f32 %v1035, %v1060
  %v1086 = vmax.f32 %v1036, %v1061
  %v1087 = vmax.f32 %v1037, %v1062
  %v1088 = vmax.f32 %v1038, %v1063
  %v1089 = vmax.f32 %v1039, %v1064
  %v1090 = vmax.f32 %v1040, %v1065
  %v1091 = vmax.f32 %v1041, %v1066
  %v1092 = vmax.f32 %v1042, %v1067
  %v1093 = vmax.f32 %v1043, %v1068
  %v1094 = vmax.f32 %v1044, %v1069
  %v1095 = vmax.f32 %v1045, %v1070
  %v1096 = vmax.f32 %v1046, %v1071
  %v1097 = vmax.f32 %v1047, %v1072
  %v1098 = vmax.f32 %v1048, %v1073
  %v1099 = vmax.f32 %v1049, %v1074
  %v1100 = vmax.f32 %v1050, %v1075
  %v1101 = vmax.f32 %v1051, %v1076
  %v1102 = vld [vmem:[%s2] sm:$0x1]
  %v1104 = vlaneseq
  %v1105 = vshrl.u32 %v1104, 7
  %v1106 = vsub.s32 0, %v1105
  %v1107 = vrot.slane %v1102, %v1106
  %v1109 = vadd.f32 %v1077, %v1107
  %v1110 = vadd.f32 %v1078, %v1107
  %v1111 = vadd.f32 %v1079, %v1107
  %v1112 = vadd.f32 %v1080, %v1107
  %v1113 = vadd.f32 %v1081, %v1107
  %v1114 = vadd.f32 %v1082, %v1107
  %v1115 = vadd.f32 %v1083, %v1107
  %v1116 = vadd.f32 %v1084, %v1107
  %v1117 = vadd.f32 %v1085, %v1107
  %v1118 = vadd.f32 %v1086, %v1107
  %v1119 = vadd.f32 %v1087, %v1107
  %v1120 = vadd.f32 %v1088, %v1107
  %v1121 = vadd.f32 %v1089, %v1107
  %v1122 = vadd.f32 %v1090, %v1107
  %v1123 = vadd.f32 %v1091, %v1107
  %v1124 = vadd.f32 %v1092, %v1107
  %v1125 = vadd.f32 %v1093, %v1107
  %v1126 = vadd.f32 %v1094, %v1107
  %v1127 = vadd.f32 %v1095, %v1107
  %v1128 = vadd.f32 %v1096, %v1107
  %v1129 = vadd.f32 %v1097, %v1107
  %v1130 = vadd.f32 %v1098, %v1107
  %v1131 = vadd.f32 %v1099, %v1107
  %v1132 = vadd.f32 %v1100, %v1107
  %v1133 = vadd.f32 %v1101, %v1107
  %v1134 = vmax.f32 %v1109, 0.0
  %v1135 = vmax.f32 %v1110, 0.0
  %v1136 = vmax.f32 %v1111, 0.0
  %v1137 = vmax.f32 %v1112, 0.0
  %v1138 = vmax.f32 %v1113, 0.0
  %v1139 = vmax.f32 %v1114, 0.0
  %v1140 = vmax.f32 %v1115, 0.0
  %v1141 = vmax.f32 %v1116, 0.0
  %v1142 = vmax.f32 %v1117, 0.0
  %v1143 = vmax.f32 %v1118, 0.0
  %v1144 = vmax.f32 %v1119, 0.0
  %v1145 = vmax.f32 %v1120, 0.0
  %v1146 = vmax.f32 %v1121, 0.0
  %v1147 = vmax.f32 %v1122, 0.0
  %v1148 = vmax.f32 %v1123, 0.0
  %v1149 = vmax.f32 %v1124, 0.0
  %v1150 = vmax.f32 %v1125, 0.0
  %v1151 = vmax.f32 %v1126, 0.0
  %v1152 = vmax.f32 %v1127, 0.0
  %v1153 = vmax.f32 %v1128, 0.0
  %v1154 = vmax.f32 %v1129, 0.0
  %v1155 = vmax.f32 %v1130, 0.0
  %v1156 = vmax.f32 %v1131, 0.0
  %v1157 = vmax.f32 %v1132, 0.0
  %v1158 = vmax.f32 %v1133, 0.0
  %v1159 = vld [vmem:[%s3] sm:$0xff]
  %v1160 = vld [vmem:[%s3 + $0x8] sm:$0xff]
  %v1161 = vld [vmem:[%s3 + $0x10] sm:$0xff]
  %v1162 = vld [vmem:[%s3 + $0x18] sm:$0xff]
  %v1163 = vld [vmem:[%s3 + $0x20] sm:$0xff]
  %v1164 = vld [vmem:[%s3 + $0x28] sm:$0xff]
  %v1165 = vld [vmem:[%s3 + $0x30] sm:$0xff]
  %v1166 = vld [vmem:[%s3 + $0x38] sm:$0xff]
  %v1167 = vld [vmem:[%s3 + $0x40] sm:$0xff]
  %v1168 = vld [vmem:[%s3 + $0x48] sm:$0xff]
  %v1169 = vld [vmem:[%s3 + $0x50] sm:$0xff]
  %v1170 = vld [vmem:[%s3 + $0x58] sm:$0xff]
  %v1171 = vld [vmem:[%s3 + $0x60] sm:$0xff]
  %v1172 = vld [vmem:[%s3 + $0x68] sm:$0xff]
  %v1173 = vld [vmem:[%s3 + $0x70] sm:$0xff]
  %v1174 = vld [vmem:[%s3 + $0x78] sm:$0xff]
  %v1175 = vld [vmem:[%s3 + $0x80] sm:$0xff]
  %v1176 = vld [vmem:[%s3 + $0x88] sm:$0xff]
  %v1177 = vld [vmem:[%s3 + $0x90] sm:$0xff]
  %v1178 = vld [vmem:[%s3 + $0x98] sm:$0xff]
  %v1179 = vld [vmem:[%s3 + $0xa0] sm:$0xff]
  %v1180 = vld [vmem:[%s3 + $0xa8] sm:$0xff]
  %v1181 = vld [vmem:[%s3 + $0xb0] sm:$0xff]
  %v1182 = vld [vmem:[%s3 + $0xb8] sm:$0xff]
  %v1183 = vld [vmem:[%s3 + $0xc0] sm:$0xff]
  %v1184 = vld [vmem:[%s3 + $0xc8] sm:$0xff]
  %v1185 = vld [vmem:[%s3 + $0xd0] sm:$0xff]
  %v1186 = vld [vmem:[%s3 + $0xd8] sm:$0xff]
  %v1187 = vld [vmem:[%s3 + $0xe0] sm:$0xff]
  %v1188 = vld [vmem:[%s3 + $0xe8] sm:$0xff]
  %v1189 = vld [vmem:[%s3 + $0xf0] sm:$0xff]
  %v1190 = vld [vmem:[%s3 + $0xf8] sm:$0xff]
  %s1191 = scalar_lea.vmem %s3, 256
  %v1192 = vld [vmem:[%s1191] sm:$0xff]
  %v1193 = vld [vmem:[%s1191 + $0x8] sm:$0xff]
  %v1194 = vld [vmem:[%s1191 + $0x10] sm:$0xff]
  %v1195 = vld [vmem:[%s1191 + $0x18] sm:$0xff]
  %v1196 = vld [vmem:[%s1191 + $0x20] sm:$0xff]
  %v1197 = vld [vmem:[%s1191 + $0x28] sm:$0xff]
  %v1198 = vld [vmem:[%s1191 + $0x30] sm:$0xff]
  %v1199 = vld [vmem:[%s1191 + $0x38] sm:$0xff]
  %v1200 = vld [vmem:[%s1191 + $0x40] sm:$0xff]
  %v1201 = vld [vmem:[%s1191 + $0x48] sm:$0xff]
  %v1202 = vld [vmem:[%s1191 + $0x50] sm:$0xff]
  %v1203 = vld [vmem:[%s1191 + $0x58] sm:$0xff]
  %v1204 = vld [vmem:[%s1191 + $0x60] sm:$0xff]
  %v1205 = vld [vmem:[%s1191 + $0x68] sm:$0xff]
  %v1206 = vld [vmem:[%s1191 + $0x70] sm:$0xff]
  %v1207 = vld [vmem:[%s1191 + $0x78] sm:$0xff]
  %v1208 = vld [vmem:[%s1191 + $0x80] sm:$0xff]
  %v1209 = vld [vmem:[%s1191 + $0x88] sm:$0xff]
  %v1210 = vld [vmem:[%s1191 + $0x90] sm:$0xff]
  %v1211 = vld [vmem:[%s1191 + $0x98] sm:$0xff]
  %v1212 = vld [vmem:[%s1191 + $0xa0] sm:$0xff]
  %v1213 = vld [vmem:[%s1191 + $0xa8] sm:$0xff]
  %v1214 = vld [vmem:[%s1191 + $0xb0] sm:$0xff]
  %v1215 = vld [vmem:[%s1191 + $0xb8] sm:$0xff]
  %v1216 = vld [vmem:[%s1191 + $0xc0] sm:$0xff]
  %v1217 = vld [vmem:[%s1191 + $0xc8] sm:$0xff]
  %v1218 = vld [vmem:[%s1191 + $0xd0] sm:$0xff]
  %v1219 = vld [vmem:[%s1191 + $0xd8] sm:$0xff]
  %v1220 = vld [vmem:[%s1191 + $0xe0] sm:$0xff]
  %v1221 = vld [vmem:[%s1191 + $0xe8] sm:$0xff]
  %v1222 = vld [vmem:[%s1191 + $0xf0] sm:$0xff]
  %v1223 = vld [vmem:[%s1191 + $0xf8] sm:$0xff]
  %1224 = vmatprep.subr.mxu0 %v1193
  %1225 = vmatpush1.msra.mxu0 %v1192
  %1226 = vmatprep.subr.mxu0 %v1195
  %1227 = vmatpush1.msra.mxu0 %v1194
  %1228 = vmatprep.subr.mxu0 %v1197
  %1229 = vmatpush1.msra.mxu0 %v1196
  %1230 = vmatprep.subr.mxu0 %v1199
  %1231 = vmatpush1.msra.mxu0 %v1198
  %1232 = vmatprep.subr.mxu0 %v1201
  %1233 = vmatpush1.msra.mxu0 %v1200
  %1234 = vmatprep.subr.mxu0 %v1203
  %1235 = vmatpush1.msra.mxu0 %v1202
  %1236 = vmatprep.subr.mxu0 %v1205
  %1237 = vmatpush1.msra.mxu0 %v1204
  %1238 = vmatprep.subr.mxu0 %v1207
  %1239 = vmatpush1.msra.mxu0 %v1206
  %1240 = vmatprep.subr.mxu0 %v1209
  %1241 = vmatpush1.msra.mxu0 %v1208
  %1242 = vmatprep.subr.mxu0 %v1211
  %1243 = vmatpush1.msra.mxu0 %v1210
  %1244 = vmatprep.subr.mxu0 %v1213
  %1245 = vmatpush1.msra.mxu0 %v1212
  %1246 = vmatprep.subr.mxu0 %v1215
  %1247 = vmatpush1.msra.mxu0 %v1214
  %1248 = vmatprep.subr.mxu0 %v1217
  %1249 = vmatpush1.msra.mxu0 %v1216
  %1250 = vmatprep.subr.mxu0 %v1219
  %1251 = vmatpush1.msra.mxu0 %v1218
  %1252 = vmatprep.subr.mxu0 %v1221
  %1253 = vmatpush1.msra.mxu0 %v1220
  %1254 = vmatprep.subr.mxu0 %v1223
  %1255 = vmatpush1.msra.mxu0 %v1222
  %1256 = vmatprep.subr.mxu0 0.0
  %1257 = vmatpush1.msra.mxu0 0.0
  %1258 = vmatprep.subr.mxu0 0.0
  %1259 = vmatpush1.msra.mxu0 0.0
  %1260 = vmatprep.subr.mxu0 0.0
  %1261 = vmatpush1.msra.mxu0 0.0
  %1262 = vmatprep.subr.mxu0 0.0
  %1263 = vmatpush1.msra.mxu0 0.0
  %1264 = vmatprep.subr.mxu0 0.0
  %1265 = vmatpush1.msra.mxu0 0.0
  %1266 = vmatprep.subr.mxu0 0.0
  %1267 = vmatpush1.msra.mxu0 0.0
  %1268 = vmatprep.subr.mxu0 0.0
  %1269 = vmatpush1.msra.mxu0 0.0
  %1270 = vmatprep.subr.mxu0 0.0
  %1271 = vmatpush1.msra.mxu0 0.0
  %1272 = vmatprep.subr.mxu0 0.0
  %1273 = vmatpush1.msra.mxu0 0.0
  %1274 = vmatprep.subr.mxu0 0.0
  %1275 = vmatpush1.msra.mxu0 0.0
  %1276 = vmatprep.subr.mxu0 0.0
  %1277 = vmatpush1.msra.mxu0 0.0
  %1278 = vmatprep.subr.mxu0 0.0
  %1279 = vmatpush1.msra.mxu0 0.0
  %1280 = vmatprep.subr.mxu0 0.0
  %1281 = vmatpush1.msra.mxu0 0.0
  %1282 = vmatprep.subr.mxu0 0.0
  %1283 = vmatpush1.msra.mxu0 0.0
  %1284 = vmatprep.subr.mxu0 0.0
  %1285 = vmatpush1.msra.mxu0 0.0
  %1286 = vmatprep.subr.mxu0 0.0
  %1287 = vmatpush1.msra.mxu0 0.0
  %1288 = vmatprep.mubr.f32.mxu0 0.0
  %1289 = vmatmul.mubr.f32.gmra.mrb[0].mxu0 %v1135
  %v1290 = vpop.f32.mrb[0].mxu0
  %v1291 = vadd.f32 0.0, %v1290
  %v1292 = vpop.f32.mrb[0].mxu0
  %v1293 = vadd.f32 0.0, %v1292
  %1294 = vdwg.mxu0
  %1295 = vmatprep.subr.mxu0 %v1160
  %1296 = vmatpush1.msra.mxu0 %v1159
  %1297 = vmatprep.subr.mxu0 %v1162
  %1298 = vmatpush1.msra.mxu0 %v1161
  %1299 = vmatprep.subr.mxu0 %v1164
  %1300 = vmatpush1.msra.mxu0 %v1163
  %1301 = vmatprep.subr.mxu0 %v1166
  %1302 = vmatpush1.msra.mxu0 %v1165
  %1303 = vmatprep.subr.mxu0 %v1168
  %1304 = vmatpush1.msra.mxu0 %v1167
  %1305 = vmatprep.subr.mxu0 %v1170
  %1306 = vmatpush1.msra.mxu0 %v1169
  %1307 = vmatprep.subr.mxu0 %v1172
  %1308 = vmatpush1.msra.mxu0 %v1171
  %1309 = vmatprep.subr.mxu0 %v1174
  %1310 = vmatpush1.msra.mxu0 %v1173
  %1311 = vmatprep.subr.mxu0 %v1176
  %1312 = vmatpush1.msra.mxu0 %v1175
  %1313 = vmatprep.subr.mxu0 %v1178
  %1314 = vmatpush1.msra.mxu0 %v1177
  %1315 = vmatprep.subr.mxu0 %v1180
  %1316 = vmatpush1.msra.mxu0 %v1179
  %1317 = vmatprep.subr.mxu0 %v1182
  %1318 = vmatpush1.msra.mxu0 %v1181
  %1319 = vmatprep.subr.mxu0 %v1184
  %1320 = vmatpush1.msra.mxu0 %v1183
  %1321 = vmatprep.subr.mxu0 %v1186
  %1322 = vmatpush1.msra.mxu0 %v1185
  %1323 = vmatprep.subr.mxu0 %v1188
  %1324 = vmatpush1.msra.mxu0 %v1187
  %1325 = vmatprep.subr.mxu0 %v1190
  %1326 = vmatpush1.msra.mxu0 %v1189
  %1327 = vmatprep.subr.mxu0 0.0
  %1328 = vmatpush1.msra.mxu0 0.0
  %1329 = vmatprep.subr.mxu0 0.0
  %1330 = vmatpush1.msra.mxu0 0.0
  %1331 = vmatprep.subr.mxu0 0.0
  %1332 = vmatpush1.msra.mxu0 0.0
  %1333 = vmatprep.subr.mxu0 0.0
  %1334 = vmatpush1.msra.mxu0 0.0
  %1335 = vmatprep.subr.mxu0 0.0
  %1336 = vmatpush1.msra.mxu0 0.0
  %1337 = vmatprep.subr.mxu0 0.0
  %1338 = vmatpush1.msra.mxu0 0.0
  %1339 = vmatprep.subr.mxu0 0.0
  %1340 = vmatpush1.msra.mxu0 0.0
  %1341 = vmatprep.subr.mxu0 0.0
  %1342 = vmatpush1.msra.mxu0 0.0
  %1343 = vmatprep.subr.mxu0 0.0
  %1344 = vmatpush1.msra.mxu0 0.0
  %1345 = vmatprep.subr.mxu0 0.0
  %1346 = vmatpush1.msra.mxu0 0.0
  %1347 = vmatprep.subr.mxu0 0.0
  %1348 = vmatpush1.msra.mxu0 0.0
  %1349 = vmatprep.subr.mxu0 0.0
  %1350 = vmatpush1.msra.mxu0 0.0
  %1351 = vmatprep.subr.mxu0 0.0
  %1352 = vmatpush1.msra.mxu0 0.0
  %1353 = vmatprep.subr.mxu0 0.0
  %1354 = vmatpush1.msra.mxu0 0.0
  %1355 = vmatprep.subr.mxu0 0.0
  %1356 = vmatpush1.msra.mxu0 0.0
  %1357 = vmatprep.subr.mxu0 0.0
  %1358 = vmatpush1.msra.mxu0 0.0
  %1359 = vmatprep.mubr.f32.mxu0 0.0
  %1360 = vmatmul.mubr.f32.gmra.mrb[0].mxu0 %v1134
  %v1361 = vpop.f32.mrb[0].mxu0
  %v1362 = vadd.f32 %v1291, %v1361
  %v1363 = vpop.f32.mrb[0].mxu0
  %v1364 = vadd.f32 %v1293, %v1363
  %1365 = vdwg.mxu0
  %s1366 = scalar_lea.vmem %s3, 512
  %v1367 = vld [vmem:[%s1366] sm:$0xff]
  %v1368 = vld [vmem:[%s1366 + $0x8] sm:$0xff]
  %v1369 = vld [vmem:[%s1366 + $0x10] sm:$0xff]
  %v1370 = vld [vmem:[%s1366 + $0x18] sm:$0xff]
  %v1371 = vld [vmem:[%s1366 + $0x20] sm:$0xff]
  %v1372 = vld [vmem:[%s1366 + $0x28] sm:$0xff]
  %v1373 = vld [vmem:[%s1366 + $0x30] sm:$0xff]
  %v1374 = vld [vmem:[%s1366 + $0x38] sm:$0xff]
  %v1375 = vld [vmem:[%s1366 + $0x40] sm:$0xff]
  %v1376 = vld [vmem:[%s1366 + $0x48] sm:$0xff]
  %v1377 = vld [vmem:[%s1366 + $0x50] sm:$0xff]
  %v1378 = vld [vmem:[%s1366 + $0x58] sm:$0xff]
  %v1379 = vld [vmem:[%s1366 + $0x60] sm:$0xff]
  %v1380 = vld [vmem:[%s1366 + $0x68] sm:$0xff]
  %v1381 = vld [vmem:[%s1366 + $0x70] sm:$0xff]
  %v1382 = vld [vmem:[%s1366 + $0x78] sm:$0xff]
  %v1383 = vld [vmem:[%s1366 + $0x80] sm:$0xff]
  %v1384 = vld [vmem:[%s1366 + $0x88] sm:$0xff]
  %v1385 = vld [vmem:[%s1366 + $0x90] sm:$0xff]
  %v1386 = vld [vmem:[%s1366 + $0x98] sm:$0xff]
  %v1387 = vld [vmem:[%s1366 + $0xa0] sm:$0xff]
  %v1388 = vld [vmem:[%s1366 + $0xa8] sm:$0xff]
  %v1389 = vld [vmem:[%s1366 + $0xb0] sm:$0xff]
  %v1390 = vld [vmem:[%s1366 + $0xb8] sm:$0xff]
  %v1391 = vld [vmem:[%s1366 + $0xc0] sm:$0xff]
  %v1392 = vld [vmem:[%s1366 + $0xc8] sm:$0xff]
  %v1393 = vld [vmem:[%s1366 + $0xd0] sm:$0xff]
  %v1394 = vld [vmem:[%s1366 + $0xd8] sm:$0xff]
  %v1395 = vld [vmem:[%s1366 + $0xe0] sm:$0xff]
  %v1396 = vld [vmem:[%s1366 + $0xe8] sm:$0xff]
  %v1397 = vld [vmem:[%s1366 + $0xf0] sm:$0xff]
  %v1398 = vld [vmem:[%s1366 + $0xf8] sm:$0xff]
  %1399 = vmatprep.subr.mxu0 %v1368
  %1400 = vmatpush1.msra.mxu0 %v1367
  %1401 = vmatprep.subr.mxu0 %v1370
  %1402 = vmatpush1.msra.mxu0 %v1369
  %1403 = vmatprep.subr.mxu0 %v1372
  %1404 = vmatpush1.msra.mxu0 %v1371
  %1405 = vmatprep.subr.mxu0 %v1374
  %1406 = vmatpush1.msra.mxu0 %v1373
  %1407 = vmatprep.subr.mxu0 %v1376
  %1408 = vmatpush1.msra.mxu0 %v1375
  %1409 = vmatprep.subr.mxu0 %v1378
  %1410 = vmatpush1.msra.mxu0 %v1377
  %1411 = vmatprep.subr.mxu0 %v1380
  %1412 = vmatpush1.msra.mxu0 %v1379
  %1413 = vmatprep.subr.mxu0 %v1382
  %1414 = vmatpush1.msra.mxu0 %v1381
  %1415 = vmatprep.subr.mxu0 %v1384
  %1416 = vmatpush1.msra.mxu0 %v1383
  %1417 = vmatprep.subr.mxu0 %v1386
  %1418 = vmatpush1.msra.mxu0 %v1385
  %1419 = vmatprep.subr.mxu0 %v1388
  %1420 = vmatpush1.msra.mxu0 %v1387
  %1421 = vmatprep.subr.mxu0 %v1390
  %1422 = vmatpush1.msra.mxu0 %v1389
  %1423 = vmatprep.subr.mxu0 %v1392
  %1424 = vmatpush1.msra.mxu0 %v1391
  %1425 = vmatprep.subr.mxu0 %v1394
  %1426 = vmatpush1.msra.mxu0 %v1393
  %1427 = vmatprep.subr.mxu0 %v1396
  %1428 = vmatpush1.msra.mxu0 %v1395
  %1429 = vmatprep.subr.mxu0 %v1398
  %1430 = vmatpush1.msra.mxu0 %v1397
  %1431 = vmatprep.subr.mxu0 0.0
  %1432 = vmatpush1.msra.mxu0 0.0
  %1433 = vmatprep.subr.mxu0 0.0
  %1434 = vmatpush1.msra.mxu0 0.0
  %1435 = vmatprep.subr.mxu0 0.0
  %1436 = vmatpush1.msra.mxu0 0.0
  %1437 = vmatprep.subr.mxu0 0.0
  %1438 = vmatpush1.msra.mxu0 0.0
  %1439 = vmatprep.subr.mxu0 0.0
  %1440 = vmatpush1.msra.mxu0 0.0
  %1441 = vmatprep.subr.mxu0 0.0
  %1442 = vmatpush1.msra.mxu0 0.0
  %1443 = vmatprep.subr.mxu0 0.0
  %1444 = vmatpush1.msra.mxu0 0.0
  %1445 = vmatprep.subr.mxu0 0.0
  %1446 = vmatpush1.msra.mxu0 0.0
  %1447 = vmatprep.subr.mxu0 0.0
  %1448 = vmatpush1.msra.mxu0 0.0
  %1449 = vmatprep.subr.mxu0 0.0
  %1450 = vmatpush1.msra.mxu0 0.0
  %1451 = vmatprep.subr.mxu0 0.0
  %1452 = vmatpush1.msra.mxu0 0.0
  %1453 = vmatprep.subr.mxu0 0.0
  %1454 = vmatpush1.msra.mxu0 0.0
  %1455 = vmatprep.subr.mxu0 0.0
  %1456 = vmatpush1.msra.mxu0 0.0
  %1457 = vmatprep.subr.mxu0 0.0
  %1458 = vmatpush1.msra.mxu0 0.0
  %1459 = vmatprep.subr.mxu0 0.0
  %1460 = vmatpush1.msra.mxu0 0.0
  %1461 = vmatprep.subr.mxu0 0.0
  %1462 = vmatpush1.msra.mxu0 0.0
  %1463 = vmatprep.mubr.f32.mxu0 0.0
  %1464 = vmatmul.mubr.f32.gmra.mrb[0].mxu0 %v1136
  %v1465 = vpop.f32.mrb[0].mxu0
  %v1466 = vadd.f32 0.0, %v1465
  %v1467 = vpop.f32.mrb[0].mxu0
  %v1468 = vadd.f32 0.0, %v1467
  %1469 = vdwg.mxu0
  %v1470 = vadd.f32 %v1362, %v1466
  %v1471 = vadd.f32 %v1364, %v1468
  %s1472 = scalar_lea.vmem %s3, 768
  %v1473 = vld [vmem:[%s1472] sm:$0xff]
  %v1474 = vld [vmem:[%s1472 + $0x8] sm:$0xff]
  %v1475 = vld [vmem:[%s1472 + $0x10] sm:$0xff]
  %v1476 = vld [vmem:[%s1472 + $0x18] sm:$0xff]
  %v1477 = vld [vmem:[%s1472 + $0x20] sm:$0xff]
  %v1478 = vld [vmem:[%s1472 + $0x28] sm:$0xff]
  %v1479 = vld [vmem:[%s1472 + $0x30] sm:$0xff]
  %v1480 = vld [vmem:[%s1472 + $0x38] sm:$0xff]
  %v1481 = vld [vmem:[%s1472 + $0x40] sm:$0xff]
  %v1482 = vld [vmem:[%s1472 + $0x48] sm:$0xff]
  %v1483 = vld [vmem:[%s1472 + $0x50] sm:$0xff]
  %v1484 = vld [vmem:[%s1472 + $0x58] sm:$0xff]
  %v1485 = vld [vmem:[%s1472 + $0x60] sm:$0xff]
  %v1486 = vld [vmem:[%s1472 + $0x68] sm:$0xff]
  %v1487 = vld [vmem:[%s1472 + $0x70] sm:$0xff]
  %v1488 = vld [vmem:[%s1472 + $0x78] sm:$0xff]
  %v1489 = vld [vmem:[%s1472 + $0x80] sm:$0xff]
  %v1490 = vld [vmem:[%s1472 + $0x88] sm:$0xff]
  %v1491 = vld [vmem:[%s1472 + $0x90] sm:$0xff]
  %v1492 = vld [vmem:[%s1472 + $0x98] sm:$0xff]
  %v1493 = vld [vmem:[%s1472 + $0xa0] sm:$0xff]
  %v1494 = vld [vmem:[%s1472 + $0xa8] sm:$0xff]
  %v1495 = vld [vmem:[%s1472 + $0xb0] sm:$0xff]
  %v1496 = vld [vmem:[%s1472 + $0xb8] sm:$0xff]
  %v1497 = vld [vmem:[%s1472 + $0xc0] sm:$0xff]
  %v1498 = vld [vmem:[%s1472 + $0xc8] sm:$0xff]
  %v1499 = vld [vmem:[%s1472 + $0xd0] sm:$0xff]
  %v1500 = vld [vmem:[%s1472 + $0xd8] sm:$0xff]
  %v1501 = vld [vmem:[%s1472 + $0xe0] sm:$0xff]
  %v1502 = vld [vmem:[%s1472 + $0xe8] sm:$0xff]
  %v1503 = vld [vmem:[%s1472 + $0xf0] sm:$0xff]
  %v1504 = vld [vmem:[%s1472 + $0xf8] sm:$0xff]
  %1505 = vmatprep.subr.mxu0 %v1474
  %1506 = vmatpush1.msra.mxu0 %v1473
  %1507 = vmatprep.subr.mxu0 %v1476
  %1508 = vmatpush1.msra.mxu0 %v1475
  %1509 = vmatprep.subr.mxu0 %v1478
  %1510 = vmatpush1.msra.mxu0 %v1477
  %1511 = vmatprep.subr.mxu0 %v1480
  %1512 = vmatpush1.msra.mxu0 %v1479
  %1513 = vmatprep.subr.mxu0 %v1482
  %1514 = vmatpush1.msra.mxu0 %v1481
  %1515 = vmatprep.subr.mxu0 %v1484
  %1516 = vmatpush1.msra.mxu0 %v1483
  %1517 = vmatprep.subr.mxu0 %v1486
  %1518 = vmatpush1.msra.mxu0 %v1485
  %1519 = vmatprep.subr.mxu0 %v1488
  %1520 = vmatpush1.msra.mxu0 %v1487
  %1521 = vmatprep.subr.mxu0 %v1490
  %1522 = vmatpush1.msra.mxu0 %v1489
  %1523 = vmatprep.subr.mxu0 %v1492
  %1524 = vmatpush1.msra.mxu0 %v1491
  %1525 = vmatprep.subr.mxu0 %v1494
  %1526 = vmatpush1.msra.mxu0 %v1493
  %1527 = vmatprep.subr.mxu0 %v1496
  %1528 = vmatpush1.msra.mxu0 %v1495
  %1529 = vmatprep.subr.mxu0 %v1498
  %1530 = vmatpush1.msra.mxu0 %v1497
  %1531 = vmatprep.subr.mxu0 %v1500
  %1532 = vmatpush1.msra.mxu0 %v1499
  %1533 = vmatprep.subr.mxu0 %v1502
  %1534 = vmatpush1.msra.mxu0 %v1501
  %1535 = vmatprep.subr.mxu0 %v1504
  %1536 = vmatpush1.msra.mxu0 %v1503
  %1537 = vmatprep.subr.mxu0 0.0
  %1538 = vmatpush1.msra.mxu0 0.0
  %1539 = vmatprep.subr.mxu0 0.0
  %1540 = vmatpush1.msra.mxu0 0.0
  %1541 = vmatprep.subr.mxu0 0.0
  %1542 = vmatpush1.msra.mxu0 0.0
  %1543 = vmatprep.subr.mxu0 0.0
  %1544 = vmatpush1.msra.mxu0 0.0
  %1545 = vmatprep.subr.mxu0 0.0
  %1546 = vmatpush1.msra.mxu0 0.0
  %1547 = vmatprep.subr.mxu0 0.0
  %1548 = vmatpush1.msra.mxu0 0.0
  %1549 = vmatprep.subr.mxu0 0.0
  %1550 = vmatpush1.msra.mxu0 0.0
  %1551 = vmatprep.subr.mxu0 0.0
  %1552 = vmatpush1.msra.mxu0 0.0
  %1553 = vmatprep.subr.mxu0 0.0
  %1554 = vmatpush1.msra.mxu0 0.0
  %1555 = vmatprep.subr.mxu0 0.0
  %1556 = vmatpush1.msra.mxu0 0.0
  %1557 = vmatprep.subr.mxu0 0.0
  %1558 = vmatpush1.msra.mxu0 0.0
  %1559 = vmatprep.subr.mxu0 0.0
  %1560 = vmatpush1.msra.mxu0 0.0
  %1561 = vmatprep.subr.mxu0 0.0
  %1562 = vmatpush1.msra.mxu0 0.0
  %1563 = vmatprep.subr.mxu0 0.0
  %1564 = vmatpush1.msra.mxu0 0.0
  %1565 = vmatprep.subr.mxu0 0.0
  %1566 = vmatpush1.msra.mxu0 0.0
  %1567 = vmatprep.subr.mxu0 0.0
  %1568 = vmatpush1.msra.mxu0 0.0
  %1569 = vmatprep.mubr.f32.mxu0 0.0
  %1570 = vmatmul.mubr.f32.gmra.mrb[0].mxu0 %v1137
  %v1571 = vpop.f32.mrb[0].mxu0
  %v1572 = vadd.f32 0.0, %v1571
  %v1573 = vpop.f32.mrb[0].mxu0
  %v1574 = vadd.f32 0.0, %v1573
  %1575 = vdwg.mxu0
  %v1576 = vadd.f32 %v1470, %v1572
  %v1577 = vadd.f32 %v1471, %v1574
  %s1578 = scalar_lea.vmem %s3, 1024
  %v1579 = vld [vmem:[%s1578] sm:$0xff]
  %v1580 = vld [vmem:[%s1578 + $0x8] sm:$0xff]
  %v1581 = vld [vmem:[%s1578 + $0x10] sm:$0xff]
  %v1582 = vld [vmem:[%s1578 + $0x18] sm:$0xff]
  %v1583 = vld [vmem:[%s1578 + $0x20] sm:$0xff]
  %v1584 = vld [vmem:[%s1578 + $0x28] sm:$0xff]
  %v1585 = vld [vmem:[%s1578 + $0x30] sm:$0xff]
  %v1586 = vld [vmem:[%s1578 + $0x38] sm:$0xff]
  %v1587 = vld [vmem:[%s1578 + $0x40] sm:$0xff]
  %v1588 = vld [vmem:[%s1578 + $0x48] sm:$0xff]
  %v1589 = vld [vmem:[%s1578 + $0x50] sm:$0xff]
  %v1590 = vld [vmem:[%s1578 + $0x58] sm:$0xff]
  %v1591 = vld [vmem:[%s1578 + $0x60] sm:$0xff]
  %v1592 = vld [vmem:[%s1578 + $0x68] sm:$0xff]
  %v1593 = vld [vmem:[%s1578 + $0x70] sm:$0xff]
  %v1594 = vld [vmem:[%s1578 + $0x78] sm:$0xff]
  %v1595 = vld [vmem:[%s1578 + $0x80] sm:$0xff]
  %v1596 = vld [vmem:[%s1578 + $0x88] sm:$0xff]
  %v1597 = vld [vmem:[%s1578 + $0x90] sm:$0xff]
  %v1598 = vld [vmem:[%s1578 + $0x98] sm:$0xff]
  %v1599 = vld [vmem:[%s1578 + $0xa0] sm:$0xff]
  %v1600 = vld [vmem:[%s1578 + $0xa8] sm:$0xff]
  %v1601 = vld [vmem:[%s1578 + $0xb0] sm:$0xff]
  %v1602 = vld [vmem:[%s1578 + $0xb8] sm:$0xff]
  %v1603 = vld [vmem:[%s1578 + $0xc0] sm:$0xff]
  %v1604 = vld [vmem:[%s1578 + $0xc8] sm:$0xff]
  %v1605 = vld [vmem:[%s1578 + $0xd0] sm:$0xff]
  %v1606 = vld [vmem:[%s1578 + $0xd8] sm:$0xff]
  %v1607 = vld [vmem:[%s1578 + $0xe0] sm:$0xff]
  %v1608 = vld [vmem:[%s1578 + $0xe8] sm:$0xff]
  %v1609 = vld [vmem:[%s1578 + $0xf0] sm:$0xff]
  %v1610 = vld [vmem:[%s1578 + $0xf8] sm:$0xff]
  %1611 = vmatprep.subr.mxu0 %v1580
  %1612 = vmatpush1.msra.mxu0 %v1579
  %1613 = vmatprep.subr.mxu0 %v1582
  %1614 = vmatpush1.msra.mxu0 %v1581
  %1615 = vmatprep.subr.mxu0 %v1584
  %1616 = vmatpush1.msra.mxu0 %v1583
  %1617 = vmatprep.subr.mxu0 %v1586
  %1618 = vmatpush1.msra.mxu0 %v1585
  %1619 = vmatprep.subr.mxu0 %v1588
  %1620 = vmatpush1.msra.mxu0 %v1587
  %1621 = vmatprep.subr.mxu0 %v1590
  %1622 = vmatpush1.msra.mxu0 %v1589
  %1623 = vmatprep.subr.mxu0 %v1592
  %1624 = vmatpush1.msra.mxu0 %v1591
  %1625 = vmatprep.subr.mxu0 %v1594
  %1626 = vmatpush1.msra.mxu0 %v1593
  %1627 = vmatprep.subr.mxu0 %v1596
  %1628 = vmatpush1.msra.mxu0 %v1595
  %1629 = vmatprep.subr.mxu0 %v1598
  %1630 = vmatpush1.msra.mxu0 %v1597
  %1631 = vmatprep.subr.mxu0 %v1600
  %1632 = vmatpush1.msra.mxu0 %v1599
  %1633 = vmatprep.subr.mxu0 %v1602
  %1634 = vmatpush1.msra.mxu0 %v1601
  %1635 = vmatprep.subr.mxu0 %v1604
  %1636 = vmatpush1.msra.mxu0 %v1603
  %1637 = vmatprep.subr.mxu0 %v1606
  %1638 = vmatpush1.msra.mxu0 %v1605
  %1639 = vmatprep.subr.mxu0 %v1608
  %1640 = vmatpush1.msra.mxu0 %v1607
  %1641 = vmatprep.subr.mxu0 %v1610
  %1642 = vmatpush1.msra.mxu0 %v1609
  %1643 = vmatprep.subr.mxu0 0.0
  %1644 = vmatpush1.msra.mxu0 0.0
  %1645 = vmatprep.subr.mxu0 0.0
  %1646 = vmatpush1.msra.mxu0 0.0
  %1647 = vmatprep.subr.mxu0 0.0
  %1648 = vmatpush1.msra.mxu0 0.0
  %1649 = vmatprep.subr.mxu0 0.0
  %1650 = vmatpush1.msra.mxu0 0.0
  %1651 = vmatprep.subr.mxu0 0.0
  %1652 = vmatpush1.msra.mxu0 0.0
  %1653 = vmatprep.subr.mxu0 0.0
  %1654 = vmatpush1.msra.mxu0 0.0
  %1655 = vmatprep.subr.mxu0 0.0
  %1656 = vmatpush1.msra.mxu0 0.0
  %1657 = vmatprep.subr.mxu0 0.0
  %1658 = vmatpush1.msra.mxu0 0.0
  %1659 = vmatprep.subr.mxu0 0.0
  %1660 = vmatpush1.msra.mxu0 0.0
  %1661 = vmatprep.subr.mxu0 0.0
  %1662 = vmatpush1.msra.mxu0 0.0
  %1663 = vmatprep.subr.mxu0 0.0
  %1664 = vmatpush1.msra.mxu0 0.0
  %1665 = vmatprep.subr.mxu0 0.0
  %1666 = vmatpush1.msra.mxu0 0.0
  %1667 = vmatprep.subr.mxu0 0.0
  %1668 = vmatpush1.msra.mxu0 0.0
  %1669 = vmatprep.subr.mxu0 0.0
  %1670 = vmatpush1.msra.mxu0 0.0
  %1671 = vmatprep.subr.mxu0 0.0
  %1672 = vmatpush1.msra.mxu0 0.0
  %1673 = vmatprep.subr.mxu0 0.0
  %1674 = vmatpush1.msra.mxu0 0.0
  %1675 = vmatprep.mubr.f32.mxu0 0.0
  %1676 = vmatmul.mubr.f32.gmra.mrb[0].mxu0 %v1138
  %v1677 = vpop.f32.mrb[0].mxu0
  %v1678 = vadd.f32 0.0, %v1677
  %v1679 = vpop.f32.mrb[0].mxu0
  %v1680 = vadd.f32 0.0, %v1679
  %1681 = vdwg.mxu0
  %v1682 = vadd.f32 %v1576, %v1678
  %v1683 = vadd.f32 %v1577, %v1680
  %s1684 = scalar_lea.vmem %s3, 1280
  %v1685 = vld [vmem:[%s1684] sm:$0xff]
  %v1686 = vld [vmem:[%s1684 + $0x8] sm:$0xff]
  %v1687 = vld [vmem:[%s1684 + $0x10] sm:$0xff]
  %v1688 = vld [vmem:[%s1684 + $0x18] sm:$0xff]
  %v1689 = vld [vmem:[%s1684 + $0x20] sm:$0xff]
  %v1690 = vld [vmem:[%s1684 + $0x28] sm:$0xff]
  %v1691 = vld [vmem:[%s1684 + $0x30] sm:$0xff]
  %v1692 = vld [vmem:[%s1684 + $0x38] sm:$0xff]
  %v1693 = vld [vmem:[%s1684 + $0x40] sm:$0xff]
  %v1694 = vld [vmem:[%s1684 + $0x48] sm:$0xff]
  %v1695 = vld [vmem:[%s1684 + $0x50] sm:$0xff]
  %v1696 = vld [vmem:[%s1684 + $0x58] sm:$0xff]
  %v1697 = vld [vmem:[%s1684 + $0x60] sm:$0xff]
  %v1698 = vld [vmem:[%s1684 + $0x68] sm:$0xff]
  %v1699 = vld [vmem:[%s1684 + $0x70] sm:$0xff]
  %v1700 = vld [vmem:[%s1684 + $0x78] sm:$0xff]
  %v1701 = vld [vmem:[%s1684 + $0x80] sm:$0xff]
  %v1702 = vld [vmem:[%s1684 + $0x88] sm:$0xff]
  %v1703 = vld [vmem:[%s1684 + $0x90] sm:$0xff]
  %v1704 = vld [vmem:[%s1684 + $0x98] sm:$0xff]
  %v1705 = vld [vmem:[%s1684 + $0xa0] sm:$0xff]
  %v1706 = vld [vmem:[%s1684 + $0xa8] sm:$0xff]
  %v1707 = vld [vmem:[%s1684 + $0xb0] sm:$0xff]
  %v1708 = vld [vmem:[%s1684 + $0xb8] sm:$0xff]
  %v1709 = vld [vmem:[%s1684 + $0xc0] sm:$0xff]
  %v1710 = vld [vmem:[%s1684 + $0xc8] sm:$0xff]
  %v1711 = vld [vmem:[%s1684 + $0xd0] sm:$0xff]
  %v1712 = vld [vmem:[%s1684 + $0xd8] sm:$0xff]
  %v1713 = vld [vmem:[%s1684 + $0xe0] sm:$0xff]
  %v1714 = vld [vmem:[%s1684 + $0xe8] sm:$0xff]
  %v1715 = vld [vmem:[%s1684 + $0xf0] sm:$0xff]
  %v1716 = vld [vmem:[%s1684 + $0xf8] sm:$0xff]
  %1717 = vmatprep.subr.mxu0 %v1686
  %1718 = vmatpush1.msra.mxu0 %v1685
  %1719 = vmatprep.subr.mxu0 %v1688
  %1720 = vmatpush1.msra.mxu0 %v1687
  %1721 = vmatprep.subr.mxu0 %v1690
  %1722 = vmatpush1.msra.mxu0 %v1689
  %1723 = vmatprep.subr.mxu0 %v1692
  %1724 = vmatpush1.msra.mxu0 %v1691
  %1725 = vmatprep.subr.mxu0 %v1694
  %1726 = vmatpush1.msra.mxu0 %v1693
  %1727 = vmatprep.subr.mxu0 %v1696
  %1728 = vmatpush1.msra.mxu0 %v1695
  %1729 = vmatprep.subr.mxu0 %v1698
  %1730 = vmatpush1.msra.mxu0 %v1697
  %1731 = vmatprep.subr.mxu0 %v1700
  %1732 = vmatpush1.msra.mxu0 %v1699
  %1733 = vmatprep.subr.mxu0 %v1702
  %1734 = vmatpush1.msra.mxu0 %v1701
  %1735 = vmatprep.subr.mxu0 %v1704
  %1736 = vmatpush1.msra.mxu0 %v1703
  %1737 = vmatprep.subr.mxu0 %v1706
  %1738 = vmatpush1.msra.mxu0 %v1705
  %1739 = vmatprep.subr.mxu0 %v1708
  %1740 = vmatpush1.msra.mxu0 %v1707
  %1741 = vmatprep.subr.mxu0 %v1710
  %1742 = vmatpush1.msra.mxu0 %v1709
  %1743 = vmatprep.subr.mxu0 %v1712
  %1744 = vmatpush1.msra.mxu0 %v1711
  %1745 = vmatprep.subr.mxu0 %v1714
  %1746 = vmatpush1.msra.mxu0 %v1713
  %1747 = vmatprep.subr.mxu0 %v1716
  %1748 = vmatpush1.msra.mxu0 %v1715
  %1749 = vmatprep.subr.mxu0 0.0
  %1750 = vmatpush1.msra.mxu0 0.0
  %1751 = vmatprep.subr.mxu0 0.0
  %1752 = vmatpush1.msra.mxu0 0.0
  %1753 = vmatprep.subr.mxu0 0.0
  %1754 = vmatpush1.msra.mxu0 0.0
  %1755 = vmatprep.subr.mxu0 0.0
  %1756 = vmatpush1.msra.mxu0 0.0
  %1757 = vmatprep.subr.mxu0 0.0
  %1758 = vmatpush1.msra.mxu0 0.0
  %1759 = vmatprep.subr.mxu0 0.0
  %1760 = vmatpush1.msra.mxu0 0.0
  %1761 = vmatprep.subr.mxu0 0.0
  %1762 = vmatpush1.msra.mxu0 0.0
  %1763 = vmatprep.subr.mxu0 0.0
  %1764 = vmatpush1.msra.mxu0 0.0
  %1765 = vmatprep.subr.mxu0 0.0
  %1766 = vmatpush1.msra.mxu0 0.0
  %1767 = vmatprep.subr.mxu0 0.0
  %1768 = vmatpush1.msra.mxu0 0.0
  %1769 = vmatprep.subr.mxu0 0.0
  %1770 = vmatpush1.msra.mxu0 0.0
  %1771 = vmatprep.subr.mxu0 0.0
  %1772 = vmatpush1.msra.mxu0 0.0
  %1773 = vmatprep.subr.mxu0 0.0
  %1774 = vmatpush1.msra.mxu0 0.0
  %1775 = vmatprep.subr.mxu0 0.0
  %1776 = vmatpush1.msra.mxu0 0.0
  %1777 = vmatprep.subr.mxu0 0.0
  %1778 = vmatpush1.msra.mxu0 0.0
  %1779 = vmatprep.subr.mxu0 0.0
  %1780 = vmatpush1.msra.mxu0 0.0
  %1781 = vmatprep.mubr.f32.mxu0 0.0
  %1782 = vmatmul.mubr.f32.gmra.mrb[0].mxu0 %v1139
  %v1783 = vpop.f32.mrb[0].mxu0
  %v1784 = vadd.f32 0.0, %v1783
  %v1785 = vpop.f32.mrb[0].mxu0
  %v1786 = vadd.f32 0.0, %v1785
  %1787 = vdwg.mxu0
  %v1788 = vadd.f32 %v1682, %v1784
  %v1789 = vadd.f32 %v1683, %v1786
  %s1790 = scalar_lea.vmem %s3, 1536
  %v1791 = vld [vmem:[%s1790] sm:$0xff]
  %v1792 = vld [vmem:[%s1790 + $0x8] sm:$0xff]
  %v1793 = vld [vmem:[%s1790 + $0x10] sm:$0xff]
  %v1794 = vld [vmem:[%s1790 + $0x18] sm:$0xff]
  %v1795 = vld [vmem:[%s1790 + $0x20] sm:$0xff]
  %v1796 = vld [vmem:[%s1790 + $0x28] sm:$0xff]
  %v1797 = vld [vmem:[%s1790 + $0x30] sm:$0xff]
  %v1798 = vld [vmem:[%s1790 + $0x38] sm:$0xff]
  %v1799 = vld [vmem:[%s1790 + $0x40] sm:$0xff]
  %v1800 = vld [vmem:[%s1790 + $0x48] sm:$0xff]
  %v1801 = vld [vmem:[%s1790 + $0x50] sm:$0xff]
  %v1802 = vld [vmem:[%s1790 + $0x58] sm:$0xff]
  %v1803 = vld [vmem:[%s1790 + $0x60] sm:$0xff]
  %v1804 = vld [vmem:[%s1790 + $0x68] sm:$0xff]
  %v1805 = vld [vmem:[%s1790 + $0x70] sm:$0xff]
  %v1806 = vld [vmem:[%s1790 + $0x78] sm:$0xff]
  %v1807 = vld [vmem:[%s1790 + $0x80] sm:$0xff]
  %v1808 = vld [vmem:[%s1790 + $0x88] sm:$0xff]
  %v1809 = vld [vmem:[%s1790 + $0x90] sm:$0xff]
  %v1810 = vld [vmem:[%s1790 + $0x98] sm:$0xff]
  %v1811 = vld [vmem:[%s1790 + $0xa0] sm:$0xff]
  %v1812 = vld [vmem:[%s1790 + $0xa8] sm:$0xff]
  %v1813 = vld [vmem:[%s1790 + $0xb0] sm:$0xff]
  %v1814 = vld [vmem:[%s1790 + $0xb8] sm:$0xff]
  %v1815 = vld [vmem:[%s1790 + $0xc0] sm:$0xff]
  %v1816 = vld [vmem:[%s1790 + $0xc8] sm:$0xff]
  %v1817 = vld [vmem:[%s1790 + $0xd0] sm:$0xff]
  %v1818 = vld [vmem:[%s1790 + $0xd8] sm:$0xff]
  %v1819 = vld [vmem:[%s1790 + $0xe0] sm:$0xff]
  %v1820 = vld [vmem:[%s1790 + $0xe8] sm:$0xff]
  %v1821 = vld [vmem:[%s1790 + $0xf0] sm:$0xff]
  %v1822 = vld [vmem:[%s1790 + $0xf8] sm:$0xff]
  %1823 = vmatprep.subr.mxu0 %v1792
  %1824 = vmatpush1.msra.mxu0 %v1791
  %1825 = vmatprep.subr.mxu0 %v1794
  %1826 = vmatpush1.msra.mxu0 %v1793
  %1827 = vmatprep.subr.mxu0 %v1796
  %1828 = vmatpush1.msra.mxu0 %v1795
  %1829 = vmatprep.subr.mxu0 %v1798
  %1830 = vmatpush1.msra.mxu0 %v1797
  %1831 = vmatprep.subr.mxu0 %v1800
  %1832 = vmatpush1.msra.mxu0 %v1799
  %1833 = vmatprep.subr.mxu0 %v1802
  %1834 = vmatpush1.msra.mxu0 %v1801
  %1835 = vmatprep.subr.mxu0 %v1804
  %1836 = vmatpush1.msra.mxu0 %v1803
  %1837 = vmatprep.subr.mxu0 %v1806
  %1838 = vmatpush1.msra.mxu0 %v1805
  %1839 = vmatprep.subr.mxu0 %v1808
  %1840 = vmatpush1.msra.mxu0 %v1807
  %1841 = vmatprep.subr.mxu0 %v1810
  %1842 = vmatpush1.msra.mxu0 %v1809
  %1843 = vmatprep.subr.mxu0 %v1812
  %1844 = vmatpush1.msra.mxu0 %v1811
  %1845 = vmatprep.subr.mxu0 %v1814
  %1846 = vmatpush1.msra.mxu0 %v1813
  %1847 = vmatprep.subr.mxu0 %v1816
  %1848 = vmatpush1.msra.mxu0 %v1815
  %1849 = vmatprep.subr.mxu0 %v1818
  %1850 = vmatpush1.msra.mxu0 %v1817
  %1851 = vmatprep.subr.mxu0 %v1820
  %1852 = vmatpush1.msra.mxu0 %v1819
  %1853 = vmatprep.subr.mxu0 %v1822
  %1854 = vmatpush1.msra.mxu0 %v1821
  %1855 = vmatprep.subr.mxu0 0.0
  %1856 = vmatpush1.msra.mxu0 0.0
  %1857 = vmatprep.subr.mxu0 0.0
  %1858 = vmatpush1.msra.mxu0 0.0
  %1859 = vmatprep.subr.mxu0 0.0
  %1860 = vmatpush1.msra.mxu0 0.0
  %1861 = vmatprep.subr.mxu0 0.0
  %1862 = vmatpush1.msra.mxu0 0.0
  %1863 = vmatprep.subr.mxu0 0.0
  %1864 = vmatpush1.msra.mxu0 0.0
  %1865 = vmatprep.subr.mxu0 0.0
  %1866 = vmatpush1.msra.mxu0 0.0
  %1867 = vmatprep.subr.mxu0 0.0
  %1868 = vmatpush1.msra.mxu0 0.0
  %1869 = vmatprep.subr.mxu0 0.0
  %1870 = vmatpush1.msra.mxu0 0.0
  %1871 = vmatprep.subr.mxu0 0.0
  %1872 = vmatpush1.msra.mxu0 0.0
  %1873 = vmatprep.subr.mxu0 0.0
  %1874 = vmatpush1.msra.mxu0 0.0
  %1875 = vmatprep.subr.mxu0 0.0
  %1876 = vmatpush1.msra.mxu0 0.0
  %1877 = vmatprep.subr.mxu0 0.0
  %1878 = vmatpush1.msra.mxu0 0.0
  %1879 = vmatprep.subr.mxu0 0.0
  %1880 = vmatpush1.msra.mxu0 0.0
  %1881 = vmatprep.subr.mxu0 0.0
  %1882 = vmatpush1.msra.mxu0 0.0
  %1883 = vmatprep.subr.mxu0 0.0
  %1884 = vmatpush1.msra.mxu0 0.0
  %1885 = vmatprep.subr.mxu0 0.0
  %1886 = vmatpush1.msra.mxu0 0.0
  %1887 = vmatprep.mubr.f32.mxu0 0.0
  %1888 = vmatmul.mubr.f32.gmra.mrb[0].mxu0 %v1140
  %v1889 = vpop.f32.mrb[0].mxu0
  %v1890 = vadd.f32 0.0, %v1889
  %v1891 = vpop.f32.mrb[0].mxu0
  %v1892 = vadd.f32 0.0, %v1891
  %1893 = vdwg.mxu0
  %v1894 = vadd.f32 %v1788, %v1890
  %v1895 = vadd.f32 %v1789, %v1892
  %s1896 = scalar_lea.vmem %s3, 1792
  %v1897 = vld [vmem:[%s1896] sm:$0xff]
  %v1898 = vld [vmem:[%s1896 + $0x8] sm:$0xff]
  %v1899 = vld [vmem:[%s1896 + $0x10] sm:$0xff]
  %v1900 = vld [vmem:[%s1896 + $0x18] sm:$0xff]
  %v1901 = vld [vmem:[%s1896 + $0x20] sm:$0xff]
  %v1902 = vld [vmem:[%s1896 + $0x28] sm:$0xff]
  %v1903 = vld [vmem:[%s1896 + $0x30] sm:$0xff]
  %v1904 = vld [vmem:[%s1896 + $0x38] sm:$0xff]
  %v1905 = vld [vmem:[%s1896 + $0x40] sm:$0xff]
  %v1906 = vld [vmem:[%s1896 + $0x48] sm:$0xff]
  %v1907 = vld [vmem:[%s1896 + $0x50] sm:$0xff]
  %v1908 = vld [vmem:[%s1896 + $0x58] sm:$0xff]
  %v1909 = vld [vmem:[%s1896 + $0x60] sm:$0xff]
  %v1910 = vld [vmem:[%s1896 + $0x68] sm:$0xff]
  %v1911 = vld [vmem:[%s1896 + $0x70] sm:$0xff]
  %v1912 = vld [vmem:[%s1896 + $0x78] sm:$0xff]
  %v1913 = vld [vmem:[%s1896 + $0x80] sm:$0xff]
  %v1914 = vld [vmem:[%s1896 + $0x88] sm:$0xff]
  %v1915 = vld [vmem:[%s1896 + $0x90] sm:$0xff]
  %v1916 = vld [vmem:[%s1896 + $0x98] sm:$0xff]
  %v1917 = vld [vmem:[%s1896 + $0xa0] sm:$0xff]
  %v1918 = vld [vmem:[%s1896 + $0xa8] sm:$0xff]
  %v1919 = vld [vmem:[%s1896 + $0xb0] sm:$0xff]
  %v1920 = vld [vmem:[%s1896 + $0xb8] sm:$0xff]
  %v1921 = vld [vmem:[%s1896 + $0xc0] sm:$0xff]
  %v1922 = vld [vmem:[%s1896 + $0xc8] sm:$0xff]
  %v1923 = vld [vmem:[%s1896 + $0xd0] sm:$0xff]
  %v1924 = vld [vmem:[%s1896 + $0xd8] sm:$0xff]
  %v1925 = vld [vmem:[%s1896 + $0xe0] sm:$0xff]
  %v1926 = vld [vmem:[%s1896 + $0xe8] sm:$0xff]
  %v1927 = vld [vmem:[%s1896 + $0xf0] sm:$0xff]
  %v1928 = vld [vmem:[%s1896 + $0xf8] sm:$0xff]
  %1929 = vmatprep.subr.mxu0 %v1898
  %1930 = vmatpush1.msra.mxu0 %v1897
  %1931 = vmatprep.subr.mxu0 %v1900
  %1932 = vmatpush1.msra.mxu0 %v1899
  %1933 = vmatprep.subr.mxu0 %v1902
  %1934 = vmatpush1.msra.mxu0 %v1901
  %1935 = vmatprep.subr.mxu0 %v1904
  %1936 = vmatpush1.msra.mxu0 %v1903
  %1937 = vmatprep.subr.mxu0 %v1906
  %1938 = vmatpush1.msra.mxu0 %v1905
  %1939 = vmatprep.subr.mxu0 %v1908
  %1940 = vmatpush1.msra.mxu0 %v1907
  %1941 = vmatprep.subr.mxu0 %v1910
  %1942 = vmatpush1.msra.mxu0 %v1909
  %1943 = vmatprep.subr.mxu0 %v1912
  %1944 = vmatpush1.msra.mxu0 %v1911
  %1945 = vmatprep.subr.mxu0 %v1914
  %1946 = vmatpush1.msra.mxu0 %v1913
  %1947 = vmatprep.subr.mxu0 %v1916
  %1948 = vmatpush1.msra.mxu0 %v1915
  %1949 = vmatprep.subr.mxu0 %v1918
  %1950 = vmatpush1.msra.mxu0 %v1917
  %1951 = vmatprep.subr.mxu0 %v1920
  %1952 = vmatpush1.msra.mxu0 %v1919
  %1953 = vmatprep.subr.mxu0 %v1922
  %1954 = vmatpush1.msra.mxu0 %v1921
  %1955 = vmatprep.subr.mxu0 %v1924
  %1956 = vmatpush1.msra.mxu0 %v1923
  %1957 = vmatprep.subr.mxu0 %v1926
  %1958 = vmatpush1.msra.mxu0 %v1925
  %1959 = vmatprep.subr.mxu0 %v1928
  %1960 = vmatpush1.msra.mxu0 %v1927
  %1961 = vmatprep.subr.mxu0 0.0
  %1962 = vmatpush1.msra.mxu0 0.0
  %1963 = vmatprep.subr.mxu0 0.0
  %1964 = vmatpush1.msra.mxu0 0.0
  %1965 = vmatprep.subr.mxu0 0.0
  %1966 = vmatpush1.msra.mxu0 0.0
  %1967 = vmatprep.subr.mxu0 0.0
  %1968 = vmatpush1.msra.mxu0 0.0
  %1969 = vmatprep.subr.mxu0 0.0
  %1970 = vmatpush1.msra.mxu0 0.0
  %1971 = vmatprep.subr.mxu0 0.0
  %1972 = vmatpush1.msra.mxu0 0.0
  %1973 = vmatprep.subr.mxu0 0.0
  %1974 = vmatpush1.msra.mxu0 0.0
  %1975 = vmatprep.subr.mxu0 0.0
  %1976 = vmatpush1.msra.mxu0 0.0
  %1977 = vmatprep.subr.mxu0 0.0
  %1978 = vmatpush1.msra.mxu0 0.0
  %1979 = vmatprep.subr.mxu0 0.0
  %1980 = vmatpush1.msra.mxu0 0.0
  %1981 = vmatprep.subr.mxu0 0.0
  %1982 = vmatpush1.msra.mxu0 0.0
  %1983 = vmatprep.subr.mxu0 0.0
  %1984 = vmatpush1.msra.mxu0 0.0
  %1985 = vmatprep.subr.mxu0 0.0
  %1986 = vmatpush1.msra.mxu0 0.0
  %1987 = vmatprep.subr.mxu0 0.0
  %1988 = vmatpush1.msra.mxu0 0.0
  %1989 = vmatprep.subr.mxu0 0.0
  %1990 = vmatpush1.msra.mxu0 0.0
  %1991 = vmatprep.subr.mxu0 0.0
  %1992 = vmatpush1.msra.mxu0 0.0
  %1993 = vmatprep.mubr.f32.mxu0 0.0
  %1994 = vmatmul.mubr.f32.gmra.mrb[0].mxu0 %v1141
  %v1995 = vpop.f32.mrb[0].mxu0
  %v1996 = vadd.f32 0.0, %v1995
  %v1997 = vpop.f32.mrb[0].mxu0
  %v1998 = vadd.f32 0.0, %v1997
  %1999 = vdwg.mxu0
  %v2000 = vadd.f32 %v1894, %v1996
  %v2001 = vadd.f32 %v1895, %v1998
  %s2002 = scalar_lea.vmem %s3, 2048
  %v2003 = vld [vmem:[%s2002] sm:$0xff]
  %v2004 = vld [vmem:[%s2002 + $0x8] sm:$0xff]
  %v2005 = vld [vmem:[%s2002 + $0x10] sm:$0xff]
  %v2006 = vld [vmem:[%s2002 + $0x18] sm:$0xff]
  %v2007 = vld [vmem:[%s2002 + $0x20] sm:$0xff]
  %v2008 = vld [vmem:[%s2002 + $0x28] sm:$0xff]
  %v2009 = vld [vmem:[%s2002 + $0x30] sm:$0xff]
  %v2010 = vld [vmem:[%s2002 + $0x38] sm:$0xff]
  %v2011 = vld [vmem:[%s2002 + $0x40] sm:$0xff]
  %v2012 = vld [vmem:[%s2002 + $0x48] sm:$0xff]
  %v2013 = vld [vmem:[%s2002 + $0x50] sm:$0xff]
  %v2014 = vld [vmem:[%s2002 + $0x58] sm:$0xff]
  %v2015 = vld [vmem:[%s2002 + $0x60] sm:$0xff]
  %v2016 = vld [vmem:[%s2002 + $0x68] sm:$0xff]
  %v2017 = vld [vmem:[%s2002 + $0x70] sm:$0xff]
  %v2018 = vld [vmem:[%s2002 + $0x78] sm:$0xff]
  %v2019 = vld [vmem:[%s2002 + $0x80] sm:$0xff]
  %v2020 = vld [vmem:[%s2002 + $0x88] sm:$0xff]
  %v2021 = vld [vmem:[%s2002 + $0x90] sm:$0xff]
  %v2022 = vld [vmem:[%s2002 + $0x98] sm:$0xff]
  %v2023 = vld [vmem:[%s2002 + $0xa0] sm:$0xff]
  %v2024 = vld [vmem:[%s2002 + $0xa8] sm:$0xff]
  %v2025 = vld [vmem:[%s2002 + $0xb0] sm:$0xff]
  %v2026 = vld [vmem:[%s2002 + $0xb8] sm:$0xff]
  %v2027 = vld [vmem:[%s2002 + $0xc0] sm:$0xff]
  %v2028 = vld [vmem:[%s2002 + $0xc8] sm:$0xff]
  %v2029 = vld [vmem:[%s2002 + $0xd0] sm:$0xff]
  %v2030 = vld [vmem:[%s2002 + $0xd8] sm:$0xff]
  %v2031 = vld [vmem:[%s2002 + $0xe0] sm:$0xff]
  %v2032 = vld [vmem:[%s2002 + $0xe8] sm:$0xff]
  %v2033 = vld [vmem:[%s2002 + $0xf0] sm:$0xff]
  %v2034 = vld [vmem:[%s2002 + $0xf8] sm:$0xff]
  %2035 = vmatprep.subr.mxu0 %v2004
  %2036 = vmatpush1.msra.mxu0 %v2003
  %2037 = vmatprep.subr.mxu0 %v2006
  %2038 = vmatpush1.msra.mxu0 %v2005
  %2039 = vmatprep.subr.mxu0 %v2008
  %2040 = vmatpush1.msra.mxu0 %v2007
  %2041 = vmatprep.subr.mxu0 %v2010
  %2042 = vmatpush1.msra.mxu0 %v2009
  %2043 = vmatprep.subr.mxu0 %v2012
  %2044 = vmatpush1.msra.mxu0 %v2011
  %2045 = vmatprep.subr.mxu0 %v2014
  %2046 = vmatpush1.msra.mxu0 %v2013
  %2047 = vmatprep.subr.mxu0 %v2016
  %2048 = vmatpush1.msra.mxu0 %v2015
  %2049 = vmatprep.subr.mxu0 %v2018
  %2050 = vmatpush1.msra.mxu0 %v2017
  %2051 = vmatprep.subr.mxu0 %v2020
  %2052 = vmatpush1.msra.mxu0 %v2019
  %2053 = vmatprep.subr.mxu0 %v2022
  %2054 = vmatpush1.msra.mxu0 %v2021
  %2055 = vmatprep.subr.mxu0 %v2024
  %2056 = vmatpush1.msra.mxu0 %v2023
  %2057 = vmatprep.subr.mxu0 %v2026
  %2058 = vmatpush1.msra.mxu0 %v2025
  %2059 = vmatprep.subr.mxu0 %v2028
  %2060 = vmatpush1.msra.mxu0 %v2027
  %2061 = vmatprep.subr.mxu0 %v2030
  %2062 = vmatpush1.msra.mxu0 %v2029
  %2063 = vmatprep.subr.mxu0 %v2032
  %2064 = vmatpush1.msra.mxu0 %v2031
  %2065 = vmatprep.subr.mxu0 %v2034
  %2066 = vmatpush1.msra.mxu0 %v2033
  %2067 = vmatprep.subr.mxu0 0.0
  %2068 = vmatpush1.msra.mxu0 0.0
  %2069 = vmatprep.subr.mxu0 0.0
  %2070 = vmatpush1.msra.mxu0 0.0
  %2071 = vmatprep.subr.mxu0 0.0
  %2072 = vmatpush1.msra.mxu0 0.0
  %2073 = vmatprep.subr.mxu0 0.0
  %2074 = vmatpush1.msra.mxu0 0.0
  %2075 = vmatprep.subr.mxu0 0.0
  %2076 = vmatpush1.msra.mxu0 0.0
  %2077 = vmatprep.subr.mxu0 0.0
  %2078 = vmatpush1.msra.mxu0 0.0
  %2079 = vmatprep.subr.mxu0 0.0
  %2080 = vmatpush1.msra.mxu0 0.0
  %2081 = vmatprep.subr.mxu0 0.0
  %2082 = vmatpush1.msra.mxu0 0.0
  %2083 = vmatprep.subr.mxu0 0.0
  %2084 = vmatpush1.msra.mxu0 0.0
  %2085 = vmatprep.subr.mxu0 0.0
  %2086 = vmatpush1.msra.mxu0 0.0
  %2087 = vmatprep.subr.mxu0 0.0
  %2088 = vmatpush1.msra.mxu0 0.0
  %2089 = vmatprep.subr.mxu0 0.0
  %2090 = vmatpush1.msra.mxu0 0.0
  %2091 = vmatprep.subr.mxu0 0.0
  %2092 = vmatpush1.msra.mxu0 0.0
  %2093 = vmatprep.subr.mxu0 0.0
  %2094 = vmatpush1.msra.mxu0 0.0
  %2095 = vmatprep.subr.mxu0 0.0
  %2096 = vmatpush1.msra.mxu0 0.0
  %2097 = vmatprep.subr.mxu0 0.0
  %2098 = vmatpush1.msra.mxu0 0.0
  %2099 = vmatprep.mubr.f32.mxu0 0.0
  %2100 = vmatmul.mubr.f32.gmra.mrb[0].mxu0 %v1142
  %v2101 = vpop.f32.mrb[0].mxu0
  %v2102 = vadd.f32 0.0, %v2101
  %v2103 = vpop.f32.mrb[0].mxu0
  %v2104 = vadd.f32 0.0, %v2103
  %2105 = vdwg.mxu0
  %v2106 = vadd.f32 %v2000, %v2102
  %v2107 = vadd.f32 %v2001, %v2104
  %s2108 = scalar_lea.vmem %s3, 2304
  %v2109 = vld [vmem:[%s2108] sm:$0xff]
  %v2110 = vld [vmem:[%s2108 + $0x8] sm:$0xff]
  %v2111 = vld [vmem:[%s2108 + $0x10] sm:$0xff]
  %v2112 = vld [vmem:[%s2108 + $0x18] sm:$0xff]
  %v2113 = vld [vmem:[%s2108 + $0x20] sm:$0xff]
  %v2114 = vld [vmem:[%s2108 + $0x28] sm:$0xff]
  %v2115 = vld [vmem:[%s2108 + $0x30] sm:$0xff]
  %v2116 = vld [vmem:[%s2108 + $0x38] sm:$0xff]
  %v2117 = vld [vmem:[%s2108 + $0x40] sm:$0xff]
  %v2118 = vld [vmem:[%s2108 + $0x48] sm:$0xff]
  %v2119 = vld [vmem:[%s2108 + $0x50] sm:$0xff]
  %v2120 = vld [vmem:[%s2108 + $0x58] sm:$0xff]
  %v2121 = vld [vmem:[%s2108 + $0x60] sm:$0xff]
  %v2122 = vld [vmem:[%s2108 + $0x68] sm:$0xff]
  %v2123 = vld [vmem:[%s2108 + $0x70] sm:$0xff]
  %v2124 = vld [vmem:[%s2108 + $0x78] sm:$0xff]
  %v2125 = vld [vmem:[%s2108 + $0x80] sm:$0xff]
  %v2126 = vld [vmem:[%s2108 + $0x88] sm:$0xff]
  %v2127 = vld [vmem:[%s2108 + $0x90] sm:$0xff]
  %v2128 = vld [vmem:[%s2108 + $0x98] sm:$0xff]
  %v2129 = vld [vmem:[%s2108 + $0xa0] sm:$0xff]
  %v2130 = vld [vmem:[%s2108 + $0xa8] sm:$0xff]
  %v2131 = vld [vmem:[%s2108 + $0xb0] sm:$0xff]
  %v2132 = vld [vmem:[%s2108 + $0xb8] sm:$0xff]
  %v2133 = vld [vmem:[%s2108 + $0xc0] sm:$0xff]
  %v2134 = vld [vmem:[%s2108 + $0xc8] sm:$0xff]
  %v2135 = vld [vmem:[%s2108 + $0xd0] sm:$0xff]
  %v2136 = vld [vmem:[%s2108 + $0xd8] sm:$0xff]
  %v2137 = vld [vmem:[%s2108 + $0xe0] sm:$0xff]
  %v2138 = vld [vmem:[%s2108 + $0xe8] sm:$0xff]
  %v2139 = vld [vmem:[%s2108 + $0xf0] sm:$0xff]
  %v2140 = vld [vmem:[%s2108 + $0xf8] sm:$0xff]
  %2141 = vmatprep.subr.mxu0 %v2110
  %2142 = vmatpush1.msra.mxu0 %v2109
  %2143 = vmatprep.subr.mxu0 %v2112
  %2144 = vmatpush1.msra.mxu0 %v2111
  %2145 = vmatprep.subr.mxu0 %v2114
  %2146 = vmatpush1.msra.mxu0 %v2113
  %2147 = vmatprep.subr.mxu0 %v2116
  %2148 = vmatpush1.msra.mxu0 %v2115
  %2149 = vmatprep.subr.mxu0 %v2118
  %2150 = vmatpush1.msra.mxu0 %v2117
  %2151 = vmatprep.subr.mxu0 %v2120
  %2152 = vmatpush1.msra.mxu0 %v2119
  %2153 = vmatprep.subr.mxu0 %v2122
  %2154 = vmatpush1.msra.mxu0 %v2121
  %2155 = vmatprep.subr.mxu0 %v2124
  %2156 = vmatpush1.msra.mxu0 %v2123
  %2157 = vmatprep.subr.mxu0 %v2126
  %2158 = vmatpush1.msra.mxu0 %v2125
  %2159 = vmatprep.subr.mxu0 %v2128
  %2160 = vmatpush1.msra.mxu0 %v2127
  %2161 = vmatprep.subr.mxu0 %v2130
  %2162 = vmatpush1.msra.mxu0 %v2129
  %2163 = vmatprep.subr.mxu0 %v2132
  %2164 = vmatpush1.msra.mxu0 %v2131
  %2165 = vmatprep.subr.mxu0 %v2134
  %2166 = vmatpush1.msra.mxu0 %v2133
  %2167 = vmatprep.subr.mxu0 %v2136
  %2168 = vmatpush1.msra.mxu0 %v2135
  %2169 = vmatprep.subr.mxu0 %v2138
  %2170 = vmatpush1.msra.mxu0 %v2137
  %2171 = vmatprep.subr.mxu0 %v2140
  %2172 = vmatpush1.msra.mxu0 %v2139
  %2173 = vmatprep.subr.mxu0 0.0
  %2174 = vmatpush1.msra.mxu0 0.0
  %2175 = vmatprep.subr.mxu0 0.0
  %2176 = vmatpush1.msra.mxu0 0.0
  %2177 = vmatprep.subr.mxu0 0.0
  %2178 = vmatpush1.msra.mxu0 0.0
  %2179 = vmatprep.subr.mxu0 0.0
  %2180 = vmatpush1.msra.mxu0 0.0
  %2181 = vmatprep.subr.mxu0 0.0
  %2182 = vmatpush1.msra.mxu0 0.0
  %2183 = vmatprep.subr.mxu0 0.0
  %2184 = vmatpush1.msra.mxu0 0.0
  %2185 = vmatprep.subr.mxu0 0.0
  %2186 = vmatpush1.msra.mxu0 0.0
  %2187 = vmatprep.subr.mxu0 0.0
  %2188 = vmatpush1.msra.mxu0 0.0
  %2189 = vmatprep.subr.mxu0 0.0
  %2190 = vmatpush1.msra.mxu0 0.0
  %2191 = vmatprep.subr.mxu0 0.0
  %2192 = vmatpush1.msra.mxu0 0.0
  %2193 = vmatprep.subr.mxu0 0.0
  %2194 = vmatpush1.msra.mxu0 0.0
  %2195 = vmatprep.subr.mxu0 0.0
  %2196 = vmatpush1.msra.mxu0 0.0
  %2197 = vmatprep.subr.mxu0 0.0
  %2198 = vmatpush1.msra.mxu0 0.0
  %2199 = vmatprep.subr.mxu0 0.0
  %2200 = vmatpush1.msra.mxu0 0.0
  %2201 = vmatprep.subr.mxu0 0.0
  %2202 = vmatpush1.msra.mxu0 0.0
  %2203 = vmatprep.subr.mxu0 0.0
  %2204 = vmatpush1.msra.mxu0 0.0
  %2205 = vmatprep.mubr.f32.mxu0 0.0
  %2206 = vmatmul.mubr.f32.gmra.mrb[0].mxu0 %v1143
  %v2207 = vpop.f32.mrb[0].mxu0
  %v2208 = vadd.f32 0.0, %v2207
  %v2209 = vpop.f32.mrb[0].mxu0
  %v2210 = vadd.f32 0.0, %v2209
  %2211 = vdwg.mxu0
  %v2212 = vadd.f32 %v2106, %v2208
  %v2213 = vadd.f32 %v2107, %v2210
  %s2214 = scalar_lea.vmem %s3, 2560
  %v2215 = vld [vmem:[%s2214] sm:$0xff]
  %v2216 = vld [vmem:[%s2214 + $0x8] sm:$0xff]
  %v2217 = vld [vmem:[%s2214 + $0x10] sm:$0xff]
  %v2218 = vld [vmem:[%s2214 + $0x18] sm:$0xff]
  %v2219 = vld [vmem:[%s2214 + $0x20] sm:$0xff]
  %v2220 = vld [vmem:[%s2214 + $0x28] sm:$0xff]
  %v2221 = vld [vmem:[%s2214 + $0x30] sm:$0xff]
  %v2222 = vld [vmem:[%s2214 + $0x38] sm:$0xff]
  %v2223 = vld [vmem:[%s2214 + $0x40] sm:$0xff]
  %v2224 = vld [vmem:[%s2214 + $0x48] sm:$0xff]
  %v2225 = vld [vmem:[%s2214 + $0x50] sm:$0xff]
  %v2226 = vld [vmem:[%s2214 + $0x58] sm:$0xff]
  %v2227 = vld [vmem:[%s2214 + $0x60] sm:$0xff]
  %v2228 = vld [vmem:[%s2214 + $0x68] sm:$0xff]
  %v2229 = vld [vmem:[%s2214 + $0x70] sm:$0xff]
  %v2230 = vld [vmem:[%s2214 + $0x78] sm:$0xff]
  %v2231 = vld [vmem:[%s2214 + $0x80] sm:$0xff]
  %v2232 = vld [vmem:[%s2214 + $0x88] sm:$0xff]
  %v2233 = vld [vmem:[%s2214 + $0x90] sm:$0xff]
  %v2234 = vld [vmem:[%s2214 + $0x98] sm:$0xff]
  %v2235 = vld [vmem:[%s2214 + $0xa0] sm:$0xff]
  %v2236 = vld [vmem:[%s2214 + $0xa8] sm:$0xff]
  %v2237 = vld [vmem:[%s2214 + $0xb0] sm:$0xff]
  %v2238 = vld [vmem:[%s2214 + $0xb8] sm:$0xff]
  %v2239 = vld [vmem:[%s2214 + $0xc0] sm:$0xff]
  %v2240 = vld [vmem:[%s2214 + $0xc8] sm:$0xff]
  %v2241 = vld [vmem:[%s2214 + $0xd0] sm:$0xff]
  %v2242 = vld [vmem:[%s2214 + $0xd8] sm:$0xff]
  %v2243 = vld [vmem:[%s2214 + $0xe0] sm:$0xff]
  %v2244 = vld [vmem:[%s2214 + $0xe8] sm:$0xff]
  %v2245 = vld [vmem:[%s2214 + $0xf0] sm:$0xff]
  %v2246 = vld [vmem:[%s2214 + $0xf8] sm:$0xff]
  %2247 = vmatprep.subr.mxu0 %v2216
  %2248 = vmatpush1.msra.mxu0 %v2215
  %2249 = vmatprep.subr.mxu0 %v2218
  %2250 = vmatpush1.msra.mxu0 %v2217
  %2251 = vmatprep.subr.mxu0 %v2220
  %2252 = vmatpush1.msra.mxu0 %v2219
  %2253 = vmatprep.subr.mxu0 %v2222
  %2254 = vmatpush1.msra.mxu0 %v2221
  %2255 = vmatprep.subr.mxu0 %v2224
  %2256 = vmatpush1.msra.mxu0 %v2223
  %2257 = vmatprep.subr.mxu0 %v2226
  %2258 = vmatpush1.msra.mxu0 %v2225
  %2259 = vmatprep.subr.mxu0 %v2228
  %2260 = vmatpush1.msra.mxu0 %v2227
  %2261 = vmatprep.subr.mxu0 %v2230
  %2262 = vmatpush1.msra.mxu0 %v2229
  %2263 = vmatprep.subr.mxu0 %v2232
  %2264 = vmatpush1.msra.mxu0 %v2231
  %2265 = vmatprep.subr.mxu0 %v2234
  %2266 = vmatpush1.msra.mxu0 %v2233
  %2267 = vmatprep.subr.mxu0 %v2236
  %2268 = vmatpush1.msra.mxu0 %v2235
  %2269 = vmatprep.subr.mxu0 %v2238
  %2270 = vmatpush1.msra.mxu0 %v2237
  %2271 = vmatprep.subr.mxu0 %v2240
  %2272 = vmatpush1.msra.mxu0 %v2239
  %2273 = vmatprep.subr.mxu0 %v2242
  %2274 = vmatpush1.msra.mxu0 %v2241
  %2275 = vmatprep.subr.mxu0 %v2244
  %2276 = vmatpush1.msra.mxu0 %v2243
  %2277 = vmatprep.subr.mxu0 %v2246
  %2278 = vmatpush1.msra.mxu0 %v2245
  %2279 = vmatprep.subr.mxu0 0.0
  %2280 = vmatpush1.msra.mxu0 0.0
  %2281 = vmatprep.subr.mxu0 0.0
  %2282 = vmatpush1.msra.mxu0 0.0
  %2283 = vmatprep.subr.mxu0 0.0
  %2284 = vmatpush1.msra.mxu0 0.0
  %2285 = vmatprep.subr.mxu0 0.0
  %2286 = vmatpush1.msra.mxu0 0.0
  %2287 = vmatprep.subr.mxu0 0.0
  %2288 = vmatpush1.msra.mxu0 0.0
  %2289 = vmatprep.subr.mxu0 0.0
  %2290 = vmatpush1.msra.mxu0 0.0
  %2291 = vmatprep.subr.mxu0 0.0
  %2292 = vmatpush1.msra.mxu0 0.0
  %2293 = vmatprep.subr.mxu0 0.0
  %2294 = vmatpush1.msra.mxu0 0.0
  %2295 = vmatprep.subr.mxu0 0.0
  %2296 = vmatpush1.msra.mxu0 0.0
  %2297 = vmatprep.subr.mxu0 0.0
  %2298 = vmatpush1.msra.mxu0 0.0
  %2299 = vmatprep.subr.mxu0 0.0
  %2300 = vmatpush1.msra.mxu0 0.0
  %2301 = vmatprep.subr.mxu0 0.0
  %2302 = vmatpush1.msra.mxu0 0.0
  %2303 = vmatprep.subr.mxu0 0.0
  %2304 = vmatpush1.msra.mxu0 0.0
  %2305 = vmatprep.subr.mxu0 0.0
  %2306 = vmatpush1.msra.mxu0 0.0
  %2307 = vmatprep.subr.mxu0 0.0
  %2308 = vmatpush1.msra.mxu0 0.0
  %2309 = vmatprep.subr.mxu0 0.0
  %2310 = vmatpush1.msra.mxu0 0.0
  %2311 = vmatprep.mubr.f32.mxu0 0.0
  %2312 = vmatmul.mubr.f32.gmra.mrb[0].mxu0 %v1144
  %v2313 = vpop.f32.mrb[0].mxu0
  %v2314 = vadd.f32 0.0, %v2313
  %v2315 = vpop.f32.mrb[0].mxu0
  %v2316 = vadd.f32 0.0, %v2315
  %2317 = vdwg.mxu0
  %v2318 = vadd.f32 %v2212, %v2314
  %v2319 = vadd.f32 %v2213, %v2316
  %s2320 = scalar_lea.vmem %s3, 2816
  %v2321 = vld [vmem:[%s2320] sm:$0xff]
  %v2322 = vld [vmem:[%s2320 + $0x8] sm:$0xff]
  %v2323 = vld [vmem:[%s2320 + $0x10] sm:$0xff]
  %v2324 = vld [vmem:[%s2320 + $0x18] sm:$0xff]
  %v2325 = vld [vmem:[%s2320 + $0x20] sm:$0xff]
  %v2326 = vld [vmem:[%s2320 + $0x28] sm:$0xff]
  %v2327 = vld [vmem:[%s2320 + $0x30] sm:$0xff]
  %v2328 = vld [vmem:[%s2320 + $0x38] sm:$0xff]
  %v2329 = vld [vmem:[%s2320 + $0x40] sm:$0xff]
  %v2330 = vld [vmem:[%s2320 + $0x48] sm:$0xff]
  %v2331 = vld [vmem:[%s2320 + $0x50] sm:$0xff]
  %v2332 = vld [vmem:[%s2320 + $0x58] sm:$0xff]
  %v2333 = vld [vmem:[%s2320 + $0x60] sm:$0xff]
  %v2334 = vld [vmem:[%s2320 + $0x68] sm:$0xff]
  %v2335 = vld [vmem:[%s2320 + $0x70] sm:$0xff]
  %v2336 = vld [vmem:[%s2320 + $0x78] sm:$0xff]
  %v2337 = vld [vmem:[%s2320 + $0x80] sm:$0xff]
  %v2338 = vld [vmem:[%s2320 + $0x88] sm:$0xff]
  %v2339 = vld [vmem:[%s2320 + $0x90] sm:$0xff]
  %v2340 = vld [vmem:[%s2320 + $0x98] sm:$0xff]
  %v2341 = vld [vmem:[%s2320 + $0xa0] sm:$0xff]
  %v2342 = vld [vmem:[%s2320 + $0xa8] sm:$0xff]
  %v2343 = vld [vmem:[%s2320 + $0xb0] sm:$0xff]
  %v2344 = vld [vmem:[%s2320 + $0xb8] sm:$0xff]
  %v2345 = vld [vmem:[%s2320 + $0xc0] sm:$0xff]
  %v2346 = vld [vmem:[%s2320 + $0xc8] sm:$0xff]
  %v2347 = vld [vmem:[%s2320 + $0xd0] sm:$0xff]
  %v2348 = vld [vmem:[%s2320 + $0xd8] sm:$0xff]
  %v2349 = vld [vmem:[%s2320 + $0xe0] sm:$0xff]
  %v2350 = vld [vmem:[%s2320 + $0xe8] sm:$0xff]
  %v2351 = vld [vmem:[%s2320 + $0xf0] sm:$0xff]
  %v2352 = vld [vmem:[%s2320 + $0xf8] sm:$0xff]
  %2353 = vmatprep.subr.mxu0 %v2322
  %2354 = vmatpush1.msra.mxu0 %v2321
  %2355 = vmatprep.subr.mxu0 %v2324
  %2356 = vmatpush1.msra.mxu0 %v2323
  %2357 = vmatprep.subr.mxu0 %v2326
  %2358 = vmatpush1.msra.mxu0 %v2325
  %2359 = vmatprep.subr.mxu0 %v2328
  %2360 = vmatpush1.msra.mxu0 %v2327
  %2361 = vmatprep.subr.mxu0 %v2330
  %2362 = vmatpush1.msra.mxu0 %v2329
  %2363 = vmatprep.subr.mxu0 %v2332
  %2364 = vmatpush1.msra.mxu0 %v2331
  %2365 = vmatprep.subr.mxu0 %v2334
  %2366 = vmatpush1.msra.mxu0 %v2333
  %2367 = vmatprep.subr.mxu0 %v2336
  %2368 = vmatpush1.msra.mxu0 %v2335
  %2369 = vmatprep.subr.mxu0 %v2338
  %2370 = vmatpush1.msra.mxu0 %v2337
  %2371 = vmatprep.subr.mxu0 %v2340
  %2372 = vmatpush1.msra.mxu0 %v2339
  %2373 = vmatprep.subr.mxu0 %v2342
  %2374 = vmatpush1.msra.mxu0 %v2341
  %2375 = vmatprep.subr.mxu0 %v2344
  %2376 = vmatpush1.msra.mxu0 %v2343
  %2377 = vmatprep.subr.mxu0 %v2346
  %2378 = vmatpush1.msra.mxu0 %v2345
  %2379 = vmatprep.subr.mxu0 %v2348
  %2380 = vmatpush1.msra.mxu0 %v2347
  %2381 = vmatprep.subr.mxu0 %v2350
  %2382 = vmatpush1.msra.mxu0 %v2349
  %2383 = vmatprep.subr.mxu0 %v2352
  %2384 = vmatpush1.msra.mxu0 %v2351
  %2385 = vmatprep.subr.mxu0 0.0
  %2386 = vmatpush1.msra.mxu0 0.0
  %2387 = vmatprep.subr.mxu0 0.0
  %2388 = vmatpush1.msra.mxu0 0.0
  %2389 = vmatprep.subr.mxu0 0.0
  %2390 = vmatpush1.msra.mxu0 0.0
  %2391 = vmatprep.subr.mxu0 0.0
  %2392 = vmatpush1.msra.mxu0 0.0
  %2393 = vmatprep.subr.mxu0 0.0
  %2394 = vmatpush1.msra.mxu0 0.0
  %2395 = vmatprep.subr.mxu0 0.0
  %2396 = vmatpush1.msra.mxu0 0.0
  %2397 = vmatprep.subr.mxu0 0.0
  %2398 = vmatpush1.msra.mxu0 0.0
  %2399 = vmatprep.subr.mxu0 0.0
  %2400 = vmatpush1.msra.mxu0 0.0
  %2401 = vmatprep.subr.mxu0 0.0
  %2402 = vmatpush1.msra.mxu0 0.0
  %2403 = vmatprep.subr.mxu0 0.0
  %2404 = vmatpush1.msra.mxu0 0.0
  %2405 = vmatprep.subr.mxu0 0.0
  %2406 = vmatpush1.msra.mxu0 0.0
  %2407 = vmatprep.subr.mxu0 0.0
  %2408 = vmatpush1.msra.mxu0 0.0
  %2409 = vmatprep.subr.mxu0 0.0
  %2410 = vmatpush1.msra.mxu0 0.0
  %2411 = vmatprep.subr.mxu0 0.0
  %2412 = vmatpush1.msra.mxu0 0.0
  %2413 = vmatprep.subr.mxu0 0.0
  %2414 = vmatpush1.msra.mxu0 0.0
  %2415 = vmatprep.subr.mxu0 0.0
  %2416 = vmatpush1.msra.mxu0 0.0
  %2417 = vmatprep.mubr.f32.mxu0 0.0
  %2418 = vmatmul.mubr.f32.gmra.mrb[0].mxu0 %v1145
  %v2419 = vpop.f32.mrb[0].mxu0
  %v2420 = vadd.f32 0.0, %v2419
  %v2421 = vpop.f32.mrb[0].mxu0
  %v2422 = vadd.f32 0.0, %v2421
  %2423 = vdwg.mxu0
  %v2424 = vadd.f32 %v2318, %v2420
  %v2425 = vadd.f32 %v2319, %v2422
  %s2426 = scalar_lea.vmem %s3, 3072
  %v2427 = vld [vmem:[%s2426] sm:$0xff]
  %v2428 = vld [vmem:[%s2426 + $0x8] sm:$0xff]
  %v2429 = vld [vmem:[%s2426 + $0x10] sm:$0xff]
  %v2430 = vld [vmem:[%s2426 + $0x18] sm:$0xff]
  %v2431 = vld [vmem:[%s2426 + $0x20] sm:$0xff]
  %v2432 = vld [vmem:[%s2426 + $0x28] sm:$0xff]
  %v2433 = vld [vmem:[%s2426 + $0x30] sm:$0xff]
  %v2434 = vld [vmem:[%s2426 + $0x38] sm:$0xff]
  %v2435 = vld [vmem:[%s2426 + $0x40] sm:$0xff]
  %v2436 = vld [vmem:[%s2426 + $0x48] sm:$0xff]
  %v2437 = vld [vmem:[%s2426 + $0x50] sm:$0xff]
  %v2438 = vld [vmem:[%s2426 + $0x58] sm:$0xff]
  %v2439 = vld [vmem:[%s2426 + $0x60] sm:$0xff]
  %v2440 = vld [vmem:[%s2426 + $0x68] sm:$0xff]
  %v2441 = vld [vmem:[%s2426 + $0x70] sm:$0xff]
  %v2442 = vld [vmem:[%s2426 + $0x78] sm:$0xff]
  %v2443 = vld [vmem:[%s2426 + $0x80] sm:$0xff]
  %v2444 = vld [vmem:[%s2426 + $0x88] sm:$0xff]
  %v2445 = vld [vmem:[%s2426 + $0x90] sm:$0xff]
  %v2446 = vld [vmem:[%s2426 + $0x98] sm:$0xff]
  %v2447 = vld [vmem:[%s2426 + $0xa0] sm:$0xff]
  %v2448 = vld [vmem:[%s2426 + $0xa8] sm:$0xff]
  %v2449 = vld [vmem:[%s2426 + $0xb0] sm:$0xff]
  %v2450 = vld [vmem:[%s2426 + $0xb8] sm:$0xff]
  %v2451 = vld [vmem:[%s2426 + $0xc0] sm:$0xff]
  %v2452 = vld [vmem:[%s2426 + $0xc8] sm:$0xff]
  %v2453 = vld [vmem:[%s2426 + $0xd0] sm:$0xff]
  %v2454 = vld [vmem:[%s2426 + $0xd8] sm:$0xff]
  %v2455 = vld [vmem:[%s2426 + $0xe0] sm:$0xff]
  %v2456 = vld [vmem:[%s2426 + $0xe8] sm:$0xff]
  %v2457 = vld [vmem:[%s2426 + $0xf0] sm:$0xff]
  %v2458 = vld [vmem:[%s2426 + $0xf8] sm:$0xff]
  %2459 = vmatprep.subr.mxu0 %v2428
  %2460 = vmatpush1.msra.mxu0 %v2427
  %2461 = vmatprep.subr.mxu0 %v2430
  %2462 = vmatpush1.msra.mxu0 %v2429
  %2463 = vmatprep.subr.mxu0 %v2432
  %2464 = vmatpush1.msra.mxu0 %v2431
  %2465 = vmatprep.subr.mxu0 %v2434
  %2466 = vmatpush1.msra.mxu0 %v2433
  %2467 = vmatprep.subr.mxu0 %v2436
  %2468 = vmatpush1.msra.mxu0 %v2435
  %2469 = vmatprep.subr.mxu0 %v2438
  %2470 = vmatpush1.msra.mxu0 %v2437
  %2471 = vmatprep.subr.mxu0 %v2440
  %2472 = vmatpush1.msra.mxu0 %v2439
  %2473 = vmatprep.subr.mxu0 %v2442
  %2474 = vmatpush1.msra.mxu0 %v2441
  %2475 = vmatprep.subr.mxu0 %v2444
  %2476 = vmatpush1.msra.mxu0 %v2443
  %2477 = vmatprep.subr.mxu0 %v2446
  %2478 = vmatpush1.msra.mxu0 %v2445
  %2479 = vmatprep.subr.mxu0 %v2448
  %2480 = vmatpush1.msra.mxu0 %v2447
  %2481 = vmatprep.subr.mxu0 %v2450
  %2482 = vmatpush1.msra.mxu0 %v2449
  %2483 = vmatprep.subr.mxu0 %v2452
  %2484 = vmatpush1.msra.mxu0 %v2451
  %2485 = vmatprep.subr.mxu0 %v2454
  %2486 = vmatpush1.msra.mxu0 %v2453
  %2487 = vmatprep.subr.mxu0 %v2456
  %2488 = vmatpush1.msra.mxu0 %v2455
  %2489 = vmatprep.subr.mxu0 %v2458
  %2490 = vmatpush1.msra.mxu0 %v2457
  %2491 = vmatprep.subr.mxu0 0.0
  %2492 = vmatpush1.msra.mxu0 0.0
  %2493 = vmatprep.subr.mxu0 0.0
  %2494 = vmatpush1.msra.mxu0 0.0
  %2495 = vmatprep.subr.mxu0 0.0
  %2496 = vmatpush1.msra.mxu0 0.0
  %2497 = vmatprep.subr.mxu0 0.0
  %2498 = vmatpush1.msra.mxu0 0.0
  %2499 = vmatprep.subr.mxu0 0.0
  %2500 = vmatpush1.msra.mxu0 0.0
  %2501 = vmatprep.subr.mxu0 0.0
  %2502 = vmatpush1.msra.mxu0 0.0
  %2503 = vmatprep.subr.mxu0 0.0
  %2504 = vmatpush1.msra.mxu0 0.0
  %2505 = vmatprep.subr.mxu0 0.0
  %2506 = vmatpush1.msra.mxu0 0.0
  %2507 = vmatprep.subr.mxu0 0.0
  %2508 = vmatpush1.msra.mxu0 0.0
  %2509 = vmatprep.subr.mxu0 0.0
  %2510 = vmatpush1.msra.mxu0 0.0
  %2511 = vmatprep.subr.mxu0 0.0
  %2512 = vmatpush1.msra.mxu0 0.0
  %2513 = vmatprep.subr.mxu0 0.0
  %2514 = vmatpush1.msra.mxu0 0.0
  %2515 = vmatprep.subr.mxu0 0.0
  %2516 = vmatpush1.msra.mxu0 0.0
  %2517 = vmatprep.subr.mxu0 0.0
  %2518 = vmatpush1.msra.mxu0 0.0
  %2519 = vmatprep.subr.mxu0 0.0
  %2520 = vmatpush1.msra.mxu0 0.0
  %2521 = vmatprep.subr.mxu0 0.0
  %2522 = vmatpush1.msra.mxu0 0.0
  %2523 = vmatprep.mubr.f32.mxu0 0.0
  %2524 = vmatmul.mubr.f32.gmra.mrb[0].mxu0 %v1146
  %v2525 = vpop.f32.mrb[0].mxu0
  %v2526 = vadd.f32 0.0, %v2525
  %v2527 = vpop.f32.mrb[0].mxu0
  %v2528 = vadd.f32 0.0, %v2527
  %2529 = vdwg.mxu0
  %v2530 = vadd.f32 %v2424, %v2526
  %v2531 = vadd.f32 %v2425, %v2528
  %s2532 = scalar_lea.vmem %s3, 3328
  %v2533 = vld [vmem:[%s2532] sm:$0xff]
  %v2534 = vld [vmem:[%s2532 + $0x8] sm:$0xff]
  %v2535 = vld [vmem:[%s2532 + $0x10] sm:$0xff]
  %v2536 = vld [vmem:[%s2532 + $0x18] sm:$0xff]
  %v2537 = vld [vmem:[%s2532 + $0x20] sm:$0xff]
  %v2538 = vld [vmem:[%s2532 + $0x28] sm:$0xff]
  %v2539 = vld [vmem:[%s2532 + $0x30] sm:$0xff]
  %v2540 = vld [vmem:[%s2532 + $0x38] sm:$0xff]
  %v2541 = vld [vmem:[%s2532 + $0x40] sm:$0xff]
  %v2542 = vld [vmem:[%s2532 + $0x48] sm:$0xff]
  %v2543 = vld [vmem:[%s2532 + $0x50] sm:$0xff]
  %v2544 = vld [vmem:[%s2532 + $0x58] sm:$0xff]
  %v2545 = vld [vmem:[%s2532 + $0x60] sm:$0xff]
  %v2546 = vld [vmem:[%s2532 + $0x68] sm:$0xff]
  %v2547 = vld [vmem:[%s2532 + $0x70] sm:$0xff]
  %v2548 = vld [vmem:[%s2532 + $0x78] sm:$0xff]
  %v2549 = vld [vmem:[%s2532 + $0x80] sm:$0xff]
  %v2550 = vld [vmem:[%s2532 + $0x88] sm:$0xff]
  %v2551 = vld [vmem:[%s2532 + $0x90] sm:$0xff]
  %v2552 = vld [vmem:[%s2532 + $0x98] sm:$0xff]
  %v2553 = vld [vmem:[%s2532 + $0xa0] sm:$0xff]
  %v2554 = vld [vmem:[%s2532 + $0xa8] sm:$0xff]
  %v2555 = vld [vmem:[%s2532 + $0xb0] sm:$0xff]
  %v2556 = vld [vmem:[%s2532 + $0xb8] sm:$0xff]
  %v2557 = vld [vmem:[%s2532 + $0xc0] sm:$0xff]
  %v2558 = vld [vmem:[%s2532 + $0xc8] sm:$0xff]
  %v2559 = vld [vmem:[%s2532 + $0xd0] sm:$0xff]
  %v2560 = vld [vmem:[%s2532 + $0xd8] sm:$0xff]
  %v2561 = vld [vmem:[%s2532 + $0xe0] sm:$0xff]
  %v2562 = vld [vmem:[%s2532 + $0xe8] sm:$0xff]
  %v2563 = vld [vmem:[%s2532 + $0xf0] sm:$0xff]
  %v2564 = vld [vmem:[%s2532 + $0xf8] sm:$0xff]
  %2565 = vmatprep.subr.mxu0 %v2534
  %2566 = vmatpush1.msra.mxu0 %v2533
  %2567 = vmatprep.subr.mxu0 %v2536
  %2568 = vmatpush1.msra.mxu0 %v2535
  %2569 = vmatprep.subr.mxu0 %v2538
  %2570 = vmatpush1.msra.mxu0 %v2537
  %2571 = vmatprep.subr.mxu0 %v2540
  %2572 = vmatpush1.msra.mxu0 %v2539
  %2573 = vmatprep.subr.mxu0 %v2542
  %2574 = vmatpush1.msra.mxu0 %v2541
  %2575 = vmatprep.subr.mxu0 %v2544
  %2576 = vmatpush1.msra.mxu0 %v2543
  %2577 = vmatprep.subr.mxu0 %v2546
  %2578 = vmatpush1.msra.mxu0 %v2545
  %2579 = vmatprep.subr.mxu0 %v2548
  %2580 = vmatpush1.msra.mxu0 %v2547
  %2581 = vmatprep.subr.mxu0 %v2550
  %2582 = vmatpush1.msra.mxu0 %v2549
  %2583 = vmatprep.subr.mxu0 %v2552
  %2584 = vmatpush1.msra.mxu0 %v2551
  %2585 = vmatprep.subr.mxu0 %v2554
  %2586 = vmatpush1.msra.mxu0 %v2553
  %2587 = vmatprep.subr.mxu0 %v2556
  %2588 = vmatpush1.msra.mxu0 %v2555
  %2589 = vmatprep.subr.mxu0 %v2558
  %2590 = vmatpush1.msra.mxu0 %v2557
  %2591 = vmatprep.subr.mxu0 %v2560
  %2592 = vmatpush1.msra.mxu0 %v2559
  %2593 = vmatprep.subr.mxu0 %v2562
  %2594 = vmatpush1.msra.mxu0 %v2561
  %2595 = vmatprep.subr.mxu0 %v2564
  %2596 = vmatpush1.msra.mxu0 %v2563
  %2597 = vmatprep.subr.mxu0 0.0
  %2598 = vmatpush1.msra.mxu0 0.0
  %2599 = vmatprep.subr.mxu0 0.0
  %2600 = vmatpush1.msra.mxu0 0.0
  %2601 = vmatprep.subr.mxu0 0.0
  %2602 = vmatpush1.msra.mxu0 0.0
  %2603 = vmatprep.subr.mxu0 0.0
  %2604 = vmatpush1.msra.mxu0 0.0
  %2605 = vmatprep.subr.mxu0 0.0
  %2606 = vmatpush1.msra.mxu0 0.0
  %2607 = vmatprep.subr.mxu0 0.0
  %2608 = vmatpush1.msra.mxu0 0.0
  %2609 = vmatprep.subr.mxu0 0.0
  %2610 = vmatpush1.msra.mxu0 0.0
  %2611 = vmatprep.subr.mxu0 0.0
  %2612 = vmatpush1.msra.mxu0 0.0
  %2613 = vmatprep.subr.mxu0 0.0
  %2614 = vmatpush1.msra.mxu0 0.0
  %2615 = vmatprep.subr.mxu0 0.0
  %2616 = vmatpush1.msra.mxu0 0.0
  %2617 = vmatprep.subr.mxu0 0.0
  %2618 = vmatpush1.msra.mxu0 0.0
  %2619 = vmatprep.subr.mxu0 0.0
  %2620 = vmatpush1.msra.mxu0 0.0
  %2621 = vmatprep.subr.mxu0 0.0
  %2622 = vmatpush1.msra.mxu0 0.0
  %2623 = vmatprep.subr.mxu0 0.0
  %2624 = vmatpush1.msra.mxu0 0.0
  %2625 = vmatprep.subr.mxu0 0.0
  %2626 = vmatpush1.msra.mxu0 0.0
  %2627 = vmatprep.subr.mxu0 0.0
  %2628 = vmatpush1.msra.mxu0 0.0
  %2629 = vmatprep.mubr.f32.mxu0 0.0
  %2630 = vmatmul.mubr.f32.gmra.mrb[0].mxu0 %v1147
  %v2631 = vpop.f32.mrb[0].mxu0
  %v2632 = vadd.f32 0.0, %v2631
  %v2633 = vpop.f32.mrb[0].mxu0
  %v2634 = vadd.f32 0.0, %v2633
  %2635 = vdwg.mxu0
  %v2636 = vadd.f32 %v2530, %v2632
  %v2637 = vadd.f32 %v2531, %v2634
  %s2638 = scalar_lea.vmem %s3, 3584
  %v2639 = vld [vmem:[%s2638] sm:$0xff]
  %v2640 = vld [vmem:[%s2638 + $0x8] sm:$0xff]
  %v2641 = vld [vmem:[%s2638 + $0x10] sm:$0xff]
  %v2642 = vld [vmem:[%s2638 + $0x18] sm:$0xff]
  %v2643 = vld [vmem:[%s2638 + $0x20] sm:$0xff]
  %v2644 = vld [vmem:[%s2638 + $0x28] sm:$0xff]
  %v2645 = vld [vmem:[%s2638 + $0x30] sm:$0xff]
  %v2646 = vld [vmem:[%s2638 + $0x38] sm:$0xff]
  %v2647 = vld [vmem:[%s2638 + $0x40] sm:$0xff]
  %v2648 = vld [vmem:[%s2638 + $0x48] sm:$0xff]
  %v2649 = vld [vmem:[%s2638 + $0x50] sm:$0xff]
  %v2650 = vld [vmem:[%s2638 + $0x58] sm:$0xff]
  %v2651 = vld [vmem:[%s2638 + $0x60] sm:$0xff]
  %v2652 = vld [vmem:[%s2638 + $0x68] sm:$0xff]
  %v2653 = vld [vmem:[%s2638 + $0x70] sm:$0xff]
  %v2654 = vld [vmem:[%s2638 + $0x78] sm:$0xff]
  %v2655 = vld [vmem:[%s2638 + $0x80] sm:$0xff]
  %v2656 = vld [vmem:[%s2638 + $0x88] sm:$0xff]
  %v2657 = vld [vmem:[%s2638 + $0x90] sm:$0xff]
  %v2658 = vld [vmem:[%s2638 + $0x98] sm:$0xff]
  %v2659 = vld [vmem:[%s2638 + $0xa0] sm:$0xff]
  %v2660 = vld [vmem:[%s2638 + $0xa8] sm:$0xff]
  %v2661 = vld [vmem:[%s2638 + $0xb0] sm:$0xff]
  %v2662 = vld [vmem:[%s2638 + $0xb8] sm:$0xff]
  %v2663 = vld [vmem:[%s2638 + $0xc0] sm:$0xff]
  %v2664 = vld [vmem:[%s2638 + $0xc8] sm:$0xff]
  %v2665 = vld [vmem:[%s2638 + $0xd0] sm:$0xff]
  %v2666 = vld [vmem:[%s2638 + $0xd8] sm:$0xff]
  %v2667 = vld [vmem:[%s2638 + $0xe0] sm:$0xff]
  %v2668 = vld [vmem:[%s2638 + $0xe8] sm:$0xff]
  %v2669 = vld [vmem:[%s2638 + $0xf0] sm:$0xff]
  %v2670 = vld [vmem:[%s2638 + $0xf8] sm:$0xff]
  %2671 = vmatprep.subr.mxu0 %v2640
  %2672 = vmatpush1.msra.mxu0 %v2639
  %2673 = vmatprep.subr.mxu0 %v2642
  %2674 = vmatpush1.msra.mxu0 %v2641
  %2675 = vmatprep.subr.mxu0 %v2644
  %2676 = vmatpush1.msra.mxu0 %v2643
  %2677 = vmatprep.subr.mxu0 %v2646
  %2678 = vmatpush1.msra.mxu0 %v2645
  %2679 = vmatprep.subr.mxu0 %v2648
  %2680 = vmatpush1.msra.mxu0 %v2647
  %2681 = vmatprep.subr.mxu0 %v2650
  %2682 = vmatpush1.msra.mxu0 %v2649
  %2683 = vmatprep.subr.mxu0 %v2652
  %2684 = vmatpush1.msra.mxu0 %v2651
  %2685 = vmatprep.subr.mxu0 %v2654
  %2686 = vmatpush1.msra.mxu0 %v2653
  %2687 = vmatprep.subr.mxu0 %v2656
  %2688 = vmatpush1.msra.mxu0 %v2655
  %2689 = vmatprep.subr.mxu0 %v2658
  %2690 = vmatpush1.msra.mxu0 %v2657
  %2691 = vmatprep.subr.mxu0 %v2660
  %2692 = vmatpush1.msra.mxu0 %v2659
  %2693 = vmatprep.subr.mxu0 %v2662
  %2694 = vmatpush1.msra.mxu0 %v2661
  %2695 = vmatprep.subr.mxu0 %v2664
  %2696 = vmatpush1.msra.mxu0 %v2663
  %2697 = vmatprep.subr.mxu0 %v2666
  %2698 = vmatpush1.msra.mxu0 %v2665
  %2699 = vmatprep.subr.mxu0 %v2668
  %2700 = vmatpush1.msra.mxu0 %v2667
  %2701 = vmatprep.subr.mxu0 %v2670
  %2702 = vmatpush1.msra.mxu0 %v2669
  %2703 = vmatprep.subr.mxu0 0.0
  %2704 = vmatpush1.msra.mxu0 0.0
  %2705 = vmatprep.subr.mxu0 0.0
  %2706 = vmatpush1.msra.mxu0 0.0
  %2707 = vmatprep.subr.mxu0 0.0
  %2708 = vmatpush1.msra.mxu0 0.0
  %2709 = vmatprep.subr.mxu0 0.0
  %2710 = vmatpush1.msra.mxu0 0.0
  %2711 = vmatprep.subr.mxu0 0.0
  %2712 = vmatpush1.msra.mxu0 0.0
  %2713 = vmatprep.subr.mxu0 0.0
  %2714 = vmatpush1.msra.mxu0 0.0
  %2715 = vmatprep.subr.mxu0 0.0
  %2716 = vmatpush1.msra.mxu0 0.0
  %2717 = vmatprep.subr.mxu0 0.0
  %2718 = vmatpush1.msra.mxu0 0.0
  %2719 = vmatprep.subr.mxu0 0.0
  %2720 = vmatpush1.msra.mxu0 0.0
  %2721 = vmatprep.subr.mxu0 0.0
  %2722 = vmatpush1.msra.mxu0 0.0
  %2723 = vmatprep.subr.mxu0 0.0
  %2724 = vmatpush1.msra.mxu0 0.0
  %2725 = vmatprep.subr.mxu0 0.0
  %2726 = vmatpush1.msra.mxu0 0.0
  %2727 = vmatprep.subr.mxu0 0.0
  %2728 = vmatpush1.msra.mxu0 0.0
  %2729 = vmatprep.subr.mxu0 0.0
  %2730 = vmatpush1.msra.mxu0 0.0
  %2731 = vmatprep.subr.mxu0 0.0
  %2732 = vmatpush1.msra.mxu0 0.0
  %2733 = vmatprep.subr.mxu0 0.0
  %2734 = vmatpush1.msra.mxu0 0.0
  %2735 = vmatprep.mubr.f32.mxu0 0.0
  %2736 = vmatmul.mubr.f32.gmra.mrb[0].mxu0 %v1148
  %v2737 = vpop.f32.mrb[0].mxu0
  %v2738 = vadd.f32 0.0, %v2737
  %v2739 = vpop.f32.mrb[0].mxu0
  %v2740 = vadd.f32 0.0, %v2739
  %2741 = vdwg.mxu0
  %v2742 = vadd.f32 %v2636, %v2738
  %v2743 = vadd.f32 %v2637, %v2740
  %s2744 = scalar_lea.vmem %s3, 3840
  %v2745 = vld [vmem:[%s2744] sm:$0xff]
  %v2746 = vld [vmem:[%s2744 + $0x8] sm:$0xff]
  %v2747 = vld [vmem:[%s2744 + $0x10] sm:$0xff]
  %v2748 = vld [vmem:[%s2744 + $0x18] sm:$0xff]
  %v2749 = vld [vmem:[%s2744 + $0x20] sm:$0xff]
  %v2750 = vld [vmem:[%s2744 + $0x28] sm:$0xff]
  %v2751 = vld [vmem:[%s2744 + $0x30] sm:$0xff]
  %v2752 = vld [vmem:[%s2744 + $0x38] sm:$0xff]
  %v2753 = vld [vmem:[%s2744 + $0x40] sm:$0xff]
  %v2754 = vld [vmem:[%s2744 + $0x48] sm:$0xff]
  %v2755 = vld [vmem:[%s2744 + $0x50] sm:$0xff]
  %v2756 = vld [vmem:[%s2744 + $0x58] sm:$0xff]
  %v2757 = vld [vmem:[%s2744 + $0x60] sm:$0xff]
  %v2758 = vld [vmem:[%s2744 + $0x68] sm:$0xff]
  %v2759 = vld [vmem:[%s2744 + $0x70] sm:$0xff]
  %v2760 = vld [vmem:[%s2744 + $0x78] sm:$0xff]
  %v2761 = vld [vmem:[%s2744 + $0x80] sm:$0xff]
  %v2762 = vld [vmem:[%s2744 + $0x88] sm:$0xff]
  %v2763 = vld [vmem:[%s2744 + $0x90] sm:$0xff]
  %v2764 = vld [vmem:[%s2744 + $0x98] sm:$0xff]
  %v2765 = vld [vmem:[%s2744 + $0xa0] sm:$0xff]
  %v2766 = vld [vmem:[%s2744 + $0xa8] sm:$0xff]
  %v2767 = vld [vmem:[%s2744 + $0xb0] sm:$0xff]
  %v2768 = vld [vmem:[%s2744 + $0xb8] sm:$0xff]
  %v2769 = vld [vmem:[%s2744 + $0xc0] sm:$0xff]
  %v2770 = vld [vmem:[%s2744 + $0xc8] sm:$0xff]
  %v2771 = vld [vmem:[%s2744 + $0xd0] sm:$0xff]
  %v2772 = vld [vmem:[%s2744 + $0xd8] sm:$0xff]
  %v2773 = vld [vmem:[%s2744 + $0xe0] sm:$0xff]
  %v2774 = vld [vmem:[%s2744 + $0xe8] sm:$0xff]
  %v2775 = vld [vmem:[%s2744 + $0xf0] sm:$0xff]
  %v2776 = vld [vmem:[%s2744 + $0xf8] sm:$0xff]
  %2777 = vmatprep.subr.mxu0 %v2746
  %2778 = vmatpush1.msra.mxu0 %v2745
  %2779 = vmatprep.subr.mxu0 %v2748
  %2780 = vmatpush1.msra.mxu0 %v2747
  %2781 = vmatprep.subr.mxu0 %v2750
  %2782 = vmatpush1.msra.mxu0 %v2749
  %2783 = vmatprep.subr.mxu0 %v2752
  %2784 = vmatpush1.msra.mxu0 %v2751
  %2785 = vmatprep.subr.mxu0 %v2754
  %2786 = vmatpush1.msra.mxu0 %v2753
  %2787 = vmatprep.subr.mxu0 %v2756
  %2788 = vmatpush1.msra.mxu0 %v2755
  %2789 = vmatprep.subr.mxu0 %v2758
  %2790 = vmatpush1.msra.mxu0 %v2757
  %2791 = vmatprep.subr.mxu0 %v2760
  %2792 = vmatpush1.msra.mxu0 %v2759
  %2793 = vmatprep.subr.mxu0 %v2762
  %2794 = vmatpush1.msra.mxu0 %v2761
  %2795 = vmatprep.subr.mxu0 %v2764
  %2796 = vmatpush1.msra.mxu0 %v2763
  %2797 = vmatprep.subr.mxu0 %v2766
  %2798 = vmatpush1.msra.mxu0 %v2765
  %2799 = vmatprep.subr.mxu0 %v2768
  %2800 = vmatpush1.msra.mxu0 %v2767
  %2801 = vmatprep.subr.mxu0 %v2770
  %2802 = vmatpush1.msra.mxu0 %v2769
  %2803 = vmatprep.subr.mxu0 %v2772
  %2804 = vmatpush1.msra.mxu0 %v2771
  %2805 = vmatprep.subr.mxu0 %v2774
  %2806 = vmatpush1.msra.mxu0 %v2773
  %2807 = vmatprep.subr.mxu0 %v2776
  %2808 = vmatpush1.msra.mxu0 %v2775
  %2809 = vmatprep.subr.mxu0 0.0
  %2810 = vmatpush1.msra.mxu0 0.0
  %2811 = vmatprep.subr.mxu0 0.0
  %2812 = vmatpush1.msra.mxu0 0.0
  %2813 = vmatprep.subr.mxu0 0.0
  %2814 = vmatpush1.msra.mxu0 0.0
  %2815 = vmatprep.subr.mxu0 0.0
  %2816 = vmatpush1.msra.mxu0 0.0
  %2817 = vmatprep.subr.mxu0 0.0
  %2818 = vmatpush1.msra.mxu0 0.0
  %2819 = vmatprep.subr.mxu0 0.0
  %2820 = vmatpush1.msra.mxu0 0.0
  %2821 = vmatprep.subr.mxu0 0.0
  %2822 = vmatpush1.msra.mxu0 0.0
  %2823 = vmatprep.subr.mxu0 0.0
  %2824 = vmatpush1.msra.mxu0 0.0
  %2825 = vmatprep.subr.mxu0 0.0
  %2826 = vmatpush1.msra.mxu0 0.0
  %2827 = vmatprep.subr.mxu0 0.0
  %2828 = vmatpush1.msra.mxu0 0.0
  %2829 = vmatprep.subr.mxu0 0.0
  %2830 = vmatpush1.msra.mxu0 0.0
  %2831 = vmatprep.subr.mxu0 0.0
  %2832 = vmatpush1.msra.mxu0 0.0
  %2833 = vmatprep.subr.mxu0 0.0
  %2834 = vmatpush1.msra.mxu0 0.0
  %2835 = vmatprep.subr.mxu0 0.0
  %2836 = vmatpush1.msra.mxu0 0.0
  %2837 = vmatprep.subr.mxu0 0.0
  %2838 = vmatpush1.msra.mxu0 0.0
  %2839 = vmatprep.subr.mxu0 0.0
  %2840 = vmatpush1.msra.mxu0 0.0
  %2841 = vmatprep.mubr.f32.mxu0 0.0
  %2842 = vmatmul.mubr.f32.gmra.mrb[0].mxu0 %v1149
  %v2843 = vpop.f32.mrb[0].mxu0
  %v2844 = vadd.f32 0.0, %v2843
  %v2845 = vpop.f32.mrb[0].mxu0
  %v2846 = vadd.f32 0.0, %v2845
  %2847 = vdwg.mxu0
  %v2848 = vadd.f32 %v2742, %v2844
  %v2849 = vadd.f32 %v2743, %v2846
  %s2850 = scalar_lea.vmem %s3, 4096
  %v2851 = vld [vmem:[%s2850] sm:$0xff]
  %v2852 = vld [vmem:[%s2850 + $0x8] sm:$0xff]
  %v2853 = vld [vmem:[%s2850 + $0x10] sm:$0xff]
  %v2854 = vld [vmem:[%s2850 + $0x18] sm:$0xff]
  %v2855 = vld [vmem:[%s2850 + $0x20] sm:$0xff]
  %v2856 = vld [vmem:[%s2850 + $0x28] sm:$0xff]
  %v2857 = vld [vmem:[%s2850 + $0x30] sm:$0xff]
  %v2858 = vld [vmem:[%s2850 + $0x38] sm:$0xff]
  %v2859 = vld [vmem:[%s2850 + $0x40] sm:$0xff]
  %v2860 = vld [vmem:[%s2850 + $0x48] sm:$0xff]
  %v2861 = vld [vmem:[%s2850 + $0x50] sm:$0xff]
  %v2862 = vld [vmem:[%s2850 + $0x58] sm:$0xff]
  %v2863 = vld [vmem:[%s2850 + $0x60] sm:$0xff]
  %v2864 = vld [vmem:[%s2850 + $0x68] sm:$0xff]
  %v2865 = vld [vmem:[%s2850 + $0x70] sm:$0xff]
  %v2866 = vld [vmem:[%s2850 + $0x78] sm:$0xff]
  %v2867 = vld [vmem:[%s2850 + $0x80] sm:$0xff]
  %v2868 = vld [vmem:[%s2850 + $0x88] sm:$0xff]
  %v2869 = vld [vmem:[%s2850 + $0x90] sm:$0xff]
  %v2870 = vld [vmem:[%s2850 + $0x98] sm:$0xff]
  %v2871 = vld [vmem:[%s2850 + $0xa0] sm:$0xff]
  %v2872 = vld [vmem:[%s2850 + $0xa8] sm:$0xff]
  %v2873 = vld [vmem:[%s2850 + $0xb0] sm:$0xff]
  %v2874 = vld [vmem:[%s2850 + $0xb8] sm:$0xff]
  %v2875 = vld [vmem:[%s2850 + $0xc0] sm:$0xff]
  %v2876 = vld [vmem:[%s2850 + $0xc8] sm:$0xff]
  %v2877 = vld [vmem:[%s2850 + $0xd0] sm:$0xff]
  %v2878 = vld [vmem:[%s2850 + $0xd8] sm:$0xff]
  %v2879 = vld [vmem:[%s2850 + $0xe0] sm:$0xff]
  %v2880 = vld [vmem:[%s2850 + $0xe8] sm:$0xff]
  %v2881 = vld [vmem:[%s2850 + $0xf0] sm:$0xff]
  %v2882 = vld [vmem:[%s2850 + $0xf8] sm:$0xff]
  %2883 = vmatprep.subr.mxu0 %v2852
  %2884 = vmatpush1.msra.mxu0 %v2851
  %2885 = vmatprep.subr.mxu0 %v2854
  %2886 = vmatpush1.msra.mxu0 %v2853
  %2887 = vmatprep.subr.mxu0 %v2856
  %2888 = vmatpush1.msra.mxu0 %v2855
  %2889 = vmatprep.subr.mxu0 %v2858
  %2890 = vmatpush1.msra.mxu0 %v2857
  %2891 = vmatprep.subr.mxu0 %v2860
  %2892 = vmatpush1.msra.mxu0 %v2859
  %2893 = vmatprep.subr.mxu0 %v2862
  %2894 = vmatpush1.msra.mxu0 %v2861
  %2895 = vmatprep.subr.mxu0 %v2864
  %2896 = vmatpush1.msra.mxu0 %v2863
  %2897 = vmatprep.subr.mxu0 %v2866
  %2898 = vmatpush1.msra.mxu0 %v2865
  %2899 = vmatprep.subr.mxu0 %v2868
  %2900 = vmatpush1.msra.mxu0 %v2867
  %2901 = vmatprep.subr.mxu0 %v2870
  %2902 = vmatpush1.msra.mxu0 %v2869
  %2903 = vmatprep.subr.mxu0 %v2872
  %2904 = vmatpush1.msra.mxu0 %v2871
  %2905 = vmatprep.subr.mxu0 %v2874
  %2906 = vmatpush1.msra.mxu0 %v2873
  %2907 = vmatprep.subr.mxu0 %v2876
  %2908 = vmatpush1.msra.mxu0 %v2875
  %2909 = vmatprep.subr.mxu0 %v2878
  %2910 = vmatpush1.msra.mxu0 %v2877
  %2911 = vmatprep.subr.mxu0 %v2880
  %2912 = vmatpush1.msra.mxu0 %v2879
  %2913 = vmatprep.subr.mxu0 %v2882
  %2914 = vmatpush1.msra.mxu0 %v2881
  %2915 = vmatprep.subr.mxu0 0.0
  %2916 = vmatpush1.msra.mxu0 0.0
  %2917 = vmatprep.subr.mxu0 0.0
  %2918 = vmatpush1.msra.mxu0 0.0
  %2919 = vmatprep.subr.mxu0 0.0
  %2920 = vmatpush1.msra.mxu0 0.0
  %2921 = vmatprep.subr.mxu0 0.0
  %2922 = vmatpush1.msra.mxu0 0.0
  %2923 = vmatprep.subr.mxu0 0.0
  %2924 = vmatpush1.msra.mxu0 0.0
  %2925 = vmatprep.subr.mxu0 0.0
  %2926 = vmatpush1.msra.mxu0 0.0
  %2927 = vmatprep.subr.mxu0 0.0
  %2928 = vmatpush1.msra.mxu0 0.0
  %2929 = vmatprep.subr.mxu0 0.0
  %2930 = vmatpush1.msra.mxu0 0.0
  %2931 = vmatprep.subr.mxu0 0.0
  %2932 = vmatpush1.msra.mxu0 0.0
  %2933 = vmatprep.subr.mxu0 0.0
  %2934 = vmatpush1.msra.mxu0 0.0
  %2935 = vmatprep.subr.mxu0 0.0
  %2936 = vmatpush1.msra.mxu0 0.0
  %2937 = vmatprep.subr.mxu0 0.0
  %2938 = vmatpush1.msra.mxu0 0.0
  %2939 = vmatprep.subr.mxu0 0.0
  %2940 = vmatpush1.msra.mxu0 0.0
  %2941 = vmatprep.subr.mxu0 0.0
  %2942 = vmatpush1.msra.mxu0 0.0
  %2943 = vmatprep.subr.mxu0 0.0
  %2944 = vmatpush1.msra.mxu0 0.0
  %2945 = vmatprep.subr.mxu0 0.0
  %2946 = vmatpush1.msra.mxu0 0.0
  %2947 = vmatprep.mubr.f32.mxu0 0.0
  %2948 = vmatmul.mubr.f32.gmra.mrb[0].mxu0 %v1150
  %v2949 = vpop.f32.mrb[0].mxu0
  %v2950 = vadd.f32 0.0, %v2949
  %v2951 = vpop.f32.mrb[0].mxu0
  %v2952 = vadd.f32 0.0, %v2951
  %2953 = vdwg.mxu0
  %v2954 = vadd.f32 %v2848, %v2950
  %v2955 = vadd.f32 %v2849, %v2952
  %s2956 = scalar_lea.vmem %s3, 4352
  %v2957 = vld [vmem:[%s2956] sm:$0xff]
  %v2958 = vld [vmem:[%s2956 + $0x8] sm:$0xff]
  %v2959 = vld [vmem:[%s2956 + $0x10] sm:$0xff]
  %v2960 = vld [vmem:[%s2956 + $0x18] sm:$0xff]
  %v2961 = vld [vmem:[%s2956 + $0x20] sm:$0xff]
  %v2962 = vld [vmem:[%s2956 + $0x28] sm:$0xff]
  %v2963 = vld [vmem:[%s2956 + $0x30] sm:$0xff]
  %v2964 = vld [vmem:[%s2956 + $0x38] sm:$0xff]
  %v2965 = vld [vmem:[%s2956 + $0x40] sm:$0xff]
  %v2966 = vld [vmem:[%s2956 + $0x48] sm:$0xff]
  %v2967 = vld [vmem:[%s2956 + $0x50] sm:$0xff]
  %v2968 = vld [vmem:[%s2956 + $0x58] sm:$0xff]
  %v2969 = vld [vmem:[%s2956 + $0x60] sm:$0xff]
  %v2970 = vld [vmem:[%s2956 + $0x68] sm:$0xff]
  %v2971 = vld [vmem:[%s2956 + $0x70] sm:$0xff]
  %v2972 = vld [vmem:[%s2956 + $0x78] sm:$0xff]
  %v2973 = vld [vmem:[%s2956 + $0x80] sm:$0xff]
  %v2974 = vld [vmem:[%s2956 + $0x88] sm:$0xff]
  %v2975 = vld [vmem:[%s2956 + $0x90] sm:$0xff]
  %v2976 = vld [vmem:[%s2956 + $0x98] sm:$0xff]
  %v2977 = vld [vmem:[%s2956 + $0xa0] sm:$0xff]
  %v2978 = vld [vmem:[%s2956 + $0xa8] sm:$0xff]
  %v2979 = vld [vmem:[%s2956 + $0xb0] sm:$0xff]
  %v2980 = vld [vmem:[%s2956 + $0xb8] sm:$0xff]
  %v2981 = vld [vmem:[%s2956 + $0xc0] sm:$0xff]
  %v2982 = vld [vmem:[%s2956 + $0xc8] sm:$0xff]
  %v2983 = vld [vmem:[%s2956 + $0xd0] sm:$0xff]
  %v2984 = vld [vmem:[%s2956 + $0xd8] sm:$0xff]
  %v2985 = vld [vmem:[%s2956 + $0xe0] sm:$0xff]
  %v2986 = vld [vmem:[%s2956 + $0xe8] sm:$0xff]
  %v2987 = vld [vmem:[%s2956 + $0xf0] sm:$0xff]
  %v2988 = vld [vmem:[%s2956 + $0xf8] sm:$0xff]
  %2989 = vmatprep.subr.mxu0 %v2958
  %2990 = vmatpush1.msra.mxu0 %v2957
  %2991 = vmatprep.subr.mxu0 %v2960
  %2992 = vmatpush1.msra.mxu0 %v2959
  %2993 = vmatprep.subr.mxu0 %v2962
  %2994 = vmatpush1.msra.mxu0 %v2961
  %2995 = vmatprep.subr.mxu0 %v2964
  %2996 = vmatpush1.msra.mxu0 %v2963
  %2997 = vmatprep.subr.mxu0 %v2966
  %2998 = vmatpush1.msra.mxu0 %v2965
  %2999 = vmatprep.subr.mxu0 %v2968
  %3000 = vmatpush1.msra.mxu0 %v2967
  %3001 = vmatprep.subr.mxu0 %v2970
  %3002 = vmatpush1.msra.mxu0 %v2969
  %3003 = vmatprep.subr.mxu0 %v2972
  %3004 = vmatpush1.msra.mxu0 %v2971
  %3005 = vmatprep.subr.mxu0 %v2974
  %3006 = vmatpush1.msra.mxu0 %v2973
  %3007 = vmatprep.subr.mxu0 %v2976
  %3008 = vmatpush1.msra.mxu0 %v2975
  %3009 = vmatprep.subr.mxu0 %v2978
  %3010 = vmatpush1.msra.mxu0 %v2977
  %3011 = vmatprep.subr.mxu0 %v2980
  %3012 = vmatpush1.msra.mxu0 %v2979
  %3013 = vmatprep.subr.mxu0 %v2982
  %3014 = vmatpush1.msra.mxu0 %v2981
  %3015 = vmatprep.subr.mxu0 %v2984
  %3016 = vmatpush1.msra.mxu0 %v2983
  %3017 = vmatprep.subr.mxu0 %v2986
  %3018 = vmatpush1.msra.mxu0 %v2985
  %3019 = vmatprep.subr.mxu0 %v2988
  %3020 = vmatpush1.msra.mxu0 %v2987
  %3021 = vmatprep.subr.mxu0 0.0
  %3022 = vmatpush1.msra.mxu0 0.0
  %3023 = vmatprep.subr.mxu0 0.0
  %3024 = vmatpush1.msra.mxu0 0.0
  %3025 = vmatprep.subr.mxu0 0.0
  %3026 = vmatpush1.msra.mxu0 0.0
  %3027 = vmatprep.subr.mxu0 0.0
  %3028 = vmatpush1.msra.mxu0 0.0
  %3029 = vmatprep.subr.mxu0 0.0
  %3030 = vmatpush1.msra.mxu0 0.0
  %3031 = vmatprep.subr.mxu0 0.0
  %3032 = vmatpush1.msra.mxu0 0.0
  %3033 = vmatprep.subr.mxu0 0.0
  %3034 = vmatpush1.msra.mxu0 0.0
  %3035 = vmatprep.subr.mxu0 0.0
  %3036 = vmatpush1.msra.mxu0 0.0
  %3037 = vmatprep.subr.mxu0 0.0
  %3038 = vmatpush1.msra.mxu0 0.0
  %3039 = vmatprep.subr.mxu0 0.0
  %3040 = vmatpush1.msra.mxu0 0.0
  %3041 = vmatprep.subr.mxu0 0.0
  %3042 = vmatpush1.msra.mxu0 0.0
  %3043 = vmatprep.subr.mxu0 0.0
  %3044 = vmatpush1.msra.mxu0 0.0
  %3045 = vmatprep.subr.mxu0 0.0
  %3046 = vmatpush1.msra.mxu0 0.0
  %3047 = vmatprep.subr.mxu0 0.0
  %3048 = vmatpush1.msra.mxu0 0.0
  %3049 = vmatprep.subr.mxu0 0.0
  %3050 = vmatpush1.msra.mxu0 0.0
  %3051 = vmatprep.subr.mxu0 0.0
  %3052 = vmatpush1.msra.mxu0 0.0
  %3053 = vmatprep.mubr.f32.mxu0 0.0
  %3054 = vmatmul.mubr.f32.gmra.mrb[0].mxu0 %v1151
  %v3055 = vpop.f32.mrb[0].mxu0
  %v3056 = vadd.f32 0.0, %v3055
  %v3057 = vpop.f32.mrb[0].mxu0
  %v3058 = vadd.f32 0.0, %v3057
  %3059 = vdwg.mxu0
  %v3060 = vadd.f32 %v2954, %v3056
  %v3061 = vadd.f32 %v2955, %v3058
  %s3062 = scalar_lea.vmem %s3, 4608
  %v3063 = vld [vmem:[%s3062] sm:$0xff]
  %v3064 = vld [vmem:[%s3062 + $0x8] sm:$0xff]
  %v3065 = vld [vmem:[%s3062 + $0x10] sm:$0xff]
  %v3066 = vld [vmem:[%s3062 + $0x18] sm:$0xff]
  %v3067 = vld [vmem:[%s3062 + $0x20] sm:$0xff]
  %v3068 = vld [vmem:[%s3062 + $0x28] sm:$0xff]
  %v3069 = vld [vmem:[%s3062 + $0x30] sm:$0xff]
  %v3070 = vld [vmem:[%s3062 + $0x38] sm:$0xff]
  %v3071 = vld [vmem:[%s3062 + $0x40] sm:$0xff]
  %v3072 = vld [vmem:[%s3062 + $0x48] sm:$0xff]
  %v3073 = vld [vmem:[%s3062 + $0x50] sm:$0xff]
  %v3074 = vld [vmem:[%s3062 + $0x58] sm:$0xff]
  %v3075 = vld [vmem:[%s3062 + $0x60] sm:$0xff]
  %v3076 = vld [vmem:[%s3062 + $0x68] sm:$0xff]
  %v3077 = vld [vmem:[%s3062 + $0x70] sm:$0xff]
  %v3078 = vld [vmem:[%s3062 + $0x78] sm:$0xff]
  %v3079 = vld [vmem:[%s3062 + $0x80] sm:$0xff]
  %v3080 = vld [vmem:[%s3062 + $0x88] sm:$0xff]
  %v3081 = vld [vmem:[%s3062 + $0x90] sm:$0xff]
  %v3082 = vld [vmem:[%s3062 + $0x98] sm:$0xff]
  %v3083 = vld [vmem:[%s3062 + $0xa0] sm:$0xff]
  %v3084 = vld [vmem:[%s3062 + $0xa8] sm:$0xff]
  %v3085 = vld [vmem:[%s3062 + $0xb0] sm:$0xff]
  %v3086 = vld [vmem:[%s3062 + $0xb8] sm:$0xff]
  %v3087 = vld [vmem:[%s3062 + $0xc0] sm:$0xff]
  %v3088 = vld [vmem:[%s3062 + $0xc8] sm:$0xff]
  %v3089 = vld [vmem:[%s3062 + $0xd0] sm:$0xff]
  %v3090 = vld [vmem:[%s3062 + $0xd8] sm:$0xff]
  %v3091 = vld [vmem:[%s3062 + $0xe0] sm:$0xff]
  %v3092 = vld [vmem:[%s3062 + $0xe8] sm:$0xff]
  %v3093 = vld [vmem:[%s3062 + $0xf0] sm:$0xff]
  %v3094 = vld [vmem:[%s3062 + $0xf8] sm:$0xff]
  %3095 = vmatprep.subr.mxu0 %v3064
  %3096 = vmatpush1.msra.mxu0 %v3063
  %3097 = vmatprep.subr.mxu0 %v3066
  %3098 = vmatpush1.msra.mxu0 %v3065
  %3099 = vmatprep.subr.mxu0 %v3068
  %3100 = vmatpush1.msra.mxu0 %v3067
  %3101 = vmatprep.subr.mxu0 %v3070
  %3102 = vmatpush1.msra.mxu0 %v3069
  %3103 = vmatprep.subr.mxu0 %v3072
  %3104 = vmatpush1.msra.mxu0 %v3071
  %3105 = vmatprep.subr.mxu0 %v3074
  %3106 = vmatpush1.msra.mxu0 %v3073
  %3107 = vmatprep.subr.mxu0 %v3076
  %3108 = vmatpush1.msra.mxu0 %v3075
  %3109 = vmatprep.subr.mxu0 %v3078
  %3110 = vmatpush1.msra.mxu0 %v3077
  %3111 = vmatprep.subr.mxu0 %v3080
  %3112 = vmatpush1.msra.mxu0 %v3079
  %3113 = vmatprep.subr.mxu0 %v3082
  %3114 = vmatpush1.msra.mxu0 %v3081
  %3115 = vmatprep.subr.mxu0 %v3084
  %3116 = vmatpush1.msra.mxu0 %v3083
  %3117 = vmatprep.subr.mxu0 %v3086
  %3118 = vmatpush1.msra.mxu0 %v3085
  %3119 = vmatprep.subr.mxu0 %v3088
  %3120 = vmatpush1.msra.mxu0 %v3087
  %3121 = vmatprep.subr.mxu0 %v3090
  %3122 = vmatpush1.msra.mxu0 %v3089
  %3123 = vmatprep.subr.mxu0 %v3092
  %3124 = vmatpush1.msra.mxu0 %v3091
  %3125 = vmatprep.subr.mxu0 %v3094
  %3126 = vmatpush1.msra.mxu0 %v3093
  %3127 = vmatprep.subr.mxu0 0.0
  %3128 = vmatpush1.msra.mxu0 0.0
  %3129 = vmatprep.subr.mxu0 0.0
  %3130 = vmatpush1.msra.mxu0 0.0
  %3131 = vmatprep.subr.mxu0 0.0
  %3132 = vmatpush1.msra.mxu0 0.0
  %3133 = vmatprep.subr.mxu0 0.0
  %3134 = vmatpush1.msra.mxu0 0.0
  %3135 = vmatprep.subr.mxu0 0.0
  %3136 = vmatpush1.msra.mxu0 0.0
  %3137 = vmatprep.subr.mxu0 0.0
  %3138 = vmatpush1.msra.mxu0 0.0
  %3139 = vmatprep.subr.mxu0 0.0
  %3140 = vmatpush1.msra.mxu0 0.0
  %3141 = vmatprep.subr.mxu0 0.0
  %3142 = vmatpush1.msra.mxu0 0.0
  %3143 = vmatprep.subr.mxu0 0.0
  %3144 = vmatpush1.msra.mxu0 0.0
  %3145 = vmatprep.subr.mxu0 0.0
  %3146 = vmatpush1.msra.mxu0 0.0
  %3147 = vmatprep.subr.mxu0 0.0
  %3148 = vmatpush1.msra.mxu0 0.0
  %3149 = vmatprep.subr.mxu0 0.0
  %3150 = vmatpush1.msra.mxu0 0.0
  %3151 = vmatprep.subr.mxu0 0.0
  %3152 = vmatpush1.msra.mxu0 0.0
  %3153 = vmatprep.subr.mxu0 0.0
  %3154 = vmatpush1.msra.mxu0 0.0
  %3155 = vmatprep.subr.mxu0 0.0
  %3156 = vmatpush1.msra.mxu0 0.0
  %3157 = vmatprep.subr.mxu0 0.0
  %3158 = vmatpush1.msra.mxu0 0.0
  %3159 = vmatprep.mubr.f32.mxu0 0.0
  %3160 = vmatmul.mubr.f32.gmra.mrb[0].mxu0 %v1152
  %v3161 = vpop.f32.mrb[0].mxu0
  %v3162 = vadd.f32 0.0, %v3161
  %v3163 = vpop.f32.mrb[0].mxu0
  %v3164 = vadd.f32 0.0, %v3163
  %3165 = vdwg.mxu0
  %v3166 = vadd.f32 %v3060, %v3162
  %v3167 = vadd.f32 %v3061, %v3164
  %s3168 = scalar_lea.vmem %s3, 4864
  %v3169 = vld [vmem:[%s3168] sm:$0xff]
  %v3170 = vld [vmem:[%s3168 + $0x8] sm:$0xff]
  %v3171 = vld [vmem:[%s3168 + $0x10] sm:$0xff]
  %v3172 = vld [vmem:[%s3168 + $0x18] sm:$0xff]
  %v3173 = vld [vmem:[%s3168 + $0x20] sm:$0xff]
  %v3174 = vld [vmem:[%s3168 + $0x28] sm:$0xff]
  %v3175 = vld [vmem:[%s3168 + $0x30] sm:$0xff]
  %v3176 = vld [vmem:[%s3168 + $0x38] sm:$0xff]
  %v3177 = vld [vmem:[%s3168 + $0x40] sm:$0xff]
  %v3178 = vld [vmem:[%s3168 + $0x48] sm:$0xff]
  %v3179 = vld [vmem:[%s3168 + $0x50] sm:$0xff]
  %v3180 = vld [vmem:[%s3168 + $0x58] sm:$0xff]
  %v3181 = vld [vmem:[%s3168 + $0x60] sm:$0xff]
  %v3182 = vld [vmem:[%s3168 + $0x68] sm:$0xff]
  %v3183 = vld [vmem:[%s3168 + $0x70] sm:$0xff]
  %v3184 = vld [vmem:[%s3168 + $0x78] sm:$0xff]
  %v3185 = vld [vmem:[%s3168 + $0x80] sm:$0xff]
  %v3186 = vld [vmem:[%s3168 + $0x88] sm:$0xff]
  %v3187 = vld [vmem:[%s3168 + $0x90] sm:$0xff]
  %v3188 = vld [vmem:[%s3168 + $0x98] sm:$0xff]
  %v3189 = vld [vmem:[%s3168 + $0xa0] sm:$0xff]
  %v3190 = vld [vmem:[%s3168 + $0xa8] sm:$0xff]
  %v3191 = vld [vmem:[%s3168 + $0xb0] sm:$0xff]
  %v3192 = vld [vmem:[%s3168 + $0xb8] sm:$0xff]
  %v3193 = vld [vmem:[%s3168 + $0xc0] sm:$0xff]
  %v3194 = vld [vmem:[%s3168 + $0xc8] sm:$0xff]
  %v3195 = vld [vmem:[%s3168 + $0xd0] sm:$0xff]
  %v3196 = vld [vmem:[%s3168 + $0xd8] sm:$0xff]
  %v3197 = vld [vmem:[%s3168 + $0xe0] sm:$0xff]
  %v3198 = vld [vmem:[%s3168 + $0xe8] sm:$0xff]
  %v3199 = vld [vmem:[%s3168 + $0xf0] sm:$0xff]
  %v3200 = vld [vmem:[%s3168 + $0xf8] sm:$0xff]
  %3201 = vmatprep.subr.mxu0 %v3170
  %3202 = vmatpush1.msra.mxu0 %v3169
  %3203 = vmatprep.subr.mxu0 %v3172
  %3204 = vmatpush1.msra.mxu0 %v3171
  %3205 = vmatprep.subr.mxu0 %v3174
  %3206 = vmatpush1.msra.mxu0 %v3173
  %3207 = vmatprep.subr.mxu0 %v3176
  %3208 = vmatpush1.msra.mxu0 %v3175
  %3209 = vmatprep.subr.mxu0 %v3178
  %3210 = vmatpush1.msra.mxu0 %v3177
  %3211 = vmatprep.subr.mxu0 %v3180
  %3212 = vmatpush1.msra.mxu0 %v3179
  %3213 = vmatprep.subr.mxu0 %v3182
  %3214 = vmatpush1.msra.mxu0 %v3181
  %3215 = vmatprep.subr.mxu0 %v3184
  %3216 = vmatpush1.msra.mxu0 %v3183
  %3217 = vmatprep.subr.mxu0 %v3186
  %3218 = vmatpush1.msra.mxu0 %v3185
  %3219 = vmatprep.subr.mxu0 %v3188
  %3220 = vmatpush1.msra.mxu0 %v3187
  %3221 = vmatprep.subr.mxu0 %v3190
  %3222 = vmatpush1.msra.mxu0 %v3189
  %3223 = vmatprep.subr.mxu0 %v3192
  %3224 = vmatpush1.msra.mxu0 %v3191
  %3225 = vmatprep.subr.mxu0 %v3194
  %3226 = vmatpush1.msra.mxu0 %v3193
  %3227 = vmatprep.subr.mxu0 %v3196
  %3228 = vmatpush1.msra.mxu0 %v3195
  %3229 = vmatprep.subr.mxu0 %v3198
  %3230 = vmatpush1.msra.mxu0 %v3197
  %3231 = vmatprep.subr.mxu0 %v3200
  %3232 = vmatpush1.msra.mxu0 %v3199
  %3233 = vmatprep.subr.mxu0 0.0
  %3234 = vmatpush1.msra.mxu0 0.0
  %3235 = vmatprep.subr.mxu0 0.0
  %3236 = vmatpush1.msra.mxu0 0.0
  %3237 = vmatprep.subr.mxu0 0.0
  %3238 = vmatpush1.msra.mxu0 0.0
  %3239 = vmatprep.subr.mxu0 0.0
  %3240 = vmatpush1.msra.mxu0 0.0
  %3241 = vmatprep.subr.mxu0 0.0
  %3242 = vmatpush1.msra.mxu0 0.0
  %3243 = vmatprep.subr.mxu0 0.0
  %3244 = vmatpush1.msra.mxu0 0.0
  %3245 = vmatprep.subr.mxu0 0.0
  %3246 = vmatpush1.msra.mxu0 0.0
  %3247 = vmatprep.subr.mxu0 0.0
  %3248 = vmatpush1.msra.mxu0 0.0
  %3249 = vmatprep.subr.mxu0 0.0
  %3250 = vmatpush1.msra.mxu0 0.0
  %3251 = vmatprep.subr.mxu0 0.0
  %3252 = vmatpush1.msra.mxu0 0.0
  %3253 = vmatprep.subr.mxu0 0.0
  %3254 = vmatpush1.msra.mxu0 0.0
  %3255 = vmatprep.subr.mxu0 0.0
  %3256 = vmatpush1.msra.mxu0 0.0
  %3257 = vmatprep.subr.mxu0 0.0
  %3258 = vmatpush1.msra.mxu0 0.0
  %3259 = vmatprep.subr.mxu0 0.0
  %3260 = vmatpush1.msra.mxu0 0.0
  %3261 = vmatprep.subr.mxu0 0.0
  %3262 = vmatpush1.msra.mxu0 0.0
  %3263 = vmatprep.subr.mxu0 0.0
  %3264 = vmatpush1.msra.mxu0 0.0
  %3265 = vmatprep.mubr.f32.mxu0 0.0
  %3266 = vmatmul.mubr.f32.gmra.mrb[0].mxu0 %v1153
  %v3267 = vpop.f32.mrb[0].mxu0
  %v3268 = vadd.f32 0.0, %v3267
  %v3269 = vpop.f32.mrb[0].mxu0
  %v3270 = vadd.f32 0.0, %v3269
  %3271 = vdwg.mxu0
  %v3272 = vadd.f32 %v3166, %v3268
  %v3273 = vadd.f32 %v3167, %v3270
  %s3274 = scalar_lea.vmem %s3, 5120
  %v3275 = vld [vmem:[%s3274] sm:$0xff]
  %v3276 = vld [vmem:[%s3274 + $0x8] sm:$0xff]
  %v3277 = vld [vmem:[%s3274 + $0x10] sm:$0xff]
  %v3278 = vld [vmem:[%s3274 + $0x18] sm:$0xff]
  %v3279 = vld [vmem:[%s3274 + $0x20] sm:$0xff]
  %v3280 = vld [vmem:[%s3274 + $0x28] sm:$0xff]
  %v3281 = vld [vmem:[%s3274 + $0x30] sm:$0xff]
  %v3282 = vld [vmem:[%s3274 + $0x38] sm:$0xff]
  %v3283 = vld [vmem:[%s3274 + $0x40] sm:$0xff]
  %v3284 = vld [vmem:[%s3274 + $0x48] sm:$0xff]
  %v3285 = vld [vmem:[%s3274 + $0x50] sm:$0xff]
  %v3286 = vld [vmem:[%s3274 + $0x58] sm:$0xff]
  %v3287 = vld [vmem:[%s3274 + $0x60] sm:$0xff]
  %v3288 = vld [vmem:[%s3274 + $0x68] sm:$0xff]
  %v3289 = vld [vmem:[%s3274 + $0x70] sm:$0xff]
  %v3290 = vld [vmem:[%s3274 + $0x78] sm:$0xff]
  %v3291 = vld [vmem:[%s3274 + $0x80] sm:$0xff]
  %v3292 = vld [vmem:[%s3274 + $0x88] sm:$0xff]
  %v3293 = vld [vmem:[%s3274 + $0x90] sm:$0xff]
  %v3294 = vld [vmem:[%s3274 + $0x98] sm:$0xff]
  %v3295 = vld [vmem:[%s3274 + $0xa0] sm:$0xff]
  %v3296 = vld [vmem:[%s3274 + $0xa8] sm:$0xff]
  %v3297 = vld [vmem:[%s3274 + $0xb0] sm:$0xff]
  %v3298 = vld [vmem:[%s3274 + $0xb8] sm:$0xff]
  %v3299 = vld [vmem:[%s3274 + $0xc0] sm:$0xff]
  %v3300 = vld [vmem:[%s3274 + $0xc8] sm:$0xff]
  %v3301 = vld [vmem:[%s3274 + $0xd0] sm:$0xff]
  %v3302 = vld [vmem:[%s3274 + $0xd8] sm:$0xff]
  %v3303 = vld [vmem:[%s3274 + $0xe0] sm:$0xff]
  %v3304 = vld [vmem:[%s3274 + $0xe8] sm:$0xff]
  %v3305 = vld [vmem:[%s3274 + $0xf0] sm:$0xff]
  %v3306 = vld [vmem:[%s3274 + $0xf8] sm:$0xff]
  %3307 = vmatprep.subr.mxu0 %v3276
  %3308 = vmatpush1.msra.mxu0 %v3275
  %3309 = vmatprep.subr.mxu0 %v3278
  %3310 = vmatpush1.msra.mxu0 %v3277
  %3311 = vmatprep.subr.mxu0 %v3280
  %3312 = vmatpush1.msra.mxu0 %v3279
  %3313 = vmatprep.subr.mxu0 %v3282
  %3314 = vmatpush1.msra.mxu0 %v3281
  %3315 = vmatprep.subr.mxu0 %v3284
  %3316 = vmatpush1.msra.mxu0 %v3283
  %3317 = vmatprep.subr.mxu0 %v3286
  %3318 = vmatpush1.msra.mxu0 %v3285
  %3319 = vmatprep.subr.mxu0 %v3288
  %3320 = vmatpush1.msra.mxu0 %v3287
  %3321 = vmatprep.subr.mxu0 %v3290
  %3322 = vmatpush1.msra.mxu0 %v3289
  %3323 = vmatprep.subr.mxu0 %v3292
  %3324 = vmatpush1.msra.mxu0 %v3291
  %3325 = vmatprep.subr.mxu0 %v3294
  %3326 = vmatpush1.msra.mxu0 %v3293
  %3327 = vmatprep.subr.mxu0 %v3296
  %3328 = vmatpush1.msra.mxu0 %v3295
  %3329 = vmatprep.subr.mxu0 %v3298
  %3330 = vmatpush1.msra.mxu0 %v3297
  %3331 = vmatprep.subr.mxu0 %v3300
  %3332 = vmatpush1.msra.mxu0 %v3299
  %3333 = vmatprep.subr.mxu0 %v3302
  %3334 = vmatpush1.msra.mxu0 %v3301
  %3335 = vmatprep.subr.mxu0 %v3304
  %3336 = vmatpush1.msra.mxu0 %v3303
  %3337 = vmatprep.subr.mxu0 %v3306
  %3338 = vmatpush1.msra.mxu0 %v3305
  %3339 = vmatprep.subr.mxu0 0.0
  %3340 = vmatpush1.msra.mxu0 0.0
  %3341 = vmatprep.subr.mxu0 0.0
  %3342 = vmatpush1.msra.mxu0 0.0
  %3343 = vmatprep.subr.mxu0 0.0
  %3344 = vmatpush1.msra.mxu0 0.0
  %3345 = vmatprep.subr.mxu0 0.0
  %3346 = vmatpush1.msra.mxu0 0.0
  %3347 = vmatprep.subr.mxu0 0.0
  %3348 = vmatpush1.msra.mxu0 0.0
  %3349 = vmatprep.subr.mxu0 0.0
  %3350 = vmatpush1.msra.mxu0 0.0
  %3351 = vmatprep.subr.mxu0 0.0
  %3352 = vmatpush1.msra.mxu0 0.0
  %3353 = vmatprep.subr.mxu0 0.0
  %3354 = vmatpush1.msra.mxu0 0.0
  %3355 = vmatprep.subr.mxu0 0.0
  %3356 = vmatpush1.msra.mxu0 0.0
  %3357 = vmatprep.subr.mxu0 0.0
  %3358 = vmatpush1.msra.mxu0 0.0
  %3359 = vmatprep.subr.mxu0 0.0
  %3360 = vmatpush1.msra.mxu0 0.0
  %3361 = vmatprep.subr.mxu0 0.0
  %3362 = vmatpush1.msra.mxu0 0.0
  %3363 = vmatprep.subr.mxu0 0.0
  %3364 = vmatpush1.msra.mxu0 0.0
  %3365 = vmatprep.subr.mxu0 0.0
  %3366 = vmatpush1.msra.mxu0 0.0
  %3367 = vmatprep.subr.mxu0 0.0
  %3368 = vmatpush1.msra.mxu0 0.0
  %3369 = vmatprep.subr.mxu0 0.0
  %3370 = vmatpush1.msra.mxu0 0.0
  %3371 = vmatprep.mubr.f32.mxu0 0.0
  %3372 = vmatmul.mubr.f32.gmra.mrb[0].mxu0 %v1154
  %v3373 = vpop.f32.mrb[0].mxu0
  %v3374 = vadd.f32 0.0, %v3373
  %v3375 = vpop.f32.mrb[0].mxu0
  %v3376 = vadd.f32 0.0, %v3375
  %3377 = vdwg.mxu0
  %v3378 = vadd.f32 %v3272, %v3374
  %v3379 = vadd.f32 %v3273, %v3376
  %s3380 = scalar_lea.vmem %s3, 5376
  %v3381 = vld [vmem:[%s3380] sm:$0xff]
  %v3382 = vld [vmem:[%s3380 + $0x8] sm:$0xff]
  %v3383 = vld [vmem:[%s3380 + $0x10] sm:$0xff]
  %v3384 = vld [vmem:[%s3380 + $0x18] sm:$0xff]
  %v3385 = vld [vmem:[%s3380 + $0x20] sm:$0xff]
  %v3386 = vld [vmem:[%s3380 + $0x28] sm:$0xff]
  %v3387 = vld [vmem:[%s3380 + $0x30] sm:$0xff]
  %v3388 = vld [vmem:[%s3380 + $0x38] sm:$0xff]
  %v3389 = vld [vmem:[%s3380 + $0x40] sm:$0xff]
  %v3390 = vld [vmem:[%s3380 + $0x48] sm:$0xff]
  %v3391 = vld [vmem:[%s3380 + $0x50] sm:$0xff]
  %v3392 = vld [vmem:[%s3380 + $0x58] sm:$0xff]
  %v3393 = vld [vmem:[%s3380 + $0x60] sm:$0xff]
  %v3394 = vld [vmem:[%s3380 + $0x68] sm:$0xff]
  %v3395 = vld [vmem:[%s3380 + $0x70] sm:$0xff]
  %v3396 = vld [vmem:[%s3380 + $0x78] sm:$0xff]
  %v3397 = vld [vmem:[%s3380 + $0x80] sm:$0xff]
  %v3398 = vld [vmem:[%s3380 + $0x88] sm:$0xff]
  %v3399 = vld [vmem:[%s3380 + $0x90] sm:$0xff]
  %v3400 = vld [vmem:[%s3380 + $0x98] sm:$0xff]
  %v3401 = vld [vmem:[%s3380 + $0xa0] sm:$0xff]
  %v3402 = vld [vmem:[%s3380 + $0xa8] sm:$0xff]
  %v3403 = vld [vmem:[%s3380 + $0xb0] sm:$0xff]
  %v3404 = vld [vmem:[%s3380 + $0xb8] sm:$0xff]
  %v3405 = vld [vmem:[%s3380 + $0xc0] sm:$0xff]
  %v3406 = vld [vmem:[%s3380 + $0xc8] sm:$0xff]
  %v3407 = vld [vmem:[%s3380 + $0xd0] sm:$0xff]
  %v3408 = vld [vmem:[%s3380 + $0xd8] sm:$0xff]
  %v3409 = vld [vmem:[%s3380 + $0xe0] sm:$0xff]
  %v3410 = vld [vmem:[%s3380 + $0xe8] sm:$0xff]
  %v3411 = vld [vmem:[%s3380 + $0xf0] sm:$0xff]
  %v3412 = vld [vmem:[%s3380 + $0xf8] sm:$0xff]
  %3413 = vmatprep.subr.mxu0 %v3382
  %3414 = vmatpush1.msra.mxu0 %v3381
  %3415 = vmatprep.subr.mxu0 %v3384
  %3416 = vmatpush1.msra.mxu0 %v3383
  %3417 = vmatprep.subr.mxu0 %v3386
  %3418 = vmatpush1.msra.mxu0 %v3385
  %3419 = vmatprep.subr.mxu0 %v3388
  %3420 = vmatpush1.msra.mxu0 %v3387
  %3421 = vmatprep.subr.mxu0 %v3390
  %3422 = vmatpush1.msra.mxu0 %v3389
  %3423 = vmatprep.subr.mxu0 %v3392
  %3424 = vmatpush1.msra.mxu0 %v3391
  %3425 = vmatprep.subr.mxu0 %v3394
  %3426 = vmatpush1.msra.mxu0 %v3393
  %3427 = vmatprep.subr.mxu0 %v3396
  %3428 = vmatpush1.msra.mxu0 %v3395
  %3429 = vmatprep.subr.mxu0 %v3398
  %3430 = vmatpush1.msra.mxu0 %v3397
  %3431 = vmatprep.subr.mxu0 %v3400
  %3432 = vmatpush1.msra.mxu0 %v3399
  %3433 = vmatprep.subr.mxu0 %v3402
  %3434 = vmatpush1.msra.mxu0 %v3401
  %3435 = vmatprep.subr.mxu0 %v3404
  %3436 = vmatpush1.msra.mxu0 %v3403
  %3437 = vmatprep.subr.mxu0 %v3406
  %3438 = vmatpush1.msra.mxu0 %v3405
  %3439 = vmatprep.subr.mxu0 %v3408
  %3440 = vmatpush1.msra.mxu0 %v3407
  %3441 = vmatprep.subr.mxu0 %v3410
  %3442 = vmatpush1.msra.mxu0 %v3409
  %3443 = vmatprep.subr.mxu0 %v3412
  %3444 = vmatpush1.msra.mxu0 %v3411
  %3445 = vmatprep.subr.mxu0 0.0
  %3446 = vmatpush1.msra.mxu0 0.0
  %3447 = vmatprep.subr.mxu0 0.0
  %3448 = vmatpush1.msra.mxu0 0.0
  %3449 = vmatprep.subr.mxu0 0.0
  %3450 = vmatpush1.msra.mxu0 0.0
  %3451 = vmatprep.subr.mxu0 0.0
  %3452 = vmatpush1.msra.mxu0 0.0
  %3453 = vmatprep.subr.mxu0 0.0
  %3454 = vmatpush1.msra.mxu0 0.0
  %3455 = vmatprep.subr.mxu0 0.0
  %3456 = vmatpush1.msra.mxu0 0.0
  %3457 = vmatprep.subr.mxu0 0.0
  %3458 = vmatpush1.msra.mxu0 0.0
  %3459 = vmatprep.subr.mxu0 0.0
  %3460 = vmatpush1.msra.mxu0 0.0
  %3461 = vmatprep.subr.mxu0 0.0
  %3462 = vmatpush1.msra.mxu0 0.0
  %3463 = vmatprep.subr.mxu0 0.0
  %3464 = vmatpush1.msra.mxu0 0.0
  %3465 = vmatprep.subr.mxu0 0.0
  %3466 = vmatpush1.msra.mxu0 0.0
  %3467 = vmatprep.subr.mxu0 0.0
  %3468 = vmatpush1.msra.mxu0 0.0
  %3469 = vmatprep.subr.mxu0 0.0
  %3470 = vmatpush1.msra.mxu0 0.0
  %3471 = vmatprep.subr.mxu0 0.0
  %3472 = vmatpush1.msra.mxu0 0.0
  %3473 = vmatprep.subr.mxu0 0.0
  %3474 = vmatpush1.msra.mxu0 0.0
  %3475 = vmatprep.subr.mxu0 0.0
  %3476 = vmatpush1.msra.mxu0 0.0
  %3477 = vmatprep.mubr.f32.mxu0 0.0
  %3478 = vmatmul.mubr.f32.gmra.mrb[0].mxu0 %v1155
  %v3479 = vpop.f32.mrb[0].mxu0
  %v3480 = vadd.f32 0.0, %v3479
  %v3481 = vpop.f32.mrb[0].mxu0
  %v3482 = vadd.f32 0.0, %v3481
  %3483 = vdwg.mxu0
  %v3484 = vadd.f32 %v3378, %v3480
  %v3485 = vadd.f32 %v3379, %v3482
  %s3486 = scalar_lea.vmem %s3, 5632
  %v3487 = vld [vmem:[%s3486] sm:$0xff]
  %v3488 = vld [vmem:[%s3486 + $0x8] sm:$0xff]
  %v3489 = vld [vmem:[%s3486 + $0x10] sm:$0xff]
  %v3490 = vld [vmem:[%s3486 + $0x18] sm:$0xff]
  %v3491 = vld [vmem:[%s3486 + $0x20] sm:$0xff]
  %v3492 = vld [vmem:[%s3486 + $0x28] sm:$0xff]
  %v3493 = vld [vmem:[%s3486 + $0x30] sm:$0xff]
  %v3494 = vld [vmem:[%s3486 + $0x38] sm:$0xff]
  %v3495 = vld [vmem:[%s3486 + $0x40] sm:$0xff]
  %v3496 = vld [vmem:[%s3486 + $0x48] sm:$0xff]
  %v3497 = vld [vmem:[%s3486 + $0x50] sm:$0xff]
  %v3498 = vld [vmem:[%s3486 + $0x58] sm:$0xff]
  %v3499 = vld [vmem:[%s3486 + $0x60] sm:$0xff]
  %v3500 = vld [vmem:[%s3486 + $0x68] sm:$0xff]
  %v3501 = vld [vmem:[%s3486 + $0x70] sm:$0xff]
  %v3502 = vld [vmem:[%s3486 + $0x78] sm:$0xff]
  %v3503 = vld [vmem:[%s3486 + $0x80] sm:$0xff]
  %v3504 = vld [vmem:[%s3486 + $0x88] sm:$0xff]
  %v3505 = vld [vmem:[%s3486 + $0x90] sm:$0xff]
  %v3506 = vld [vmem:[%s3486 + $0x98] sm:$0xff]
  %v3507 = vld [vmem:[%s3486 + $0xa0] sm:$0xff]
  %v3508 = vld [vmem:[%s3486 + $0xa8] sm:$0xff]
  %v3509 = vld [vmem:[%s3486 + $0xb0] sm:$0xff]
  %v3510 = vld [vmem:[%s3486 + $0xb8] sm:$0xff]
  %v3511 = vld [vmem:[%s3486 + $0xc0] sm:$0xff]
  %v3512 = vld [vmem:[%s3486 + $0xc8] sm:$0xff]
  %v3513 = vld [vmem:[%s3486 + $0xd0] sm:$0xff]
  %v3514 = vld [vmem:[%s3486 + $0xd8] sm:$0xff]
  %v3515 = vld [vmem:[%s3486 + $0xe0] sm:$0xff]
  %v3516 = vld [vmem:[%s3486 + $0xe8] sm:$0xff]
  %v3517 = vld [vmem:[%s3486 + $0xf0] sm:$0xff]
  %v3518 = vld [vmem:[%s3486 + $0xf8] sm:$0xff]
  %3519 = vmatprep.subr.mxu0 %v3488
  %3520 = vmatpush1.msra.mxu0 %v3487
  %3521 = vmatprep.subr.mxu0 %v3490
  %3522 = vmatpush1.msra.mxu0 %v3489
  %3523 = vmatprep.subr.mxu0 %v3492
  %3524 = vmatpush1.msra.mxu0 %v3491
  %3525 = vmatprep.subr.mxu0 %v3494
  %3526 = vmatpush1.msra.mxu0 %v3493
  %3527 = vmatprep.subr.mxu0 %v3496
  %3528 = vmatpush1.msra.mxu0 %v3495
  %3529 = vmatprep.subr.mxu0 %v3498
  %3530 = vmatpush1.msra.mxu0 %v3497
  %3531 = vmatprep.subr.mxu0 %v3500
  %3532 = vmatpush1.msra.mxu0 %v3499
  %3533 = vmatprep.subr.mxu0 %v3502
  %3534 = vmatpush1.msra.mxu0 %v3501
  %3535 = vmatprep.subr.mxu0 %v3504
  %3536 = vmatpush1.msra.mxu0 %v3503
  %3537 = vmatprep.subr.mxu0 %v3506
  %3538 = vmatpush1.msra.mxu0 %v3505
  %3539 = vmatprep.subr.mxu0 %v3508
  %3540 = vmatpush1.msra.mxu0 %v3507
  %3541 = vmatprep.subr.mxu0 %v3510
  %3542 = vmatpush1.msra.mxu0 %v3509
  %3543 = vmatprep.subr.mxu0 %v3512
  %3544 = vmatpush1.msra.mxu0 %v3511
  %3545 = vmatprep.subr.mxu0 %v3514
  %3546 = vmatpush1.msra.mxu0 %v3513
  %3547 = vmatprep.subr.mxu0 %v3516
  %3548 = vmatpush1.msra.mxu0 %v3515
  %3549 = vmatprep.subr.mxu0 %v3518
  %3550 = vmatpush1.msra.mxu0 %v3517
  %3551 = vmatprep.subr.mxu0 0.0
  %3552 = vmatpush1.msra.mxu0 0.0
  %3553 = vmatprep.subr.mxu0 0.0
  %3554 = vmatpush1.msra.mxu0 0.0
  %3555 = vmatprep.subr.mxu0 0.0
  %3556 = vmatpush1.msra.mxu0 0.0
  %3557 = vmatprep.subr.mxu0 0.0
  %3558 = vmatpush1.msra.mxu0 0.0
  %3559 = vmatprep.subr.mxu0 0.0
  %3560 = vmatpush1.msra.mxu0 0.0
  %3561 = vmatprep.subr.mxu0 0.0
  %3562 = vmatpush1.msra.mxu0 0.0
  %3563 = vmatprep.subr.mxu0 0.0
  %3564 = vmatpush1.msra.mxu0 0.0
  %3565 = vmatprep.subr.mxu0 0.0
  %3566 = vmatpush1.msra.mxu0 0.0
  %3567 = vmatprep.subr.mxu0 0.0
  %3568 = vmatpush1.msra.mxu0 0.0
  %3569 = vmatprep.subr.mxu0 0.0
  %3570 = vmatpush1.msra.mxu0 0.0
  %3571 = vmatprep.subr.mxu0 0.0
  %3572 = vmatpush1.msra.mxu0 0.0
  %3573 = vmatprep.subr.mxu0 0.0
  %3574 = vmatpush1.msra.mxu0 0.0
  %3575 = vmatprep.subr.mxu0 0.0
  %3576 = vmatpush1.msra.mxu0 0.0
  %3577 = vmatprep.subr.mxu0 0.0
  %3578 = vmatpush1.msra.mxu0 0.0
  %3579 = vmatprep.subr.mxu0 0.0
  %3580 = vmatpush1.msra.mxu0 0.0
  %3581 = vmatprep.subr.mxu0 0.0
  %3582 = vmatpush1.msra.mxu0 0.0
  %3583 = vmatprep.mubr.f32.mxu0 0.0
  %3584 = vmatmul.mubr.f32.gmra.mrb[0].mxu0 %v1156
  %v3585 = vpop.f32.mrb[0].mxu0
  %v3586 = vadd.f32 0.0, %v3585
  %v3587 = vpop.f32.mrb[0].mxu0
  %v3588 = vadd.f32 0.0, %v3587
  %3589 = vdwg.mxu0
  %v3590 = vadd.f32 %v3484, %v3586
  %v3591 = vadd.f32 %v3485, %v3588
  %s3592 = scalar_lea.vmem %s3, 5888
  %v3593 = vld [vmem:[%s3592] sm:$0xff]
  %v3594 = vld [vmem:[%s3592 + $0x8] sm:$0xff]
  %v3595 = vld [vmem:[%s3592 + $0x10] sm:$0xff]
  %v3596 = vld [vmem:[%s3592 + $0x18] sm:$0xff]
  %v3597 = vld [vmem:[%s3592 + $0x20] sm:$0xff]
  %v3598 = vld [vmem:[%s3592 + $0x28] sm:$0xff]
  %v3599 = vld [vmem:[%s3592 + $0x30] sm:$0xff]
  %v3600 = vld [vmem:[%s3592 + $0x38] sm:$0xff]
  %v3601 = vld [vmem:[%s3592 + $0x40] sm:$0xff]
  %v3602 = vld [vmem:[%s3592 + $0x48] sm:$0xff]
  %v3603 = vld [vmem:[%s3592 + $0x50] sm:$0xff]
  %v3604 = vld [vmem:[%s3592 + $0x58] sm:$0xff]
  %v3605 = vld [vmem:[%s3592 + $0x60] sm:$0xff]
  %v3606 = vld [vmem:[%s3592 + $0x68] sm:$0xff]
  %v3607 = vld [vmem:[%s3592 + $0x70] sm:$0xff]
  %v3608 = vld [vmem:[%s3592 + $0x78] sm:$0xff]
  %v3609 = vld [vmem:[%s3592 + $0x80] sm:$0xff]
  %v3610 = vld [vmem:[%s3592 + $0x88] sm:$0xff]
  %v3611 = vld [vmem:[%s3592 + $0x90] sm:$0xff]
  %v3612 = vld [vmem:[%s3592 + $0x98] sm:$0xff]
  %v3613 = vld [vmem:[%s3592 + $0xa0] sm:$0xff]
  %v3614 = vld [vmem:[%s3592 + $0xa8] sm:$0xff]
  %v3615 = vld [vmem:[%s3592 + $0xb0] sm:$0xff]
  %v3616 = vld [vmem:[%s3592 + $0xb8] sm:$0xff]
  %v3617 = vld [vmem:[%s3592 + $0xc0] sm:$0xff]
  %v3618 = vld [vmem:[%s3592 + $0xc8] sm:$0xff]
  %v3619 = vld [vmem:[%s3592 + $0xd0] sm:$0xff]
  %v3620 = vld [vmem:[%s3592 + $0xd8] sm:$0xff]
  %v3621 = vld [vmem:[%s3592 + $0xe0] sm:$0xff]
  %v3622 = vld [vmem:[%s3592 + $0xe8] sm:$0xff]
  %v3623 = vld [vmem:[%s3592 + $0xf0] sm:$0xff]
  %v3624 = vld [vmem:[%s3592 + $0xf8] sm:$0xff]
  %3625 = vmatprep.subr.mxu0 %v3594
  %3626 = vmatpush1.msra.mxu0 %v3593
  %3627 = vmatprep.subr.mxu0 %v3596
  %3628 = vmatpush1.msra.mxu0 %v3595
  %3629 = vmatprep.subr.mxu0 %v3598
  %3630 = vmatpush1.msra.mxu0 %v3597
  %3631 = vmatprep.subr.mxu0 %v3600
  %3632 = vmatpush1.msra.mxu0 %v3599
  %3633 = vmatprep.subr.mxu0 %v3602
  %3634 = vmatpush1.msra.mxu0 %v3601
  %3635 = vmatprep.subr.mxu0 %v3604
  %3636 = vmatpush1.msra.mxu0 %v3603
  %3637 = vmatprep.subr.mxu0 %v3606
  %3638 = vmatpush1.msra.mxu0 %v3605
  %3639 = vmatprep.subr.mxu0 %v3608
  %3640 = vmatpush1.msra.mxu0 %v3607
  %3641 = vmatprep.subr.mxu0 %v3610
  %3642 = vmatpush1.msra.mxu0 %v3609
  %3643 = vmatprep.subr.mxu0 %v3612
  %3644 = vmatpush1.msra.mxu0 %v3611
  %3645 = vmatprep.subr.mxu0 %v3614
  %3646 = vmatpush1.msra.mxu0 %v3613
  %3647 = vmatprep.subr.mxu0 %v3616
  %3648 = vmatpush1.msra.mxu0 %v3615
  %3649 = vmatprep.subr.mxu0 %v3618
  %3650 = vmatpush1.msra.mxu0 %v3617
  %3651 = vmatprep.subr.mxu0 %v3620
  %3652 = vmatpush1.msra.mxu0 %v3619
  %3653 = vmatprep.subr.mxu0 %v3622
  %3654 = vmatpush1.msra.mxu0 %v3621
  %3655 = vmatprep.subr.mxu0 %v3624
  %3656 = vmatpush1.msra.mxu0 %v3623
  %3657 = vmatprep.subr.mxu0 0.0
  %3658 = vmatpush1.msra.mxu0 0.0
  %3659 = vmatprep.subr.mxu0 0.0
  %3660 = vmatpush1.msra.mxu0 0.0
  %3661 = vmatprep.subr.mxu0 0.0
  %3662 = vmatpush1.msra.mxu0 0.0
  %3663 = vmatprep.subr.mxu0 0.0
  %3664 = vmatpush1.msra.mxu0 0.0
  %3665 = vmatprep.subr.mxu0 0.0
  %3666 = vmatpush1.msra.mxu0 0.0
  %3667 = vmatprep.subr.mxu0 0.0
  %3668 = vmatpush1.msra.mxu0 0.0
  %3669 = vmatprep.subr.mxu0 0.0
  %3670 = vmatpush1.msra.mxu0 0.0
  %3671 = vmatprep.subr.mxu0 0.0
  %3672 = vmatpush1.msra.mxu0 0.0
  %3673 = vmatprep.subr.mxu0 0.0
  %3674 = vmatpush1.msra.mxu0 0.0
  %3675 = vmatprep.subr.mxu0 0.0
  %3676 = vmatpush1.msra.mxu0 0.0
  %3677 = vmatprep.subr.mxu0 0.0
  %3678 = vmatpush1.msra.mxu0 0.0
  %3679 = vmatprep.subr.mxu0 0.0
  %3680 = vmatpush1.msra.mxu0 0.0
  %3681 = vmatprep.subr.mxu0 0.0
  %3682 = vmatpush1.msra.mxu0 0.0
  %3683 = vmatprep.subr.mxu0 0.0
  %3684 = vmatpush1.msra.mxu0 0.0
  %3685 = vmatprep.subr.mxu0 0.0
  %3686 = vmatpush1.msra.mxu0 0.0
  %3687 = vmatprep.subr.mxu0 0.0
  %3688 = vmatpush1.msra.mxu0 0.0
  %3689 = vmatprep.mubr.f32.mxu0 0.0
  %3690 = vmatmul.mubr.f32.gmra.mrb[0].mxu0 %v1157
  %v3691 = vpop.f32.mrb[0].mxu0
  %v3692 = vadd.f32 0.0, %v3691
  %v3693 = vpop.f32.mrb[0].mxu0
  %v3694 = vadd.f32 0.0, %v3693
  %3695 = vdwg.mxu0
  %v3696 = vadd.f32 %v3590, %v3692
  %v3697 = vadd.f32 %v3591, %v3694
  %s3698 = scalar_lea.vmem %s3, 6144
  %v3699 = vld [vmem:[%s3698] sm:$0xff]
  %v3700 = vld [vmem:[%s3698 + $0x8] sm:$0xff]
  %v3701 = vld [vmem:[%s3698 + $0x10] sm:$0xff]
  %v3702 = vld [vmem:[%s3698 + $0x18] sm:$0xff]
  %v3703 = vld [vmem:[%s3698 + $0x20] sm:$0xff]
  %v3704 = vld [vmem:[%s3698 + $0x28] sm:$0xff]
  %v3705 = vld [vmem:[%s3698 + $0x30] sm:$0xff]
  %v3706 = vld [vmem:[%s3698 + $0x38] sm:$0xff]
  %v3707 = vld [vmem:[%s3698 + $0x40] sm:$0xff]
  %v3708 = vld [vmem:[%s3698 + $0x48] sm:$0xff]
  %v3709 = vld [vmem:[%s3698 + $0x50] sm:$0xff]
  %v3710 = vld [vmem:[%s3698 + $0x58] sm:$0xff]
  %v3711 = vld [vmem:[%s3698 + $0x60] sm:$0xff]
  %v3712 = vld [vmem:[%s3698 + $0x68] sm:$0xff]
  %v3713 = vld [vmem:[%s3698 + $0x70] sm:$0xff]
  %v3714 = vld [vmem:[%s3698 + $0x78] sm:$0xff]
  %v3715 = vld [vmem:[%s3698 + $0x80] sm:$0xff]
  %v3716 = vld [vmem:[%s3698 + $0x88] sm:$0xff]
  %v3717 = vld [vmem:[%s3698 + $0x90] sm:$0xff]
  %v3718 = vld [vmem:[%s3698 + $0x98] sm:$0xff]
  %v3719 = vld [vmem:[%s3698 + $0xa0] sm:$0xff]
  %v3720 = vld [vmem:[%s3698 + $0xa8] sm:$0xff]
  %v3721 = vld [vmem:[%s3698 + $0xb0] sm:$0xff]
  %v3722 = vld [vmem:[%s3698 + $0xb8] sm:$0xff]
  %v3723 = vld [vmem:[%s3698 + $0xc0] sm:$0xff]
  %v3724 = vld [vmem:[%s3698 + $0xc8] sm:$0xff]
  %v3725 = vld [vmem:[%s3698 + $0xd0] sm:$0xff]
  %v3726 = vld [vmem:[%s3698 + $0xd8] sm:$0xff]
  %v3727 = vld [vmem:[%s3698 + $0xe0] sm:$0xff]
  %v3728 = vld [vmem:[%s3698 + $0xe8] sm:$0xff]
  %v3729 = vld [vmem:[%s3698 + $0xf0] sm:$0xff]
  %v3730 = vld [vmem:[%s3698 + $0xf8] sm:$0xff]
  %3731 = vmatprep.subr.mxu0 %v3700
  %3732 = vmatpush1.msra.mxu0 %v3699
  %3733 = vmatprep.subr.mxu0 %v3702
  %3734 = vmatpush1.msra.mxu0 %v3701
  %3735 = vmatprep.subr.mxu0 %v3704
  %3736 = vmatpush1.msra.mxu0 %v3703
  %3737 = vmatprep.subr.mxu0 %v3706
  %3738 = vmatpush1.msra.mxu0 %v3705
  %3739 = vmatprep.subr.mxu0 %v3708
  %3740 = vmatpush1.msra.mxu0 %v3707
  %3741 = vmatprep.subr.mxu0 %v3710
  %3742 = vmatpush1.msra.mxu0 %v3709
  %3743 = vmatprep.subr.mxu0 %v3712
  %3744 = vmatpush1.msra.mxu0 %v3711
  %3745 = vmatprep.subr.mxu0 %v3714
  %3746 = vmatpush1.msra.mxu0 %v3713
  %3747 = vmatprep.subr.mxu0 %v3716
  %3748 = vmatpush1.msra.mxu0 %v3715
  %3749 = vmatprep.subr.mxu0 %v3718
  %3750 = vmatpush1.msra.mxu0 %v3717
  %3751 = vmatprep.subr.mxu0 %v3720
  %3752 = vmatpush1.msra.mxu0 %v3719
  %3753 = vmatprep.subr.mxu0 %v3722
  %3754 = vmatpush1.msra.mxu0 %v3721
  %3755 = vmatprep.subr.mxu0 %v3724
  %3756 = vmatpush1.msra.mxu0 %v3723
  %3757 = vmatprep.subr.mxu0 %v3726
  %3758 = vmatpush1.msra.mxu0 %v3725
  %3759 = vmatprep.subr.mxu0 %v3728
  %3760 = vmatpush1.msra.mxu0 %v3727
  %3761 = vmatprep.subr.mxu0 %v3730
  %3762 = vmatpush1.msra.mxu0 %v3729
  %3763 = vmatprep.subr.mxu0 0.0
  %3764 = vmatpush1.msra.mxu0 0.0
  %3765 = vmatprep.subr.mxu0 0.0
  %3766 = vmatpush1.msra.mxu0 0.0
  %3767 = vmatprep.subr.mxu0 0.0
  %3768 = vmatpush1.msra.mxu0 0.0
  %3769 = vmatprep.subr.mxu0 0.0
  %3770 = vmatpush1.msra.mxu0 0.0
  %3771 = vmatprep.subr.mxu0 0.0
  %3772 = vmatpush1.msra.mxu0 0.0
  %3773 = vmatprep.subr.mxu0 0.0
  %3774 = vmatpush1.msra.mxu0 0.0
  %3775 = vmatprep.subr.mxu0 0.0
  %3776 = vmatpush1.msra.mxu0 0.0
  %3777 = vmatprep.subr.mxu0 0.0
  %3778 = vmatpush1.msra.mxu0 0.0
  %3779 = vmatprep.subr.mxu0 0.0
  %3780 = vmatpush1.msra.mxu0 0.0
  %3781 = vmatprep.subr.mxu0 0.0
  %3782 = vmatpush1.msra.mxu0 0.0
  %3783 = vmatprep.subr.mxu0 0.0
  %3784 = vmatpush1.msra.mxu0 0.0
  %3785 = vmatprep.subr.mxu0 0.0
  %3786 = vmatpush1.msra.mxu0 0.0
  %3787 = vmatprep.subr.mxu0 0.0
  %3788 = vmatpush1.msra.mxu0 0.0
  %3789 = vmatprep.subr.mxu0 0.0
  %3790 = vmatpush1.msra.mxu0 0.0
  %3791 = vmatprep.subr.mxu0 0.0
  %3792 = vmatpush1.msra.mxu0 0.0
  %3793 = vmatprep.subr.mxu0 0.0
  %3794 = vmatpush1.msra.mxu0 0.0
  %3795 = vmatprep.mubr.f32.mxu0 0.0
  %3796 = vmatmul.mubr.f32.gmra.mrb[0].mxu0 %v1158
  %v3797 = vpop.f32.mrb[0].mxu0
  %v3798 = vadd.f32 0.0, %v3797
  %v3799 = vpop.f32.mrb[0].mxu0
  %v3800 = vadd.f32 0.0, %v3799
  %3801 = vdwg.mxu0
  %v3802 = vadd.f32 %v3696, %v3798
  %v3803 = vadd.f32 %v3697, %v3800
  %v3804 = vld [vmem:[%s4] sm:$0x3]
  %v3806 = vlaneseq
  %v3807 = vshrl.u32 %v3806, 7
  %v3808 = vsub.s32 0, %v3807
  %v3809 = vrot.slane %v3804, %v3808
  %v3810 = vlaneseq
  %v3811 = vshrl.u32 %v3810, 7
  %v3812 = vsub.s32 1, %v3811
  %v3813 = vrot.slane %v3804, %v3812
  %v3816 = vadd.f32 %v3802, %v3809
  %v3817 = vadd.f32 %v3803, %v3813
  %v3818 = vmax.f32 %v3816, 0.0
  %v3819 = vmax.f32 %v3817, 0.0
  %v3820 = vld [vmem:[%s5] sm:$0xff]
  %v3821 = vld [vmem:[%s5 + $0x8] sm:$0xff]
  %v3822 = vld [vmem:[%s5 + $0x10] sm:$0xff]
  %v3823 = vld [vmem:[%s5 + $0x18] sm:$0xff]
  %v3824 = vld [vmem:[%s5 + $0x20] sm:$0xff]
  %v3825 = vld [vmem:[%s5 + $0x28] sm:$0xff]
  %v3826 = vld [vmem:[%s5 + $0x30] sm:$0xff]
  %v3827 = vld [vmem:[%s5 + $0x38] sm:$0xff]
  %v3828 = vld [vmem:[%s5 + $0x40] sm:$0xff]
  %v3829 = vld [vmem:[%s5 + $0x48] sm:$0xff]
  %v3830 = vld [vmem:[%s5 + $0x50] sm:$0xff]
  %v3831 = vld [vmem:[%s5 + $0x58] sm:$0xff]
  %v3832 = vld [vmem:[%s5 + $0x60] sm:$0xff]
  %v3833 = vld [vmem:[%s5 + $0x68] sm:$0xff]
  %v3834 = vld [vmem:[%s5 + $0x70] sm:$0xff]
  %v3835 = vld [vmem:[%s5 + $0x78] sm:$0xff]
  %v3836 = vld [vmem:[%s5 + $0x80] sm:$0xff]
  %v3837 = vld [vmem:[%s5 + $0x88] sm:$0xff]
  %v3838 = vld [vmem:[%s5 + $0x90] sm:$0xff]
  %v3839 = vld [vmem:[%s5 + $0x98] sm:$0xff]
  %v3840 = vld [vmem:[%s5 + $0xa0] sm:$0xff]
  %v3841 = vld [vmem:[%s5 + $0xa8] sm:$0xff]
  %v3842 = vld [vmem:[%s5 + $0xb0] sm:$0xff]
  %v3843 = vld [vmem:[%s5 + $0xb8] sm:$0xff]
  %v3844 = vld [vmem:[%s5 + $0xc0] sm:$0xff]
  %v3845 = vld [vmem:[%s5 + $0xc8] sm:$0xff]
  %v3846 = vld [vmem:[%s5 + $0xd0] sm:$0xff]
  %v3847 = vld [vmem:[%s5 + $0xd8] sm:$0xff]
  %v3848 = vld [vmem:[%s5 + $0xe0] sm:$0xff]
  %v3849 = vld [vmem:[%s5 + $0xe8] sm:$0xff]
  %v3850 = vld [vmem:[%s5 + $0xf0] sm:$0xff]
  %v3851 = vld [vmem:[%s5 + $0xf8] sm:$0xff]
  %v3852 = vld [vmem:[%s6] sm:$0x1]
  %v3854 = vlaneseq
  %v3855 = vshrl.u32 %v3854, 7
  %v3856 = vsub.s32 0, %v3855
  %v3857 = vrot.slane %v3852, %v3856
  %3859 = vmatprep.subr.mxu0 0.0
  %3860 = vmatpush1.msra.mxu0 %v3820
  %3861 = vmatprep.subr.mxu0 0.0
  %3862 = vmatpush1.msra.mxu0 %v3821
  %3863 = vmatprep.subr.mxu0 0.0
  %3864 = vmatpush1.msra.mxu0 %v3822
  %3865 = vmatprep.subr.mxu0 0.0
  %3866 = vmatpush1.msra.mxu0 %v3823
  %3867 = vmatprep.subr.mxu0 0.0
  %3868 = vmatpush1.msra.mxu0 %v3824
  %3869 = vmatprep.subr.mxu0 0.0
  %3870 = vmatpush1.msra.mxu0 %v3825
  %3871 = vmatprep.subr.mxu0 0.0
  %3872 = vmatpush1.msra.mxu0 %v3826
  %3873 = vmatprep.subr.mxu0 0.0
  %3874 = vmatpush1.msra.mxu0 %v3827
  %3875 = vmatprep.subr.mxu0 0.0
  %3876 = vmatpush1.msra.mxu0 %v3828
  %3877 = vmatprep.subr.mxu0 0.0
  %3878 = vmatpush1.msra.mxu0 %v3829
  %3879 = vmatprep.subr.mxu0 0.0
  %3880 = vmatpush1.msra.mxu0 %v3830
  %3881 = vmatprep.subr.mxu0 0.0
  %3882 = vmatpush1.msra.mxu0 %v3831
  %3883 = vmatprep.subr.mxu0 0.0
  %3884 = vmatpush1.msra.mxu0 %v3832
  %3885 = vmatprep.subr.mxu0 0.0
  %3886 = vmatpush1.msra.mxu0 %v3833
  %3887 = vmatprep.subr.mxu0 0.0
  %3888 = vmatpush1.msra.mxu0 %v3834
  %3889 = vmatprep.subr.mxu0 0.0
  %3890 = vmatpush1.msra.mxu0 %v3835
  %3891 = vmatprep.subr.mxu0 0.0
  %3892 = vmatpush1.msra.mxu0 %v3836
  %3893 = vmatprep.subr.mxu0 0.0
  %3894 = vmatpush1.msra.mxu0 %v3837
  %3895 = vmatprep.subr.mxu0 0.0
  %3896 = vmatpush1.msra.mxu0 %v3838
  %3897 = vmatprep.subr.mxu0 0.0
  %3898 = vmatpush1.msra.mxu0 %v3839
  %3899 = vmatprep.subr.mxu0 0.0
  %3900 = vmatpush1.msra.mxu0 %v3840
  %3901 = vmatprep.subr.mxu0 0.0
  %3902 = vmatpush1.msra.mxu0 %v3841
  %3903 = vmatprep.subr.mxu0 0.0
  %3904 = vmatpush1.msra.mxu0 %v3842
  %3905 = vmatprep.subr.mxu0 0.0
  %3906 = vmatpush1.msra.mxu0 %v3843
  %3907 = vmatprep.subr.mxu0 0.0
  %3908 = vmatpush1.msra.mxu0 %v3844
  %3909 = vmatprep.subr.mxu0 0.0
  %3910 = vmatpush1.msra.mxu0 %v3845
  %3911 = vmatprep.subr.mxu0 0.0
  %3912 = vmatpush1.msra.mxu0 %v3846
  %3913 = vmatprep.subr.mxu0 0.0
  %3914 = vmatpush1.msra.mxu0 %v3847
  %3915 = vmatprep.subr.mxu0 0.0
  %3916 = vmatpush1.msra.mxu0 %v3848
  %3917 = vmatprep.subr.mxu0 0.0
  %3918 = vmatpush1.msra.mxu0 %v3849
  %3919 = vmatprep.subr.mxu0 0.0
  %3920 = vmatpush1.msra.mxu0 %v3850
  %3921 = vmatprep.subr.mxu0 0.0
  %3922 = vmatpush1.msra.mxu0 %v3851
  %3923 = vmatprep.mubr.f32.mxu0 %v3819
  %3924 = vmatmul.mubr.f32.gmra.mrb[0].mxu0 %v3818
  %v3925 = vpop.f32.mrb[0].mxu0
  %v3926 = vadd.f32 %v3857, %v3925
  %v3927 = vpop.f32.mrb[0].mxu0
  %3928 = vdwg.mxu0
  %v3929 = vmax.f32 %v3926, 0.0
  %v3930 = vld [vmem:[%s7] sm:$0xff]
  %v3931 = vld [vmem:[%s7 + $0x8] sm:$0xff]
  %v3932 = vld [vmem:[%s7 + $0x10] sm:$0xff]
  %v3933 = vld [vmem:[%s7 + $0x18] sm:$0xff]
  %v3934 = vld [vmem:[%s7 + $0x20] sm:$0xff]
  %v3935 = vld [vmem:[%s7 + $0x28] sm:$0xff]
  %v3936 = vld [vmem:[%s7 + $0x30] sm:$0xff]
  %v3937 = vld [vmem:[%s7 + $0x38] sm:$0xff]
  %v3938 = vld [vmem:[%s7 + $0x40] sm:$0xff]
  %v3939 = vld [vmem:[%s7 + $0x48] sm:$0xff]
  %v3940 = vld [vmem:[%s7 + $0x50] sm:$0xff]
  %v3941 = vld [vmem:[%s7 + $0x58] sm:$0xff]
  %v3942 = vld [vmem:[%s7 + $0x60] sm:$0xff]
  %v3943 = vld [vmem:[%s7 + $0x68] sm:$0xff]
  %v3944 = vld [vmem:[%s7 + $0x70] sm:$0xff]
  %v3945 = vld [vmem:[%s7 + $0x78] sm:$0xff]
  %v3946 = vld [vmem:[%s8] sm:$0x1]
  %v3948 = vlaneseq
  %v3949 = vshrl.u32 %v3948, 7
  %v3950 = vsub.s32 0, %v3949
  %v3951 = vrot.slane %v3946, %v3950
  %3953 = vmatprep.subr.mxu0 0.0
  %3954 = vmatpush1.msra.mxu0 %v3930
  %3955 = vmatprep.subr.mxu0 0.0
  %3956 = vmatpush1.msra.mxu0 %v3931
  %3957 = vmatprep.subr.mxu0 0.0
  %3958 = vmatpush1.msra.mxu0 %v3932
  %3959 = vmatprep.subr.mxu0 0.0
  %3960 = vmatpush1.msra.mxu0 %v3933
  %3961 = vmatprep.subr.mxu0 0.0
  %3962 = vmatpush1.msra.mxu0 %v3934
  %3963 = vmatprep.subr.mxu0 0.0
  %3964 = vmatpush1.msra.mxu0 %v3935
  %3965 = vmatprep.subr.mxu0 0.0
  %3966 = vmatpush1.msra.mxu0 %v3936
  %3967 = vmatprep.subr.mxu0 0.0
  %3968 = vmatpush1.msra.mxu0 %v3937
  %3969 = vmatprep.subr.mxu0 0.0
  %3970 = vmatpush1.msra.mxu0 %v3938
  %3971 = vmatprep.subr.mxu0 0.0
  %3972 = vmatpush1.msra.mxu0 %v3939
  %3973 = vmatprep.subr.mxu0 0.0
  %3974 = vmatpush1.msra.mxu0 %v3940
  %3975 = vmatprep.subr.mxu0 0.0
  %3976 = vmatpush1.msra.mxu0 %v3941
  %3977 = vmatprep.subr.mxu0 0.0
  %3978 = vmatpush1.msra.mxu0 %v3942
  %3979 = vmatprep.subr.mxu0 0.0
  %3980 = vmatpush1.msra.mxu0 %v3943
  %3981 = vmatprep.subr.mxu0 0.0
  %3982 = vmatpush1.msra.mxu0 %v3944
  %3983 = vmatprep.subr.mxu0 0.0
  %3984 = vmatpush1.msra.mxu0 %v3945
  %3985 = vmatprep.subr.mxu0 0.0
  %3986 = vmatpush1.msra.mxu0 0.0
  %3987 = vmatprep.subr.mxu0 0.0
  %3988 = vmatpush1.msra.mxu0 0.0
  %3989 = vmatprep.subr.mxu0 0.0
  %3990 = vmatpush1.msra.mxu0 0.0
  %3991 = vmatprep.subr.mxu0 0.0
  %3992 = vmatpush1.msra.mxu0 0.0
  %3993 = vmatprep.subr.mxu0 0.0
  %3994 = vmatpush1.msra.mxu0 0.0
  %3995 = vmatprep.subr.mxu0 0.0
  %3996 = vmatpush1.msra.mxu0 0.0
  %3997 = vmatprep.subr.mxu0 0.0
  %3998 = vmatpush1.msra.mxu0 0.0
  %3999 = vmatprep.subr.mxu0 0.0
  %4000 = vmatpush1.msra.mxu0 0.0
  %4001 = vmatprep.subr.mxu0 0.0
  %4002 = vmatpush1.msra.mxu0 0.0
  %4003 = vmatprep.subr.mxu0 0.0
  %4004 = vmatpush1.msra.mxu0 0.0
  %4005 = vmatprep.subr.mxu0 0.0
  %4006 = vmatpush1.msra.mxu0 0.0
  %4007 = vmatprep.subr.mxu0 0.0
  %4008 = vmatpush1.msra.mxu0 0.0
  %4009 = vmatprep.subr.mxu0 0.0
  %4010 = vmatpush1.msra.mxu0 0.0
  %4011 = vmatprep.subr.mxu0 0.0
  %4012 = vmatpush1.msra.mxu0 0.0
  %4013 = vmatprep.subr.mxu0 0.0
  %4014 = vmatpush1.msra.mxu0 0.0
  %4015 = vmatprep.subr.mxu0 0.0
  %4016 = vmatpush1.msra.mxu0 0.0
  %4017 = vmatprep.mubr.f32.mxu0 0.0
  %4018 = vmatmul.mubr.f32.gmra.mrb[0].mxu0 %v3929
  %v4019 = vpop.f32.mrb[0].mxu0
  %v4020 = vadd.f32 %v3951, %v4019
  %v4021 = vpop.f32.mrb[0].mxu0
  %4022 = vdwg.mxu0
  %4023 = vst [vmem:[%s9] sm:$0xff] %v4020
  // Predicated region
  $region38: #{_lenet_forward_impl.3} parent=0 // pred_check
    _
  $region39: #{_lenet_forward_impl.3} parent=0 // pred_check_branch
    %4025 = sbr.rel (0) target = $region41
  $region40: #{_lenet_forward_impl.3} parent=0 // pred_region
    _
  $region41: #{_lenet_forward_impl.3} parent=0 // pred_fallthru
    _
  // Predicated region
  $region42: #{_lenet_forward_impl.3} parent=0 // pred_check
    _
  $region43: #{_lenet_forward_impl.3} parent=0 // pred_check_branch
    %4027 = sbr.rel (0) target = $region45
  $region44: #{_lenet_forward_impl.3} parent=0 // pred_region
    _
  $region45: #{_lenet_forward_impl.3} parent=0 // pred_fallthru
    _

</llo_original>
